<compile_context>
chip_gen: v7x
topology: tpu7x:2x2x1
jax: 0.10.0
libtpu: 0.0.40
codegen_flags: <defaults>
</compile_context>

<pallas_src>
import functools

import jax
import jax.numpy as jnp
from jax import lax
from jax.experimental import pallas as pl
from jax.experimental.pallas import tpu as pltpu

EPS = 1e-5
LANE = 128


# ------------------------------- small helpers ------------------------------ #

def _round_up(x, m):
    return ((x + m - 1) // m) * m


def _pad_ch(c):
    # Review item: do not inflate tiny channel counts to 128; sublane multiple
    # is enough, lane-dense (128) only once the layer is already that wide.
    return _round_up(c, LANE) if c >= LANE else _round_up(c, 8)


def _pick_tile_h(H, W):
    # Multiple-of-8 row tiles dividing H; prefer M = tile_h*W >= 256 so the
    # MXU M dim is full on v6e/v7x (v5e's 128x128 MXU is already full at 128).
    cands = [th for th in range(8, H + 1, 8) if H % th == 0 and th * W <= 8192]
    if not cands:
        return H
    for th in cands:
        if th * W >= 256:
            return th
    return cands[-1]


def _pick_rows(total, c):
    # Large blocks for the HBM-bound elementwise pass (>=512 rows when possible).
    cap = max(8, (2 * 1024 * 1024) // max(4 * c, 1))
    for rb in (8192, 4096, 2048, 1024, 512, 256, 128, 64, 32, 16, 8):
        if rb <= cap and total % rb == 0:
            return rb
    return total


def _vmem_limit_bytes():
    cap = 64 * 1024 * 1024
    try:
        cap = int(pltpu.get_tpu_info().vmem_capacity_bytes)
    except Exception:
        pass
    return max(32 * 1024 * 1024, min(3 * cap // 4, 96 * 1024 * 1024))


# ------------------------------- Pallas kernels ----------------------------- #

def _conv3x3_bn_stats_kernel(x_ref, w_ref, b_ref, sc_ref, sh_ref,
                             y_ref, sum_ref, sq_ref, *, fuse_input_bn_relu):
    """3x3 SAME conv on one (tile_h x W) row band with:
       - optional fused input transform z = max(x*scale + shift, 0)
         (= previous layer's BN+ReLU, so its activation never touches HBM),
       - spatial zero padding handled in-kernel,
       - bf16 MXU operands / f32 accumulation,
       - per-sample BN partial statistics accumulated across the h-tile axis.

    x_ref:   (1, H, W, Cin_p)    whole sample, VMEM-resident across h tiles
    w_ref:   (9, Cin_p, Cout_p)  bf16 taps, tap index = dy*3 + dx
    b_ref:   (1, Cout_p)         conv bias (f32)
    sc_ref:  (1, Cin_p)          input BN scale (ignored unless fused)
    sh_ref:  (1, Cin_p)          input BN shift (ignored unless fused)
    y_ref:   (1, tile_h, W, Cout_p)  f32 pre-BN conv output
    sum_ref: (1, 1, 1, Cout_p)   per-sample sum    (accumulated over h tiles)
    sq_ref:  (1, 1, 1, Cout_p)   per-sample sum^2  (accumulated over h tiles)
    """
    j = pl.program_id(1)
    num_h = pl.num_programs(1)
    tile_h, W, cout = y_ref.shape[1], y_ref.shape[2], y_ref.shape[3]
    H, cin = x_ref.shape[1], x_ref.shape[3]

    row0 = j * tile_h
    if tile_h % 8 == 0:
        row0 = pl.multiple_of(row0, 8)          # aligned sublane loads

    def prep(rows):
        rows = rows.astype(jnp.float32)
        if fuse_input_bn_relu:
            rows = jnp.maximum(rows * sc_ref[...] + sh_ref[...], 0.0)
        return rows

    # Halo band (tile_h + 2 rows).  Out-of-image halo rows are forced to zero
    # AFTER the fused activation (the conv pads the post-activation map).
    top = prep(x_ref[0, pl.ds(jnp.maximum(row0 - 1, 0), 1), :, :])
    mid = prep(x_ref[0, pl.ds(row0, tile_h), :, :])
    bot = prep(x_ref[0, pl.ds(jnp.minimum(row0 + tile_h, H - 1), 1), :, :])
    top = top * (j > 0).astype(jnp.float32)
    bot = bot * (j + 1 < num_h).astype(jnp.float32)

    band = jnp.concatenate([top, mid, bot], axis=0)            # (tile_h+2, W, Cin)
    zcol = jnp.zeros((tile_h + 2, 1, cin), jnp.float32)
    band = jnp.concatenate([zcol, band, zcol], axis=1)         # (tile_h+2, W+2, Cin)
    band = band.astype(jnp.bfloat16)                           # bf16 MXU operand

    # 9 accumulating MXU dots (no im2col concat buffer); only 3 column-shifted
    # copies of the band are materialized (one per dx).
    acc = jnp.zeros((tile_h * W, cout), jnp.float32)
    for dx in range(3):
        band_dx = band[:, dx:dx + W, :]
        for dy in range(3):
            slab = band_dx[dy:dy + tile_h].reshape(tile_h * W, cin)
            acc = acc + jnp.dot(slab, w_ref[dy * 3 + dx],
                                preferred_element_type=jnp.float32)
    acc = acc + b_ref[...]                                     # conv bias

    y_ref[0] = acc.reshape(tile_h, W, cout).astype(y_ref.dtype)

    @pl.when(j == 0)
    def _():
        sum_ref[...] = jnp.zeros_like(sum_ref)
        sq_ref[...] = jnp.zeros_like(sq_ref)

    sum_ref[...] += jnp.sum(acc, axis=0, keepdims=True).reshape(1, 1, 1, cout)
    sq_ref[...] += jnp.sum(acc * acc, axis=0, keepdims=True).reshape(1, 1, 1, cout)


def _bn_relu_kernel(y_ref, sc_ref, sh_ref, o_ref):
    """Fused y*scale + shift -> ReLU on a flat (rows, C) block."""
    o_ref[...] = jnp.maximum(
        y_ref[...] * sc_ref[...] + sh_ref[...], 0.0).astype(o_ref.dtype)


# ------------------------------ Pallas wrappers ------------------------------ #

def conv3x3_bn_stats(x, w, b, scale, shift, tile_h, *, fuse):
    """x: (N, H, W, Cin_p) (bf16 or f32); w: (9, Cin_p, Cout_p) bf16.
    Returns y (N, H, W, Cout_p) f32 and per-sample BN partials (N,1,1,Cout_p)."""
    n, H, W, cin = x.shape
    cout = w.shape[2]
    num_h = H // tile_h
    kernel = functools.partial(_conv3x3_bn_stats_kernel, fuse_input_bn_relu=fuse)
    return pl.pallas_call(
        kernel,
        out_shape=(
            jax.ShapeDtypeStruct((n, H, W, cout), jnp.float32),
            jax.ShapeDtypeStruct((n, 1, 1, cout), jnp.float32),
            jax.ShapeDtypeStruct((n, 1, 1, cout), jnp.float32),
        ),
        grid_spec=pltpu.PrefetchScalarGridSpec(
            num_scalar_prefetch=0,
            grid=(n, num_h),
            in_specs=[
                # Whole sample resident across h tiles (block index ignores j).
                # TODO(synk): pl.ANY + manual halo-band DMA for huge images.
                pl.BlockSpec((1, H, W, cin), lambda i, j: (i, 0, 0, 0)),
                pl.BlockSpec((9, cin, cout), lambda i, j: (0, 0, 0)),
                pl.BlockSpec((1, cout), lambda i, j: (0, 0)),
                pl.BlockSpec((1, cin), lambda i, j: (0, 0)),
                pl.BlockSpec((1, cin), lambda i, j: (0, 0)),
            ],
            out_specs=[
                pl.BlockSpec((1, tile_h, W, cout), lambda i, j: (i, j, 0, 0)),
                # Per-sample stat blocks stay resident & accumulate across j.
                pl.BlockSpec((1, 1, 1, cout), lambda i, j: (i, 0, 0, 0)),
                pl.BlockSpec((1, 1, 1, cout), lambda i, j: (i, 0, 0, 0)),
            ],
        ),
        compiler_params=pltpu.CompilerParams(
            # n first & parallel: v7x's two TensorCores split on samples, each
            # fetching its own image once.  h revisits the stat outputs ->
            # "arbitrary".
            dimension_semantics=("parallel", "arbitrary"),
            vmem_limit_bytes=_vmem_limit_bytes()),
    )(x, w, b, scale, shift)


def bn_relu_flat(y_flat, scale, shift):
    """BN(affine) + ReLU over a flat (rows, C) view with large blocks."""
    total, c = y_flat.shape
    rb = _pick_rows(total, c)
    return pl.pallas_call(
        _bn_relu_kernel,
        out_shape=jax.ShapeDtypeStruct((total, c), jnp.float32),
        grid_spec=pltpu.PrefetchScalarGridSpec(
            num_scalar_prefetch=0,
            grid=(total // rb,),
            in_specs=[
                pl.BlockSpec((rb, c), lambda i: (i, 0)),
                pl.BlockSpec((1, c), lambda i: (0, 0)),
                pl.BlockSpec((1, c), lambda i: (0, 0)),
            ],
            out_specs=pl.BlockSpec((rb, c), lambda i: (i, 0)),
        ),
        compiler_params=pltpu.CompilerParams(
            dimension_semantics=("parallel",),
            vmem_limit_bytes=_vmem_limit_bytes()),
    )(y_flat, scale, shift)


# ---------------------------- DoubleConv forward ----------------------------- #

def _scale_shift(sum_p, sq_p, gamma, beta, count):
    """Finalize train-mode BN from per-sample partial sums (tiny per-channel)."""
    tot = jnp.sum(sum_p, axis=(0, 1, 2))
    totsq = jnp.sum(sq_p, axis=(0, 1, 2))
    mean = tot / count
    var = jnp.maximum(totsq / count - mean * mean, 0.0)   # biased, like PyTorch
    scale = gamma * lax.rsqrt(var + EPS)
    shift = beta - mean * scale
    c = scale.shape[0]
    return scale.reshape(1, c), shift.reshape(1, c)


def _pad_channels(a, c_to, value=0.0):
    c = a.shape[-1]
    if c == c_to:
        return a
    pad = [(0, 0)] * (a.ndim - 1) + [(0, c_to - c)]
    return jnp.pad(a, pad, constant_values=value)


def _prep_weight(w_hwio, cin_p, cout_p):
    kh, kw, ci, co = w_hwio.shape
    w = jnp.zeros((kh * kw, cin_p, cout_p), jnp.float32)
    w = w.at[:, :ci, :co].set(w_hwio.reshape(kh * kw, ci, co).astype(jnp.float32))
    return w.astype(jnp.bfloat16)


def double_conv_forward(x_nchw, params):
    n, cin, H, W = x_nchw.shape
    cout = params["w1"].shape[-1]
    cin_p, cmid_p, cout_p = _pad_ch(cin), _pad_ch(cout), _pad_ch(cout)
    tile_h = _pick_tile_h(H, W)
    count = jnp.float32(n * H * W)

    # NCHW -> NHWC; minimal channel padding; bf16 to halve image DMA / feed MXU.
    x = jnp.transpose(x_nchw, (0, 2, 3, 1)).astype(jnp.float32)
    x = _pad_channels(x, cin_p).astype(jnp.bfloat16)

    w1 = _prep_weight(params["w1"], cin_p, cmid_p)
    w2 = _prep_weight(params["w2"], cmid_p, cout_p)
    b1 = _pad_channels(params["b1"], cmid_p).reshape(1, cmid_p).astype(jnp.float32)
    b2 = _pad_channels(params["b2"], cout_p).reshape(1, cout_p).astype(jnp.float32)
    g1 = _pad_channels(params["gamma1"], cmid_p, 1.0)
    bt1 = _pad_channels(params["beta1"], cmid_p, 0.0)
    g2 = _pad_channels(params["gamma2"], cout_p, 1.0)
    bt2 = _pad_channels(params["beta2"], cout_p, 0.0)

    ones = jnp.ones((1, cin_p), jnp.float32)     # dummies, unused when fuse=False
    zeros = jnp.zeros((1, cin_p), jnp.float32)

    # Conv #1 (+ fused BN1 partial statistics).
    y1, s1, q1 = conv3x3_bn_stats(x, w1, b1, ones, zeros, tile_h, fuse=False)
    scale1, shift1 = _scale_shift(s1, q1, g1, bt1, count)

    # Conv #2 with BN1+ReLU fused into its input path (block 1's activation
    # never round-trips HBM) + fused BN2 partial statistics.
    y2, s2, q2 = conv3x3_bn_stats(y1, w2, b2, scale1, shift1, tile_h, fuse=True)
    scale2, shift2 = _scale_shift(s2, q2, g2, bt2, count)

    # Final BN2 + ReLU: one flat, large-block elementwise pass.
    z2 = bn_relu_flat(y2.reshape(n * H * W, cout_p), scale2, shift2)
    z2 = z2.reshape(n, H, W, cout_p)

    # Drop channel padding, back to NCHW.
    return jnp.transpose(z2[..., :cout], (0, 3, 1, 2))


# ------------------------------- JAX reference -------------------------------- #
# Precision-matched reference: conv operands in bf16 with f32 accumulation (same
# as the kernel's MXU path, per the perf review), BN/ReLU in f32.

def _ref_block(x_nhwc, w, b, gamma, beta):
    y = lax.conv_general_dilated(
        x_nhwc.astype(jnp.bfloat16), w.astype(jnp.bfloat16),
        window_strides=(1, 1), padding="SAME",
        dimension_numbers=("NHWC", "HWIO", "NHWC"),
        preferred_element_type=jnp.float32) + b
    mean = jnp.mean(y, axis=(0, 1, 2))
    var = jnp.var(y, axis=(0, 1, 2))
    yn = (y - mean) * lax.rsqrt(var + EPS) * gamma + beta
    return jnp.maximum(yn, 0.0)


def double_conv_reference(x_nchw, params):
    x = jnp.transpose(x_nchw, (0, 2, 3, 1)).astype(jnp.float32)
    h = _ref_block(x, params["w1"], params["b1"], params["gamma1"], params["beta1"])
    h = _ref_block(h, params["w2"], params["b2"], params["gamma2"], params["beta2"])
    return jnp.transpose(h, (0, 3, 1, 2))


# ----------------------------------- main ------------------------------------- #

def make_params(key, cin, cout):
    ks = jax.random.split(key, 8)
    return {
        "w1": 0.1 * jax.random.normal(ks[0], (3, 3, cin, cout), jnp.float32),
        "b1": 0.1 * jax.random.normal(ks[1], (cout,), jnp.float32),
        "gamma1": 1.0 + 0.1 * jax.random.normal(ks[2], (cout,), jnp.float32),
        "beta1": 0.1 * jax.random.normal(ks[3], (cout,), jnp.float32),
        "w2": 0.1 * jax.random.normal(ks[4], (3, 3, cout, cout), jnp.float32),
        "b2": 0.1 * jax.random.normal(ks[5], (cout,), jnp.float32),
        "gamma2": 1.0 + 0.1 * jax.random.normal(ks[6], (cout,), jnp.float32),
        "beta2": 0.1 * jax.random.normal(ks[7], (cout,), jnp.float32),
    }


if __name__ == "__main__":
    key = jax.random.PRNGKey(0)
    k_x, k_p = jax.random.split(key)

    N, CIN, COUT, H, W = 2, 4, 8, 16, 16
    x = jax.random.normal(k_x, (N, CIN, H, W), jnp.float32)   # NCHW, like PyTorch
    params = make_params(k_p, CIN, COUT)

    out = jax.jit(double_conv_forward)(x, params)
    out = jax.block_until_ready(out)

    ref = double_conv_reference(x, params)
    assert out.shape == (N, COUT, H, W)
    # Tolerance covers f32 accumulation-order and bf16 rounding-boundary
    # differences between the kernel and the precision-matched reference.
    err = jnp.max(jnp.abs(out - ref))
    assert jnp.allclose(out, ref, atol=5e-3, rtol=5e-3), f"max abs diff {err}"

    print("KERNEL_OK")
</pallas_src>

<mosaic_0001>
module attributes {stable_mosaic.version = 11 : i64} {
  func.func @_conv3x3_bn_stats_kernel(%arg0: i32, %arg1: i32, %arg2: memref<1x16x16x8xbf16, #tpu.memory_space<vmem>>, %arg3: memref<9x8x8xbf16, #tpu.memory_space<vmem>>, %arg4: memref<1x8xf32, #tpu.memory_space<vmem>>, %arg5: memref<1x8xf32, #tpu.memory_space<vmem>>, %arg6: memref<1x8xf32, #tpu.memory_space<vmem>>, %arg7: memref<1x16x16x8xf32, #tpu.memory_space<vmem>>, %arg8: memref<1x1x1x8xf32, #tpu.memory_space<vmem>>, %arg9: memref<1x1x1x8xf32, #tpu.memory_space<vmem>>) attributes {dimension_semantics = [#tpu.dimension_semantics<parallel>, #tpu.dimension_semantics<arbitrary>], iteration_bounds = array<i64: 2, 1>, scalar_prefetch = 0 : i64, scratch_operands = 0 : i64, tpu.core_type = #tpu.core_type<tc>, window_params = [{transform_indices = @transform_0, window_bounds = array<i64: 1, 16, 16, 8>}, {pipeline_mode = #tpu.pipeline_mode<synchronous>, transform_indices = @transform_1, window_bounds = array<i64: 9, 8, 8>}, {pipeline_mode = #tpu.pipeline_mode<synchronous>, transform_indices = @transform_2, window_bounds = array<i64: 1, 8>}, {pipeline_mode = #tpu.pipeline_mode<synchronous>, transform_indices = @transform_3, window_bounds = array<i64: 1, 8>}, {pipeline_mode = #tpu.pipeline_mode<synchronous>, transform_indices = @transform_4, window_bounds = array<i64: 1, 8>}, {transform_indices = @transform_5, window_bounds = array<i64: 1, 16, 16, 8>}, {transform_indices = @transform_6, window_bounds = array<i64: 1, 1, 1, 8>}, {transform_indices = @transform_7, window_bounds = array<i64: 1, 1, 1, 8>}]} {
    %c16_i32 = arith.constant 16 : i32
    %0 = arith.muli %arg1, %c16_i32 : i32
    %1 = tpu.assume_multiple %0, 8 : i32
    %c1_i32 = arith.constant 1 : i32
    %2 = arith.subi %1, %c1_i32 : i32
    %c0_i32 = arith.constant 0 : i32
    %3 = arith.maxsi %2, %c0_i32 : i32
    %c0 = arith.constant 0 : index
    %4 = arith.index_cast %3 : i32 to index
    %c0_0 = arith.constant 0 : index
    %c0_1 = arith.constant 0 : index
    %5 = vector.load %arg2[%c0, %4, %c0_0, %c0_1] : memref<1x16x16x8xbf16, #tpu.memory_space<vmem>>, vector<1x1x16x8xbf16>
    %6 = vector.shape_cast %5 : vector<1x1x16x8xbf16> to vector<1x16x8xbf16>
    %7 = arith.extf %6 : vector<1x16x8xbf16> to vector<1x16x8xf32>
    %c0_2 = arith.constant 0 : index
    %8 = arith.index_cast %1 : i32 to index
    %c0_3 = arith.constant 0 : index
    %c0_4 = arith.constant 0 : index
    %9 = vector.load %arg2[%c0_2, %8, %c0_3, %c0_4] : memref<1x16x16x8xbf16, #tpu.memory_space<vmem>>, vector<1x16x16x8xbf16>
    %10 = vector.shape_cast %9 : vector<1x16x16x8xbf16> to vector<16x16x8xbf16>
    %11 = arith.extf %10 : vector<16x16x8xbf16> to vector<16x16x8xf32>
    %c16_i32_5 = arith.constant 16 : i32
    %12 = arith.addi %1, %c16_i32_5 : i32
    %c15_i32 = arith.constant 15 : i32
    %13 = arith.minsi %12, %c15_i32 : i32
    %c0_6 = arith.constant 0 : index
    %14 = arith.index_cast %13 : i32 to index
    %c0_7 = arith.constant 0 : index
    %c0_8 = arith.constant 0 : index
    %15 = vector.load %arg2[%c0_6, %14, %c0_7, %c0_8] : memref<1x16x16x8xbf16, #tpu.memory_space<vmem>>, vector<1x1x16x8xbf16>
    %16 = vector.shape_cast %15 : vector<1x1x16x8xbf16> to vector<1x16x8xbf16>
    %17 = arith.extf %16 : vector<1x16x8xbf16> to vector<1x16x8xf32>
    %c0_i32_9 = arith.constant 0 : i32
    %18 = arith.cmpi sgt, %arg1, %c0_i32_9 : i32
    %19 = arith.extui %18 : i1 to i32
    %20 = arith.sitofp %19 : i32 to f32
    %21 = vector.broadcast %20 : f32 to vector<1x16x8xf32>
    %22 = arith.mulf %7, %21 : vector<1x16x8xf32>
    %c1_i32_10 = arith.constant 1 : i32
    %23 = arith.addi %arg1, %c1_i32_10 : i32
    %c1_i32_11 = arith.constant 1 : i32
    %24 = arith.cmpi slt, %23, %c1_i32_11 : i32
    %25 = arith.extui %24 : i1 to i32
    %26 = arith.sitofp %25 : i32 to f32
    %27 = vector.broadcast %26 : f32 to vector<1x16x8xf32>
    %28 = arith.mulf %17, %27 : vector<1x16x8xf32>
    %29 = tpu.concatenate %22, %11, %28 in 0 : vector<1x16x8xf32>, vector<16x16x8xf32>, vector<1x16x8xf32> -> vector<18x16x8xf32>
    %cst = arith.constant 0.000000e+00 : f32
    %30 = vector.broadcast %cst : f32 to vector<18x1x8xf32>
    %31 = tpu.concatenate %30, %29, %30 in 1 : vector<18x1x8xf32>, vector<18x16x8xf32>, vector<18x1x8xf32> -> vector<18x18x8xf32>
    %32 = arith.truncf %31 : vector<18x18x8xf32> to vector<18x18x8xbf16>
    %cst_12 = arith.constant 0.000000e+00 : f32
    %33 = vector.broadcast %cst_12 : f32 to vector<256x8xf32>
    %34 = vector.extract_strided_slice %32 {offsets = [0, 0, 0], sizes = [18, 16, 8], strides = [1, 1, 1]} : vector<18x18x8xbf16> to vector<18x16x8xbf16>
    %35 = vector.extract_strided_slice %34 {offsets = [0, 0, 0], sizes = [16, 16, 8], strides = [1, 1, 1]} : vector<18x16x8xbf16> to vector<16x16x8xbf16>
    %36 = vector.shape_cast %35 : vector<16x16x8xbf16> to vector<256x8xbf16>
    %c0_13 = arith.constant 0 : index
    %c0_14 = arith.constant 0 : index
    %c0_15 = arith.constant 0 : index
    %37 = vector.load %arg3[%c0_13, %c0_14, %c0_15] : memref<9x8x8xbf16, #tpu.memory_space<vmem>>, vector<1x8x8xbf16>
    %38 = vector.shape_cast %37 : vector<1x8x8xbf16> to vector<8x8xbf16>
    %cst_16 = arith.constant dense<0.000000e+00> : vector<256x8xf32>
    %39 = tpu.matmul %36, %38, %cst_16 {dimension_numbers = #tpu.dot_dimension_numbers<[1], [0], [0], [1], [0, 0, 1, 1], [], []>} : vector<256x8xbf16>, vector<8x8xbf16>, vector<256x8xf32> -> vector<256x8xf32>
    %40 = arith.addf %33, %39 : vector<256x8xf32>
    %41 = vector.extract_strided_slice %34 {offsets = [1, 0, 0], sizes = [16, 16, 8], strides = [1, 1, 1]} : vector<18x16x8xbf16> to vector<16x16x8xbf16>
    %42 = vector.shape_cast %41 : vector<16x16x8xbf16> to vector<256x8xbf16>
    %c3 = arith.constant 3 : index
    %c0_17 = arith.constant 0 : index
    %c0_18 = arith.constant 0 : index
    %43 = vector.load %arg3[%c3, %c0_17, %c0_18] : memref<9x8x8xbf16, #tpu.memory_space<vmem>>, vector<1x8x8xbf16>
    %44 = vector.shape_cast %43 : vector<1x8x8xbf16> to vector<8x8xbf16>
    %cst_19 = arith.constant dense<0.000000e+00> : vector<256x8xf32>
    %45 = tpu.matmul %42, %44, %cst_19 {dimension_numbers = #tpu.dot_dimension_numbers<[1], [0], [0], [1], [0, 0, 1, 1], [], []>} : vector<256x8xbf16>, vector<8x8xbf16>, vector<256x8xf32> -> vector<256x8xf32>
    %46 = arith.addf %40, %45 : vector<256x8xf32>
    %47 = vector.extract_strided_slice %34 {offsets = [2, 0, 0], sizes = [16, 16, 8], strides = [1, 1, 1]} : vector<18x16x8xbf16> to vector<16x16x8xbf16>
    %48 = vector.shape_cast %47 : vector<16x16x8xbf16> to vector<256x8xbf16>
    %c6 = arith.constant 6 : index
    %c0_20 = arith.constant 0 : index
    %c0_21 = arith.constant 0 : index
    %49 = vector.load %arg3[%c6, %c0_20, %c0_21] : memref<9x8x8xbf16, #tpu.memory_space<vmem>>, vector<1x8x8xbf16>
    %50 = vector.shape_cast %49 : vector<1x8x8xbf16> to vector<8x8xbf16>
    %cst_22 = arith.constant dense<0.000000e+00> : vector<256x8xf32>
    %51 = tpu.matmul %48, %50, %cst_22 {dimension_numbers = #tpu.dot_dimension_numbers<[1], [0], [0], [1], [0, 0, 1, 1], [], []>} : vector<256x8xbf16>, vector<8x8xbf16>, vector<256x8xf32> -> vector<256x8xf32>
    %52 = arith.addf %46, %51 : vector<256x8xf32>
    %53 = vector.extract_strided_slice %32 {offsets = [0, 1, 0], sizes = [18, 16, 8], strides = [1, 1, 1]} : vector<18x18x8xbf16> to vector<18x16x8xbf16>
    %54 = vector.extract_strided_slice %53 {offsets = [0, 0, 0], sizes = [16, 16, 8], strides = [1, 1, 1]} : vector<18x16x8xbf16> to vector<16x16x8xbf16>
    %55 = vector.shape_cast %54 : vector<16x16x8xbf16> to vector<256x8xbf16>
    %c1 = arith.constant 1 : index
    %c0_23 = arith.constant 0 : index
    %c0_24 = arith.constant 0 : index
    %56 = vector.load %arg3[%c1, %c0_23, %c0_24] : memref<9x8x8xbf16, #tpu.memory_space<vmem>>, vector<1x8x8xbf16>
    %57 = vector.shape_cast %56 : vector<1x8x8xbf16> to vector<8x8xbf16>
    %cst_25 = arith.constant dense<0.000000e+00> : vector<256x8xf32>
    %58 = tpu.matmul %55, %57, %cst_25 {dimension_numbers = #tpu.dot_dimension_numbers<[1], [0], [0], [1], [0, 0, 1, 1], [], []>} : vector<256x8xbf16>, vector<8x8xbf16>, vector<256x8xf32> -> vector<256x8xf32>
    %59 = arith.addf %52, %58 : vector<256x8xf32>
    %60 = vector.extract_strided_slice %53 {offsets = [1, 0, 0], sizes = [16, 16, 8], strides = [1, 1, 1]} : vector<18x16x8xbf16> to vector<16x16x8xbf16>
    %61 = vector.shape_cast %60 : vector<16x16x8xbf16> to vector<256x8xbf16>
    %c4 = arith.constant 4 : index
    %c0_26 = arith.constant 0 : index
    %c0_27 = arith.constant 0 : index
    %62 = vector.load %arg3[%c4, %c0_26, %c0_27] : memref<9x8x8xbf16, #tpu.memory_space<vmem>>, vector<1x8x8xbf16>
    %63 = vector.shape_cast %62 : vector<1x8x8xbf16> to vector<8x8xbf16>
    %cst_28 = arith.constant dense<0.000000e+00> : vector<256x8xf32>
    %64 = tpu.matmul %61, %63, %cst_28 {dimension_numbers = #tpu.dot_dimension_numbers<[1], [0], [0], [1], [0, 0, 1, 1], [], []>} : vector<256x8xbf16>, vector<8x8xbf16>, vector<256x8xf32> -> vector<256x8xf32>
    %65 = arith.addf %59, %64 : vector<256x8xf32>
    %66 = vector.extract_strided_slice %53 {offsets = [2, 0, 0], sizes = [16, 16, 8], strides = [1, 1, 1]} : vector<18x16x8xbf16> to vector<16x16x8xbf16>
    %67 = vector.shape_cast %66 : vector<16x16x8xbf16> to vector<256x8xbf16>
    %c7 = arith.constant 7 : index
    %c0_29 = arith.constant 0 : index
    %c0_30 = arith.constant 0 : index
    %68 = vector.load %arg3[%c7, %c0_29, %c0_30] : memref<9x8x8xbf16, #tpu.memory_space<vmem>>, vector<1x8x8xbf16>
    %69 = vector.shape_cast %68 : vector<1x8x8xbf16> to vector<8x8xbf16>
    %cst_31 = arith.constant dense<0.000000e+00> : vector<256x8xf32>
    %70 = tpu.matmul %67, %69, %cst_31 {dimension_numbers = #tpu.dot_dimension_numbers<[1], [0], [0], [1], [0, 0, 1, 1], [], []>} : vector<256x8xbf16>, vector<8x8xbf16>, vector<256x8xf32> -> vector<256x8xf32>
    %71 = arith.addf %65, %70 : vector<256x8xf32>
    %72 = vector.extract_strided_slice %32 {offsets = [0, 2, 0], sizes = [18, 16, 8], strides = [1, 1, 1]} : vector<18x18x8xbf16> to vector<18x16x8xbf16>
    %73 = vector.extract_strided_slice %72 {offsets = [0, 0, 0], sizes = [16, 16, 8], strides = [1, 1, 1]} : vector<18x16x8xbf16> to vector<16x16x8xbf16>
    %74 = vector.shape_cast %73 : vector<16x16x8xbf16> to vector<256x8xbf16>
    %c2 = arith.constant 2 : index
    %c0_32 = arith.constant 0 : index
    %c0_33 = arith.constant 0 : index
    %75 = vector.load %arg3[%c2, %c0_32, %c0_33] : memref<9x8x8xbf16, #tpu.memory_space<vmem>>, vector<1x8x8xbf16>
    %76 = vector.shape_cast %75 : vector<1x8x8xbf16> to vector<8x8xbf16>
    %cst_34 = arith.constant dense<0.000000e+00> : vector<256x8xf32>
    %77 = tpu.matmul %74, %76, %cst_34 {dimension_numbers = #tpu.dot_dimension_numbers<[1], [0], [0], [1], [0, 0, 1, 1], [], []>} : vector<256x8xbf16>, vector<8x8xbf16>, vector<256x8xf32> -> vector<256x8xf32>
    %78 = arith.addf %71, %77 : vector<256x8xf32>
    %79 = vector.extract_strided_slice %72 {offsets = [1, 0, 0], sizes = [16, 16, 8], strides = [1, 1, 1]} : vector<18x16x8xbf16> to vector<16x16x8xbf16>
    %80 = vector.shape_cast %79 : vector<16x16x8xbf16> to vector<256x8xbf16>
    %c5 = arith.constant 5 : index
    %c0_35 = arith.constant 0 : index
    %c0_36 = arith.constant 0 : index
    %81 = vector.load %arg3[%c5, %c0_35, %c0_36] : memref<9x8x8xbf16, #tpu.memory_space<vmem>>, vector<1x8x8xbf16>
    %82 = vector.shape_cast %81 : vector<1x8x8xbf16> to vector<8x8xbf16>
    %cst_37 = arith.constant dense<0.000000e+00> : vector<256x8xf32>
    %83 = tpu.matmul %80, %82, %cst_37 {dimension_numbers = #tpu.dot_dimension_numbers<[1], [0], [0], [1], [0, 0, 1, 1], [], []>} : vector<256x8xbf16>, vector<8x8xbf16>, vector<256x8xf32> -> vector<256x8xf32>
    %84 = arith.addf %78, %83 : vector<256x8xf32>
    %85 = vector.extract_strided_slice %72 {offsets = [2, 0, 0], sizes = [16, 16, 8], strides = [1, 1, 1]} : vector<18x16x8xbf16> to vector<16x16x8xbf16>
    %86 = vector.shape_cast %85 : vector<16x16x8xbf16> to vector<256x8xbf16>
    %c8 = arith.constant 8 : index
    %c0_38 = arith.constant 0 : index
    %c0_39 = arith.constant 0 : index
    %87 = vector.load %arg3[%c8, %c0_38, %c0_39] : memref<9x8x8xbf16, #tpu.memory_space<vmem>>, vector<1x8x8xbf16>
    %88 = vector.shape_cast %87 : vector<1x8x8xbf16> to vector<8x8xbf16>
    %cst_40 = arith.constant dense<0.000000e+00> : vector<256x8xf32>
    %89 = tpu.matmul %86, %88, %cst_40 {dimension_numbers = #tpu.dot_dimension_numbers<[1], [0], [0], [1], [0, 0, 1, 1], [], []>} : vector<256x8xbf16>, vector<8x8xbf16>, vector<256x8xf32> -> vector<256x8xf32>
    %90 = arith.addf %84, %89 : vector<256x8xf32>
    %c0_41 = arith.constant 0 : index
    %c0_42 = arith.constant 0 : index
    %91 = vector.load %arg4[%c0_41, %c0_42] : memref<1x8xf32, #tpu.memory_space<vmem>>, vector<1x8xf32>
    %92 = vector.broadcast %91 : vector<1x8xf32> to vector<256x8xf32>
    %93 = arith.addf %90, %92 : vector<256x8xf32>
    %94 = vector.shape_cast %93 : vector<256x8xf32> to vector<16x16x8xf32>
    %c0_43 = arith.constant 0 : index
    %c0_44 = arith.constant 0 : index
    %c0_45 = arith.constant 0 : index
    %c0_46 = arith.constant 0 : index
    %95 = vector.load %arg7[%c0_43, %c0_44, %c0_45, %c0_46] : memref<1x16x16x8xf32, #tpu.memory_space<vmem>>, vector<1x16x16x8xf32>
    %96 = vector.shape_cast %95 : vector<1x16x16x8xf32> to vector<16x16x8xf32>
    %97 = vector.shape_cast %94 : vector<16x16x8xf32> to vector<1x16x16x8xf32>
    tpu.vector_store %arg7[%c0_43, %c0_44, %c0_45, %c0_46], %97 {strides = array<i32>} : memref<1x16x16x8xf32, #tpu.memory_space<vmem>>, vector<1x16x16x8xf32>,
    %c0_i32_47 = arith.constant 0 : i32
    %98 = arith.cmpi eq, %arg1, %c0_i32_47 : i32
    %99 = arith.extui %98 : i1 to i32
    %c0_i32_48 = arith.constant 0 : i32
    %100 = arith.cmpi ne, %99, %c0_i32_48 : i32
    scf.if %100 {
      %cst_67 = arith.constant 0.000000e+00 : f32
      %114 = vector.broadcast %cst_67 : f32 to vector<1x1x1x8xf32>
      %c0_68 = arith.constant 0 : index
      %c0_69 = arith.constant 0 : index
      %c0_70 = arith.constant 0 : index
      %c0_71 = arith.constant 0 : index
      %115 = vector.load %arg8[%c0_68, %c0_69, %c0_70, %c0_71] : memref<1x1x1x8xf32, #tpu.memory_space<vmem>>, vector<1x1x1x8xf32>
      tpu.vector_store %arg8[%c0_68, %c0_69, %c0_70, %c0_71], %114 {strides = array<i32>} : memref<1x1x1x8xf32, #tpu.memory_space<vmem>>, vector<1x1x1x8xf32>,
      %cst_72 = arith.constant 0.000000e+00 : f32
      %116 = vector.broadcast %cst_72 : f32 to vector<1x1x1x8xf32>
      %c0_73 = arith.constant 0 : index
      %c0_74 = arith.constant 0 : index
      %c0_75 = arith.constant 0 : index
      %c0_76 = arith.constant 0 : index
      %117 = vector.load %arg9[%c0_73, %c0_74, %c0_75, %c0_76] : memref<1x1x1x8xf32, #tpu.memory_space<vmem>>, vector<1x1x1x8xf32>
      tpu.vector_store %arg9[%c0_73, %c0_74, %c0_75, %c0_76], %116 {strides = array<i32>} : memref<1x1x1x8xf32, #tpu.memory_space<vmem>>, vector<1x1x1x8xf32>,
    } else {
    }
    %c0_49 = arith.constant 0 : index
    %c0_50 = arith.constant 0 : index
    %c0_51 = arith.constant 0 : index
    %c0_52 = arith.constant 0 : index
    %101 = vector.load %arg8[%c0_49, %c0_50, %c0_51, %c0_52] : memref<1x1x1x8xf32, #tpu.memory_space<vmem>>, vector<1x1x1x8xf32>
    %cst_53 = arith.constant dense<0.000000e+00> : vector<8xf32>
    %102 = vector.multi_reduction <add>, %93, %cst_53 [0] : vector<256x8xf32> to vector<8xf32>
    %103 = vector.shape_cast %102 : vector<8xf32> to vector<1x8xf32>
    %104 = vector.shape_cast %103 : vector<1x8xf32> to vector<1x1x1x8xf32>
    %105 = arith.addf %101, %104 : vector<1x1x1x8xf32>
    %c0_54 = arith.constant 0 : index
    %c0_55 = arith.constant 0 : index
    %c0_56 = arith.constant 0 : index
    %c0_57 = arith.constant 0 : index
    %106 = vector.load %arg8[%c0_54, %c0_55, %c0_56, %c0_57] : memref<1x1x1x8xf32, #tpu.memory_space<vmem>>, vector<1x1x1x8xf32>
    tpu.vector_store %arg8[%c0_54, %c0_55, %c0_56, %c0_57], %105 {strides = array<i32>} : memref<1x1x1x8xf32, #tpu.memory_space<vmem>>, vector<1x1x1x8xf32>,
    %c0_58 = arith.constant 0 : index
    %c0_59 = arith.constant 0 : index
    %c0_60 = arith.constant 0 : index
    %c0_61 = arith.constant 0 : index
    %107 = vector.load %arg9[%c0_58, %c0_59, %c0_60, %c0_61] : memref<1x1x1x8xf32, #tpu.memory_space<vmem>>, vector<1x1x1x8xf32>
    %108 = arith.mulf %93, %93 : vector<256x8xf32>
    %cst_62 = arith.constant dense<0.000000e+00> : vector<8xf32>
    %109 = vector.multi_reduction <add>, %108, %cst_62 [0] : vector<256x8xf32> to vector<8xf32>
    %110 = vector.shape_cast %109 : vector<8xf32> to vector<1x8xf32>
    %111 = vector.shape_cast %110 : vector<1x8xf32> to vector<1x1x1x8xf32>
    %112 = arith.addf %107, %111 : vector<1x1x1x8xf32>
    %c0_63 = arith.constant 0 : index
    %c0_64 = arith.constant 0 : index
    %c0_65 = arith.constant 0 : index
    %c0_66 = arith.constant 0 : index
    %113 = vector.load %arg9[%c0_63, %c0_64, %c0_65, %c0_66] : memref<1x1x1x8xf32, #tpu.memory_space<vmem>>, vector<1x1x1x8xf32>
    tpu.vector_store %arg9[%c0_63, %c0_64, %c0_65, %c0_66], %112 {strides = array<i32>} : memref<1x1x1x8xf32, #tpu.memory_space<vmem>>, vector<1x1x1x8xf32>,
    return
  }
  func.func @transform_0(%arg0: i32, %arg1: i32) -> (i32, i32, i32, i32) {
    %c0_i32 = arith.constant 0 : i32
    %c0_i32_0 = arith.constant 0 : i32
    %c0_i32_1 = arith.constant 0 : i32
    %c0_i32_2 = arith.constant 0 : i32
    return %arg0, %c0_i32, %c0_i32_0, %c0_i32_1 : i32, i32, i32, i32
  }
  func.func @transform_1(%arg0: i32, %arg1: i32) -> (i32, i32, i32) {
    %c0_i32 = arith.constant 0 : i32
    %c0_i32_0 = arith.constant 0 : i32
    %c0_i32_1 = arith.constant 0 : i32
    %c0_i32_2 = arith.constant 0 : i32
    return %c0_i32, %c0_i32_0, %c0_i32_1 : i32, i32, i32
  }
  func.func @transform_2(%arg0: i32, %arg1: i32) -> (i32, i32) {
    %c0_i32 = arith.constant 0 : i32
    %c0_i32_0 = arith.constant 0 : i32
    %c0_i32_1 = arith.constant 0 : i32
    return %c0_i32, %c0_i32_0 : i32, i32
  }
  func.func @transform_3(%arg0: i32, %arg1: i32) -> (i32, i32) {
    %c0_i32 = arith.constant 0 : i32
    %c0_i32_0 = arith.constant 0 : i32
    %c0_i32_1 = arith.constant 0 : i32
    return %c0_i32, %c0_i32_0 : i32, i32
  }
  func.func @transform_4(%arg0: i32, %arg1: i32) -> (i32, i32) {
    %c0_i32 = arith.constant 0 : i32
    %c0_i32_0 = arith.constant 0 : i32
    %c0_i32_1 = arith.constant 0 : i32
    return %c0_i32, %c0_i32_0 : i32, i32
  }
  func.func @transform_5(%arg0: i32, %arg1: i32) -> (i32, i32, i32, i32) {
    %c0_i32 = arith.constant 0 : i32
    %c0_i32_0 = arith.constant 0 : i32
    %c0_i32_1 = arith.constant 0 : i32
    return %arg0, %arg1, %c0_i32, %c0_i32_0 : i32, i32, i32, i32
  }
  func.func @transform_6(%arg0: i32, %arg1: i32) -> (i32, i32, i32, i32) {
    %c0_i32 = arith.constant 0 : i32
    %c0_i32_0 = arith.constant 0 : i32
    %c0_i32_1 = arith.constant 0 : i32
    %c0_i32_2 = arith.constant 0 : i32
    return %arg0, %c0_i32, %c0_i32_0, %c0_i32_1 : i32, i32, i32, i32
  }
  func.func @transform_7(%arg0: i32, %arg1: i32) -> (i32, i32, i32, i32) {
    %c0_i32 = arith.constant 0 : i32
    %c0_i32_0 = arith.constant 0 : i32
    %c0_i32_1 = arith.constant 0 : i32
    %c0_i32_2 = arith.constant 0 : i32
    return %arg0, %c0_i32, %c0_i32_0, %c0_i32_1 : i32, i32, i32, i32
  }
}

module attributes {stable_mosaic.version = 11 : i64} {
  func.func @_bn_relu_kernel(%arg0: i32, %arg1: memref<512x8xf32, #tpu.memory_space<vmem>>, %arg2: memref<1x8xf32, #tpu.memory_space<vmem>>, %arg3: memref<1x8xf32, #tpu.memory_space<vmem>>, %arg4: memref<512x8xf32, #tpu.memory_space<vmem>>) attributes {dimension_semantics = [#tpu.dimension_semantics<parallel>], iteration_bounds = array<i64: 1>, scalar_prefetch = 0 : i64, scratch_operands = 0 : i64, tpu.core_type = #tpu.core_type<tc>, window_params = [{transform_indices = @transform_0, window_bounds = array<i64: 512, 8>}, {pipeline_mode = #tpu.pipeline_mode<synchronous>, transform_indices = @transform_1, window_bounds = array<i64: 1, 8>}, {pipeline_mode = #tpu.pipeline_mode<synchronous>, transform_indices = @transform_2, window_bounds = array<i64: 1, 8>}, {transform_indices = @transform_3, window_bounds = array<i64: 512, 8>}]} {
    %c0 = arith.constant 0 : index
    %c0_0 = arith.constant 0 : index
    %0 = vector.load %arg1[%c0, %c0_0] : memref<512x8xf32, #tpu.memory_space<vmem>>, vector<512x8xf32>
    %c0_1 = arith.constant 0 : index
    %c0_2 = arith.constant 0 : index
    %1 = vector.load %arg2[%c0_1, %c0_2] : memref<1x8xf32, #tpu.memory_space<vmem>>, vector<1x8xf32>
    %2 = vector.broadcast %1 : vector<1x8xf32> to vector<512x8xf32>
    %3 = arith.mulf %0, %2 : vector<512x8xf32>
    %c0_3 = arith.constant 0 : index
    %c0_4 = arith.constant 0 : index
    %4 = vector.load %arg3[%c0_3, %c0_4] : memref<1x8xf32, #tpu.memory_space<vmem>>, vector<1x8xf32>
    %5 = vector.broadcast %4 : vector<1x8xf32> to vector<512x8xf32>
    %6 = arith.addf %3, %5 : vector<512x8xf32>
    %cst = arith.constant 0.000000e+00 : f32
    %7 = vector.broadcast %cst : f32 to vector<512x8xf32>
    %8 = arith.maximumf %6, %7 : vector<512x8xf32>
    %c0_5 = arith.constant 0 : index
    %c0_6 = arith.constant 0 : index
    %9 = vector.load %arg4[%c0_5, %c0_6] : memref<512x8xf32, #tpu.memory_space<vmem>>, vector<512x8xf32>
    tpu.vector_store %arg4[%c0_5, %c0_6], %8 {strides = array<i32>} : memref<512x8xf32, #tpu.memory_space<vmem>>, vector<512x8xf32>,
    return
  }
  func.func @transform_0(%arg0: i32) -> (i32, i32) {
    %c0_i32 = arith.constant 0 : i32
    %c0_i32_0 = arith.constant 0 : i32
    return %arg0, %c0_i32 : i32, i32
  }
  func.func @transform_1(%arg0: i32) -> (i32, i32) {
    %c0_i32 = arith.constant 0 : i32
    %c0_i32_0 = arith.constant 0 : i32
    %c0_i32_1 = arith.constant 0 : i32
    return %c0_i32, %c0_i32_0 : i32, i32
  }
  func.func @transform_2(%arg0: i32) -> (i32, i32) {
    %c0_i32 = arith.constant 0 : i32
    %c0_i32_0 = arith.constant 0 : i32
    %c0_i32_1 = arith.constant 0 : i32
    return %c0_i32, %c0_i32_0 : i32, i32
  }
  func.func @transform_3(%arg0: i32) -> (i32, i32) {
    %c0_i32 = arith.constant 0 : i32
    %c0_i32_0 = arith.constant 0 : i32
    return %arg0, %c0_i32 : i32, i32
  }
}

module attributes {stable_mosaic.version = 11 : i64} {
  func.func @_conv3x3_bn_stats_kernel(%arg0: i32, %arg1: i32, %arg2: memref<1x16x16x8xf32, #tpu.memory_space<vmem>>, %arg3: memref<9x8x8xbf16, #tpu.memory_space<vmem>>, %arg4: memref<1x8xf32, #tpu.memory_space<vmem>>, %arg5: memref<1x8xf32, #tpu.memory_space<vmem>>, %arg6: memref<1x8xf32, #tpu.memory_space<vmem>>, %arg7: memref<1x16x16x8xf32, #tpu.memory_space<vmem>>, %arg8: memref<1x1x1x8xf32, #tpu.memory_space<vmem>>, %arg9: memref<1x1x1x8xf32, #tpu.memory_space<vmem>>) attributes {dimension_semantics = [#tpu.dimension_semantics<parallel>, #tpu.dimension_semantics<arbitrary>], iteration_bounds = array<i64: 2, 1>, scalar_prefetch = 0 : i64, scratch_operands = 0 : i64, tpu.core_type = #tpu.core_type<tc>, window_params = [{transform_indices = @transform_0, window_bounds = array<i64: 1, 16, 16, 8>}, {pipeline_mode = #tpu.pipeline_mode<synchronous>, transform_indices = @transform_1, window_bounds = array<i64: 9, 8, 8>}, {pipeline_mode = #tpu.pipeline_mode<synchronous>, transform_indices = @transform_2, window_bounds = array<i64: 1, 8>}, {pipeline_mode = #tpu.pipeline_mode<synchronous>, transform_indices = @transform_3, window_bounds = array<i64: 1, 8>}, {pipeline_mode = #tpu.pipeline_mode<synchronous>, transform_indices = @transform_4, window_bounds = array<i64: 1, 8>}, {transform_indices = @transform_5, window_bounds = array<i64: 1, 16, 16, 8>}, {transform_indices = @transform_6, window_bounds = array<i64: 1, 1, 1, 8>}, {transform_indices = @transform_7, window_bounds = array<i64: 1, 1, 1, 8>}]} {
    %c16_i32 = arith.constant 16 : i32
    %0 = arith.muli %arg1, %c16_i32 : i32
    %1 = tpu.assume_multiple %0, 8 : i32
    %c1_i32 = arith.constant 1 : i32
    %2 = arith.subi %1, %c1_i32 : i32
    %c0_i32 = arith.constant 0 : i32
    %3 = arith.maxsi %2, %c0_i32 : i32
    %c0 = arith.constant 0 : index
    %4 = arith.index_cast %3 : i32 to index
    %c0_0 = arith.constant 0 : index
    %c0_1 = arith.constant 0 : index
    %5 = vector.load %arg2[%c0, %4, %c0_0, %c0_1] : memref<1x16x16x8xf32, #tpu.memory_space<vmem>>, vector<1x1x16x8xf32>
    %6 = vector.shape_cast %5 : vector<1x1x16x8xf32> to vector<1x16x8xf32>
    %c0_2 = arith.constant 0 : index
    %c0_3 = arith.constant 0 : index
    %7 = vector.load %arg5[%c0_2, %c0_3] : memref<1x8xf32, #tpu.memory_space<vmem>>, vector<1x8xf32>
    %8 = vector.shape_cast %7 : vector<1x8xf32> to vector<1x1x8xf32>
    %9 = vector.broadcast %8 : vector<1x1x8xf32> to vector<1x16x8xf32>
    %10 = arith.mulf %6, %9 : vector<1x16x8xf32>
    %c0_4 = arith.constant 0 : index
    %c0_5 = arith.constant 0 : index
    %11 = vector.load %arg6[%c0_4, %c0_5] : memref<1x8xf32, #tpu.memory_space<vmem>>, vector<1x8xf32>
    %12 = vector.shape_cast %11 : vector<1x8xf32> to vector<1x1x8xf32>
    %13 = vector.broadcast %12 : vector<1x1x8xf32> to vector<1x16x8xf32>
    %14 = arith.addf %10, %13 : vector<1x16x8xf32>
    %cst = arith.constant 0.000000e+00 : f32
    %15 = vector.broadcast %cst : f32 to vector<1x16x8xf32>
    %16 = arith.maximumf %14, %15 : vector<1x16x8xf32>
    %c0_6 = arith.constant 0 : index
    %17 = arith.index_cast %1 : i32 to index
    %c0_7 = arith.constant 0 : index
    %c0_8 = arith.constant 0 : index
    %18 = vector.load %arg2[%c0_6, %17, %c0_7, %c0_8] : memref<1x16x16x8xf32, #tpu.memory_space<vmem>>, vector<1x16x16x8xf32>
    %19 = vector.shape_cast %18 : vector<1x16x16x8xf32> to vector<16x16x8xf32>
    %c0_9 = arith.constant 0 : index
    %c0_10 = arith.constant 0 : index
    %20 = vector.load %arg5[%c0_9, %c0_10] : memref<1x8xf32, #tpu.memory_space<vmem>>, vector<1x8xf32>
    %21 = vector.shape_cast %20 : vector<1x8xf32> to vector<1x1x8xf32>
    %22 = vector.broadcast %21 : vector<1x1x8xf32> to vector<16x16x8xf32>
    %23 = arith.mulf %19, %22 : vector<16x16x8xf32>
    %c0_11 = arith.constant 0 : index
    %c0_12 = arith.constant 0 : index
    %24 = vector.load %arg6[%c0_11, %c0_12] : memref<1x8xf32, #tpu.memory_space<vmem>>, vector<1x8xf32>
    %25 = vector.shape_cast %24 : vector<1x8xf32> to vector<1x1x8xf32>
    %26 = vector.broadcast %25 : vector<1x1x8xf32> to vector<16x16x8xf32>
    %27 = arith.addf %23, %26 : vector<16x16x8xf32>
    %cst_13 = arith.constant 0.000000e+00 : f32
    %28 = vector.broadcast %cst_13 : f32 to vector<16x16x8xf32>
    %29 = arith.maximumf %27, %28 : vector<16x16x8xf32>
    %c16_i32_14 = arith.constant 16 : i32
    %30 = arith.addi %1, %c16_i32_14 : i32
    %c15_i32 = arith.constant 15 : i32
    %31 = arith.minsi %30, %c15_i32 : i32
    %c0_15 = arith.constant 0 : index
    %32 = arith.index_cast %31 : i32 to index
    %c0_16 = arith.constant 0 : index
    %c0_17 = arith.constant 0 : index
    %33 = vector.load %arg2[%c0_15, %32, %c0_16, %c0_17] : memref<1x16x16x8xf32, #tpu.memory_space<vmem>>, vector<1x1x16x8xf32>
    %34 = vector.shape_cast %33 : vector<1x1x16x8xf32> to vector<1x16x8xf32>
    %c0_18 = arith.constant 0 : index
    %c0_19 = arith.constant 0 : index
    %35 = vector.load %arg5[%c0_18, %c0_19] : memref<1x8xf32, #tpu.memory_space<vmem>>, vector<1x8xf32>
    %36 = vector.shape_cast %35 : vector<1x8xf32> to vector<1x1x8xf32>
    %37 = vector.broadcast %36 : vector<1x1x8xf32> to vector<1x16x8xf32>
    %38 = arith.mulf %34, %37 : vector<1x16x8xf32>
    %c0_20 = arith.constant 0 : index
    %c0_21 = arith.constant 0 : index
    %39 = vector.load %arg6[%c0_20, %c0_21] : memref<1x8xf32, #tpu.memory_space<vmem>>, vector<1x8xf32>
    %40 = vector.shape_cast %39 : vector<1x8xf32> to vector<1x1x8xf32>
    %41 = vector.broadcast %40 : vector<1x1x8xf32> to vector<1x16x8xf32>
    %42 = arith.addf %38, %41 : vector<1x16x8xf32>
    %cst_22 = arith.constant 0.000000e+00 : f32
    %43 = vector.broadcast %cst_22 : f32 to vector<1x16x8xf32>
    %44 = arith.maximumf %42, %43 : vector<1x16x8xf32>
    %c0_i32_23 = arith.constant 0 : i32
    %45 = arith.cmpi sgt, %arg1, %c0_i32_23 : i32
    %46 = arith.extui %45 : i1 to i32
    %47 = arith.sitofp %46 : i32 to f32
    %48 = vector.broadcast %47 : f32 to vector<1x16x8xf32>
    %49 = arith.mulf %16, %48 : vector<1x16x8xf32>
    %c1_i32_24 = arith.constant 1 : i32
    %50 = arith.addi %arg1, %c1_i32_24 : i32
    %c1_i32_25 = arith.constant 1 : i32
    %51 = arith.cmpi slt, %50, %c1_i32_25 : i32
    %52 = arith.extui %51 : i1 to i32
    %53 = arith.sitofp %52 : i32 to f32
    %54 = vector.broadcast %53 : f32 to vector<1x16x8xf32>
    %55 = arith.mulf %44, %54 : vector<1x16x8xf32>
    %56 = tpu.concatenate %49, %29, %55 in 0 : vector<1x16x8xf32>, vector<16x16x8xf32>, vector<1x16x8xf32> -> vector<18x16x8xf32>
    %cst_26 = arith.constant 0.000000e+00 : f32
    %57 = vector.broadcast %cst_26 : f32 to vector<18x1x8xf32>
    %58 = tpu.concatenate %57, %56, %57 in 1 : vector<18x1x8xf32>, vector<18x16x8xf32>, vector<18x1x8xf32> -> vector<18x18x8xf32>
    %59 = arith.truncf %58 : vector<18x18x8xf32> to vector<18x18x8xbf16>
    %cst_27 = arith.constant 0.000000e+00 : f32
    %60 = vector.broadcast %cst_27 : f32 to vector<256x8xf32>
    %61 = vector.extract_strided_slice %59 {offsets = [0, 0, 0], sizes = [18, 16, 8], strides = [1, 1, 1]} : vector<18x18x8xbf16> to vector<18x16x8xbf16>
    %62 = vector.extract_strided_slice %61 {offsets = [0, 0, 0], sizes = [16, 16, 8], strides = [1, 1, 1]} : vector<18x16x8xbf16> to vector<16x16x8xbf16>
    %63 = vector.shape_cast %62 : vector<16x16x8xbf16> to vector<256x8xbf16>
    %c0_28 = arith.constant 0 : index
    %c0_29 = arith.constant 0 : index
    %c0_30 = arith.constant 0 : index
    %64 = vector.load %arg3[%c0_28, %c0_29, %c0_30] : memref<9x8x8xbf16, #tpu.memory_space<vmem>>, vector<1x8x8xbf16>
    %65 = vector.shape_cast %64 : vector<1x8x8xbf16> to vector<8x8xbf16>
    %cst_31 = arith.constant dense<0.000000e+00> : vector<256x8xf32>
    %66 = tpu.matmul %63, %65, %cst_31 {dimension_numbers = #tpu.dot_dimension_numbers<[1], [0], [0], [1], [0, 0, 1, 1], [], []>} : vector<256x8xbf16>, vector<8x8xbf16>, vector<256x8xf32> -> vector<256x8xf32>
    %67 = arith.addf %60, %66 : vector<256x8xf32>
    %68 = vector.extract_strided_slice %61 {offsets = [1, 0, 0], sizes = [16, 16, 8], strides = [1, 1, 1]} : vector<18x16x8xbf16> to vector<16x16x8xbf16>
    %69 = vector.shape_cast %68 : vector<16x16x8xbf16> to vector<256x8xbf16>
    %c3 = arith.constant 3 : index
    %c0_32 = arith.constant 0 : index
    %c0_33 = arith.constant 0 : index
    %70 = vector.load %arg3[%c3, %c0_32, %c0_33] : memref<9x8x8xbf16, #tpu.memory_space<vmem>>, vector<1x8x8xbf16>
    %71 = vector.shape_cast %70 : vector<1x8x8xbf16> to vector<8x8xbf16>
    %cst_34 = arith.constant dense<0.000000e+00> : vector<256x8xf32>
    %72 = tpu.matmul %69, %71, %cst_34 {dimension_numbers = #tpu.dot_dimension_numbers<[1], [0], [0], [1], [0, 0, 1, 1], [], []>} : vector<256x8xbf16>, vector<8x8xbf16>, vector<256x8xf32> -> vector<256x8xf32>
    %73 = arith.addf %67, %72 : vector<256x8xf32>
    %74 = vector.extract_strided_slice %61 {offsets = [2, 0, 0], sizes = [16, 16, 8], strides = [1, 1, 1]} : vector<18x16x8xbf16> to vector<16x16x8xbf16>
    %75 = vector.shape_cast %74 : vector<16x16x8xbf16> to vector<256x8xbf16>
    %c6 = arith.constant 6 : index
    %c0_35 = arith.constant 0 : index
    %c0_36 = arith.constant 0 : index
    %76 = vector.load %arg3[%c6, %c0_35, %c0_36] : memref<9x8x8xbf16, #tpu.memory_space<vmem>>, vector<1x8x8xbf16>
    %77 = vector.shape_cast %76 : vector<1x8x8xbf16> to vector<8x8xbf16>
    %cst_37 = arith.constant dense<0.000000e+00> : vector<256x8xf32>
    %78 = tpu.matmul %75, %77, %cst_37 {dimension_numbers = #tpu.dot_dimension_numbers<[1], [0], [0], [1], [0, 0, 1, 1], [], []>} : vector<256x8xbf16>, vector<8x8xbf16>, vector<256x8xf32> -> vector<256x8xf32>
    %79 = arith.addf %73, %78 : vector<256x8xf32>
    %80 = vector.extract_strided_slice %59 {offsets = [0, 1, 0], sizes = [18, 16, 8], strides = [1, 1, 1]} : vector<18x18x8xbf16> to vector<18x16x8xbf16>
    %81 = vector.extract_strided_slice %80 {offsets = [0, 0, 0], sizes = [16, 16, 8], strides = [1, 1, 1]} : vector<18x16x8xbf16> to vector<16x16x8xbf16>
    %82 = vector.shape_cast %81 : vector<16x16x8xbf16> to vector<256x8xbf16>
    %c1 = arith.constant 1 : index
    %c0_38 = arith.constant 0 : index
    %c0_39 = arith.constant 0 : index
    %83 = vector.load %arg3[%c1, %c0_38, %c0_39] : memref<9x8x8xbf16, #tpu.memory_space<vmem>>, vector<1x8x8xbf16>
    %84 = vector.shape_cast %83 : vector<1x8x8xbf16> to vector<8x8xbf16>
    %cst_40 = arith.constant dense<0.000000e+00> : vector<256x8xf32>
    %85 = tpu.matmul %82, %84, %cst_40 {dimension_numbers = #tpu.dot_dimension_numbers<[1], [0], [0], [1], [0, 0, 1, 1], [], []>} : vector<256x8xbf16>, vector<8x8xbf16>, vector<256x8xf32> -> vector<256x8xf32>
    %86 = arith.addf %79, %85 : vector<256x8xf32>
    %87 = vector.extract_strided_slice %80 {offsets = [1, 0, 0], sizes = [16, 16, 8], strides = [1, 1, 1]} : vector<18x16x8xbf16> to vector<16x16x8xbf16>
    %88 = vector.shape_cast %87 : vector<16x16x8xbf16> to vector<256x8xbf16>
    %c4 = arith.constant 4 : index
    %c0_41 = arith.constant 0 : index
    %c0_42 = arith.constant 0 : index
    %89 = vector.load %arg3[%c4, %c0_41, %c0_42] : memref<9x8x8xbf16, #tpu.memory_space<vmem>>, vector<1x8x8xbf16>
    %90 = vector.shape_cast %89 : vector<1x8x8xbf16> to vector<8x8xbf16>
    %cst_43 = arith.constant dense<0.000000e+00> : vector<256x8xf32>
    %91 = tpu.matmul %88, %90, %cst_43 {dimension_numbers = #tpu.dot_dimension_numbers<[1], [0], [0], [1], [0, 0, 1, 1], [], []>} : vector<256x8xbf16>, vector<8x8xbf16>, vector<256x8xf32> -> vector<256x8xf32>
    %92 = arith.addf %86, %91 : vector<256x8xf32>
    %93 = vector.extract_strided_slice %80 {offsets = [2, 0, 0], sizes = [16, 16, 8], strides = [1, 1, 1]} : vector<18x16x8xbf16> to vector<16x16x8xbf16>
    %94 = vector.shape_cast %93 : vector<16x16x8xbf16> to vector<256x8xbf16>
    %c7 = arith.constant 7 : index
    %c0_44 = arith.constant 0 : index
    %c0_45 = arith.constant 0 : index
    %95 = vector.load %arg3[%c7, %c0_44, %c0_45] : memref<9x8x8xbf16, #tpu.memory_space<vmem>>, vector<1x8x8xbf16>
    %96 = vector.shape_cast %95 : vector<1x8x8xbf16> to vector<8x8xbf16>
    %cst_46 = arith.constant dense<0.000000e+00> : vector<256x8xf32>
    %97 = tpu.matmul %94, %96, %cst_46 {dimension_numbers = #tpu.dot_dimension_numbers<[1], [0], [0], [1], [0, 0, 1, 1], [], []>} : vector<256x8xbf16>, vector<8x8xbf16>, vector<256x8xf32> -> vector<256x8xf32>
    %98 = arith.addf %92, %97 : vector<256x8xf32>
    %99 = vector.extract_strided_slice %59 {offsets = [0, 2, 0], sizes = [18, 16, 8], strides = [1, 1, 1]} : vector<18x18x8xbf16> to vector<18x16x8xbf16>
    %100 = vector.extract_strided_slice %99 {offsets = [0, 0, 0], sizes = [16, 16, 8], strides = [1, 1, 1]} : vector<18x16x8xbf16> to vector<16x16x8xbf16>
    %101 = vector.shape_cast %100 : vector<16x16x8xbf16> to vector<256x8xbf16>
    %c2 = arith.constant 2 : index
    %c0_47 = arith.constant 0 : index
    %c0_48 = arith.constant 0 : index
    %102 = vector.load %arg3[%c2, %c0_47, %c0_48] : memref<9x8x8xbf16, #tpu.memory_space<vmem>>, vector<1x8x8xbf16>
    %103 = vector.shape_cast %102 : vector<1x8x8xbf16> to vector<8x8xbf16>
    %cst_49 = arith.constant dense<0.000000e+00> : vector<256x8xf32>
    %104 = tpu.matmul %101, %103, %cst_49 {dimension_numbers = #tpu.dot_dimension_numbers<[1], [0], [0], [1], [0, 0, 1, 1], [], []>} : vector<256x8xbf16>, vector<8x8xbf16>, vector<256x8xf32> -> vector<256x8xf32>
    %105 = arith.addf %98, %104 : vector<256x8xf32>
    %106 = vector.extract_strided_slice %99 {offsets = [1, 0, 0], sizes = [16, 16, 8], strides = [1, 1, 1]} : vector<18x16x8xbf16> to vector<16x16x8xbf16>
    %107 = vector.shape_cast %106 : vector<16x16x8xbf16> to vector<256x8xbf16>
    %c5 = arith.constant 5 : index
    %c0_50 = arith.constant 0 : index
    %c0_51 = arith.constant 0 : index
    %108 = vector.load %arg3[%c5, %c0_50, %c0_51] : memref<9x8x8xbf16, #tpu.memory_space<vmem>>, vector<1x8x8xbf16>
    %109 = vector.shape_cast %108 : vector<1x8x8xbf16> to vector<8x8xbf16>
    %cst_52 = arith.constant dense<0.000000e+00> : vector<256x8xf32>
    %110 = tpu.matmul %107, %109, %cst_52 {dimension_numbers = #tpu.dot_dimension_numbers<[1], [0], [0], [1], [0, 0, 1, 1], [], []>} : vector<256x8xbf16>, vector<8x8xbf16>, vector<256x8xf32> -> vector<256x8xf32>
    %111 = arith.addf %105, %110 : vector<256x8xf32>
    %112 = vector.extract_strided_slice %99 {offsets = [2, 0, 0], sizes = [16, 16, 8], strides = [1, 1, 1]} : vector<18x16x8xbf16> to vector<16x16x8xbf16>
    %113 = vector.shape_cast %112 : vector<16x16x8xbf16> to vector<256x8xbf16>
    %c8 = arith.constant 8 : index
    %c0_53 = arith.constant 0 : index
    %c0_54 = arith.constant 0 : index
    %114 = vector.load %arg3[%c8, %c0_53, %c0_54] : memref<9x8x8xbf16, #tpu.memory_space<vmem>>, vector<1x8x8xbf16>
    %115 = vector.shape_cast %114 : vector<1x8x8xbf16> to vector<8x8xbf16>
    %cst_55 = arith.constant dense<0.000000e+00> : vector<256x8xf32>
    %116 = tpu.matmul %113, %115, %cst_55 {dimension_numbers = #tpu.dot_dimension_numbers<[1], [0], [0], [1], [0, 0, 1, 1], [], []>} : vector<256x8xbf16>, vector<8x8xbf16>, vector<256x8xf32> -> vector<256x8xf32>
    %117 = arith.addf %111, %116 : vector<256x8xf32>
    %c0_56 = arith.constant 0 : index
    %c0_57 = arith.constant 0 : index
    %118 = vector.load %arg4[%c0_56, %c0_57] : memref<1x8xf32, #tpu.memory_space<vmem>>, vector<1x8xf32>
    %119 = vector.broadcast %118 : vector<1x8xf32> to vector<256x8xf32>
    %120 = arith.addf %117, %119 : vector<256x8xf32>
    %121 = vector.shape_cast %120 : vector<256x8xf32> to vector<16x16x8xf32>
    %c0_58 = arith.constant 0 : index
    %c0_59 = arith.constant 0 : index
    %c0_60 = arith.constant 0 : index
    %c0_61 = arith.constant 0 : index
    %122 = vector.load %arg7[%c0_58, %c0_59, %c0_60, %c0_61] : memref<1x16x16x8xf32, #tpu.memory_space<vmem>>, vector<1x16x16x8xf32>
    %123 = vector.shape_cast %122 : vector<1x16x16x8xf32> to vector<16x16x8xf32>
    %124 = vector.shape_cast %121 : vector<16x16x8xf32> to vector<1x16x16x8xf32>
    tpu.vector_store %arg7[%c0_58, %c0_59, %c0_60, %c0_61], %124 {strides = array<i32>} : memref<1x16x16x8xf32, #tpu.memory_space<vmem>>, vector<1x16x16x8xf32>,
    %c0_i32_62 = arith.constant 0 : i32
    %125 = arith.cmpi eq, %arg1, %c0_i32_62 : i32
    %126 = arith.extui %125 : i1 to i32
    %c0_i32_63 = arith.constant 0 : i32
    %127 = arith.cmpi ne, %126, %c0_i32_63 : i32
    scf.if %127 {
      %cst_82 = arith.constant 0.000000e+00 : f32
      %141 = vector.broadcast %cst_82 : f32 to vector<1x1x1x8xf32>
      %c0_83 = arith.constant 0 : index
      %c0_84 = arith.constant 0 : index
      %c0_85 = arith.constant 0 : index
      %c0_86 = arith.constant 0 : index
      %142 = vector.load %arg8[%c0_83, %c0_84, %c0_85, %c0_86] : memref<1x1x1x8xf32, #tpu.memory_space<vmem>>, vector<1x1x1x8xf32>
      tpu.vector_store %arg8[%c0_83, %c0_84, %c0_85, %c0_86], %141 {strides = array<i32>} : memref<1x1x1x8xf32, #tpu.memory_space<vmem>>, vector<1x1x1x8xf32>,
      %cst_87 = arith.constant 0.000000e+00 : f32
      %143 = vector.broadcast %cst_87 : f32 to vector<1x1x1x8xf32>
      %c0_88 = arith.constant 0 : index
      %c0_89 = arith.constant 0 : index
      %c0_90 = arith.constant 0 : index
      %c0_91 = arith.constant 0 : index
      %144 = vector.load %arg9[%c0_88, %c0_89, %c0_90, %c0_91] : memref<1x1x1x8xf32, #tpu.memory_space<vmem>>, vector<1x1x1x8xf32>
      tpu.vector_store %arg9[%c0_88, %c0_89, %c0_90, %c0_91], %143 {strides = array<i32>} : memref<1x1x1x8xf32, #tpu.memory_space<vmem>>, vector<1x1x1x8xf32>,
    } else {
    }
    %c0_64 = arith.constant 0 : index
    %c0_65 = arith.constant 0 : index
    %c0_66 = arith.constant 0 : index
    %c0_67 = arith.constant 0 : index
    %128 = vector.load %arg8[%c0_64, %c0_65, %c0_66, %c0_67] : memref<1x1x1x8xf32, #tpu.memory_space<vmem>>, vector<1x1x1x8xf32>
    %cst_68 = arith.constant dense<0.000000e+00> : vector<8xf32>
    %129 = vector.multi_reduction <add>, %120, %cst_68 [0] : vector<256x8xf32> to vector<8xf32>
    %130 = vector.shape_cast %129 : vector<8xf32> to vector<1x8xf32>
    %131 = vector.shape_cast %130 : vector<1x8xf32> to vector<1x1x1x8xf32>
    %132 = arith.addf %128, %131 : vector<1x1x1x8xf32>
    %c0_69 = arith.constant 0 : index
    %c0_70 = arith.constant 0 : index
    %c0_71 = arith.constant 0 : index
    %c0_72 = arith.constant 0 : index
    %133 = vector.load %arg8[%c0_69, %c0_70, %c0_71, %c0_72] : memref<1x1x1x8xf32, #tpu.memory_space<vmem>>, vector<1x1x1x8xf32>
    tpu.vector_store %arg8[%c0_69, %c0_70, %c0_71, %c0_72], %132 {strides = array<i32>} : memref<1x1x1x8xf32, #tpu.memory_space<vmem>>, vector<1x1x1x8xf32>,
    %c0_73 = arith.constant 0 : index
    %c0_74 = arith.constant 0 : index
    %c0_75 = arith.constant 0 : index
    %c0_76 = arith.constant 0 : index
    %134 = vector.load %arg9[%c0_73, %c0_74, %c0_75, %c0_76] : memref<1x1x1x8xf32, #tpu.memory_space<vmem>>, vector<1x1x1x8xf32>
    %135 = arith.mulf %120, %120 : vector<256x8xf32>
    %cst_77 = arith.constant dense<0.000000e+00> : vector<8xf32>
    %136 = vector.multi_reduction <add>, %135, %cst_77 [0] : vector<256x8xf32> to vector<8xf32>
    %137 = vector.shape_cast %136 : vector<8xf32> to vector<1x8xf32>
    %138 = vector.shape_cast %137 : vector<1x8xf32> to vector<1x1x1x8xf32>
    %139 = arith.addf %134, %138 : vector<1x1x1x8xf32>
    %c0_78 = arith.constant 0 : index
    %c0_79 = arith.constant 0 : index
    %c0_80 = arith.constant 0 : index
    %c0_81 = arith.constant 0 : index
    %140 = vector.load %arg9[%c0_78, %c0_79, %c0_80, %c0_81] : memref<1x1x1x8xf32, #tpu.memory_space<vmem>>, vector<1x1x1x8xf32>
    tpu.vector_store %arg9[%c0_78, %c0_79, %c0_80, %c0_81], %139 {strides = array<i32>} : memref<1x1x1x8xf32, #tpu.memory_space<vmem>>, vector<1x1x1x8xf32>,
    return
  }
  func.func @transform_0(%arg0: i32, %arg1: i32) -> (i32, i32, i32, i32) {
    %c0_i32 = arith.constant 0 : i32
    %c0_i32_0 = arith.constant 0 : i32
    %c0_i32_1 = arith.constant 0 : i32
    %c0_i32_2 = arith.constant 0 : i32
    return %arg0, %c0_i32, %c0_i32_0, %c0_i32_1 : i32, i32, i32, i32
  }
  func.func @transform_1(%arg0: i32, %arg1: i32) -> (i32, i32, i32) {
    %c0_i32 = arith.constant 0 : i32
    %c0_i32_0 = arith.constant 0 : i32
    %c0_i32_1 = arith.constant 0 : i32
    %c0_i32_2 = arith.constant 0 : i32
    return %c0_i32, %c0_i32_0, %c0_i32_1 : i32, i32, i32
  }
  func.func @transform_2(%arg0: i32, %arg1: i32) -> (i32, i32) {
    %c0_i32 = arith.constant 0 : i32
    %c0_i32_0 = arith.constant 0 : i32
    %c0_i32_1 = arith.constant 0 : i32
    return %c0_i32, %c0_i32_0 : i32, i32
  }
  func.func @transform_3(%arg0: i32, %arg1: i32) -> (i32, i32) {
    %c0_i32 = arith.constant 0 : i32
    %c0_i32_0 = arith.constant 0 : i32
    %c0_i32_1 = arith.constant 0 : i32
    return %c0_i32, %c0_i32_0 : i32, i32
  }
  func.func @transform_4(%arg0: i32, %arg1: i32) -> (i32, i32) {
    %c0_i32 = arith.constant 0 : i32
    %c0_i32_0 = arith.constant 0 : i32
    %c0_i32_1 = arith.constant 0 : i32
    return %c0_i32, %c0_i32_0 : i32, i32
  }
  func.func @transform_5(%arg0: i32, %arg1: i32) -> (i32, i32, i32, i32) {
    %c0_i32 = arith.constant 0 : i32
    %c0_i32_0 = arith.constant 0 : i32
    %c0_i32_1 = arith.constant 0 : i32
    return %arg0, %arg1, %c0_i32, %c0_i32_0 : i32, i32, i32, i32
  }
  func.func @transform_6(%arg0: i32, %arg1: i32) -> (i32, i32, i32, i32) {
    %c0_i32 = arith.constant 0 : i32
    %c0_i32_0 = arith.constant 0 : i32
    %c0_i32_1 = arith.constant 0 : i32
    %c0_i32_2 = arith.constant 0 : i32
    return %arg0, %c0_i32, %c0_i32_0, %c0_i32_1 : i32, i32, i32, i32
  }
  func.func @transform_7(%arg0: i32, %arg1: i32) -> (i32, i32, i32, i32) {
    %c0_i32 = arith.constant 0 : i32
    %c0_i32_0 = arith.constant 0 : i32
    %c0_i32_1 = arith.constant 0 : i32
    %c0_i32_2 = arith.constant 0 : i32
    return %arg0, %c0_i32, %c0_i32_0, %c0_i32_1 : i32, i32, i32, i32
  }
}

</mosaic_0001>

<llo_original>
// kernel: double_conv_forward.5
$region0: #{double_conv_forward.5}
  #allocation0 [shape = 'u32[]', space=smem, size = 0x4, offset = 0x4, fixed_abs, tag = 'smem constant byte address 0x4 - core index']
  #allocation1 [shape = 'u32[144,128]{1,0:T(1,128)}', space=vmem, size = 0x12000, scoped, tag = 'internal scratch']
  %s0 = inlined_call_operand.vmem [shape: f32[512,8], index: 0, kind: input, shape index: {}]
  %s1 = inlined_call_operand.vmem [shape: f32[1,8], index: 1, kind: input, shape index: {}]
  %s2 = inlined_call_operand.vmem [shape: f32[1,8], index: 2, kind: input, shape index: {}]
  %s3 = inlined_call_operand.vmem [shape: f32[512,8], index: 3, kind: output, shape index: {}]
  %s4 = sld [smem:[#allocation0]]
  $region22: #{double_conv_forward.5} parent=0
    _
  %s6 = ssub.s32 1, %s4
  %s7 = scalar_select 0, %s6, %s4
  // Predicated region
  $region2: #{double_conv_forward.5} parent=0 // pred_check
    _
  $region3: #{double_conv_forward.5} parent=0 // pred_check_branch
    %9 = sbr.rel (0) target = $region5
  $region4: #{double_conv_forward.5} parent=0 // pred_region
    _
  $region5: #{double_conv_forward.5} parent=0 // pred_fallthru
    _
  // Predicated region
  $region6: #{double_conv_forward.5} parent=0 // pred_check
    _
  $region7: #{double_conv_forward.5} parent=0 // pred_check_branch
    %11 = sbr.rel (0) target = $region9
  $region8: #{double_conv_forward.5} parent=0 // pred_region
    _
  $region9: #{double_conv_forward.5} parent=0 // pred_fallthru
    _
  // Predicated region
  $region10: #{double_conv_forward.5} parent=0 // pred_check
    _
  $region11: #{double_conv_forward.5} parent=0 // pred_check_branch
    %13 = sbr.rel (0) target = $region13
  $region12: #{double_conv_forward.5} parent=0 // pred_region
    _
  $region13: #{double_conv_forward.5} parent=0 // pred_fallthru
    _
  %v14 = vld [vmem:[%s0] sm:$0xff]
  %v15 = vld [vmem:[%s0 + $0x8] sm:$0xff]
  %v16 = vld [vmem:[%s0 + $0x10] sm:$0xff]
  %v17 = vld [vmem:[%s0 + $0x18] sm:$0xff]
  %v18 = vld [vmem:[%s0 + $0x20] sm:$0xff]
  %v19 = vld [vmem:[%s0 + $0x28] sm:$0xff]
  %v20 = vld [vmem:[%s0 + $0x30] sm:$0xff]
  %v21 = vld [vmem:[%s0 + $0x38] sm:$0xff]
  %v22 = vld [vmem:[%s0 + $0x40] sm:$0xff]
  %v23 = vld [vmem:[%s0 + $0x48] sm:$0xff]
  %v24 = vld [vmem:[%s0 + $0x50] sm:$0xff]
  %v25 = vld [vmem:[%s0 + $0x58] sm:$0xff]
  %v26 = vld [vmem:[%s0 + $0x60] sm:$0xff]
  %v27 = vld [vmem:[%s0 + $0x68] sm:$0xff]
  %v28 = vld [vmem:[%s0 + $0x70] sm:$0xff]
  %v29 = vld [vmem:[%s0 + $0x78] sm:$0xff]
  %v30 = vld [vmem:[%s0 + $0x80] sm:$0xff]
  %v31 = vld [vmem:[%s0 + $0x88] sm:$0xff]
  %v32 = vld [vmem:[%s0 + $0x90] sm:$0xff]
  %v33 = vld [vmem:[%s0 + $0x98] sm:$0xff]
  %v34 = vld [vmem:[%s0 + $0xa0] sm:$0xff]
  %v35 = vld [vmem:[%s0 + $0xa8] sm:$0xff]
  %v36 = vld [vmem:[%s0 + $0xb0] sm:$0xff]
  %v37 = vld [vmem:[%s0 + $0xb8] sm:$0xff]
  %v38 = vld [vmem:[%s0 + $0xc0] sm:$0xff]
  %v39 = vld [vmem:[%s0 + $0xc8] sm:$0xff]
  %v40 = vld [vmem:[%s0 + $0xd0] sm:$0xff]
  %v41 = vld [vmem:[%s0 + $0xd8] sm:$0xff]
  %v42 = vld [vmem:[%s0 + $0xe0] sm:$0xff]
  %v43 = vld [vmem:[%s0 + $0xe8] sm:$0xff]
  %v44 = vld [vmem:[%s0 + $0xf0] sm:$0xff]
  %v45 = vld [vmem:[%s0 + $0xf8] sm:$0xff]
  %v46 = vld [vmem:[%s0 + $0x100] sm:$0xff]
  %v47 = vld [vmem:[%s0 + $0x108] sm:$0xff]
  %v48 = vld [vmem:[%s0 + $0x110] sm:$0xff]
  %v49 = vld [vmem:[%s0 + $0x118] sm:$0xff]
  %v50 = vld [vmem:[%s0 + $0x120] sm:$0xff]
  %v51 = vld [vmem:[%s0 + $0x128] sm:$0xff]
  %v52 = vld [vmem:[%s0 + $0x130] sm:$0xff]
  %v53 = vld [vmem:[%s0 + $0x138] sm:$0xff]
  %v54 = vld [vmem:[%s0 + $0x140] sm:$0xff]
  %v55 = vld [vmem:[%s0 + $0x148] sm:$0xff]
  %v56 = vld [vmem:[%s0 + $0x150] sm:$0xff]
  %v57 = vld [vmem:[%s0 + $0x158] sm:$0xff]
  %v58 = vld [vmem:[%s0 + $0x160] sm:$0xff]
  %v59 = vld [vmem:[%s0 + $0x168] sm:$0xff]
  %v60 = vld [vmem:[%s0 + $0x170] sm:$0xff]
  %v61 = vld [vmem:[%s0 + $0x178] sm:$0xff]
  %v62 = vld [vmem:[%s0 + $0x180] sm:$0xff]
  %v63 = vld [vmem:[%s0 + $0x188] sm:$0xff]
  %v64 = vld [vmem:[%s0 + $0x190] sm:$0xff]
  %v65 = vld [vmem:[%s0 + $0x198] sm:$0xff]
  %v66 = vld [vmem:[%s0 + $0x1a0] sm:$0xff]
  %v67 = vld [vmem:[%s0 + $0x1a8] sm:$0xff]
  %v68 = vld [vmem:[%s0 + $0x1b0] sm:$0xff]
  %v69 = vld [vmem:[%s0 + $0x1b8] sm:$0xff]
  %v70 = vld [vmem:[%s0 + $0x1c0] sm:$0xff]
  %v71 = vld [vmem:[%s0 + $0x1c8] sm:$0xff]
  %v72 = vld [vmem:[%s0 + $0x1d0] sm:$0xff]
  %v73 = vld [vmem:[%s0 + $0x1d8] sm:$0xff]
  %v74 = vld [vmem:[%s0 + $0x1e0] sm:$0xff]
  %v75 = vld [vmem:[%s0 + $0x1e8] sm:$0xff]
  %v76 = vld [vmem:[%s0 + $0x1f0] sm:$0xff]
  %v77 = vld [vmem:[%s0 + $0x1f8] sm:$0xff]
  %v78 = vld [vmem:[%s1] sm:$0x1]
  %v80 = vlaneseq
  %v81 = vshrl.u32 %v80, 7
  %v82 = vsub.s32 0, %v81
  %v83 = vrot.slane %v78, %v82
  %v85 = vmul.f32 %v14, %v83
  %v86 = vmul.f32 %v15, %v83
  %v87 = vmul.f32 %v16, %v83
  %v88 = vmul.f32 %v17, %v83
  %v89 = vmul.f32 %v18, %v83
  %v90 = vmul.f32 %v19, %v83
  %v91 = vmul.f32 %v20, %v83
  %v92 = vmul.f32 %v21, %v83
  %v93 = vmul.f32 %v22, %v83
  %v94 = vmul.f32 %v23, %v83
  %v95 = vmul.f32 %v24, %v83
  %v96 = vmul.f32 %v25, %v83
  %v97 = vmul.f32 %v26, %v83
  %v98 = vmul.f32 %v27, %v83
  %v99 = vmul.f32 %v28, %v83
  %v100 = vmul.f32 %v29, %v83
  %v101 = vmul.f32 %v30, %v83
  %v102 = vmul.f32 %v31, %v83
  %v103 = vmul.f32 %v32, %v83
  %v104 = vmul.f32 %v33, %v83
  %v105 = vmul.f32 %v34, %v83
  %v106 = vmul.f32 %v35, %v83
  %v107 = vmul.f32 %v36, %v83
  %v108 = vmul.f32 %v37, %v83
  %v109 = vmul.f32 %v38, %v83
  %v110 = vmul.f32 %v39, %v83
  %v111 = vmul.f32 %v40, %v83
  %v112 = vmul.f32 %v41, %v83
  %v113 = vmul.f32 %v42, %v83
  %v114 = vmul.f32 %v43, %v83
  %v115 = vmul.f32 %v44, %v83
  %v116 = vmul.f32 %v45, %v83
  %v117 = vmul.f32 %v46, %v83
  %v118 = vmul.f32 %v47, %v83
  %v119 = vmul.f32 %v48, %v83
  %v120 = vmul.f32 %v49, %v83
  %v121 = vmul.f32 %v50, %v83
  %v122 = vmul.f32 %v51, %v83
  %v123 = vmul.f32 %v52, %v83
  %v124 = vmul.f32 %v53, %v83
  %v125 = vmul.f32 %v54, %v83
  %v126 = vmul.f32 %v55, %v83
  %v127 = vmul.f32 %v56, %v83
  %v128 = vmul.f32 %v57, %v83
  %v129 = vmul.f32 %v58, %v83
  %v130 = vmul.f32 %v59, %v83
  %v131 = vmul.f32 %v60, %v83
  %v132 = vmul.f32 %v61, %v83
  %v133 = vmul.f32 %v62, %v83
  %v134 = vmul.f32 %v63, %v83
  %v135 = vmul.f32 %v64, %v83
  %v136 = vmul.f32 %v65, %v83
  %v137 = vmul.f32 %v66, %v83
  %v138 = vmul.f32 %v67, %v83
  %v139 = vmul.f32 %v68, %v83
  %v140 = vmul.f32 %v69, %v83
  %v141 = vmul.f32 %v70, %v83
  %v142 = vmul.f32 %v71, %v83
  %v143 = vmul.f32 %v72, %v83
  %v144 = vmul.f32 %v73, %v83
  %v145 = vmul.f32 %v74, %v83
  %v146 = vmul.f32 %v75, %v83
  %v147 = vmul.f32 %v76, %v83
  %v148 = vmul.f32 %v77, %v83
  %v149 = vld [vmem:[%s2] sm:$0x1]
  %v151 = vlaneseq
  %v152 = vshrl.u32 %v151, 7
  %v153 = vsub.s32 0, %v152
  %v154 = vrot.slane %v149, %v153
  %v156 = vadd.f32 %v85, %v154
  %v157 = vadd.f32 %v86, %v154
  %v158 = vadd.f32 %v87, %v154
  %v159 = vadd.f32 %v88, %v154
  %v160 = vadd.f32 %v89, %v154
  %v161 = vadd.f32 %v90, %v154
  %v162 = vadd.f32 %v91, %v154
  %v163 = vadd.f32 %v92, %v154
  %v164 = vadd.f32 %v93, %v154
  %v165 = vadd.f32 %v94, %v154
  %v166 = vadd.f32 %v95, %v154
  %v167 = vadd.f32 %v96, %v154
  %v168 = vadd.f32 %v97, %v154
  %v169 = vadd.f32 %v98, %v154
  %v170 = vadd.f32 %v99, %v154
  %v171 = vadd.f32 %v100, %v154
  %v172 = vadd.f32 %v101, %v154
  %v173 = vadd.f32 %v102, %v154
  %v174 = vadd.f32 %v103, %v154
  %v175 = vadd.f32 %v104, %v154
  %v176 = vadd.f32 %v105, %v154
  %v177 = vadd.f32 %v106, %v154
  %v178 = vadd.f32 %v107, %v154
  %v179 = vadd.f32 %v108, %v154
  %v180 = vadd.f32 %v109, %v154
  %v181 = vadd.f32 %v110, %v154
  %v182 = vadd.f32 %v111, %v154
  %v183 = vadd.f32 %v112, %v154
  %v184 = vadd.f32 %v113, %v154
  %v185 = vadd.f32 %v114, %v154
  %v186 = vadd.f32 %v115, %v154
  %v187 = vadd.f32 %v116, %v154
  %v188 = vadd.f32 %v117, %v154
  %v189 = vadd.f32 %v118, %v154
  %v190 = vadd.f32 %v119, %v154
  %v191 = vadd.f32 %v120, %v154
  %v192 = vadd.f32 %v121, %v154
  %v193 = vadd.f32 %v122, %v154
  %v194 = vadd.f32 %v123, %v154
  %v195 = vadd.f32 %v124, %v154
  %v196 = vadd.f32 %v125, %v154
  %v197 = vadd.f32 %v126, %v154
  %v198 = vadd.f32 %v127, %v154
  %v199 = vadd.f32 %v128, %v154
  %v200 = vadd.f32 %v129, %v154
  %v201 = vadd.f32 %v130, %v154
  %v202 = vadd.f32 %v131, %v154
  %v203 = vadd.f32 %v132, %v154
  %v204 = vadd.f32 %v133, %v154
  %v205 = vadd.f32 %v134, %v154
  %v206 = vadd.f32 %v135, %v154
  %v207 = vadd.f32 %v136, %v154
  %v208 = vadd.f32 %v137, %v154
  %v209 = vadd.f32 %v138, %v154
  %v210 = vadd.f32 %v139, %v154
  %v211 = vadd.f32 %v140, %v154
  %v212 = vadd.f32 %v141, %v154
  %v213 = vadd.f32 %v142, %v154
  %v214 = vadd.f32 %v143, %v154
  %v215 = vadd.f32 %v144, %v154
  %v216 = vadd.f32 %v145, %v154
  %v217 = vadd.f32 %v146, %v154
  %v218 = vadd.f32 %v147, %v154
  %v219 = vadd.f32 %v148, %v154
  %v220 = vmax.f32 %v156, 0.0
  %v221 = vmax.f32 %v157, 0.0
  %v222 = vmax.f32 %v158, 0.0
  %v223 = vmax.f32 %v159, 0.0
  %v224 = vmax.f32 %v160, 0.0
  %v225 = vmax.f32 %v161, 0.0
  %v226 = vmax.f32 %v162, 0.0
  %v227 = vmax.f32 %v163, 0.0
  %v228 = vmax.f32 %v164, 0.0
  %v229 = vmax.f32 %v165, 0.0
  %v230 = vmax.f32 %v166, 0.0
  %v231 = vmax.f32 %v167, 0.0
  %v232 = vmax.f32 %v168, 0.0
  %v233 = vmax.f32 %v169, 0.0
  %v234 = vmax.f32 %v170, 0.0
  %v235 = vmax.f32 %v171, 0.0
  %v236 = vmax.f32 %v172, 0.0
  %v237 = vmax.f32 %v173, 0.0
  %v238 = vmax.f32 %v174, 0.0
  %v239 = vmax.f32 %v175, 0.0
  %v240 = vmax.f32 %v176, 0.0
  %v241 = vmax.f32 %v177, 0.0
  %v242 = vmax.f32 %v178, 0.0
  %v243 = vmax.f32 %v179, 0.0
  %v244 = vmax.f32 %v180, 0.0
  %v245 = vmax.f32 %v181, 0.0
  %v246 = vmax.f32 %v182, 0.0
  %v247 = vmax.f32 %v183, 0.0
  %v248 = vmax.f32 %v184, 0.0
  %v249 = vmax.f32 %v185, 0.0
  %v250 = vmax.f32 %v186, 0.0
  %v251 = vmax.f32 %v187, 0.0
  %v252 = vmax.f32 %v188, 0.0
  %v253 = vmax.f32 %v189, 0.0
  %v254 = vmax.f32 %v190, 0.0
  %v255 = vmax.f32 %v191, 0.0
  %v256 = vmax.f32 %v192, 0.0
  %v257 = vmax.f32 %v193, 0.0
  %v258 = vmax.f32 %v194, 0.0
  %v259 = vmax.f32 %v195, 0.0
  %v260 = vmax.f32 %v196, 0.0
  %v261 = vmax.f32 %v197, 0.0
  %v262 = vmax.f32 %v198, 0.0
  %v263 = vmax.f32 %v199, 0.0
  %v264 = vmax.f32 %v200, 0.0
  %v265 = vmax.f32 %v201, 0.0
  %v266 = vmax.f32 %v202, 0.0
  %v267 = vmax.f32 %v203, 0.0
  %v268 = vmax.f32 %v204, 0.0
  %v269 = vmax.f32 %v205, 0.0
  %v270 = vmax.f32 %v206, 0.0
  %v271 = vmax.f32 %v207, 0.0
  %v272 = vmax.f32 %v208, 0.0
  %v273 = vmax.f32 %v209, 0.0
  %v274 = vmax.f32 %v210, 0.0
  %v275 = vmax.f32 %v211, 0.0
  %v276 = vmax.f32 %v212, 0.0
  %v277 = vmax.f32 %v213, 0.0
  %v278 = vmax.f32 %v214, 0.0
  %v279 = vmax.f32 %v215, 0.0
  %v280 = vmax.f32 %v216, 0.0
  %v281 = vmax.f32 %v217, 0.0
  %v282 = vmax.f32 %v218, 0.0
  %v283 = vmax.f32 %v219, 0.0
  %vm284 = vcmask 64512
  %285 = vst.msk [vmem:[%s3] sm:$0xff] %vm284, %v220
  %286 = vst.msk [vmem:[%s3 + $0x8] sm:$0xff] %vm284, %v221
  %287 = vst.msk [vmem:[%s3 + $0x10] sm:$0xff] %vm284, %v222
  %288 = vst.msk [vmem:[%s3 + $0x18] sm:$0xff] %vm284, %v223
  %289 = vst.msk [vmem:[%s3 + $0x20] sm:$0xff] %vm284, %v224
  %290 = vst.msk [vmem:[%s3 + $0x28] sm:$0xff] %vm284, %v225
  %291 = vst.msk [vmem:[%s3 + $0x30] sm:$0xff] %vm284, %v226
  %292 = vst.msk [vmem:[%s3 + $0x38] sm:$0xff] %vm284, %v227
  %293 = vst.msk [vmem:[%s3 + $0x40] sm:$0xff] %vm284, %v228
  %294 = vst.msk [vmem:[%s3 + $0x48] sm:$0xff] %vm284, %v229
  %295 = vst.msk [vmem:[%s3 + $0x50] sm:$0xff] %vm284, %v230
  %296 = vst.msk [vmem:[%s3 + $0x58] sm:$0xff] %vm284, %v231
  %297 = vst.msk [vmem:[%s3 + $0x60] sm:$0xff] %vm284, %v232
  %298 = vst.msk [vmem:[%s3 + $0x68] sm:$0xff] %vm284, %v233
  %299 = vst.msk [vmem:[%s3 + $0x70] sm:$0xff] %vm284, %v234
  %300 = vst.msk [vmem:[%s3 + $0x78] sm:$0xff] %vm284, %v235
  %301 = vst.msk [vmem:[%s3 + $0x80] sm:$0xff] %vm284, %v236
  %302 = vst.msk [vmem:[%s3 + $0x88] sm:$0xff] %vm284, %v237
  %303 = vst.msk [vmem:[%s3 + $0x90] sm:$0xff] %vm284, %v238
  %304 = vst.msk [vmem:[%s3 + $0x98] sm:$0xff] %vm284, %v239
  %305 = vst.msk [vmem:[%s3 + $0xa0] sm:$0xff] %vm284, %v240
  %306 = vst.msk [vmem:[%s3 + $0xa8] sm:$0xff] %vm284, %v241
  %307 = vst.msk [vmem:[%s3 + $0xb0] sm:$0xff] %vm284, %v242
  %308 = vst.msk [vmem:[%s3 + $0xb8] sm:$0xff] %vm284, %v243
  %309 = vst.msk [vmem:[%s3 + $0xc0] sm:$0xff] %vm284, %v244
  %310 = vst.msk [vmem:[%s3 + $0xc8] sm:$0xff] %vm284, %v245
  %311 = vst.msk [vmem:[%s3 + $0xd0] sm:$0xff] %vm284, %v246
  %312 = vst.msk [vmem:[%s3 + $0xd8] sm:$0xff] %vm284, %v247
  %313 = vst.msk [vmem:[%s3 + $0xe0] sm:$0xff] %vm284, %v248
  %314 = vst.msk [vmem:[%s3 + $0xe8] sm:$0xff] %vm284, %v249
  %315 = vst.msk [vmem:[%s3 + $0xf0] sm:$0xff] %vm284, %v250
  %316 = vst.msk [vmem:[%s3 + $0xf8] sm:$0xff] %vm284, %v251
  %317 = vst.msk [vmem:[%s3 + $0x100] sm:$0xff] %vm284, %v252
  %318 = vst.msk [vmem:[%s3 + $0x108] sm:$0xff] %vm284, %v253
  %319 = vst.msk [vmem:[%s3 + $0x110] sm:$0xff] %vm284, %v254
  %320 = vst.msk [vmem:[%s3 + $0x118] sm:$0xff] %vm284, %v255
  %321 = vst.msk [vmem:[%s3 + $0x120] sm:$0xff] %vm284, %v256
  %322 = vst.msk [vmem:[%s3 + $0x128] sm:$0xff] %vm284, %v257
  %323 = vst.msk [vmem:[%s3 + $0x130] sm:$0xff] %vm284, %v258
  %324 = vst.msk [vmem:[%s3 + $0x138] sm:$0xff] %vm284, %v259
  %325 = vst.msk [vmem:[%s3 + $0x140] sm:$0xff] %vm284, %v260
  %326 = vst.msk [vmem:[%s3 + $0x148] sm:$0xff] %vm284, %v261
  %327 = vst.msk [vmem:[%s3 + $0x150] sm:$0xff] %vm284, %v262
  %328 = vst.msk [vmem:[%s3 + $0x158] sm:$0xff] %vm284, %v263
  %329 = vst.msk [vmem:[%s3 + $0x160] sm:$0xff] %vm284, %v264
  %330 = vst.msk [vmem:[%s3 + $0x168] sm:$0xff] %vm284, %v265
  %331 = vst.msk [vmem:[%s3 + $0x170] sm:$0xff] %vm284, %v266
  %332 = vst.msk [vmem:[%s3 + $0x178] sm:$0xff] %vm284, %v267
  %333 = vst.msk [vmem:[%s3 + $0x180] sm:$0xff] %vm284, %v268
  %334 = vst.msk [vmem:[%s3 + $0x188] sm:$0xff] %vm284, %v269
  %335 = vst.msk [vmem:[%s3 + $0x190] sm:$0xff] %vm284, %v270
  %336 = vst.msk [vmem:[%s3 + $0x198] sm:$0xff] %vm284, %v271
  %337 = vst.msk [vmem:[%s3 + $0x1a0] sm:$0xff] %vm284, %v272
  %338 = vst.msk [vmem:[%s3 + $0x1a8] sm:$0xff] %vm284, %v273
  %339 = vst.msk [vmem:[%s3 + $0x1b0] sm:$0xff] %vm284, %v274
  %340 = vst.msk [vmem:[%s3 + $0x1b8] sm:$0xff] %vm284, %v275
  %341 = vst.msk [vmem:[%s3 + $0x1c0] sm:$0xff] %vm284, %v276
  %342 = vst.msk [vmem:[%s3 + $0x1c8] sm:$0xff] %vm284, %v277
  %343 = vst.msk [vmem:[%s3 + $0x1d0] sm:$0xff] %vm284, %v278
  %344 = vst.msk [vmem:[%s3 + $0x1d8] sm:$0xff] %vm284, %v279
  %345 = vst.msk [vmem:[%s3 + $0x1e0] sm:$0xff] %vm284, %v280
  %346 = vst.msk [vmem:[%s3 + $0x1e8] sm:$0xff] %vm284, %v281
  %347 = vst.msk [vmem:[%s3 + $0x1f0] sm:$0xff] %vm284, %v282
  %348 = vst.msk [vmem:[%s3 + $0x1f8] sm:$0xff] %vm284, %v283
  // Predicated region
  $region14: #{double_conv_forward.5} parent=0 // pred_check
    _
  $region15: #{double_conv_forward.5} parent=0 // pred_check_branch
    %350 = sbr.rel (0) target = $region17
  $region16: #{double_conv_forward.5} parent=0 // pred_region
    _
  $region17: #{double_conv_forward.5} parent=0 // pred_fallthru
    _
  // Predicated region
  $region18: #{double_conv_forward.5} parent=0 // pred_check
    _
  $region19: #{double_conv_forward.5} parent=0 // pred_check_branch
    %352 = sbr.rel (0) target = $region21
  $region20: #{double_conv_forward.5} parent=0 // pred_region
    _
  $region21: #{double_conv_forward.5} parent=0 // pred_fallthru
    _

// kernel: double_conv_forward.3
$region0: #{double_conv_forward.3}
  #allocation0 [shape = 'u32[]', space=smem, size = 0x4, offset = 0x4, fixed_abs, tag = 'smem constant byte address 0x4 - core index']
  #allocation1 [shape = 'u32[144,128]{1,0:T(1,128)}', space=vmem, size = 0x12000, scoped, tag = 'internal scratch']
  %s0 = inlined_call_operand.vmem [shape: bf16[2,16,16,8], index: 0, kind: input, shape index: {}]
  %s1 = inlined_call_operand.vmem [shape: bf16[9,8,8], index: 1, kind: input, shape index: {}]
  %s2 = inlined_call_operand.vmem [shape: f32[1,8], index: 2, kind: input, shape index: {}]
  %s3 = inlined_call_operand.vmem [shape: f32[1,8], index: 3, kind: input, shape index: {}]
  %s4 = inlined_call_operand.vmem [shape: f32[1,8], index: 4, kind: input, shape index: {}]
  %s5 = inlined_call_operand.vmem [shape: f32[2,16,16,8], index: 5, kind: output, shape index: {0}]
  %s6 = inlined_call_operand.vmem [shape: f32[2,1,1,8], index: 6, kind: output, shape index: {1}]
  %s7 = inlined_call_operand.vmem [shape: f32[2,1,1,8], index: 7, kind: output, shape index: {2}]
  %8 = xla_tuple %s5, %s6, %s7
  %s9 = sld [smem:[#allocation0]]
  $region73: #{double_conv_forward.3} parent=0
    _
  %s11 = ssub.s32 1, %s9
  %s12 = scalar_select 0, %s11, %s9
  loop: start=0, step=1, limit=4
  $region2: #{double_conv_forward.3} parent=0 // loop_pre_header
    _
  $region3: #{double_conv_forward.3} parent=0 // loop_header
    %s14 = sphi 0, %s18
    %p15 = scmp.ge.s32.totalorder %s14, 4
    %s21 = sphi 0, %s33
    %s22 = sphi 0, %s29
    %s23 = sphi 0, %s21
    %s24 = sphi 0, %s22
    %s25 = sphi 0, %s23
    %s26 = sphi 0, %s24
    %s36 = sphi 0, %s38
    %s39 = sphi 0, %s36
    %s40 = sphi 0, %s39
    %s56 = sphi 0, %s40
    %s60 = sphi 0, %s60
    %s62 = sphi 0, %s60
    %s63 = sphi 0, %s62
    %s77 = sphi 0, %s63
    %s81 = sphi 0, %s81
    %s83 = sphi 0, %s81
    %s84 = sphi 0, %s83
    %s98 = sphi 0, %s84
    %s102 = sphi 0, %s102
    %s104 = sphi 0, %s102
    %s105 = sphi 0, %s104
    %s119 = sphi 0, %s105
    %s123 = sphi 0, %s123
    %s125 = sphi 0, %s123
    %s126 = sphi 0, %s125
    %s140 = sphi 0, %s126
    %s148 = sphi 0, %s150
    %s151 = sphi 0, %s148
    %s152 = sphi 0, %s151
    %s168 = sphi 0, %s152
    %s174 = sphi 0, %s176
    %s177 = sphi 0, %s174
    %s178 = sphi 0, %s177
    %s194 = sphi 0, %s178
    %s200 = sphi 0, %s202
    %s203 = sphi 0, %s200
    %s204 = sphi 0, %s203
    %s220 = sphi 0, %s204
  $region4: #{double_conv_forward.3} parent=0 // loop_header_branch
    %17 = sbr.rel (%p15) target = $region8
  $region5: #{double_conv_forward.3} parent=0 // loop_body
    %s19 = ssub.s32 %s14, 1
    %s20 = ssub.s32 %s14, 2
    %s27 = sadd.s32 1, %s22
    %p28 = scmp.ge.s32.totalorder %s27, 1
    %s29 = scalar_select %p28, 0, %s27
    %s30 = sadd.s32 1, %s21
    %s31 = scalar_select %p28, %s30, %s21
    %p32 = scmp.ge.s32.totalorder %s31, 2
    %s33 = scalar_select %p32, 0, %s31
    %s34 = ssub.s32 %s21, %s33
    %p35 = scmp.eq.s32.totalorder %s34, 0
    %s37 = sadd.s32 %s36, 1
    %s38 = scalar_select %p35, %s36, %s37
    %p41 = pneg %p35
    %p42 = scmp.eq.s32.totalorder %s14, 1
    %p43 = por %p41, %p42
    %p44 = scmp.ne.s32.totalorder %s36, %s39
    %p45 = scmp.eq.s32.totalorder %s14, 0
    %p46 = por %p44, %p45
    %p47 = scmp.ne.s32.totalorder %s36, %s39
    %p48 = scmp.eq.s32.totalorder %s19, 1
    %p49 = por %p47, %p48
    %p50 = scmp.ne.s32.totalorder %s39, %s40
    %p51 = scmp.eq.s32.totalorder %s19, 0
    %p52 = por %p50, %p51
    %p53 = scmp.ne.s32.totalorder %s39, %s40
    %p54 = scmp.eq.s32.totalorder %s20, 1
    %p55 = por %p53, %p54
    %p57 = scmp.ne.s32.totalorder %s40, %s56
    %p58 = scmp.eq.s32.totalorder %s20, 0
    %p59 = por %p57, %p58
    %s61 = sadd.s32 %s60, 1
    %p64 = scmp.eq.s32.totalorder %s14, 1
    %p65 = scmp.ne.s32.totalorder %s60, %s62
    %p66 = scmp.eq.s32.totalorder %s14, 0
    %p67 = por %p65, %p66
    %p68 = scmp.ne.s32.totalorder %s60, %s62
    %p69 = scmp.eq.s32.totalorder %s19, 1
    %p70 = por %p68, %p69
    %p71 = scmp.ne.s32.totalorder %s62, %s63
    %p72 = scmp.eq.s32.totalorder %s19, 0
    %p73 = por %p71, %p72
    %p74 = scmp.ne.s32.totalorder %s62, %s63
    %p75 = scmp.eq.s32.totalorder %s20, 1
    %p76 = por %p74, %p75
    %p78 = scmp.ne.s32.totalorder %s63, %s77
    %p79 = scmp.eq.s32.totalorder %s20, 0
    %p80 = por %p78, %p79
    %s82 = sadd.s32 %s81, 1
    %p85 = scmp.eq.s32.totalorder %s14, 1
    %p86 = scmp.ne.s32.totalorder %s81, %s83
    %p87 = scmp.eq.s32.totalorder %s14, 0
    %p88 = por %p86, %p87
    %p89 = scmp.ne.s32.totalorder %s81, %s83
    %p90 = scmp.eq.s32.totalorder %s19, 1
    %p91 = por %p89, %p90
    %p92 = scmp.ne.s32.totalorder %s83, %s84
    %p93 = scmp.eq.s32.totalorder %s19, 0
    %p94 = por %p92, %p93
    %p95 = scmp.ne.s32.totalorder %s83, %s84
    %p96 = scmp.eq.s32.totalorder %s20, 1
    %p97 = por %p95, %p96
    %p99 = scmp.ne.s32.totalorder %s84, %s98
    %p100 = scmp.eq.s32.totalorder %s20, 0
    %p101 = por %p99, %p100
    %s103 = sadd.s32 %s102, 1
    %p106 = scmp.eq.s32.totalorder %s14, 1
    %p107 = scmp.ne.s32.totalorder %s102, %s104
    %p108 = scmp.eq.s32.totalorder %s14, 0
    %p109 = por %p107, %p108
    %p110 = scmp.ne.s32.totalorder %s102, %s104
    %p111 = scmp.eq.s32.totalorder %s19, 1
    %p112 = por %p110, %p111
    %p113 = scmp.ne.s32.totalorder %s104, %s105
    %p114 = scmp.eq.s32.totalorder %s19, 0
    %p115 = por %p113, %p114
    %p116 = scmp.ne.s32.totalorder %s104, %s105
    %p117 = scmp.eq.s32.totalorder %s20, 1
    %p118 = por %p116, %p117
    %p120 = scmp.ne.s32.totalorder %s105, %s119
    %p121 = scmp.eq.s32.totalorder %s20, 0
    %p122 = por %p120, %p121
    %s124 = sadd.s32 %s123, 1
    %p127 = scmp.eq.s32.totalorder %s14, 1
    %p128 = scmp.ne.s32.totalorder %s123, %s125
    %p129 = scmp.eq.s32.totalorder %s14, 0
    %p130 = por %p128, %p129
    %p131 = scmp.ne.s32.totalorder %s123, %s125
    %p132 = scmp.eq.s32.totalorder %s19, 1
    %p133 = por %p131, %p132
    %p134 = scmp.ne.s32.totalorder %s125, %s126
    %p135 = scmp.eq.s32.totalorder %s19, 0
    %p136 = por %p134, %p135
    %p137 = scmp.ne.s32.totalorder %s125, %s126
    %p138 = scmp.eq.s32.totalorder %s20, 1
    %p139 = por %p137, %p138
    %p141 = scmp.ne.s32.totalorder %s126, %s140
    %p142 = scmp.eq.s32.totalorder %s20, 0
    %p143 = por %p141, %p142
    %s144 = ssub.s32 %s21, %s33
    %s145 = ssub.s32 %s22, %s29
    %s146 = sor.u32 %s144, %s145
    %p147 = scmp.eq.s32.totalorder %s146, 0
    %s149 = sadd.s32 %s148, 1
    %s150 = scalar_select %p147, %s148, %s149
    %p153 = pneg %p147
    %p154 = scmp.eq.s32.totalorder %s14, 1
    %p155 = por %p153, %p154
    %p156 = scmp.ne.s32.totalorder %s148, %s151
    %p157 = scmp.eq.s32.totalorder %s14, 0
    %p158 = por %p156, %p157
    %p159 = scmp.ne.s32.totalorder %s148, %s151
    %p160 = scmp.eq.s32.totalorder %s19, 1
    %p161 = por %p159, %p160
    %p162 = scmp.ne.s32.totalorder %s151, %s152
    %p163 = scmp.eq.s32.totalorder %s19, 0
    %p164 = por %p162, %p163
    %p165 = scmp.ne.s32.totalorder %s151, %s152
    %p166 = scmp.eq.s32.totalorder %s20, 1
    %p167 = por %p165, %p166
    %p169 = scmp.ne.s32.totalorder %s152, %s168
    %p170 = scmp.eq.s32.totalorder %s20, 0
    %p171 = por %p169, %p170
    %s172 = ssub.s32 %s21, %s33
    %p173 = scmp.eq.s32.totalorder %s172, 0
    %s175 = sadd.s32 %s174, 1
    %s176 = scalar_select %p173, %s174, %s175
    %p179 = pneg %p173
    %p180 = scmp.eq.s32.totalorder %s14, 1
    %p181 = por %p179, %p180
    %p182 = scmp.ne.s32.totalorder %s174, %s177
    %p183 = scmp.eq.s32.totalorder %s14, 0
    %p184 = por %p182, %p183
    %p185 = scmp.ne.s32.totalorder %s174, %s177
    %p186 = scmp.eq.s32.totalorder %s19, 1
    %p187 = por %p185, %p186
    %p188 = scmp.ne.s32.totalorder %s177, %s178
    %p189 = scmp.eq.s32.totalorder %s19, 0
    %p190 = por %p188, %p189
    %p191 = scmp.ne.s32.totalorder %s177, %s178
    %p192 = scmp.eq.s32.totalorder %s20, 1
    %p193 = por %p191, %p192
    %p195 = scmp.ne.s32.totalorder %s178, %s194
    %p196 = scmp.eq.s32.totalorder %s20, 0
    %p197 = por %p195, %p196
    %s198 = ssub.s32 %s21, %s33
    %p199 = scmp.eq.s32.totalorder %s198, 0
    %s201 = sadd.s32 %s200, 1
    %s202 = scalar_select %p199, %s200, %s201
    %p205 = pneg %p199
    %p206 = scmp.eq.s32.totalorder %s14, 1
    %p207 = por %p205, %p206
    %p208 = scmp.ne.s32.totalorder %s200, %s203
    %p209 = scmp.eq.s32.totalorder %s14, 0
    %p210 = por %p208, %p209
    %p211 = scmp.ne.s32.totalorder %s200, %s203
    %p212 = scmp.eq.s32.totalorder %s19, 1
    %p213 = por %p211, %p212
    %p214 = scmp.ne.s32.totalorder %s203, %s204
    %p215 = scmp.eq.s32.totalorder %s19, 0
    %p216 = por %p214, %p215
    %p217 = scmp.ne.s32.totalorder %s203, %s204
    %p218 = scmp.eq.s32.totalorder %s20, 1
    %p219 = por %p217, %p218
    %p221 = scmp.ne.s32.totalorder %s204, %s220
    %p222 = scmp.eq.s32.totalorder %s20, 0
    %p223 = por %p221, %p222
    %p224 = scmp.le.s32.totalorder 1, %s14
    %p225 = scmp.lt.s32.totalorder %s14, 3
    %p226 = pnand %p224, %p225
    %p227 = pneg %p226
    // Predicated region
    $region9: #{double_conv_forward.3} parent=5 // pred_check
      _
    $region10: #{double_conv_forward.3} parent=5 // pred_check_branch
      %229 = sbr.rel (%p226) target = $region12
    $region11: #{double_conv_forward.3} parent=5 // pred_region
      %s230 = ssub.s32 %s14, 1
      // Predicated region
      $region13: #{double_conv_forward.3} parent=11 // pred_check
        %p231 = pneg %p73
      $region14: #{double_conv_forward.3} parent=11 // pred_check_branch
        %233 = sbr.rel (%p231) target = $region16
      $region15: #{double_conv_forward.3} parent=11 // pred_region
        _
      $region16: #{double_conv_forward.3} parent=11 // pred_fallthru
        _
      // Predicated region
      $region17: #{double_conv_forward.3} parent=11 // pred_check
        %p234 = pneg %p94
      $region18: #{double_conv_forward.3} parent=11 // pred_check_branch
        %236 = sbr.rel (%p234) target = $region20
      $region19: #{double_conv_forward.3} parent=11 // pred_region
        _
      $region20: #{double_conv_forward.3} parent=11 // pred_fallthru
        _
      // Predicated region
      $region21: #{double_conv_forward.3} parent=11 // pred_check
        %p237 = pneg %p115
      $region22: #{double_conv_forward.3} parent=11 // pred_check_branch
        %239 = sbr.rel (%p237) target = $region24
      $region23: #{double_conv_forward.3} parent=11 // pred_region
        _
      $region24: #{double_conv_forward.3} parent=11 // pred_fallthru
        _
      // Predicated region
      $region25: #{double_conv_forward.3} parent=11 // pred_check
        %p240 = pneg %p136
      $region26: #{double_conv_forward.3} parent=11 // pred_check_branch
        %242 = sbr.rel (%p240) target = $region28
      $region27: #{double_conv_forward.3} parent=11 // pred_region
        _
      $region28: #{double_conv_forward.3} parent=11 // pred_fallthru
        _
    $region12: #{double_conv_forward.3} parent=5 // pred_fallthru
      _
    %p243 = scmp.lt.s32.totalorder %s14, 2
    // Predicated region
    $region29: #{double_conv_forward.3} parent=5 // pred_check
      %p244 = pneg %p243
    $region30: #{double_conv_forward.3} parent=5 // pred_check_branch
      %246 = sbr.rel (%p244) target = $region32
    $region31: #{double_conv_forward.3} parent=5 // pred_region
      // Predicated region
      $region33: #{double_conv_forward.3} parent=31 // pred_check
        %p247 = pneg %p46
      $region34: #{double_conv_forward.3} parent=31 // pred_check_branch
        %249 = sbr.rel (%p247) target = $region36
      $region35: #{double_conv_forward.3} parent=31 // pred_region
        %p250 = scmp.lt.s32.totalorder %s21, 1
        %s251 = scalar_select %p250, %s21, 1
        %s252 = smul.addr %s251, 32
        %s253 = smul.addr %s252, 4
        %s254 = scalar_lea.vmem %s0, %s253
      $region36: #{double_conv_forward.3} parent=31 // pred_fallthru
        _
    $region32: #{double_conv_forward.3} parent=5 // pred_fallthru
      _
    %p255 = scmp.le.s32.totalorder 1, %s14
    %p256 = scmp.lt.s32.totalorder %s14, 3
    %p257 = pnand %p255, %p256
    %p258 = pneg %p257
    // Predicated region
    $region37: #{double_conv_forward.3} parent=5 // pred_check
      _
    $region38: #{double_conv_forward.3} parent=5 // pred_check_branch
      %260 = sbr.rel (%p257) target = $region40
    $region39: #{double_conv_forward.3} parent=5 // pred_region
      %s261 = ssub.s32 %s14, 1
      %p262 = scmp.lt.s32.totalorder %s23, 1
      %s263 = scalar_select %p262, %s23, 1
      %s264 = smul.addr %s263, 32
      %s265 = smul.addr %s264, 4
      %s266 = scalar_lea.vmem %s0, %s265
      %p267 = pneg %p52
      %p268 = pneg %p49
      %p269 = pneg %p73
      %p270 = pneg %p70
      %p271 = pneg %p94
      %p272 = pneg %p91
      %p273 = pneg %p115
      %p274 = pneg %p112
      %p275 = pneg %p136
      %p276 = pneg %p133
      %p277 = pneg %p164
      %p278 = pneg %p161
      %s279 = smul.u32 16, %s24
      %p280 = scmp.lt.s32.totalorder %s23, 1
      %s281 = scalar_select %p280, %s23, 1
      %p282 = scmp.lt.s32.totalorder %s279, 15
      %s283 = scalar_select %p282, %s279, 15
      %s284 = smul.addr %s283, 2
      %s285 = smul.addr %s281, 32
      %s286 = sadd.s32 %s284, %s285
      %s287 = smul.addr %s286, 8
      %s288 = scalar_lea.vmem %s5, %s287
      %p289 = pneg %p190
      %p290 = pneg %p187
      %p291 = scmp.lt.s32.totalorder %s23, 1
      %s292 = scalar_select %p291, %s23, 1
      %s293 = scalar_lea.vmem %s6, %s292
      %p294 = pneg %p216
      %p295 = pneg %p213
      %p296 = scmp.lt.s32.totalorder %s23, 1
      %s297 = scalar_select %p296, %s23, 1
      %s298 = scalar_lea.vmem %s7, %s297
      %p299 = scmp.lt.s32.totalorder %s23, 1
      %s300 = scalar_select %p299, %s23, 1
      %s301 = smul.addr %s300, 32
      %s302 = smul.addr %s301, 4
      %s303 = scalar_lea.vmem %s0, %s302
      %s304 = smul.u32 16, %s24
      %p305 = scmp.lt.s32.totalorder %s23, 1
      %s306 = scalar_select %p305, %s23, 1
      %p307 = scmp.lt.s32.totalorder %s304, 15
      %s308 = scalar_select %p307, %s304, 15
      %s309 = smul.addr %s308, 2
      %s310 = smul.addr %s306, 32
      %s311 = sadd.s32 %s309, %s310
      %s312 = smul.addr %s311, 8
      %s313 = scalar_lea.vmem %s5, %s312
      %s314 = smul.u32 16, %s24
      %p315 = scmp.lt.s32.totalorder %s23, 1
      %s316 = scalar_select %p315, %s23, 1
      %s317 = scalar_lea.vmem %s6, %s316
      %p318 = scmp.lt.s32.totalorder %s23, 1
      %s319 = scalar_select %p318, %s23, 1
      %s320 = scalar_lea.vmem %s7, %s319
      %s322 = smul.u32 %s24, 16
      %s323 = ssub.s32 %s322, 1
      %p324 = scmp.gt.s32.totalorder %s323, 0
      %s325 = scalar_select %p324, %s323, 0
      %s326 = smul.u32 %s325, 2
      %s327 = smul.addr %s326, 4
      %s328 = scalar_lea.vmem %s303, %s327
      %v329 = vld [vmem:[%s328] sm:$0xf]
      %v330 = vld [vmem:[%s328 + $0x4] sm:$0xf]
      %v331 = vunpack.c.l.bf16 %v329
      %v332 = vunpack.c.l.bf16 %v330
      %s333 = smul.u32 %s322, 2
      %s334 = smul.addr %s333, 4
      %s335 = scalar_lea.vmem %s303, %s334
      %v336 = vld [vmem:[%s335] sm:$0xf]
      %v337 = vld [vmem:[%s335 + $0x4] sm:$0xf]
      %v338 = vld [vmem:[%s335 + $0x8] sm:$0xf]
      %v339 = vld [vmem:[%s335 + $0xc] sm:$0xf]
      %v340 = vld [vmem:[%s335 + $0x10] sm:$0xf]
      %v341 = vld [vmem:[%s335 + $0x14] sm:$0xf]
      %v342 = vld [vmem:[%s335 + $0x18] sm:$0xf]
      %v343 = vld [vmem:[%s335 + $0x1c] sm:$0xf]
      %v344 = vld [vmem:[%s335 + $0x20] sm:$0xf]
      %v345 = vld [vmem:[%s335 + $0x24] sm:$0xf]
      %v346 = vld [vmem:[%s335 + $0x28] sm:$0xf]
      %v347 = vld [vmem:[%s335 + $0x2c] sm:$0xf]
      %v348 = vld [vmem:[%s335 + $0x30] sm:$0xf]
      %v349 = vld [vmem:[%s335 + $0x34] sm:$0xf]
      %v350 = vld [vmem:[%s335 + $0x38] sm:$0xf]
      %v351 = vld [vmem:[%s335 + $0x3c] sm:$0xf]
      %v352 = vld [vmem:[%s335 + $0x40] sm:$0xf]
      %v353 = vld [vmem:[%s335 + $0x44] sm:$0xf]
      %v354 = vld [vmem:[%s335 + $0x48] sm:$0xf]
      %v355 = vld [vmem:[%s335 + $0x4c] sm:$0xf]
      %v356 = vld [vmem:[%s335 + $0x50] sm:$0xf]
      %v357 = vld [vmem:[%s335 + $0x54] sm:$0xf]
      %v358 = vld [vmem:[%s335 + $0x58] sm:$0xf]
      %v359 = vld [vmem:[%s335 + $0x5c] sm:$0xf]
      %v360 = vld [vmem:[%s335 + $0x60] sm:$0xf]
      %v361 = vld [vmem:[%s335 + $0x64] sm:$0xf]
      %v362 = vld [vmem:[%s335 + $0x68] sm:$0xf]
      %v363 = vld [vmem:[%s335 + $0x6c] sm:$0xf]
      %v364 = vld [vmem:[%s335 + $0x70] sm:$0xf]
      %v365 = vld [vmem:[%s335 + $0x74] sm:$0xf]
      %v366 = vld [vmem:[%s335 + $0x78] sm:$0xf]
      %v367 = vld [vmem:[%s335 + $0x7c] sm:$0xf]
      %v368 = vunpack.c.l.bf16 %v336
      %v369 = vunpack.c.l.bf16 %v337
      %v370 = vunpack.c.l.bf16 %v338
      %v371 = vunpack.c.l.bf16 %v339
      %v372 = vunpack.c.l.bf16 %v340
      %v373 = vunpack.c.l.bf16 %v341
      %v374 = vunpack.c.l.bf16 %v342
      %v375 = vunpack.c.l.bf16 %v343
      %v376 = vunpack.c.l.bf16 %v344
      %v377 = vunpack.c.l.bf16 %v345
      %v378 = vunpack.c.l.bf16 %v346
      %v379 = vunpack.c.l.bf16 %v347
      %v380 = vunpack.c.l.bf16 %v348
      %v381 = vunpack.c.l.bf16 %v349
      %v382 = vunpack.c.l.bf16 %v350
      %v383 = vunpack.c.l.bf16 %v351
      %v384 = vunpack.c.l.bf16 %v352
      %v385 = vunpack.c.l.bf16 %v353
      %v386 = vunpack.c.l.bf16 %v354
      %v387 = vunpack.c.l.bf16 %v355
      %v388 = vunpack.c.l.bf16 %v356
      %v389 = vunpack.c.l.bf16 %v357
      %v390 = vunpack.c.l.bf16 %v358
      %v391 = vunpack.c.l.bf16 %v359
      %v392 = vunpack.c.l.bf16 %v360
      %v393 = vunpack.c.l.bf16 %v361
      %v394 = vunpack.c.l.bf16 %v362
      %v395 = vunpack.c.l.bf16 %v363
      %v396 = vunpack.c.l.bf16 %v364
      %v397 = vunpack.c.l.bf16 %v365
      %v398 = vunpack.c.l.bf16 %v366
      %v399 = vunpack.c.l.bf16 %v367
      %s400 = sadd.s32 %s322, 16
      %p401 = scmp.lt.s32.totalorder %s400, 15
      %s402 = scalar_select %p401, %s400, 15
      %s403 = smul.u32 %s402, 2
      %s404 = smul.addr %s403, 4
      %s405 = scalar_lea.vmem %s303, %s404
      %v406 = vld [vmem:[%s405] sm:$0xf]
      %v407 = vld [vmem:[%s405 + $0x4] sm:$0xf]
      %v408 = vunpack.c.l.bf16 %v406
      %v409 = vunpack.c.l.bf16 %v407
      %p410 = scmp.gt.s32.totalorder %s24, 0
      %s411 = scalar_select %p410, 1, 0
      %s412 = scvt.s32.f32 %s411
      %v413 = vstv %s412
      %v414 = vmul.f32 %v331, %v413
      %v415 = vmul.f32 %v332, %v413
      %s416 = sadd.s32 %s24, 1
      %p417 = scmp.lt.s32.totalorder %s416, 1
      %s418 = scalar_select %p417, 1, 0
      %s419 = scvt.s32.f32 %s418
      %v420 = vstv %s419
      %v421 = vmul.f32 %v408, %v420
      %v422 = vmul.f32 %v409, %v420
      %vm459 = vcmask 1040384
      %v460 = vrot.slane %v414, 7
      %v461 = vrot.slane %v415, 7
      %v462 = vsel %vm459, %v460, %v461
      %v463 = vrot.slane %v368, 7
      %v464 = vrot.slane %v369, 7
      %v465 = vsel %vm459, %v463, %v464
      %v466 = vrot.slane %v370, 7
      %v467 = vrot.slane %v371, 7
      %v468 = vsel %vm459, %v466, %v467
      %v469 = vrot.slane %v372, 7
      %v470 = vrot.slane %v373, 7
      %v471 = vsel %vm459, %v469, %v470
      %v472 = vrot.slane %v374, 7
      %v473 = vrot.slane %v375, 7
      %v474 = vsel %vm459, %v472, %v473
      %v475 = vrot.slane %v376, 7
      %v476 = vrot.slane %v377, 7
      %v477 = vsel %vm459, %v475, %v476
      %v478 = vrot.slane %v378, 7
      %v479 = vrot.slane %v379, 7
      %v480 = vsel %vm459, %v478, %v479
      %v481 = vrot.slane %v380, 7
      %v482 = vrot.slane %v381, 7
      %v483 = vsel %vm459, %v481, %v482
      %v484 = vrot.slane %v382, 7
      %v485 = vrot.slane %v383, 7
      %v486 = vsel %vm459, %v484, %v485
      %v487 = vrot.slane %v384, 7
      %v488 = vrot.slane %v385, 7
      %v489 = vsel %vm459, %v487, %v488
      %v490 = vrot.slane %v386, 7
      %v491 = vrot.slane %v387, 7
      %v492 = vsel %vm459, %v490, %v491
      %v493 = vrot.slane %v388, 7
      %v494 = vrot.slane %v389, 7
      %v495 = vsel %vm459, %v493, %v494
      %v496 = vrot.slane %v390, 7
      %v497 = vrot.slane %v391, 7
      %v498 = vsel %vm459, %v496, %v497
      %v499 = vrot.slane %v392, 7
      %v500 = vrot.slane %v393, 7
      %v501 = vsel %vm459, %v499, %v500
      %v502 = vrot.slane %v394, 7
      %v503 = vrot.slane %v395, 7
      %v504 = vsel %vm459, %v502, %v503
      %v505 = vrot.slane %v396, 7
      %v506 = vrot.slane %v397, 7
      %v507 = vsel %vm459, %v505, %v506
      %v508 = vrot.slane %v398, 7
      %v509 = vrot.slane %v399, 7
      %v510 = vsel %vm459, %v508, %v509
      %v511 = vrot.slane %v421, 7
      %v512 = vrot.slane %v422, 7
      %v513 = vsel %vm459, %v511, %v512
      %v568 = vsel %vm459, 0.0, %v460
      %v569 = vsel %vm459, 0.0, %v463
      %v570 = vsel %vm459, 0.0, %v466
      %v571 = vsel %vm459, 0.0, %v469
      %v572 = vsel %vm459, 0.0, %v472
      %v573 = vsel %vm459, 0.0, %v475
      %v574 = vsel %vm459, 0.0, %v478
      %v575 = vsel %vm459, 0.0, %v481
      %v576 = vsel %vm459, 0.0, %v484
      %v577 = vsel %vm459, 0.0, %v487
      %v578 = vsel %vm459, 0.0, %v490
      %v579 = vsel %vm459, 0.0, %v493
      %v580 = vsel %vm459, 0.0, %v496
      %v581 = vsel %vm459, 0.0, %v499
      %v582 = vsel %vm459, 0.0, %v502
      %v583 = vsel %vm459, 0.0, %v505
      %v584 = vsel %vm459, 0.0, %v508
      %v585 = vsel %vm459, 0.0, %v511
      %v586 = vsel %vm459, %v461, 0.0
      %v587 = vsel %vm459, %v464, 0.0
      %v588 = vsel %vm459, %v467, 0.0
      %v589 = vsel %vm459, %v470, 0.0
      %v590 = vsel %vm459, %v473, 0.0
      %v591 = vsel %vm459, %v476, 0.0
      %v592 = vsel %vm459, %v479, 0.0
      %v593 = vsel %vm459, %v482, 0.0
      %v594 = vsel %vm459, %v485, 0.0
      %v595 = vsel %vm459, %v488, 0.0
      %v596 = vsel %vm459, %v491, 0.0
      %v597 = vsel %vm459, %v494, 0.0
      %v598 = vsel %vm459, %v497, 0.0
      %v599 = vsel %vm459, %v500, 0.0
      %v600 = vsel %vm459, %v503, 0.0
      %v601 = vsel %vm459, %v506, 0.0
      %v602 = vsel %vm459, %v509, 0.0
      %v603 = vsel %vm459, %v512, 0.0
      %v604 = vpack.c.bf16 %v462, %v568
      %v605 = vpack.c.bf16 %v586, %v586
      %v606 = vpack.c.bf16 %v465, %v569
      %v607 = vpack.c.bf16 %v587, %v587
      %v608 = vpack.c.bf16 %v468, %v570
      %v609 = vpack.c.bf16 %v588, %v588
      %v610 = vpack.c.bf16 %v471, %v571
      %v611 = vpack.c.bf16 %v589, %v589
      %v612 = vpack.c.bf16 %v474, %v572
      %v613 = vpack.c.bf16 %v590, %v590
      %v614 = vpack.c.bf16 %v477, %v573
      %v615 = vpack.c.bf16 %v591, %v591
      %v616 = vpack.c.bf16 %v480, %v574
      %v617 = vpack.c.bf16 %v592, %v592
      %v618 = vpack.c.bf16 %v483, %v575
      %v619 = vpack.c.bf16 %v593, %v593
      %v620 = vpack.c.bf16 %v486, %v576
      %v621 = vpack.c.bf16 %v594, %v594
      %v622 = vpack.c.bf16 %v489, %v577
      %v623 = vpack.c.bf16 %v595, %v595
      %v624 = vpack.c.bf16 %v492, %v578
      %v625 = vpack.c.bf16 %v596, %v596
      %v626 = vpack.c.bf16 %v495, %v579
      %v627 = vpack.c.bf16 %v597, %v597
      %v628 = vpack.c.bf16 %v498, %v580
      %v629 = vpack.c.bf16 %v598, %v598
      %v630 = vpack.c.bf16 %v501, %v581
      %v631 = vpack.c.bf16 %v599, %v599
      %v632 = vpack.c.bf16 %v504, %v582
      %v633 = vpack.c.bf16 %v600, %v600
      %v634 = vpack.c.bf16 %v507, %v583
      %v635 = vpack.c.bf16 %v601, %v601
      %v636 = vpack.c.bf16 %v510, %v584
      %v637 = vpack.c.bf16 %v602, %v602
      %v638 = vpack.c.bf16 %v513, %v585
      %v639 = vpack.c.bf16 %v603, %v603
      %v640 = vld [vmem:[%s1] sm:$0xf]
      %s641 = scalar_lea.vmem %s1, 12
      %v642 = vld [vmem:[%s641] sm:$0xf]
      %vm643 = vcmask 64512
      %v645 = vsel %vm643, %v606, 0
      %v648 = vsel %vm643, %v608, 0
      %v651 = vsel %vm643, %v610, 0
      %v654 = vsel %vm643, %v612, 0
      %v657 = vsel %vm643, %v614, 0
      %v660 = vsel %vm643, %v616, 0
      %v663 = vsel %vm643, %v618, 0
      %v666 = vsel %vm643, %v620, 0
      %v669 = vsel %vm643, %v622, 0
      %v672 = vsel %vm643, %v624, 0
      %v675 = vsel %vm643, %v626, 0
      %v678 = vsel %vm643, %v628, 0
      %v681 = vsel %vm643, %v630, 0
      %v684 = vsel %vm643, %v632, 0
      %v687 = vsel %vm643, %v634, 0
      %v690 = vsel %vm643, %v636, 0
      %vm692 = vcmask 1043456
      %v694 = vsel %vm692, %v642, 0
      %696 = vmatprep.subr.bf16.mxu0 0
      %697 = vmatpush1.bf16.msra.mxu0 %v694
      %698 = vmatprep.subr.bf16.mxu0 0
      %699 = vmatpush1.bf16.msra.mxu0 0
      %700 = vmatprep.subr.bf16.mxu0 0
      %701 = vmatpush1.bf16.msra.mxu0 0
      %702 = vmatprep.subr.bf16.mxu0 0
      %703 = vmatpush1.bf16.msra.mxu0 0
      %704 = vmatprep.subr.bf16.mxu0 0
      %705 = vmatpush1.bf16.msra.mxu0 0
      %706 = vmatprep.subr.bf16.mxu0 0
      %707 = vmatpush1.bf16.msra.mxu0 0
      %708 = vmatprep.subr.bf16.mxu0 0
      %709 = vmatpush1.bf16.msra.mxu0 0
      %710 = vmatprep.subr.bf16.mxu0 0
      %711 = vmatpush1.bf16.msra.mxu0 0
      %712 = vmatprep.subr.bf16.mxu0 0
      %713 = vmatpush1.bf16.msra.mxu0 0
      %714 = vmatprep.subr.bf16.mxu0 0
      %715 = vmatpush1.bf16.msra.mxu0 0
      %716 = vmatprep.subr.bf16.mxu0 0
      %717 = vmatpush1.bf16.msra.mxu0 0
      %718 = vmatprep.subr.bf16.mxu0 0
      %719 = vmatpush1.bf16.msra.mxu0 0
      %720 = vmatprep.subr.bf16.mxu0 0
      %721 = vmatpush1.bf16.msra.mxu0 0
      %722 = vmatprep.subr.bf16.mxu0 0
      %723 = vmatpush1.bf16.msra.mxu0 0
      %724 = vmatprep.subr.bf16.mxu0 0
      %725 = vmatpush1.bf16.msra.mxu0 0
      %726 = vmatprep.subr.bf16.mxu0 0
      %727 = vmatpush1.bf16.msra.mxu0 0
      %728 = vmatprep.mubr.bf16.mxu0 0
      %729 = vmatmul.mubr.bf16.gmra.mrb[0].mxu0 %v645
      %v730 = vpop.f32.mrb[0].mxu0
      %v731 = vadd.f32 0.0, %v730
      %v732 = vpop.f32.mrb[0].mxu0
      %v733 = vpop.f32.mrb[0].mxu0
      %v734 = vadd.f32 0.0, %v733
      %v735 = vpop.f32.mrb[0].mxu0
      %736 = vmatprep.mubr.bf16.mxu0 0
      %737 = vmatmul.mubr.bf16.gmra.mrb[0].mxu0 %v648
      %v738 = vpop.f32.mrb[0].mxu0
      %v739 = vadd.f32 0.0, %v738
      %v740 = vpop.f32.mrb[0].mxu0
      %v741 = vpop.f32.mrb[0].mxu0
      %v742 = vadd.f32 0.0, %v741
      %v743 = vpop.f32.mrb[0].mxu0
      %744 = vmatprep.mubr.bf16.mxu0 0
      %745 = vmatmul.mubr.bf16.gmra.mrb[0].mxu0 %v651
      %v746 = vpop.f32.mrb[0].mxu0
      %v747 = vadd.f32 0.0, %v746
      %v748 = vpop.f32.mrb[0].mxu0
      %v749 = vpop.f32.mrb[0].mxu0
      %v750 = vadd.f32 0.0, %v749
      %v751 = vpop.f32.mrb[0].mxu0
      %752 = vmatprep.mubr.bf16.mxu0 0
      %753 = vmatmul.mubr.bf16.gmra.mrb[0].mxu0 %v654
      %v754 = vpop.f32.mrb[0].mxu0
      %v755 = vadd.f32 0.0, %v754
      %v756 = vpop.f32.mrb[0].mxu0
      %v757 = vpop.f32.mrb[0].mxu0
      %v758 = vadd.f32 0.0, %v757
      %v759 = vpop.f32.mrb[0].mxu0
      %760 = vmatprep.mubr.bf16.mxu0 0
      %761 = vmatmul.mubr.bf16.gmra.mrb[0].mxu0 %v657
      %v762 = vpop.f32.mrb[0].mxu0
      %v763 = vadd.f32 0.0, %v762
      %v764 = vpop.f32.mrb[0].mxu0
      %v765 = vpop.f32.mrb[0].mxu0
      %v766 = vadd.f32 0.0, %v765
      %v767 = vpop.f32.mrb[0].mxu0
      %768 = vmatprep.mubr.bf16.mxu0 0
      %769 = vmatmul.mubr.bf16.gmra.mrb[0].mxu0 %v660
      %v770 = vpop.f32.mrb[0].mxu0
      %v771 = vadd.f32 0.0, %v770
      %v772 = vpop.f32.mrb[0].mxu0
      %v773 = vpop.f32.mrb[0].mxu0
      %v774 = vadd.f32 0.0, %v773
      %v775 = vpop.f32.mrb[0].mxu0
      %776 = vmatprep.mubr.bf16.mxu0 0
      %777 = vmatmul.mubr.bf16.gmra.mrb[0].mxu0 %v663
      %v778 = vpop.f32.mrb[0].mxu0
      %v779 = vadd.f32 0.0, %v778
      %v780 = vpop.f32.mrb[0].mxu0
      %v781 = vpop.f32.mrb[0].mxu0
      %v782 = vadd.f32 0.0, %v781
      %v783 = vpop.f32.mrb[0].mxu0
      %784 = vmatprep.mubr.bf16.mxu0 0
      %785 = vmatmul.mubr.bf16.gmra.mrb[0].mxu0 %v666
      %v786 = vpop.f32.mrb[0].mxu0
      %v787 = vadd.f32 0.0, %v786
      %v788 = vpop.f32.mrb[0].mxu0
      %v789 = vpop.f32.mrb[0].mxu0
      %v790 = vadd.f32 0.0, %v789
      %v791 = vpop.f32.mrb[0].mxu0
      %792 = vmatprep.mubr.bf16.mxu0 0
      %793 = vmatmul.mubr.bf16.gmra.mrb[0].mxu0 %v669
      %v794 = vpop.f32.mrb[0].mxu0
      %v795 = vadd.f32 0.0, %v794
      %v796 = vpop.f32.mrb[0].mxu0
      %v797 = vpop.f32.mrb[0].mxu0
      %v798 = vadd.f32 0.0, %v797
      %v799 = vpop.f32.mrb[0].mxu0
      %800 = vmatprep.mubr.bf16.mxu0 0
      %801 = vmatmul.mubr.bf16.gmra.mrb[0].mxu0 %v672
      %v802 = vpop.f32.mrb[0].mxu0
      %v803 = vadd.f32 0.0, %v802
      %v804 = vpop.f32.mrb[0].mxu0
      %v805 = vpop.f32.mrb[0].mxu0
      %v806 = vadd.f32 0.0, %v805
      %v807 = vpop.f32.mrb[0].mxu0
      %808 = vmatprep.mubr.bf16.mxu0 0
      %809 = vmatmul.mubr.bf16.gmra.mrb[0].mxu0 %v675
      %v810 = vpop.f32.mrb[0].mxu0
      %v811 = vadd.f32 0.0, %v810
      %v812 = vpop.f32.mrb[0].mxu0
      %v813 = vpop.f32.mrb[0].mxu0
      %v814 = vadd.f32 0.0, %v813
      %v815 = vpop.f32.mrb[0].mxu0
      %816 = vmatprep.mubr.bf16.mxu0 0
      %817 = vmatmul.mubr.bf16.gmra.mrb[0].mxu0 %v678
      %v818 = vpop.f32.mrb[0].mxu0
      %v819 = vadd.f32 0.0, %v818
      %v820 = vpop.f32.mrb[0].mxu0
      %v821 = vpop.f32.mrb[0].mxu0
      %v822 = vadd.f32 0.0, %v821
      %v823 = vpop.f32.mrb[0].mxu0
      %824 = vmatprep.mubr.bf16.mxu0 0
      %825 = vmatmul.mubr.bf16.gmra.mrb[0].mxu0 %v681
      %v826 = vpop.f32.mrb[0].mxu0
      %v827 = vadd.f32 0.0, %v826
      %v828 = vpop.f32.mrb[0].mxu0
      %v829 = vpop.f32.mrb[0].mxu0
      %v830 = vadd.f32 0.0, %v829
      %v831 = vpop.f32.mrb[0].mxu0
      %832 = vmatprep.mubr.bf16.mxu0 0
      %833 = vmatmul.mubr.bf16.gmra.mrb[0].mxu0 %v684
      %v834 = vpop.f32.mrb[0].mxu0
      %v835 = vadd.f32 0.0, %v834
      %v836 = vpop.f32.mrb[0].mxu0
      %v837 = vpop.f32.mrb[0].mxu0
      %v838 = vadd.f32 0.0, %v837
      %v839 = vpop.f32.mrb[0].mxu0
      %840 = vmatprep.mubr.bf16.mxu0 0
      %841 = vmatmul.mubr.bf16.gmra.mrb[0].mxu0 %v687
      %v842 = vpop.f32.mrb[0].mxu0
      %v843 = vadd.f32 0.0, %v842
      %v844 = vpop.f32.mrb[0].mxu0
      %v845 = vpop.f32.mrb[0].mxu0
      %v846 = vadd.f32 0.0, %v845
      %v847 = vpop.f32.mrb[0].mxu0
      %848 = vmatprep.mubr.bf16.mxu0 0
      %849 = vmatmul.mubr.bf16.gmra.mrb[0].mxu0 %v690
      %v850 = vpop.f32.mrb[0].mxu0
      %v851 = vadd.f32 0.0, %v850
      %v852 = vpop.f32.mrb[0].mxu0
      %v853 = vpop.f32.mrb[0].mxu0
      %v854 = vadd.f32 0.0, %v853
      %v855 = vpop.f32.mrb[0].mxu0
      %856 = vdwg.mxu0
      %v858 = vsel %vm643, %v604, 0
      %v861 = vsel %vm692, %v640, 0
      %863 = vmatprep.subr.bf16.mxu0 0
      %864 = vmatpush1.bf16.msra.mxu0 %v861
      %865 = vmatprep.subr.bf16.mxu0 0
      %866 = vmatpush1.bf16.msra.mxu0 0
      %867 = vmatprep.subr.bf16.mxu0 0
      %868 = vmatpush1.bf16.msra.mxu0 0
      %869 = vmatprep.subr.bf16.mxu0 0
      %870 = vmatpush1.bf16.msra.mxu0 0
      %871 = vmatprep.subr.bf16.mxu0 0
      %872 = vmatpush1.bf16.msra.mxu0 0
      %873 = vmatprep.subr.bf16.mxu0 0
      %874 = vmatpush1.bf16.msra.mxu0 0
      %875 = vmatprep.subr.bf16.mxu0 0
      %876 = vmatpush1.bf16.msra.mxu0 0
      %877 = vmatprep.subr.bf16.mxu0 0
      %878 = vmatpush1.bf16.msra.mxu0 0
      %879 = vmatprep.subr.bf16.mxu0 0
      %880 = vmatpush1.bf16.msra.mxu0 0
      %881 = vmatprep.subr.bf16.mxu0 0
      %882 = vmatpush1.bf16.msra.mxu0 0
      %883 = vmatprep.subr.bf16.mxu0 0
      %884 = vmatpush1.bf16.msra.mxu0 0
      %885 = vmatprep.subr.bf16.mxu0 0
      %886 = vmatpush1.bf16.msra.mxu0 0
      %887 = vmatprep.subr.bf16.mxu0 0
      %888 = vmatpush1.bf16.msra.mxu0 0
      %889 = vmatprep.subr.bf16.mxu0 0
      %890 = vmatpush1.bf16.msra.mxu0 0
      %891 = vmatprep.subr.bf16.mxu0 0
      %892 = vmatpush1.bf16.msra.mxu0 0
      %893 = vmatprep.subr.bf16.mxu0 0
      %894 = vmatpush1.bf16.msra.mxu0 0
      %895 = vmatprep.mubr.bf16.mxu0 0
      %896 = vmatmul.mubr.bf16.gmra.mrb[0].mxu0 %v858
      %v897 = vpop.f32.mrb[0].mxu0
      %v898 = vadd.f32 %v731, %v897
      %v899 = vpop.f32.mrb[0].mxu0
      %v900 = vpop.f32.mrb[0].mxu0
      %v901 = vadd.f32 %v734, %v900
      %v902 = vpop.f32.mrb[0].mxu0
      %903 = vmatprep.mubr.bf16.mxu0 0
      %904 = vmatmul.mubr.bf16.gmra.mrb[0].mxu0 %v645
      %v905 = vpop.f32.mrb[0].mxu0
      %v906 = vadd.f32 %v739, %v905
      %v907 = vpop.f32.mrb[0].mxu0
      %v908 = vpop.f32.mrb[0].mxu0
      %v909 = vadd.f32 %v742, %v908
      %v910 = vpop.f32.mrb[0].mxu0
      %911 = vmatprep.mubr.bf16.mxu0 0
      %912 = vmatmul.mubr.bf16.gmra.mrb[0].mxu0 %v648
      %v913 = vpop.f32.mrb[0].mxu0
      %v914 = vadd.f32 %v747, %v913
      %v915 = vpop.f32.mrb[0].mxu0
      %v916 = vpop.f32.mrb[0].mxu0
      %v917 = vadd.f32 %v750, %v916
      %v918 = vpop.f32.mrb[0].mxu0
      %919 = vmatprep.mubr.bf16.mxu0 0
      %920 = vmatmul.mubr.bf16.gmra.mrb[0].mxu0 %v651
      %v921 = vpop.f32.mrb[0].mxu0
      %v922 = vadd.f32 %v755, %v921
      %v923 = vpop.f32.mrb[0].mxu0
      %v924 = vpop.f32.mrb[0].mxu0
      %v925 = vadd.f32 %v758, %v924
      %v926 = vpop.f32.mrb[0].mxu0
      %927 = vmatprep.mubr.bf16.mxu0 0
      %928 = vmatmul.mubr.bf16.gmra.mrb[0].mxu0 %v654
      %v929 = vpop.f32.mrb[0].mxu0
      %v930 = vadd.f32 %v763, %v929
      %v931 = vpop.f32.mrb[0].mxu0
      %v932 = vpop.f32.mrb[0].mxu0
      %v933 = vadd.f32 %v766, %v932
      %v934 = vpop.f32.mrb[0].mxu0
      %935 = vmatprep.mubr.bf16.mxu0 0
      %936 = vmatmul.mubr.bf16.gmra.mrb[0].mxu0 %v657
      %v937 = vpop.f32.mrb[0].mxu0
      %v938 = vadd.f32 %v771, %v937
      %v939 = vpop.f32.mrb[0].mxu0
      %v940 = vpop.f32.mrb[0].mxu0
      %v941 = vadd.f32 %v774, %v940
      %v942 = vpop.f32.mrb[0].mxu0
      %943 = vmatprep.mubr.bf16.mxu0 0
      %944 = vmatmul.mubr.bf16.gmra.mrb[0].mxu0 %v660
      %v945 = vpop.f32.mrb[0].mxu0
      %v946 = vadd.f32 %v779, %v945
      %v947 = vpop.f32.mrb[0].mxu0
      %v948 = vpop.f32.mrb[0].mxu0
      %v949 = vadd.f32 %v782, %v948
      %v950 = vpop.f32.mrb[0].mxu0
      %951 = vmatprep.mubr.bf16.mxu0 0
      %952 = vmatmul.mubr.bf16.gmra.mrb[0].mxu0 %v663
      %v953 = vpop.f32.mrb[0].mxu0
      %v954 = vadd.f32 %v787, %v953
      %v955 = vpop.f32.mrb[0].mxu0
      %v956 = vpop.f32.mrb[0].mxu0
      %v957 = vadd.f32 %v790, %v956
      %v958 = vpop.f32.mrb[0].mxu0
      %959 = vmatprep.mubr.bf16.mxu0 0
      %960 = vmatmul.mubr.bf16.gmra.mrb[0].mxu0 %v666
      %v961 = vpop.f32.mrb[0].mxu0
      %v962 = vadd.f32 %v795, %v961
      %v963 = vpop.f32.mrb[0].mxu0
      %v964 = vpop.f32.mrb[0].mxu0
      %v965 = vadd.f32 %v798, %v964
      %v966 = vpop.f32.mrb[0].mxu0
      %967 = vmatprep.mubr.bf16.mxu0 0
      %968 = vmatmul.mubr.bf16.gmra.mrb[0].mxu0 %v669
      %v969 = vpop.f32.mrb[0].mxu0
      %v970 = vadd.f32 %v803, %v969
      %v971 = vpop.f32.mrb[0].mxu0
      %v972 = vpop.f32.mrb[0].mxu0
      %v973 = vadd.f32 %v806, %v972
      %v974 = vpop.f32.mrb[0].mxu0
      %975 = vmatprep.mubr.bf16.mxu0 0
      %976 = vmatmul.mubr.bf16.gmra.mrb[0].mxu0 %v672
      %v977 = vpop.f32.mrb[0].mxu0
      %v978 = vadd.f32 %v811, %v977
      %v979 = vpop.f32.mrb[0].mxu0
      %v980 = vpop.f32.mrb[0].mxu0
      %v981 = vadd.f32 %v814, %v980
      %v982 = vpop.f32.mrb[0].mxu0
      %983 = vmatprep.mubr.bf16.mxu0 0
      %984 = vmatmul.mubr.bf16.gmra.mrb[0].mxu0 %v675
      %v985 = vpop.f32.mrb[0].mxu0
      %v986 = vadd.f32 %v819, %v985
      %v987 = vpop.f32.mrb[0].mxu0
      %v988 = vpop.f32.mrb[0].mxu0
      %v989 = vadd.f32 %v822, %v988
      %v990 = vpop.f32.mrb[0].mxu0
      %991 = vmatprep.mubr.bf16.mxu0 0
      %992 = vmatmul.mubr.bf16.gmra.mrb[0].mxu0 %v678
      %v993 = vpop.f32.mrb[0].mxu0
      %v994 = vadd.f32 %v827, %v993
      %v995 = vpop.f32.mrb[0].mxu0
      %v996 = vpop.f32.mrb[0].mxu0
      %v997 = vadd.f32 %v830, %v996
      %v998 = vpop.f32.mrb[0].mxu0
      %999 = vmatprep.mubr.bf16.mxu0 0
      %1000 = vmatmul.mubr.bf16.gmra.mrb[0].mxu0 %v681
      %v1001 = vpop.f32.mrb[0].mxu0
      %v1002 = vadd.f32 %v835, %v1001
      %v1003 = vpop.f32.mrb[0].mxu0
      %v1004 = vpop.f32.mrb[0].mxu0
      %v1005 = vadd.f32 %v838, %v1004
      %v1006 = vpop.f32.mrb[0].mxu0
      %1007 = vmatprep.mubr.bf16.mxu0 0
      %1008 = vmatmul.mubr.bf16.gmra.mrb[0].mxu0 %v684
      %v1009 = vpop.f32.mrb[0].mxu0
      %v1010 = vadd.f32 %v843, %v1009
      %v1011 = vpop.f32.mrb[0].mxu0
      %v1012 = vpop.f32.mrb[0].mxu0
      %v1013 = vadd.f32 %v846, %v1012
      %v1014 = vpop.f32.mrb[0].mxu0
      %1015 = vmatprep.mubr.bf16.mxu0 0
      %1016 = vmatmul.mubr.bf16.gmra.mrb[0].mxu0 %v687
      %v1017 = vpop.f32.mrb[0].mxu0
      %v1018 = vadd.f32 %v851, %v1017
      %v1019 = vpop.f32.mrb[0].mxu0
      %v1020 = vpop.f32.mrb[0].mxu0
      %v1021 = vadd.f32 %v854, %v1020
      %v1022 = vpop.f32.mrb[0].mxu0
      %1023 = vdwg.mxu0
      %s1024 = scalar_lea.vmem %s1, 24
      %v1025 = vld [vmem:[%s1024] sm:$0xf]
      %v1027 = vsel %vm643, %v638, 0
      %v1030 = vsel %vm692, %v1025, 0
      %1032 = vmatprep.subr.bf16.mxu0 0
      %1033 = vmatpush1.bf16.msra.mxu0 %v1030
      %1034 = vmatprep.subr.bf16.mxu0 0
      %1035 = vmatpush1.bf16.msra.mxu0 0
      %1036 = vmatprep.subr.bf16.mxu0 0
      %1037 = vmatpush1.bf16.msra.mxu0 0
      %1038 = vmatprep.subr.bf16.mxu0 0
      %1039 = vmatpush1.bf16.msra.mxu0 0
      %1040 = vmatprep.subr.bf16.mxu0 0
      %1041 = vmatpush1.bf16.msra.mxu0 0
      %1042 = vmatprep.subr.bf16.mxu0 0
      %1043 = vmatpush1.bf16.msra.mxu0 0
      %1044 = vmatprep.subr.bf16.mxu0 0
      %1045 = vmatpush1.bf16.msra.mxu0 0
      %1046 = vmatprep.subr.bf16.mxu0 0
      %1047 = vmatpush1.bf16.msra.mxu0 0
      %1048 = vmatprep.subr.bf16.mxu0 0
      %1049 = vmatpush1.bf16.msra.mxu0 0
      %1050 = vmatprep.subr.bf16.mxu0 0
      %1051 = vmatpush1.bf16.msra.mxu0 0
      %1052 = vmatprep.subr.bf16.mxu0 0
      %1053 = vmatpush1.bf16.msra.mxu0 0
      %1054 = vmatprep.subr.bf16.mxu0 0
      %1055 = vmatpush1.bf16.msra.mxu0 0
      %1056 = vmatprep.subr.bf16.mxu0 0
      %1057 = vmatpush1.bf16.msra.mxu0 0
      %1058 = vmatprep.subr.bf16.mxu0 0
      %1059 = vmatpush1.bf16.msra.mxu0 0
      %1060 = vmatprep.subr.bf16.mxu0 0
      %1061 = vmatpush1.bf16.msra.mxu0 0
      %1062 = vmatprep.subr.bf16.mxu0 0
      %1063 = vmatpush1.bf16.msra.mxu0 0
      %1064 = vmatprep.mubr.bf16.mxu0 0
      %1065 = vmatmul.mubr.bf16.gmra.mrb[0].mxu0 %v648
      %v1066 = vpop.f32.mrb[0].mxu0
      %v1067 = vadd.f32 0.0, %v1066
      %v1068 = vpop.f32.mrb[0].mxu0
      %v1069 = vpop.f32.mrb[0].mxu0
      %v1070 = vadd.f32 0.0, %v1069
      %v1071 = vpop.f32.mrb[0].mxu0
      %1072 = vmatprep.mubr.bf16.mxu0 0
      %1073 = vmatmul.mubr.bf16.gmra.mrb[0].mxu0 %v651
      %v1074 = vpop.f32.mrb[0].mxu0
      %v1075 = vadd.f32 0.0, %v1074
      %v1076 = vpop.f32.mrb[0].mxu0
      %v1077 = vpop.f32.mrb[0].mxu0
      %v1078 = vadd.f32 0.0, %v1077
      %v1079 = vpop.f32.mrb[0].mxu0
      %1080 = vmatprep.mubr.bf16.mxu0 0
      %1081 = vmatmul.mubr.bf16.gmra.mrb[0].mxu0 %v654
      %v1082 = vpop.f32.mrb[0].mxu0
      %v1083 = vadd.f32 0.0, %v1082
      %v1084 = vpop.f32.mrb[0].mxu0
      %v1085 = vpop.f32.mrb[0].mxu0
      %v1086 = vadd.f32 0.0, %v1085
      %v1087 = vpop.f32.mrb[0].mxu0
      %1088 = vmatprep.mubr.bf16.mxu0 0
      %1089 = vmatmul.mubr.bf16.gmra.mrb[0].mxu0 %v657
      %v1090 = vpop.f32.mrb[0].mxu0
      %v1091 = vadd.f32 0.0, %v1090
      %v1092 = vpop.f32.mrb[0].mxu0
      %v1093 = vpop.f32.mrb[0].mxu0
      %v1094 = vadd.f32 0.0, %v1093
      %v1095 = vpop.f32.mrb[0].mxu0
      %1096 = vmatprep.mubr.bf16.mxu0 0
      %1097 = vmatmul.mubr.bf16.gmra.mrb[0].mxu0 %v660
      %v1098 = vpop.f32.mrb[0].mxu0
      %v1099 = vadd.f32 0.0, %v1098
      %v1100 = vpop.f32.mrb[0].mxu0
      %v1101 = vpop.f32.mrb[0].mxu0
      %v1102 = vadd.f32 0.0, %v1101
      %v1103 = vpop.f32.mrb[0].mxu0
      %1104 = vmatprep.mubr.bf16.mxu0 0
      %1105 = vmatmul.mubr.bf16.gmra.mrb[0].mxu0 %v663
      %v1106 = vpop.f32.mrb[0].mxu0
      %v1107 = vadd.f32 0.0, %v1106
      %v1108 = vpop.f32.mrb[0].mxu0
      %v1109 = vpop.f32.mrb[0].mxu0
      %v1110 = vadd.f32 0.0, %v1109
      %v1111 = vpop.f32.mrb[0].mxu0
      %1112 = vmatprep.mubr.bf16.mxu0 0
      %1113 = vmatmul.mubr.bf16.gmra.mrb[0].mxu0 %v666
      %v1114 = vpop.f32.mrb[0].mxu0
      %v1115 = vadd.f32 0.0, %v1114
      %v1116 = vpop.f32.mrb[0].mxu0
      %v1117 = vpop.f32.mrb[0].mxu0
      %v1118 = vadd.f32 0.0, %v1117
      %v1119 = vpop.f32.mrb[0].mxu0
      %1120 = vmatprep.mubr.bf16.mxu0 0
      %1121 = vmatmul.mubr.bf16.gmra.mrb[0].mxu0 %v669
      %v1122 = vpop.f32.mrb[0].mxu0
      %v1123 = vadd.f32 0.0, %v1122
      %v1124 = vpop.f32.mrb[0].mxu0
      %v1125 = vpop.f32.mrb[0].mxu0
      %v1126 = vadd.f32 0.0, %v1125
      %v1127 = vpop.f32.mrb[0].mxu0
      %1128 = vmatprep.mubr.bf16.mxu0 0
      %1129 = vmatmul.mubr.bf16.gmra.mrb[0].mxu0 %v672
      %v1130 = vpop.f32.mrb[0].mxu0
      %v1131 = vadd.f32 0.0, %v1130
      %v1132 = vpop.f32.mrb[0].mxu0
      %v1133 = vpop.f32.mrb[0].mxu0
      %v1134 = vadd.f32 0.0, %v1133
      %v1135 = vpop.f32.mrb[0].mxu0
      %1136 = vmatprep.mubr.bf16.mxu0 0
      %1137 = vmatmul.mubr.bf16.gmra.mrb[0].mxu0 %v675
      %v1138 = vpop.f32.mrb[0].mxu0
      %v1139 = vadd.f32 0.0, %v1138
      %v1140 = vpop.f32.mrb[0].mxu0
      %v1141 = vpop.f32.mrb[0].mxu0
      %v1142 = vadd.f32 0.0, %v1141
      %v1143 = vpop.f32.mrb[0].mxu0
      %1144 = vmatprep.mubr.bf16.mxu0 0
      %1145 = vmatmul.mubr.bf16.gmra.mrb[0].mxu0 %v678
      %v1146 = vpop.f32.mrb[0].mxu0
      %v1147 = vadd.f32 0.0, %v1146
      %v1148 = vpop.f32.mrb[0].mxu0
      %v1149 = vpop.f32.mrb[0].mxu0
      %v1150 = vadd.f32 0.0, %v1149
      %v1151 = vpop.f32.mrb[0].mxu0
      %1152 = vmatprep.mubr.bf16.mxu0 0
      %1153 = vmatmul.mubr.bf16.gmra.mrb[0].mxu0 %v681
      %v1154 = vpop.f32.mrb[0].mxu0
      %v1155 = vadd.f32 0.0, %v1154
      %v1156 = vpop.f32.mrb[0].mxu0
      %v1157 = vpop.f32.mrb[0].mxu0
      %v1158 = vadd.f32 0.0, %v1157
      %v1159 = vpop.f32.mrb[0].mxu0
      %1160 = vmatprep.mubr.bf16.mxu0 0
      %1161 = vmatmul.mubr.bf16.gmra.mrb[0].mxu0 %v684
      %v1162 = vpop.f32.mrb[0].mxu0
      %v1163 = vadd.f32 0.0, %v1162
      %v1164 = vpop.f32.mrb[0].mxu0
      %v1165 = vpop.f32.mrb[0].mxu0
      %v1166 = vadd.f32 0.0, %v1165
      %v1167 = vpop.f32.mrb[0].mxu0
      %1168 = vmatprep.mubr.bf16.mxu0 0
      %1169 = vmatmul.mubr.bf16.gmra.mrb[0].mxu0 %v687
      %v1170 = vpop.f32.mrb[0].mxu0
      %v1171 = vadd.f32 0.0, %v1170
      %v1172 = vpop.f32.mrb[0].mxu0
      %v1173 = vpop.f32.mrb[0].mxu0
      %v1174 = vadd.f32 0.0, %v1173
      %v1175 = vpop.f32.mrb[0].mxu0
      %1176 = vmatprep.mubr.bf16.mxu0 0
      %1177 = vmatmul.mubr.bf16.gmra.mrb[0].mxu0 %v690
      %v1178 = vpop.f32.mrb[0].mxu0
      %v1179 = vadd.f32 0.0, %v1178
      %v1180 = vpop.f32.mrb[0].mxu0
      %v1181 = vpop.f32.mrb[0].mxu0
      %v1182 = vadd.f32 0.0, %v1181
      %v1183 = vpop.f32.mrb[0].mxu0
      %1184 = vmatprep.mubr.bf16.mxu0 0
      %1185 = vmatmul.mubr.bf16.gmra.mrb[0].mxu0 %v1027
      %v1186 = vpop.f32.mrb[0].mxu0
      %v1187 = vadd.f32 0.0, %v1186
      %v1188 = vpop.f32.mrb[0].mxu0
      %v1189 = vpop.f32.mrb[0].mxu0
      %v1190 = vadd.f32 0.0, %v1189
      %v1191 = vpop.f32.mrb[0].mxu0
      %1192 = vdwg.mxu0
      %v1193 = vadd.f32 %v898, %v1067
      %v1194 = vadd.f32 %v901, %v1070
      %v1195 = vadd.f32 %v906, %v1075
      %v1196 = vadd.f32 %v909, %v1078
      %v1197 = vadd.f32 %v914, %v1083
      %v1198 = vadd.f32 %v917, %v1086
      %v1199 = vadd.f32 %v922, %v1091
      %v1200 = vadd.f32 %v925, %v1094
      %v1201 = vadd.f32 %v930, %v1099
      %v1202 = vadd.f32 %v933, %v1102
      %v1203 = vadd.f32 %v938, %v1107
      %v1204 = vadd.f32 %v941, %v1110
      %v1205 = vadd.f32 %v946, %v1115
      %v1206 = vadd.f32 %v949, %v1118
      %v1207 = vadd.f32 %v954, %v1123
      %v1208 = vadd.f32 %v957, %v1126
      %v1209 = vadd.f32 %v962, %v1131
      %v1210 = vadd.f32 %v965, %v1134
      %v1211 = vadd.f32 %v970, %v1139
      %v1212 = vadd.f32 %v973, %v1142
      %v1213 = vadd.f32 %v978, %v1147
      %v1214 = vadd.f32 %v981, %v1150
      %v1215 = vadd.f32 %v986, %v1155
      %v1216 = vadd.f32 %v989, %v1158
      %v1217 = vadd.f32 %v994, %v1163
      %v1218 = vadd.f32 %v997, %v1166
      %v1219 = vadd.f32 %v1002, %v1171
      %v1220 = vadd.f32 %v1005, %v1174
      %v1221 = vadd.f32 %v1010, %v1179
      %v1222 = vadd.f32 %v1013, %v1182
      %v1223 = vadd.f32 %v1018, %v1187
      %v1224 = vadd.f32 %v1021, %v1190
      %vm1225 = vsmask.f32 7424
      %v1226 = vshrl.u32 %v604, 16
      %v1228 = vshll.u32 %v604, 16
      %v1230 = vrot.slane %v1228, 1
      %v1231 = vor.u32 %v1226, %v1230
      %v1233 = vshll.u32 %v605, 16
      %v1235 = vrot.slane %v1233, 1
      %v1236 = vsel %vm1225, %v1231, %v1235
      %v1237 = vshrl.u32 %v606, 16
      %v1239 = vshll.u32 %v606, 16
      %v1241 = vrot.slane %v1239, 1
      %v1242 = vor.u32 %v1237, %v1241
      %v1244 = vshll.u32 %v607, 16
      %v1246 = vrot.slane %v1244, 1
      %v1247 = vsel %vm1225, %v1242, %v1246
      %v1248 = vshrl.u32 %v608, 16
      %v1250 = vshll.u32 %v608, 16
      %v1252 = vrot.slane %v1250, 1
      %v1253 = vor.u32 %v1248, %v1252
      %v1255 = vshll.u32 %v609, 16
      %v1257 = vrot.slane %v1255, 1
      %v1258 = vsel %vm1225, %v1253, %v1257
      %v1259 = vshrl.u32 %v610, 16
      %v1261 = vshll.u32 %v610, 16
      %v1263 = vrot.slane %v1261, 1
      %v1264 = vor.u32 %v1259, %v1263
      %v1266 = vshll.u32 %v611, 16
      %v1268 = vrot.slane %v1266, 1
      %v1269 = vsel %vm1225, %v1264, %v1268
      %v1270 = vshrl.u32 %v612, 16
      %v1272 = vshll.u32 %v612, 16
      %v1274 = vrot.slane %v1272, 1
      %v1275 = vor.u32 %v1270, %v1274
      %v1277 = vshll.u32 %v613, 16
      %v1279 = vrot.slane %v1277, 1
      %v1280 = vsel %vm1225, %v1275, %v1279
      %v1281 = vshrl.u32 %v614, 16
      %v1283 = vshll.u32 %v614, 16
      %v1285 = vrot.slane %v1283, 1
      %v1286 = vor.u32 %v1281, %v1285
      %v1288 = vshll.u32 %v615, 16
      %v1290 = vrot.slane %v1288, 1
      %v1291 = vsel %vm1225, %v1286, %v1290
      %v1292 = vshrl.u32 %v616, 16
      %v1294 = vshll.u32 %v616, 16
      %v1296 = vrot.slane %v1294, 1
      %v1297 = vor.u32 %v1292, %v1296
      %v1299 = vshll.u32 %v617, 16
      %v1301 = vrot.slane %v1299, 1
      %v1302 = vsel %vm1225, %v1297, %v1301
      %v1303 = vshrl.u32 %v618, 16
      %v1305 = vshll.u32 %v618, 16
      %v1307 = vrot.slane %v1305, 1
      %v1308 = vor.u32 %v1303, %v1307
      %v1310 = vshll.u32 %v619, 16
      %v1312 = vrot.slane %v1310, 1
      %v1313 = vsel %vm1225, %v1308, %v1312
      %v1314 = vshrl.u32 %v620, 16
      %v1316 = vshll.u32 %v620, 16
      %v1318 = vrot.slane %v1316, 1
      %v1319 = vor.u32 %v1314, %v1318
      %v1321 = vshll.u32 %v621, 16
      %v1323 = vrot.slane %v1321, 1
      %v1324 = vsel %vm1225, %v1319, %v1323
      %v1325 = vshrl.u32 %v622, 16
      %v1327 = vshll.u32 %v622, 16
      %v1329 = vrot.slane %v1327, 1
      %v1330 = vor.u32 %v1325, %v1329
      %v1332 = vshll.u32 %v623, 16
      %v1334 = vrot.slane %v1332, 1
      %v1335 = vsel %vm1225, %v1330, %v1334
      %v1336 = vshrl.u32 %v624, 16
      %v1338 = vshll.u32 %v624, 16
      %v1340 = vrot.slane %v1338, 1
      %v1341 = vor.u32 %v1336, %v1340
      %v1343 = vshll.u32 %v625, 16
      %v1345 = vrot.slane %v1343, 1
      %v1346 = vsel %vm1225, %v1341, %v1345
      %v1347 = vshrl.u32 %v626, 16
      %v1349 = vshll.u32 %v626, 16
      %v1351 = vrot.slane %v1349, 1
      %v1352 = vor.u32 %v1347, %v1351
      %v1354 = vshll.u32 %v627, 16
      %v1356 = vrot.slane %v1354, 1
      %v1357 = vsel %vm1225, %v1352, %v1356
      %v1358 = vshrl.u32 %v628, 16
      %v1360 = vshll.u32 %v628, 16
      %v1362 = vrot.slane %v1360, 1
      %v1363 = vor.u32 %v1358, %v1362
      %v1365 = vshll.u32 %v629, 16
      %v1367 = vrot.slane %v1365, 1
      %v1368 = vsel %vm1225, %v1363, %v1367
      %v1369 = vshrl.u32 %v630, 16
      %v1371 = vshll.u32 %v630, 16
      %v1373 = vrot.slane %v1371, 1
      %v1374 = vor.u32 %v1369, %v1373
      %v1376 = vshll.u32 %v631, 16
      %v1378 = vrot.slane %v1376, 1
      %v1379 = vsel %vm1225, %v1374, %v1378
      %v1380 = vshrl.u32 %v632, 16
      %v1382 = vshll.u32 %v632, 16
      %v1384 = vrot.slane %v1382, 1
      %v1385 = vor.u32 %v1380, %v1384
      %v1387 = vshll.u32 %v633, 16
      %v1389 = vrot.slane %v1387, 1
      %v1390 = vsel %vm1225, %v1385, %v1389
      %v1391 = vshrl.u32 %v634, 16
      %v1393 = vshll.u32 %v634, 16
      %v1395 = vrot.slane %v1393, 1
      %v1396 = vor.u32 %v1391, %v1395
      %v1398 = vshll.u32 %v635, 16
      %v1400 = vrot.slane %v1398, 1
      %v1401 = vsel %vm1225, %v1396, %v1400
      %s1402 = scalar_lea.vmem %s1, 4
      %v1403 = vld [vmem:[%s1402] sm:$0xf]
      %v1405 = vsel %vm643, %v1236, 0
      %v1408 = vsel %vm643, %v1247, 0
      %v1411 = vsel %vm643, %v1258, 0
      %v1414 = vsel %vm643, %v1269, 0
      %v1417 = vsel %vm643, %v1280, 0
      %v1420 = vsel %vm643, %v1291, 0
      %v1423 = vsel %vm643, %v1302, 0
      %v1426 = vsel %vm643, %v1313, 0
      %v1429 = vsel %vm643, %v1324, 0
      %v1432 = vsel %vm643, %v1335, 0
      %v1435 = vsel %vm643, %v1346, 0
      %v1438 = vsel %vm643, %v1357, 0
      %v1441 = vsel %vm643, %v1368, 0
      %v1444 = vsel %vm643, %v1379, 0
      %v1447 = vsel %vm643, %v1390, 0
      %v1450 = vsel %vm643, %v1401, 0
      %v1453 = vsel %vm692, %v1403, 0
      %1455 = vmatprep.subr.bf16.mxu0 0
      %1456 = vmatpush1.bf16.msra.mxu0 %v1453
      %1457 = vmatprep.subr.bf16.mxu0 0
      %1458 = vmatpush1.bf16.msra.mxu0 0
      %1459 = vmatprep.subr.bf16.mxu0 0
      %1460 = vmatpush1.bf16.msra.mxu0 0
      %1461 = vmatprep.subr.bf16.mxu0 0
      %1462 = vmatpush1.bf16.msra.mxu0 0
      %1463 = vmatprep.subr.bf16.mxu0 0
      %1464 = vmatpush1.bf16.msra.mxu0 0
      %1465 = vmatprep.subr.bf16.mxu0 0
      %1466 = vmatpush1.bf16.msra.mxu0 0
      %1467 = vmatprep.subr.bf16.mxu0 0
      %1468 = vmatpush1.bf16.msra.mxu0 0
      %1469 = vmatprep.subr.bf16.mxu0 0
      %1470 = vmatpush1.bf16.msra.mxu0 0
      %1471 = vmatprep.subr.bf16.mxu0 0
      %1472 = vmatpush1.bf16.msra.mxu0 0
      %1473 = vmatprep.subr.bf16.mxu0 0
      %1474 = vmatpush1.bf16.msra.mxu0 0
      %1475 = vmatprep.subr.bf16.mxu0 0
      %1476 = vmatpush1.bf16.msra.mxu0 0
      %1477 = vmatprep.subr.bf16.mxu0 0
      %1478 = vmatpush1.bf16.msra.mxu0 0
      %1479 = vmatprep.subr.bf16.mxu0 0
      %1480 = vmatpush1.bf16.msra.mxu0 0
      %1481 = vmatprep.subr.bf16.mxu0 0
      %1482 = vmatpush1.bf16.msra.mxu0 0
      %1483 = vmatprep.subr.bf16.mxu0 0
      %1484 = vmatpush1.bf16.msra.mxu0 0
      %1485 = vmatprep.subr.bf16.mxu0 0
      %1486 = vmatpush1.bf16.msra.mxu0 0
      %1487 = vmatprep.mubr.bf16.mxu0 0
      %1488 = vmatmul.mubr.bf16.gmra.mrb[0].mxu0 %v1405
      %v1489 = vpop.f32.mrb[0].mxu0
      %v1490 = vadd.f32 0.0, %v1489
      %v1491 = vpop.f32.mrb[0].mxu0
      %v1492 = vpop.f32.mrb[0].mxu0
      %v1493 = vadd.f32 0.0, %v1492
      %v1494 = vpop.f32.mrb[0].mxu0
      %1495 = vmatprep.mubr.bf16.mxu0 0
      %1496 = vmatmul.mubr.bf16.gmra.mrb[0].mxu0 %v1408
      %v1497 = vpop.f32.mrb[0].mxu0
      %v1498 = vadd.f32 0.0, %v1497
      %v1499 = vpop.f32.mrb[0].mxu0
      %v1500 = vpop.f32.mrb[0].mxu0
      %v1501 = vadd.f32 0.0, %v1500
      %v1502 = vpop.f32.mrb[0].mxu0
      %1503 = vmatprep.mubr.bf16.mxu0 0
      %1504 = vmatmul.mubr.bf16.gmra.mrb[0].mxu0 %v1411
      %v1505 = vpop.f32.mrb[0].mxu0
      %v1506 = vadd.f32 0.0, %v1505
      %v1507 = vpop.f32.mrb[0].mxu0
      %v1508 = vpop.f32.mrb[0].mxu0
      %v1509 = vadd.f32 0.0, %v1508
      %v1510 = vpop.f32.mrb[0].mxu0
      %1511 = vmatprep.mubr.bf16.mxu0 0
      %1512 = vmatmul.mubr.bf16.gmra.mrb[0].mxu0 %v1414
      %v1513 = vpop.f32.mrb[0].mxu0
      %v1514 = vadd.f32 0.0, %v1513
      %v1515 = vpop.f32.mrb[0].mxu0
      %v1516 = vpop.f32.mrb[0].mxu0
      %v1517 = vadd.f32 0.0, %v1516
      %v1518 = vpop.f32.mrb[0].mxu0
      %1519 = vmatprep.mubr.bf16.mxu0 0
      %1520 = vmatmul.mubr.bf16.gmra.mrb[0].mxu0 %v1417
      %v1521 = vpop.f32.mrb[0].mxu0
      %v1522 = vadd.f32 0.0, %v1521
      %v1523 = vpop.f32.mrb[0].mxu0
      %v1524 = vpop.f32.mrb[0].mxu0
      %v1525 = vadd.f32 0.0, %v1524
      %v1526 = vpop.f32.mrb[0].mxu0
      %1527 = vmatprep.mubr.bf16.mxu0 0
      %1528 = vmatmul.mubr.bf16.gmra.mrb[0].mxu0 %v1420
      %v1529 = vpop.f32.mrb[0].mxu0
      %v1530 = vadd.f32 0.0, %v1529
      %v1531 = vpop.f32.mrb[0].mxu0
      %v1532 = vpop.f32.mrb[0].mxu0
      %v1533 = vadd.f32 0.0, %v1532
      %v1534 = vpop.f32.mrb[0].mxu0
      %1535 = vmatprep.mubr.bf16.mxu0 0
      %1536 = vmatmul.mubr.bf16.gmra.mrb[0].mxu0 %v1423
      %v1537 = vpop.f32.mrb[0].mxu0
      %v1538 = vadd.f32 0.0, %v1537
      %v1539 = vpop.f32.mrb[0].mxu0
      %v1540 = vpop.f32.mrb[0].mxu0
      %v1541 = vadd.f32 0.0, %v1540
      %v1542 = vpop.f32.mrb[0].mxu0
      %1543 = vmatprep.mubr.bf16.mxu0 0
      %1544 = vmatmul.mubr.bf16.gmra.mrb[0].mxu0 %v1426
      %v1545 = vpop.f32.mrb[0].mxu0
      %v1546 = vadd.f32 0.0, %v1545
      %v1547 = vpop.f32.mrb[0].mxu0
      %v1548 = vpop.f32.mrb[0].mxu0
      %v1549 = vadd.f32 0.0, %v1548
      %v1550 = vpop.f32.mrb[0].mxu0
      %1551 = vmatprep.mubr.bf16.mxu0 0
      %1552 = vmatmul.mubr.bf16.gmra.mrb[0].mxu0 %v1429
      %v1553 = vpop.f32.mrb[0].mxu0
      %v1554 = vadd.f32 0.0, %v1553
      %v1555 = vpop.f32.mrb[0].mxu0
      %v1556 = vpop.f32.mrb[0].mxu0
      %v1557 = vadd.f32 0.0, %v1556
      %v1558 = vpop.f32.mrb[0].mxu0
      %1559 = vmatprep.mubr.bf16.mxu0 0
      %1560 = vmatmul.mubr.bf16.gmra.mrb[0].mxu0 %v1432
      %v1561 = vpop.f32.mrb[0].mxu0
      %v1562 = vadd.f32 0.0, %v1561
      %v1563 = vpop.f32.mrb[0].mxu0
      %v1564 = vpop.f32.mrb[0].mxu0
      %v1565 = vadd.f32 0.0, %v1564
      %v1566 = vpop.f32.mrb[0].mxu0
      %1567 = vmatprep.mubr.bf16.mxu0 0
      %1568 = vmatmul.mubr.bf16.gmra.mrb[0].mxu0 %v1435
      %v1569 = vpop.f32.mrb[0].mxu0
      %v1570 = vadd.f32 0.0, %v1569
      %v1571 = vpop.f32.mrb[0].mxu0
      %v1572 = vpop.f32.mrb[0].mxu0
      %v1573 = vadd.f32 0.0, %v1572
      %v1574 = vpop.f32.mrb[0].mxu0
      %1575 = vmatprep.mubr.bf16.mxu0 0
      %1576 = vmatmul.mubr.bf16.gmra.mrb[0].mxu0 %v1438
      %v1577 = vpop.f32.mrb[0].mxu0
      %v1578 = vadd.f32 0.0, %v1577
      %v1579 = vpop.f32.mrb[0].mxu0
      %v1580 = vpop.f32.mrb[0].mxu0
      %v1581 = vadd.f32 0.0, %v1580
      %v1582 = vpop.f32.mrb[0].mxu0
      %1583 = vmatprep.mubr.bf16.mxu0 0
      %1584 = vmatmul.mubr.bf16.gmra.mrb[0].mxu0 %v1441
      %v1585 = vpop.f32.mrb[0].mxu0
      %v1586 = vadd.f32 0.0, %v1585
      %v1587 = vpop.f32.mrb[0].mxu0
      %v1588 = vpop.f32.mrb[0].mxu0
      %v1589 = vadd.f32 0.0, %v1588
      %v1590 = vpop.f32.mrb[0].mxu0
      %1591 = vmatprep.mubr.bf16.mxu0 0
      %1592 = vmatmul.mubr.bf16.gmra.mrb[0].mxu0 %v1444
      %v1593 = vpop.f32.mrb[0].mxu0
      %v1594 = vadd.f32 0.0, %v1593
      %v1595 = vpop.f32.mrb[0].mxu0
      %v1596 = vpop.f32.mrb[0].mxu0
      %v1597 = vadd.f32 0.0, %v1596
      %v1598 = vpop.f32.mrb[0].mxu0
      %1599 = vmatprep.mubr.bf16.mxu0 0
      %1600 = vmatmul.mubr.bf16.gmra.mrb[0].mxu0 %v1447
      %v1601 = vpop.f32.mrb[0].mxu0
      %v1602 = vadd.f32 0.0, %v1601
      %v1603 = vpop.f32.mrb[0].mxu0
      %v1604 = vpop.f32.mrb[0].mxu0
      %v1605 = vadd.f32 0.0, %v1604
      %v1606 = vpop.f32.mrb[0].mxu0
      %1607 = vmatprep.mubr.bf16.mxu0 0
      %1608 = vmatmul.mubr.bf16.gmra.mrb[0].mxu0 %v1450
      %v1609 = vpop.f32.mrb[0].mxu0
      %v1610 = vadd.f32 0.0, %v1609
      %v1611 = vpop.f32.mrb[0].mxu0
      %v1612 = vpop.f32.mrb[0].mxu0
      %v1613 = vadd.f32 0.0, %v1612
      %v1614 = vpop.f32.mrb[0].mxu0
      %1615 = vdwg.mxu0
      %v1616 = vadd.f32 %v1193, %v1490
      %v1617 = vadd.f32 %v1194, %v1493
      %v1618 = vadd.f32 %v1195, %v1498
      %v1619 = vadd.f32 %v1196, %v1501
      %v1620 = vadd.f32 %v1197, %v1506
      %v1621 = vadd.f32 %v1198, %v1509
      %v1622 = vadd.f32 %v1199, %v1514
      %v1623 = vadd.f32 %v1200, %v1517
      %v1624 = vadd.f32 %v1201, %v1522
      %v1625 = vadd.f32 %v1202, %v1525
      %v1626 = vadd.f32 %v1203, %v1530
      %v1627 = vadd.f32 %v1204, %v1533
      %v1628 = vadd.f32 %v1205, %v1538
      %v1629 = vadd.f32 %v1206, %v1541
      %v1630 = vadd.f32 %v1207, %v1546
      %v1631 = vadd.f32 %v1208, %v1549
      %v1632 = vadd.f32 %v1209, %v1554
      %v1633 = vadd.f32 %v1210, %v1557
      %v1634 = vadd.f32 %v1211, %v1562
      %v1635 = vadd.f32 %v1212, %v1565
      %v1636 = vadd.f32 %v1213, %v1570
      %v1637 = vadd.f32 %v1214, %v1573
      %v1638 = vadd.f32 %v1215, %v1578
      %v1639 = vadd.f32 %v1216, %v1581
      %v1640 = vadd.f32 %v1217, %v1586
      %v1641 = vadd.f32 %v1218, %v1589
      %v1642 = vadd.f32 %v1219, %v1594
      %v1643 = vadd.f32 %v1220, %v1597
      %v1644 = vadd.f32 %v1221, %v1602
      %v1645 = vadd.f32 %v1222, %v1605
      %v1646 = vadd.f32 %v1223, %v1610
      %v1647 = vadd.f32 %v1224, %v1613
      %v1648 = vshrl.u32 %v636, 16
      %v1650 = vshll.u32 %v636, 16
      %v1652 = vrot.slane %v1650, 1
      %v1653 = vor.u32 %v1648, %v1652
      %v1655 = vshll.u32 %v637, 16
      %v1657 = vrot.slane %v1655, 1
      %v1658 = vsel %vm1225, %v1653, %v1657
      %s1659 = scalar_lea.vmem %s1, 16
      %v1660 = vld [vmem:[%s1659] sm:$0xf]
      %v1662 = vsel %vm643, %v1658, 0
      %v1665 = vsel %vm692, %v1660, 0
      %1667 = vmatprep.subr.bf16.mxu0 0
      %1668 = vmatpush1.bf16.msra.mxu0 %v1665
      %1669 = vmatprep.subr.bf16.mxu0 0
      %1670 = vmatpush1.bf16.msra.mxu0 0
      %1671 = vmatprep.subr.bf16.mxu0 0
      %1672 = vmatpush1.bf16.msra.mxu0 0
      %1673 = vmatprep.subr.bf16.mxu0 0
      %1674 = vmatpush1.bf16.msra.mxu0 0
      %1675 = vmatprep.subr.bf16.mxu0 0
      %1676 = vmatpush1.bf16.msra.mxu0 0
      %1677 = vmatprep.subr.bf16.mxu0 0
      %1678 = vmatpush1.bf16.msra.mxu0 0
      %1679 = vmatprep.subr.bf16.mxu0 0
      %1680 = vmatpush1.bf16.msra.mxu0 0
      %1681 = vmatprep.subr.bf16.mxu0 0
      %1682 = vmatpush1.bf16.msra.mxu0 0
      %1683 = vmatprep.subr.bf16.mxu0 0
      %1684 = vmatpush1.bf16.msra.mxu0 0
      %1685 = vmatprep.subr.bf16.mxu0 0
      %1686 = vmatpush1.bf16.msra.mxu0 0
      %1687 = vmatprep.subr.bf16.mxu0 0
      %1688 = vmatpush1.bf16.msra.mxu0 0
      %1689 = vmatprep.subr.bf16.mxu0 0
      %1690 = vmatpush1.bf16.msra.mxu0 0
      %1691 = vmatprep.subr.bf16.mxu0 0
      %1692 = vmatpush1.bf16.msra.mxu0 0
      %1693 = vmatprep.subr.bf16.mxu0 0
      %1694 = vmatpush1.bf16.msra.mxu0 0
      %1695 = vmatprep.subr.bf16.mxu0 0
      %1696 = vmatpush1.bf16.msra.mxu0 0
      %1697 = vmatprep.subr.bf16.mxu0 0
      %1698 = vmatpush1.bf16.msra.mxu0 0
      %1699 = vmatprep.mubr.bf16.mxu0 0
      %1700 = vmatmul.mubr.bf16.gmra.mrb[0].mxu0 %v1408
      %v1701 = vpop.f32.mrb[0].mxu0
      %v1702 = vadd.f32 0.0, %v1701
      %v1703 = vpop.f32.mrb[0].mxu0
      %v1704 = vpop.f32.mrb[0].mxu0
      %v1705 = vadd.f32 0.0, %v1704
      %v1706 = vpop.f32.mrb[0].mxu0
      %1707 = vmatprep.mubr.bf16.mxu0 0
      %1708 = vmatmul.mubr.bf16.gmra.mrb[0].mxu0 %v1411
      %v1709 = vpop.f32.mrb[0].mxu0
      %v1710 = vadd.f32 0.0, %v1709
      %v1711 = vpop.f32.mrb[0].mxu0
      %v1712 = vpop.f32.mrb[0].mxu0
      %v1713 = vadd.f32 0.0, %v1712
      %v1714 = vpop.f32.mrb[0].mxu0
      %1715 = vmatprep.mubr.bf16.mxu0 0
      %1716 = vmatmul.mubr.bf16.gmra.mrb[0].mxu0 %v1414
      %v1717 = vpop.f32.mrb[0].mxu0
      %v1718 = vadd.f32 0.0, %v1717
      %v1719 = vpop.f32.mrb[0].mxu0
      %v1720 = vpop.f32.mrb[0].mxu0
      %v1721 = vadd.f32 0.0, %v1720
      %v1722 = vpop.f32.mrb[0].mxu0
      %1723 = vmatprep.mubr.bf16.mxu0 0
      %1724 = vmatmul.mubr.bf16.gmra.mrb[0].mxu0 %v1417
      %v1725 = vpop.f32.mrb[0].mxu0
      %v1726 = vadd.f32 0.0, %v1725
      %v1727 = vpop.f32.mrb[0].mxu0
      %v1728 = vpop.f32.mrb[0].mxu0
      %v1729 = vadd.f32 0.0, %v1728
      %v1730 = vpop.f32.mrb[0].mxu0
      %1731 = vmatprep.mubr.bf16.mxu0 0
      %1732 = vmatmul.mubr.bf16.gmra.mrb[0].mxu0 %v1420
      %v1733 = vpop.f32.mrb[0].mxu0
      %v1734 = vadd.f32 0.0, %v1733
      %v1735 = vpop.f32.mrb[0].mxu0
      %v1736 = vpop.f32.mrb[0].mxu0
      %v1737 = vadd.f32 0.0, %v1736
      %v1738 = vpop.f32.mrb[0].mxu0
      %1739 = vmatprep.mubr.bf16.mxu0 0
      %1740 = vmatmul.mubr.bf16.gmra.mrb[0].mxu0 %v1423
      %v1741 = vpop.f32.mrb[0].mxu0
      %v1742 = vadd.f32 0.0, %v1741
      %v1743 = vpop.f32.mrb[0].mxu0
      %v1744 = vpop.f32.mrb[0].mxu0
      %v1745 = vadd.f32 0.0, %v1744
      %v1746 = vpop.f32.mrb[0].mxu0
      %1747 = vmatprep.mubr.bf16.mxu0 0
      %1748 = vmatmul.mubr.bf16.gmra.mrb[0].mxu0 %v1426
      %v1749 = vpop.f32.mrb[0].mxu0
      %v1750 = vadd.f32 0.0, %v1749
      %v1751 = vpop.f32.mrb[0].mxu0
      %v1752 = vpop.f32.mrb[0].mxu0
      %v1753 = vadd.f32 0.0, %v1752
      %v1754 = vpop.f32.mrb[0].mxu0
      %1755 = vmatprep.mubr.bf16.mxu0 0
      %1756 = vmatmul.mubr.bf16.gmra.mrb[0].mxu0 %v1429
      %v1757 = vpop.f32.mrb[0].mxu0
      %v1758 = vadd.f32 0.0, %v1757
      %v1759 = vpop.f32.mrb[0].mxu0
      %v1760 = vpop.f32.mrb[0].mxu0
      %v1761 = vadd.f32 0.0, %v1760
      %v1762 = vpop.f32.mrb[0].mxu0
      %1763 = vmatprep.mubr.bf16.mxu0 0
      %1764 = vmatmul.mubr.bf16.gmra.mrb[0].mxu0 %v1432
      %v1765 = vpop.f32.mrb[0].mxu0
      %v1766 = vadd.f32 0.0, %v1765
      %v1767 = vpop.f32.mrb[0].mxu0
      %v1768 = vpop.f32.mrb[0].mxu0
      %v1769 = vadd.f32 0.0, %v1768
      %v1770 = vpop.f32.mrb[0].mxu0
      %1771 = vmatprep.mubr.bf16.mxu0 0
      %1772 = vmatmul.mubr.bf16.gmra.mrb[0].mxu0 %v1435
      %v1773 = vpop.f32.mrb[0].mxu0
      %v1774 = vadd.f32 0.0, %v1773
      %v1775 = vpop.f32.mrb[0].mxu0
      %v1776 = vpop.f32.mrb[0].mxu0
      %v1777 = vadd.f32 0.0, %v1776
      %v1778 = vpop.f32.mrb[0].mxu0
      %1779 = vmatprep.mubr.bf16.mxu0 0
      %1780 = vmatmul.mubr.bf16.gmra.mrb[0].mxu0 %v1438
      %v1781 = vpop.f32.mrb[0].mxu0
      %v1782 = vadd.f32 0.0, %v1781
      %v1783 = vpop.f32.mrb[0].mxu0
      %v1784 = vpop.f32.mrb[0].mxu0
      %v1785 = vadd.f32 0.0, %v1784
      %v1786 = vpop.f32.mrb[0].mxu0
      %1787 = vmatprep.mubr.bf16.mxu0 0
      %1788 = vmatmul.mubr.bf16.gmra.mrb[0].mxu0 %v1441
      %v1789 = vpop.f32.mrb[0].mxu0
      %v1790 = vadd.f32 0.0, %v1789
      %v1791 = vpop.f32.mrb[0].mxu0
      %v1792 = vpop.f32.mrb[0].mxu0
      %v1793 = vadd.f32 0.0, %v1792
      %v1794 = vpop.f32.mrb[0].mxu0
      %1795 = vmatprep.mubr.bf16.mxu0 0
      %1796 = vmatmul.mubr.bf16.gmra.mrb[0].mxu0 %v1444
      %v1797 = vpop.f32.mrb[0].mxu0
      %v1798 = vadd.f32 0.0, %v1797
      %v1799 = vpop.f32.mrb[0].mxu0
      %v1800 = vpop.f32.mrb[0].mxu0
      %v1801 = vadd.f32 0.0, %v1800
      %v1802 = vpop.f32.mrb[0].mxu0
      %1803 = vmatprep.mubr.bf16.mxu0 0
      %1804 = vmatmul.mubr.bf16.gmra.mrb[0].mxu0 %v1447
      %v1805 = vpop.f32.mrb[0].mxu0
      %v1806 = vadd.f32 0.0, %v1805
      %v1807 = vpop.f32.mrb[0].mxu0
      %v1808 = vpop.f32.mrb[0].mxu0
      %v1809 = vadd.f32 0.0, %v1808
      %v1810 = vpop.f32.mrb[0].mxu0
      %1811 = vmatprep.mubr.bf16.mxu0 0
      %1812 = vmatmul.mubr.bf16.gmra.mrb[0].mxu0 %v1450
      %v1813 = vpop.f32.mrb[0].mxu0
      %v1814 = vadd.f32 0.0, %v1813
      %v1815 = vpop.f32.mrb[0].mxu0
      %v1816 = vpop.f32.mrb[0].mxu0
      %v1817 = vadd.f32 0.0, %v1816
      %v1818 = vpop.f32.mrb[0].mxu0
      %1819 = vmatprep.mubr.bf16.mxu0 0
      %1820 = vmatmul.mubr.bf16.gmra.mrb[0].mxu0 %v1662
      %v1821 = vpop.f32.mrb[0].mxu0
      %v1822 = vadd.f32 0.0, %v1821
      %v1823 = vpop.f32.mrb[0].mxu0
      %v1824 = vpop.f32.mrb[0].mxu0
      %v1825 = vadd.f32 0.0, %v1824
      %v1826 = vpop.f32.mrb[0].mxu0
      %1827 = vdwg.mxu0
      %v1828 = vadd.f32 %v1616, %v1702
      %v1829 = vadd.f32 %v1617, %v1705
      %v1830 = vadd.f32 %v1618, %v1710
      %v1831 = vadd.f32 %v1619, %v1713
      %v1832 = vadd.f32 %v1620, %v1718
      %v1833 = vadd.f32 %v1621, %v1721
      %v1834 = vadd.f32 %v1622, %v1726
      %v1835 = vadd.f32 %v1623, %v1729
      %v1836 = vadd.f32 %v1624, %v1734
      %v1837 = vadd.f32 %v1625, %v1737
      %v1838 = vadd.f32 %v1626, %v1742
      %v1839 = vadd.f32 %v1627, %v1745
      %v1840 = vadd.f32 %v1628, %v1750
      %v1841 = vadd.f32 %v1629, %v1753
      %v1842 = vadd.f32 %v1630, %v1758
      %v1843 = vadd.f32 %v1631, %v1761
      %v1844 = vadd.f32 %v1632, %v1766
      %v1845 = vadd.f32 %v1633, %v1769
      %v1846 = vadd.f32 %v1634, %v1774
      %v1847 = vadd.f32 %v1635, %v1777
      %v1848 = vadd.f32 %v1636, %v1782
      %v1849 = vadd.f32 %v1637, %v1785
      %v1850 = vadd.f32 %v1638, %v1790
      %v1851 = vadd.f32 %v1639, %v1793
      %v1852 = vadd.f32 %v1640, %v1798
      %v1853 = vadd.f32 %v1641, %v1801
      %v1854 = vadd.f32 %v1642, %v1806
      %v1855 = vadd.f32 %v1643, %v1809
      %v1856 = vadd.f32 %v1644, %v1814
      %v1857 = vadd.f32 %v1645, %v1817
      %v1858 = vadd.f32 %v1646, %v1822
      %v1859 = vadd.f32 %v1647, %v1825
      %v1860 = vshrl.u32 %v638, 16
      %v1862 = vshll.u32 %v638, 16
      %v1864 = vrot.slane %v1862, 1
      %v1865 = vor.u32 %v1860, %v1864
      %v1867 = vshll.u32 %v639, 16
      %v1869 = vrot.slane %v1867, 1
      %v1870 = vsel %vm1225, %v1865, %v1869
      %s1871 = scalar_lea.vmem %s1, 28
      %v1872 = vld [vmem:[%s1871] sm:$0xf]
      %v1874 = vsel %vm643, %v1870, 0
      %v1877 = vsel %vm692, %v1872, 0
      %1879 = vmatprep.subr.bf16.mxu0 0
      %1880 = vmatpush1.bf16.msra.mxu0 %v1877
      %1881 = vmatprep.subr.bf16.mxu0 0
      %1882 = vmatpush1.bf16.msra.mxu0 0
      %1883 = vmatprep.subr.bf16.mxu0 0
      %1884 = vmatpush1.bf16.msra.mxu0 0
      %1885 = vmatprep.subr.bf16.mxu0 0
      %1886 = vmatpush1.bf16.msra.mxu0 0
      %1887 = vmatprep.subr.bf16.mxu0 0
      %1888 = vmatpush1.bf16.msra.mxu0 0
      %1889 = vmatprep.subr.bf16.mxu0 0
      %1890 = vmatpush1.bf16.msra.mxu0 0
      %1891 = vmatprep.subr.bf16.mxu0 0
      %1892 = vmatpush1.bf16.msra.mxu0 0
      %1893 = vmatprep.subr.bf16.mxu0 0
      %1894 = vmatpush1.bf16.msra.mxu0 0
      %1895 = vmatprep.subr.bf16.mxu0 0
      %1896 = vmatpush1.bf16.msra.mxu0 0
      %1897 = vmatprep.subr.bf16.mxu0 0
      %1898 = vmatpush1.bf16.msra.mxu0 0
      %1899 = vmatprep.subr.bf16.mxu0 0
      %1900 = vmatpush1.bf16.msra.mxu0 0
      %1901 = vmatprep.subr.bf16.mxu0 0
      %1902 = vmatpush1.bf16.msra.mxu0 0
      %1903 = vmatprep.subr.bf16.mxu0 0
      %1904 = vmatpush1.bf16.msra.mxu0 0
      %1905 = vmatprep.subr.bf16.mxu0 0
      %1906 = vmatpush1.bf16.msra.mxu0 0
      %1907 = vmatprep.subr.bf16.mxu0 0
      %1908 = vmatpush1.bf16.msra.mxu0 0
      %1909 = vmatprep.subr.bf16.mxu0 0
      %1910 = vmatpush1.bf16.msra.mxu0 0
      %1911 = vmatprep.mubr.bf16.mxu0 0
      %1912 = vmatmul.mubr.bf16.gmra.mrb[0].mxu0 %v1411
      %v1913 = vpop.f32.mrb[0].mxu0
      %v1914 = vadd.f32 0.0, %v1913
      %v1915 = vpop.f32.mrb[0].mxu0
      %v1916 = vpop.f32.mrb[0].mxu0
      %v1917 = vadd.f32 0.0, %v1916
      %v1918 = vpop.f32.mrb[0].mxu0
      %1919 = vmatprep.mubr.bf16.mxu0 0
      %1920 = vmatmul.mubr.bf16.gmra.mrb[0].mxu0 %v1414
      %v1921 = vpop.f32.mrb[0].mxu0
      %v1922 = vadd.f32 0.0, %v1921
      %v1923 = vpop.f32.mrb[0].mxu0
      %v1924 = vpop.f32.mrb[0].mxu0
      %v1925 = vadd.f32 0.0, %v1924
      %v1926 = vpop.f32.mrb[0].mxu0
      %1927 = vmatprep.mubr.bf16.mxu0 0
      %1928 = vmatmul.mubr.bf16.gmra.mrb[0].mxu0 %v1417
      %v1929 = vpop.f32.mrb[0].mxu0
      %v1930 = vadd.f32 0.0, %v1929
      %v1931 = vpop.f32.mrb[0].mxu0
      %v1932 = vpop.f32.mrb[0].mxu0
      %v1933 = vadd.f32 0.0, %v1932
      %v1934 = vpop.f32.mrb[0].mxu0
      %1935 = vmatprep.mubr.bf16.mxu0 0
      %1936 = vmatmul.mubr.bf16.gmra.mrb[0].mxu0 %v1420
      %v1937 = vpop.f32.mrb[0].mxu0
      %v1938 = vadd.f32 0.0, %v1937
      %v1939 = vpop.f32.mrb[0].mxu0
      %v1940 = vpop.f32.mrb[0].mxu0
      %v1941 = vadd.f32 0.0, %v1940
      %v1942 = vpop.f32.mrb[0].mxu0
      %1943 = vmatprep.mubr.bf16.mxu0 0
      %1944 = vmatmul.mubr.bf16.gmra.mrb[0].mxu0 %v1423
      %v1945 = vpop.f32.mrb[0].mxu0
      %v1946 = vadd.f32 0.0, %v1945
      %v1947 = vpop.f32.mrb[0].mxu0
      %v1948 = vpop.f32.mrb[0].mxu0
      %v1949 = vadd.f32 0.0, %v1948
      %v1950 = vpop.f32.mrb[0].mxu0
      %1951 = vmatprep.mubr.bf16.mxu0 0
      %1952 = vmatmul.mubr.bf16.gmra.mrb[0].mxu0 %v1426
      %v1953 = vpop.f32.mrb[0].mxu0
      %v1954 = vadd.f32 0.0, %v1953
      %v1955 = vpop.f32.mrb[0].mxu0
      %v1956 = vpop.f32.mrb[0].mxu0
      %v1957 = vadd.f32 0.0, %v1956
      %v1958 = vpop.f32.mrb[0].mxu0
      %1959 = vmatprep.mubr.bf16.mxu0 0
      %1960 = vmatmul.mubr.bf16.gmra.mrb[0].mxu0 %v1429
      %v1961 = vpop.f32.mrb[0].mxu0
      %v1962 = vadd.f32 0.0, %v1961
      %v1963 = vpop.f32.mrb[0].mxu0
      %v1964 = vpop.f32.mrb[0].mxu0
      %v1965 = vadd.f32 0.0, %v1964
      %v1966 = vpop.f32.mrb[0].mxu0
      %1967 = vmatprep.mubr.bf16.mxu0 0
      %1968 = vmatmul.mubr.bf16.gmra.mrb[0].mxu0 %v1432
      %v1969 = vpop.f32.mrb[0].mxu0
      %v1970 = vadd.f32 0.0, %v1969
      %v1971 = vpop.f32.mrb[0].mxu0
      %v1972 = vpop.f32.mrb[0].mxu0
      %v1973 = vadd.f32 0.0, %v1972
      %v1974 = vpop.f32.mrb[0].mxu0
      %1975 = vmatprep.mubr.bf16.mxu0 0
      %1976 = vmatmul.mubr.bf16.gmra.mrb[0].mxu0 %v1435
      %v1977 = vpop.f32.mrb[0].mxu0
      %v1978 = vadd.f32 0.0, %v1977
      %v1979 = vpop.f32.mrb[0].mxu0
      %v1980 = vpop.f32.mrb[0].mxu0
      %v1981 = vadd.f32 0.0, %v1980
      %v1982 = vpop.f32.mrb[0].mxu0
      %1983 = vmatprep.mubr.bf16.mxu0 0
      %1984 = vmatmul.mubr.bf16.gmra.mrb[0].mxu0 %v1438
      %v1985 = vpop.f32.mrb[0].mxu0
      %v1986 = vadd.f32 0.0, %v1985
      %v1987 = vpop.f32.mrb[0].mxu0
      %v1988 = vpop.f32.mrb[0].mxu0
      %v1989 = vadd.f32 0.0, %v1988
      %v1990 = vpop.f32.mrb[0].mxu0
      %1991 = vmatprep.mubr.bf16.mxu0 0
      %1992 = vmatmul.mubr.bf16.gmra.mrb[0].mxu0 %v1441
      %v1993 = vpop.f32.mrb[0].mxu0
      %v1994 = vadd.f32 0.0, %v1993
      %v1995 = vpop.f32.mrb[0].mxu0
      %v1996 = vpop.f32.mrb[0].mxu0
      %v1997 = vadd.f32 0.0, %v1996
      %v1998 = vpop.f32.mrb[0].mxu0
      %1999 = vmatprep.mubr.bf16.mxu0 0
      %2000 = vmatmul.mubr.bf16.gmra.mrb[0].mxu0 %v1444
      %v2001 = vpop.f32.mrb[0].mxu0
      %v2002 = vadd.f32 0.0, %v2001
      %v2003 = vpop.f32.mrb[0].mxu0
      %v2004 = vpop.f32.mrb[0].mxu0
      %v2005 = vadd.f32 0.0, %v2004
      %v2006 = vpop.f32.mrb[0].mxu0
      %2007 = vmatprep.mubr.bf16.mxu0 0
      %2008 = vmatmul.mubr.bf16.gmra.mrb[0].mxu0 %v1447
      %v2009 = vpop.f32.mrb[0].mxu0
      %v2010 = vadd.f32 0.0, %v2009
      %v2011 = vpop.f32.mrb[0].mxu0
      %v2012 = vpop.f32.mrb[0].mxu0
      %v2013 = vadd.f32 0.0, %v2012
      %v2014 = vpop.f32.mrb[0].mxu0
      %2015 = vmatprep.mubr.bf16.mxu0 0
      %2016 = vmatmul.mubr.bf16.gmra.mrb[0].mxu0 %v1450
      %v2017 = vpop.f32.mrb[0].mxu0
      %v2018 = vadd.f32 0.0, %v2017
      %v2019 = vpop.f32.mrb[0].mxu0
      %v2020 = vpop.f32.mrb[0].mxu0
      %v2021 = vadd.f32 0.0, %v2020
      %v2022 = vpop.f32.mrb[0].mxu0
      %2023 = vmatprep.mubr.bf16.mxu0 0
      %2024 = vmatmul.mubr.bf16.gmra.mrb[0].mxu0 %v1662
      %v2025 = vpop.f32.mrb[0].mxu0
      %v2026 = vadd.f32 0.0, %v2025
      %v2027 = vpop.f32.mrb[0].mxu0
      %v2028 = vpop.f32.mrb[0].mxu0
      %v2029 = vadd.f32 0.0, %v2028
      %v2030 = vpop.f32.mrb[0].mxu0
      %2031 = vmatprep.mubr.bf16.mxu0 0
      %2032 = vmatmul.mubr.bf16.gmra.mrb[0].mxu0 %v1874
      %v2033 = vpop.f32.mrb[0].mxu0
      %v2034 = vadd.f32 0.0, %v2033
      %v2035 = vpop.f32.mrb[0].mxu0
      %v2036 = vpop.f32.mrb[0].mxu0
      %v2037 = vadd.f32 0.0, %v2036
      %v2038 = vpop.f32.mrb[0].mxu0
      %2039 = vdwg.mxu0
      %v2040 = vadd.f32 %v1828, %v1914
      %v2041 = vadd.f32 %v1829, %v1917
      %v2042 = vadd.f32 %v1830, %v1922
      %v2043 = vadd.f32 %v1831, %v1925
      %v2044 = vadd.f32 %v1832, %v1930
      %v2045 = vadd.f32 %v1833, %v1933
      %v2046 = vadd.f32 %v1834, %v1938
      %v2047 = vadd.f32 %v1835, %v1941
      %v2048 = vadd.f32 %v1836, %v1946
      %v2049 = vadd.f32 %v1837, %v1949
      %v2050 = vadd.f32 %v1838, %v1954
      %v2051 = vadd.f32 %v1839, %v1957
      %v2052 = vadd.f32 %v1840, %v1962
      %v2053 = vadd.f32 %v1841, %v1965
      %v2054 = vadd.f32 %v1842, %v1970
      %v2055 = vadd.f32 %v1843, %v1973
      %v2056 = vadd.f32 %v1844, %v1978
      %v2057 = vadd.f32 %v1845, %v1981
      %v2058 = vadd.f32 %v1846, %v1986
      %v2059 = vadd.f32 %v1847, %v1989
      %v2060 = vadd.f32 %v1848, %v1994
      %v2061 = vadd.f32 %v1849, %v1997
      %v2062 = vadd.f32 %v1850, %v2002
      %v2063 = vadd.f32 %v1851, %v2005
      %v2064 = vadd.f32 %v1852, %v2010
      %v2065 = vadd.f32 %v1853, %v2013
      %v2066 = vadd.f32 %v1854, %v2018
      %v2067 = vadd.f32 %v1855, %v2021
      %v2068 = vadd.f32 %v1856, %v2026
      %v2069 = vadd.f32 %v1857, %v2029
      %v2070 = vadd.f32 %v1858, %v2034
      %v2071 = vadd.f32 %v1859, %v2037
      %vm2104 = vcmask 1046528
      %v2105 = vrot.slane %v604, 1
      %v2106 = vrot.slane %v605, 1
      %v2107 = vsel %vm2104, %v2105, %v2106
      %v2108 = vrot.slane %v606, 1
      %v2109 = vrot.slane %v607, 1
      %v2110 = vsel %vm2104, %v2108, %v2109
      %v2111 = vrot.slane %v608, 1
      %v2112 = vrot.slane %v609, 1
      %v2113 = vsel %vm2104, %v2111, %v2112
      %v2114 = vrot.slane %v610, 1
      %v2115 = vrot.slane %v611, 1
      %v2116 = vsel %vm2104, %v2114, %v2115
      %v2117 = vrot.slane %v612, 1
      %v2118 = vrot.slane %v613, 1
      %v2119 = vsel %vm2104, %v2117, %v2118
      %v2120 = vrot.slane %v614, 1
      %v2121 = vrot.slane %v615, 1
      %v2122 = vsel %vm2104, %v2120, %v2121
      %v2123 = vrot.slane %v616, 1
      %v2124 = vrot.slane %v617, 1
      %v2125 = vsel %vm2104, %v2123, %v2124
      %v2126 = vrot.slane %v618, 1
      %v2127 = vrot.slane %v619, 1
      %v2128 = vsel %vm2104, %v2126, %v2127
      %v2129 = vrot.slane %v620, 1
      %v2130 = vrot.slane %v621, 1
      %v2131 = vsel %vm2104, %v2129, %v2130
      %v2132 = vrot.slane %v622, 1
      %v2133 = vrot.slane %v623, 1
      %v2134 = vsel %vm2104, %v2132, %v2133
      %v2135 = vrot.slane %v624, 1
      %v2136 = vrot.slane %v625, 1
      %v2137 = vsel %vm2104, %v2135, %v2136
      %v2138 = vrot.slane %v626, 1
      %v2139 = vrot.slane %v627, 1
      %v2140 = vsel %vm2104, %v2138, %v2139
      %v2141 = vrot.slane %v628, 1
      %v2142 = vrot.slane %v629, 1
      %v2143 = vsel %vm2104, %v2141, %v2142
      %v2144 = vrot.slane %v630, 1
      %v2145 = vrot.slane %v631, 1
      %v2146 = vsel %vm2104, %v2144, %v2145
      %v2147 = vrot.slane %v632, 1
      %v2148 = vrot.slane %v633, 1
      %v2149 = vsel %vm2104, %v2147, %v2148
      %v2150 = vrot.slane %v634, 1
      %v2151 = vrot.slane %v635, 1
      %v2152 = vsel %vm2104, %v2150, %v2151
      %s2153 = scalar_lea.vmem %s1, 8
      %v2154 = vld [vmem:[%s2153] sm:$0xf]
      %v2156 = vsel %vm643, %v2107, 0
      %v2159 = vsel %vm643, %v2110, 0
      %v2162 = vsel %vm643, %v2113, 0
      %v2165 = vsel %vm643, %v2116, 0
      %v2168 = vsel %vm643, %v2119, 0
      %v2171 = vsel %vm643, %v2122, 0
      %v2174 = vsel %vm643, %v2125, 0
      %v2177 = vsel %vm643, %v2128, 0
      %v2180 = vsel %vm643, %v2131, 0
      %v2183 = vsel %vm643, %v2134, 0
      %v2186 = vsel %vm643, %v2137, 0
      %v2189 = vsel %vm643, %v2140, 0
      %v2192 = vsel %vm643, %v2143, 0
      %v2195 = vsel %vm643, %v2146, 0
      %v2198 = vsel %vm643, %v2149, 0
      %v2201 = vsel %vm643, %v2152, 0
      %v2204 = vsel %vm692, %v2154, 0
      %2206 = vmatprep.subr.bf16.mxu0 0
      %2207 = vmatpush1.bf16.msra.mxu0 %v2204
      %2208 = vmatprep.subr.bf16.mxu0 0
      %2209 = vmatpush1.bf16.msra.mxu0 0
      %2210 = vmatprep.subr.bf16.mxu0 0
      %2211 = vmatpush1.bf16.msra.mxu0 0
      %2212 = vmatprep.subr.bf16.mxu0 0
      %2213 = vmatpush1.bf16.msra.mxu0 0
      %2214 = vmatprep.subr.bf16.mxu0 0
      %2215 = vmatpush1.bf16.msra.mxu0 0
      %2216 = vmatprep.subr.bf16.mxu0 0
      %2217 = vmatpush1.bf16.msra.mxu0 0
      %2218 = vmatprep.subr.bf16.mxu0 0
      %2219 = vmatpush1.bf16.msra.mxu0 0
      %2220 = vmatprep.subr.bf16.mxu0 0
      %2221 = vmatpush1.bf16.msra.mxu0 0
      %2222 = vmatprep.subr.bf16.mxu0 0
      %2223 = vmatpush1.bf16.msra.mxu0 0
      %2224 = vmatprep.subr.bf16.mxu0 0
      %2225 = vmatpush1.bf16.msra.mxu0 0
      %2226 = vmatprep.subr.bf16.mxu0 0
      %2227 = vmatpush1.bf16.msra.mxu0 0
      %2228 = vmatprep.subr.bf16.mxu0 0
      %2229 = vmatpush1.bf16.msra.mxu0 0
      %2230 = vmatprep.subr.bf16.mxu0 0
      %2231 = vmatpush1.bf16.msra.mxu0 0
      %2232 = vmatprep.subr.bf16.mxu0 0
      %2233 = vmatpush1.bf16.msra.mxu0 0
      %2234 = vmatprep.subr.bf16.mxu0 0
      %2235 = vmatpush1.bf16.msra.mxu0 0
      %2236 = vmatprep.subr.bf16.mxu0 0
      %2237 = vmatpush1.bf16.msra.mxu0 0
      %2238 = vmatprep.mubr.bf16.mxu0 0
      %2239 = vmatmul.mubr.bf16.gmra.mrb[0].mxu0 %v2156
      %v2240 = vpop.f32.mrb[0].mxu0
      %v2241 = vadd.f32 0.0, %v2240
      %v2242 = vpop.f32.mrb[0].mxu0
      %v2243 = vpop.f32.mrb[0].mxu0
      %v2244 = vadd.f32 0.0, %v2243
      %v2245 = vpop.f32.mrb[0].mxu0
      %2246 = vmatprep.mubr.bf16.mxu0 0
      %2247 = vmatmul.mubr.bf16.gmra.mrb[0].mxu0 %v2159
      %v2248 = vpop.f32.mrb[0].mxu0
      %v2249 = vadd.f32 0.0, %v2248
      %v2250 = vpop.f32.mrb[0].mxu0
      %v2251 = vpop.f32.mrb[0].mxu0
      %v2252 = vadd.f32 0.0, %v2251
      %v2253 = vpop.f32.mrb[0].mxu0
      %2254 = vmatprep.mubr.bf16.mxu0 0
      %2255 = vmatmul.mubr.bf16.gmra.mrb[0].mxu0 %v2162
      %v2256 = vpop.f32.mrb[0].mxu0
      %v2257 = vadd.f32 0.0, %v2256
      %v2258 = vpop.f32.mrb[0].mxu0
      %v2259 = vpop.f32.mrb[0].mxu0
      %v2260 = vadd.f32 0.0, %v2259
      %v2261 = vpop.f32.mrb[0].mxu0
      %2262 = vmatprep.mubr.bf16.mxu0 0
      %2263 = vmatmul.mubr.bf16.gmra.mrb[0].mxu0 %v2165
      %v2264 = vpop.f32.mrb[0].mxu0
      %v2265 = vadd.f32 0.0, %v2264
      %v2266 = vpop.f32.mrb[0].mxu0
      %v2267 = vpop.f32.mrb[0].mxu0
      %v2268 = vadd.f32 0.0, %v2267
      %v2269 = vpop.f32.mrb[0].mxu0
      %2270 = vmatprep.mubr.bf16.mxu0 0
      %2271 = vmatmul.mubr.bf16.gmra.mrb[0].mxu0 %v2168
      %v2272 = vpop.f32.mrb[0].mxu0
      %v2273 = vadd.f32 0.0, %v2272
      %v2274 = vpop.f32.mrb[0].mxu0
      %v2275 = vpop.f32.mrb[0].mxu0
      %v2276 = vadd.f32 0.0, %v2275
      %v2277 = vpop.f32.mrb[0].mxu0
      %2278 = vmatprep.mubr.bf16.mxu0 0
      %2279 = vmatmul.mubr.bf16.gmra.mrb[0].mxu0 %v2171
      %v2280 = vpop.f32.mrb[0].mxu0
      %v2281 = vadd.f32 0.0, %v2280
      %v2282 = vpop.f32.mrb[0].mxu0
      %v2283 = vpop.f32.mrb[0].mxu0
      %v2284 = vadd.f32 0.0, %v2283
      %v2285 = vpop.f32.mrb[0].mxu0
      %2286 = vmatprep.mubr.bf16.mxu0 0
      %2287 = vmatmul.mubr.bf16.gmra.mrb[0].mxu0 %v2174
      %v2288 = vpop.f32.mrb[0].mxu0
      %v2289 = vadd.f32 0.0, %v2288
      %v2290 = vpop.f32.mrb[0].mxu0
      %v2291 = vpop.f32.mrb[0].mxu0
      %v2292 = vadd.f32 0.0, %v2291
      %v2293 = vpop.f32.mrb[0].mxu0
      %2294 = vmatprep.mubr.bf16.mxu0 0
      %2295 = vmatmul.mubr.bf16.gmra.mrb[0].mxu0 %v2177
      %v2296 = vpop.f32.mrb[0].mxu0
      %v2297 = vadd.f32 0.0, %v2296
      %v2298 = vpop.f32.mrb[0].mxu0
      %v2299 = vpop.f32.mrb[0].mxu0
      %v2300 = vadd.f32 0.0, %v2299
      %v2301 = vpop.f32.mrb[0].mxu0
      %2302 = vmatprep.mubr.bf16.mxu0 0
      %2303 = vmatmul.mubr.bf16.gmra.mrb[0].mxu0 %v2180
      %v2304 = vpop.f32.mrb[0].mxu0
      %v2305 = vadd.f32 0.0, %v2304
      %v2306 = vpop.f32.mrb[0].mxu0
      %v2307 = vpop.f32.mrb[0].mxu0
      %v2308 = vadd.f32 0.0, %v2307
      %v2309 = vpop.f32.mrb[0].mxu0
      %2310 = vmatprep.mubr.bf16.mxu0 0
      %2311 = vmatmul.mubr.bf16.gmra.mrb[0].mxu0 %v2183
      %v2312 = vpop.f32.mrb[0].mxu0
      %v2313 = vadd.f32 0.0, %v2312
      %v2314 = vpop.f32.mrb[0].mxu0
      %v2315 = vpop.f32.mrb[0].mxu0
      %v2316 = vadd.f32 0.0, %v2315
      %v2317 = vpop.f32.mrb[0].mxu0
      %2318 = vmatprep.mubr.bf16.mxu0 0
      %2319 = vmatmul.mubr.bf16.gmra.mrb[0].mxu0 %v2186
      %v2320 = vpop.f32.mrb[0].mxu0
      %v2321 = vadd.f32 0.0, %v2320
      %v2322 = vpop.f32.mrb[0].mxu0
      %v2323 = vpop.f32.mrb[0].mxu0
      %v2324 = vadd.f32 0.0, %v2323
      %v2325 = vpop.f32.mrb[0].mxu0
      %2326 = vmatprep.mubr.bf16.mxu0 0
      %2327 = vmatmul.mubr.bf16.gmra.mrb[0].mxu0 %v2189
      %v2328 = vpop.f32.mrb[0].mxu0
      %v2329 = vadd.f32 0.0, %v2328
      %v2330 = vpop.f32.mrb[0].mxu0
      %v2331 = vpop.f32.mrb[0].mxu0
      %v2332 = vadd.f32 0.0, %v2331
      %v2333 = vpop.f32.mrb[0].mxu0
      %2334 = vmatprep.mubr.bf16.mxu0 0
      %2335 = vmatmul.mubr.bf16.gmra.mrb[0].mxu0 %v2192
      %v2336 = vpop.f32.mrb[0].mxu0
      %v2337 = vadd.f32 0.0, %v2336
      %v2338 = vpop.f32.mrb[0].mxu0
      %v2339 = vpop.f32.mrb[0].mxu0
      %v2340 = vadd.f32 0.0, %v2339
      %v2341 = vpop.f32.mrb[0].mxu0
      %2342 = vmatprep.mubr.bf16.mxu0 0
      %2343 = vmatmul.mubr.bf16.gmra.mrb[0].mxu0 %v2195
      %v2344 = vpop.f32.mrb[0].mxu0
      %v2345 = vadd.f32 0.0, %v2344
      %v2346 = vpop.f32.mrb[0].mxu0
      %v2347 = vpop.f32.mrb[0].mxu0
      %v2348 = vadd.f32 0.0, %v2347
      %v2349 = vpop.f32.mrb[0].mxu0
      %2350 = vmatprep.mubr.bf16.mxu0 0
      %2351 = vmatmul.mubr.bf16.gmra.mrb[0].mxu0 %v2198
      %v2352 = vpop.f32.mrb[0].mxu0
      %v2353 = vadd.f32 0.0, %v2352
      %v2354 = vpop.f32.mrb[0].mxu0
      %v2355 = vpop.f32.mrb[0].mxu0
      %v2356 = vadd.f32 0.0, %v2355
      %v2357 = vpop.f32.mrb[0].mxu0
      %2358 = vmatprep.mubr.bf16.mxu0 0
      %2359 = vmatmul.mubr.bf16.gmra.mrb[0].mxu0 %v2201
      %v2360 = vpop.f32.mrb[0].mxu0
      %v2361 = vadd.f32 0.0, %v2360
      %v2362 = vpop.f32.mrb[0].mxu0
      %v2363 = vpop.f32.mrb[0].mxu0
      %v2364 = vadd.f32 0.0, %v2363
      %v2365 = vpop.f32.mrb[0].mxu0
      %2366 = vdwg.mxu0
      %v2367 = vadd.f32 %v2040, %v2241
      %v2368 = vadd.f32 %v2041, %v2244
      %v2369 = vadd.f32 %v2042, %v2249
      %v2370 = vadd.f32 %v2043, %v2252
      %v2371 = vadd.f32 %v2044, %v2257
      %v2372 = vadd.f32 %v2045, %v2260
      %v2373 = vadd.f32 %v2046, %v2265
      %v2374 = vadd.f32 %v2047, %v2268
      %v2375 = vadd.f32 %v2048, %v2273
      %v2376 = vadd.f32 %v2049, %v2276
      %v2377 = vadd.f32 %v2050, %v2281
      %v2378 = vadd.f32 %v2051, %v2284
      %v2379 = vadd.f32 %v2052, %v2289
      %v2380 = vadd.f32 %v2053, %v2292
      %v2381 = vadd.f32 %v2054, %v2297
      %v2382 = vadd.f32 %v2055, %v2300
      %v2383 = vadd.f32 %v2056, %v2305
      %v2384 = vadd.f32 %v2057, %v2308
      %v2385 = vadd.f32 %v2058, %v2313
      %v2386 = vadd.f32 %v2059, %v2316
      %v2387 = vadd.f32 %v2060, %v2321
      %v2388 = vadd.f32 %v2061, %v2324
      %v2389 = vadd.f32 %v2062, %v2329
      %v2390 = vadd.f32 %v2063, %v2332
      %v2391 = vadd.f32 %v2064, %v2337
      %v2392 = vadd.f32 %v2065, %v2340
      %v2393 = vadd.f32 %v2066, %v2345
      %v2394 = vadd.f32 %v2067, %v2348
      %v2395 = vadd.f32 %v2068, %v2353
      %v2396 = vadd.f32 %v2069, %v2356
      %v2397 = vadd.f32 %v2070, %v2361
      %v2398 = vadd.f32 %v2071, %v2364
      %v2401 = vrot.slane %v636, 1
      %v2402 = vrot.slane %v637, 1
      %v2403 = vsel %vm2104, %v2401, %v2402
      %s2404 = scalar_lea.vmem %s1, 20
      %v2405 = vld [vmem:[%s2404] sm:$0xf]
      %v2407 = vsel %vm643, %v2403, 0
      %v2410 = vsel %vm692, %v2405, 0
      %2412 = vmatprep.subr.bf16.mxu0 0
      %2413 = vmatpush1.bf16.msra.mxu0 %v2410
      %2414 = vmatprep.subr.bf16.mxu0 0
      %2415 = vmatpush1.bf16.msra.mxu0 0
      %2416 = vmatprep.subr.bf16.mxu0 0
      %2417 = vmatpush1.bf16.msra.mxu0 0
      %2418 = vmatprep.subr.bf16.mxu0 0
      %2419 = vmatpush1.bf16.msra.mxu0 0
      %2420 = vmatprep.subr.bf16.mxu0 0
      %2421 = vmatpush1.bf16.msra.mxu0 0
      %2422 = vmatprep.subr.bf16.mxu0 0
      %2423 = vmatpush1.bf16.msra.mxu0 0
      %2424 = vmatprep.subr.bf16.mxu0 0
      %2425 = vmatpush1.bf16.msra.mxu0 0
      %2426 = vmatprep.subr.bf16.mxu0 0
      %2427 = vmatpush1.bf16.msra.mxu0 0
      %2428 = vmatprep.subr.bf16.mxu0 0
      %2429 = vmatpush1.bf16.msra.mxu0 0
      %2430 = vmatprep.subr.bf16.mxu0 0
      %2431 = vmatpush1.bf16.msra.mxu0 0
      %2432 = vmatprep.subr.bf16.mxu0 0
      %2433 = vmatpush1.bf16.msra.mxu0 0
      %2434 = vmatprep.subr.bf16.mxu0 0
      %2435 = vmatpush1.bf16.msra.mxu0 0
      %2436 = vmatprep.subr.bf16.mxu0 0
      %2437 = vmatpush1.bf16.msra.mxu0 0
      %2438 = vmatprep.subr.bf16.mxu0 0
      %2439 = vmatpush1.bf16.msra.mxu0 0
      %2440 = vmatprep.subr.bf16.mxu0 0
      %2441 = vmatpush1.bf16.msra.mxu0 0
      %2442 = vmatprep.subr.bf16.mxu0 0
      %2443 = vmatpush1.bf16.msra.mxu0 0
      %2444 = vmatprep.mubr.bf16.mxu0 0
      %2445 = vmatmul.mubr.bf16.gmra.mrb[0].mxu0 %v2159
      %v2446 = vpop.f32.mrb[0].mxu0
      %v2447 = vadd.f32 0.0, %v2446
      %v2448 = vpop.f32.mrb[0].mxu0
      %v2449 = vpop.f32.mrb[0].mxu0
      %v2450 = vadd.f32 0.0, %v2449
      %v2451 = vpop.f32.mrb[0].mxu0
      %2452 = vmatprep.mubr.bf16.mxu0 0
      %2453 = vmatmul.mubr.bf16.gmra.mrb[0].mxu0 %v2162
      %v2454 = vpop.f32.mrb[0].mxu0
      %v2455 = vadd.f32 0.0, %v2454
      %v2456 = vpop.f32.mrb[0].mxu0
      %v2457 = vpop.f32.mrb[0].mxu0
      %v2458 = vadd.f32 0.0, %v2457
      %v2459 = vpop.f32.mrb[0].mxu0
      %2460 = vmatprep.mubr.bf16.mxu0 0
      %2461 = vmatmul.mubr.bf16.gmra.mrb[0].mxu0 %v2165
      %v2462 = vpop.f32.mrb[0].mxu0
      %v2463 = vadd.f32 0.0, %v2462
      %v2464 = vpop.f32.mrb[0].mxu0
      %v2465 = vpop.f32.mrb[0].mxu0
      %v2466 = vadd.f32 0.0, %v2465
      %v2467 = vpop.f32.mrb[0].mxu0
      %2468 = vmatprep.mubr.bf16.mxu0 0
      %2469 = vmatmul.mubr.bf16.gmra.mrb[0].mxu0 %v2168
      %v2470 = vpop.f32.mrb[0].mxu0
      %v2471 = vadd.f32 0.0, %v2470
      %v2472 = vpop.f32.mrb[0].mxu0
      %v2473 = vpop.f32.mrb[0].mxu0
      %v2474 = vadd.f32 0.0, %v2473
      %v2475 = vpop.f32.mrb[0].mxu0
      %2476 = vmatprep.mubr.bf16.mxu0 0
      %2477 = vmatmul.mubr.bf16.gmra.mrb[0].mxu0 %v2171
      %v2478 = vpop.f32.mrb[0].mxu0
      %v2479 = vadd.f32 0.0, %v2478
      %v2480 = vpop.f32.mrb[0].mxu0
      %v2481 = vpop.f32.mrb[0].mxu0
      %v2482 = vadd.f32 0.0, %v2481
      %v2483 = vpop.f32.mrb[0].mxu0
      %2484 = vmatprep.mubr.bf16.mxu0 0
      %2485 = vmatmul.mubr.bf16.gmra.mrb[0].mxu0 %v2174
      %v2486 = vpop.f32.mrb[0].mxu0
      %v2487 = vadd.f32 0.0, %v2486
      %v2488 = vpop.f32.mrb[0].mxu0
      %v2489 = vpop.f32.mrb[0].mxu0
      %v2490 = vadd.f32 0.0, %v2489
      %v2491 = vpop.f32.mrb[0].mxu0
      %2492 = vmatprep.mubr.bf16.mxu0 0
      %2493 = vmatmul.mubr.bf16.gmra.mrb[0].mxu0 %v2177
      %v2494 = vpop.f32.mrb[0].mxu0
      %v2495 = vadd.f32 0.0, %v2494
      %v2496 = vpop.f32.mrb[0].mxu0
      %v2497 = vpop.f32.mrb[0].mxu0
      %v2498 = vadd.f32 0.0, %v2497
      %v2499 = vpop.f32.mrb[0].mxu0
      %2500 = vmatprep.mubr.bf16.mxu0 0
      %2501 = vmatmul.mubr.bf16.gmra.mrb[0].mxu0 %v2180
      %v2502 = vpop.f32.mrb[0].mxu0
      %v2503 = vadd.f32 0.0, %v2502
      %v2504 = vpop.f32.mrb[0].mxu0
      %v2505 = vpop.f32.mrb[0].mxu0
      %v2506 = vadd.f32 0.0, %v2505
      %v2507 = vpop.f32.mrb[0].mxu0
      %2508 = vmatprep.mubr.bf16.mxu0 0
      %2509 = vmatmul.mubr.bf16.gmra.mrb[0].mxu0 %v2183
      %v2510 = vpop.f32.mrb[0].mxu0
      %v2511 = vadd.f32 0.0, %v2510
      %v2512 = vpop.f32.mrb[0].mxu0
      %v2513 = vpop.f32.mrb[0].mxu0
      %v2514 = vadd.f32 0.0, %v2513
      %v2515 = vpop.f32.mrb[0].mxu0
      %2516 = vmatprep.mubr.bf16.mxu0 0
      %2517 = vmatmul.mubr.bf16.gmra.mrb[0].mxu0 %v2186
      %v2518 = vpop.f32.mrb[0].mxu0
      %v2519 = vadd.f32 0.0, %v2518
      %v2520 = vpop.f32.mrb[0].mxu0
      %v2521 = vpop.f32.mrb[0].mxu0
      %v2522 = vadd.f32 0.0, %v2521
      %v2523 = vpop.f32.mrb[0].mxu0
      %2524 = vmatprep.mubr.bf16.mxu0 0
      %2525 = vmatmul.mubr.bf16.gmra.mrb[0].mxu0 %v2189
      %v2526 = vpop.f32.mrb[0].mxu0
      %v2527 = vadd.f32 0.0, %v2526
      %v2528 = vpop.f32.mrb[0].mxu0
      %v2529 = vpop.f32.mrb[0].mxu0
      %v2530 = vadd.f32 0.0, %v2529
      %v2531 = vpop.f32.mrb[0].mxu0
      %2532 = vmatprep.mubr.bf16.mxu0 0
      %2533 = vmatmul.mubr.bf16.gmra.mrb[0].mxu0 %v2192
      %v2534 = vpop.f32.mrb[0].mxu0
      %v2535 = vadd.f32 0.0, %v2534
      %v2536 = vpop.f32.mrb[0].mxu0
      %v2537 = vpop.f32.mrb[0].mxu0
      %v2538 = vadd.f32 0.0, %v2537
      %v2539 = vpop.f32.mrb[0].mxu0
      %2540 = vmatprep.mubr.bf16.mxu0 0
      %2541 = vmatmul.mubr.bf16.gmra.mrb[0].mxu0 %v2195
      %v2542 = vpop.f32.mrb[0].mxu0
      %v2543 = vadd.f32 0.0, %v2542
      %v2544 = vpop.f32.mrb[0].mxu0
      %v2545 = vpop.f32.mrb[0].mxu0
      %v2546 = vadd.f32 0.0, %v2545
      %v2547 = vpop.f32.mrb[0].mxu0
      %2548 = vmatprep.mubr.bf16.mxu0 0
      %2549 = vmatmul.mubr.bf16.gmra.mrb[0].mxu0 %v2198
      %v2550 = vpop.f32.mrb[0].mxu0
      %v2551 = vadd.f32 0.0, %v2550
      %v2552 = vpop.f32.mrb[0].mxu0
      %v2553 = vpop.f32.mrb[0].mxu0
      %v2554 = vadd.f32 0.0, %v2553
      %v2555 = vpop.f32.mrb[0].mxu0
      %2556 = vmatprep.mubr.bf16.mxu0 0
      %2557 = vmatmul.mubr.bf16.gmra.mrb[0].mxu0 %v2201
      %v2558 = vpop.f32.mrb[0].mxu0
      %v2559 = vadd.f32 0.0, %v2558
      %v2560 = vpop.f32.mrb[0].mxu0
      %v2561 = vpop.f32.mrb[0].mxu0
      %v2562 = vadd.f32 0.0, %v2561
      %v2563 = vpop.f32.mrb[0].mxu0
      %2564 = vmatprep.mubr.bf16.mxu0 0
      %2565 = vmatmul.mubr.bf16.gmra.mrb[0].mxu0 %v2407
      %v2566 = vpop.f32.mrb[0].mxu0
      %v2567 = vadd.f32 0.0, %v2566
      %v2568 = vpop.f32.mrb[0].mxu0
      %v2569 = vpop.f32.mrb[0].mxu0
      %v2570 = vadd.f32 0.0, %v2569
      %v2571 = vpop.f32.mrb[0].mxu0
      %2572 = vdwg.mxu0
      %v2573 = vadd.f32 %v2367, %v2447
      %v2574 = vadd.f32 %v2368, %v2450
      %v2575 = vadd.f32 %v2369, %v2455
      %v2576 = vadd.f32 %v2370, %v2458
      %v2577 = vadd.f32 %v2371, %v2463
      %v2578 = vadd.f32 %v2372, %v2466
      %v2579 = vadd.f32 %v2373, %v2471
      %v2580 = vadd.f32 %v2374, %v2474
      %v2581 = vadd.f32 %v2375, %v2479
      %v2582 = vadd.f32 %v2376, %v2482
      %v2583 = vadd.f32 %v2377, %v2487
      %v2584 = vadd.f32 %v2378, %v2490
      %v2585 = vadd.f32 %v2379, %v2495
      %v2586 = vadd.f32 %v2380, %v2498
      %v2587 = vadd.f32 %v2381, %v2503
      %v2588 = vadd.f32 %v2382, %v2506
      %v2589 = vadd.f32 %v2383, %v2511
      %v2590 = vadd.f32 %v2384, %v2514
      %v2591 = vadd.f32 %v2385, %v2519
      %v2592 = vadd.f32 %v2386, %v2522
      %v2593 = vadd.f32 %v2387, %v2527
      %v2594 = vadd.f32 %v2388, %v2530
      %v2595 = vadd.f32 %v2389, %v2535
      %v2596 = vadd.f32 %v2390, %v2538
      %v2597 = vadd.f32 %v2391, %v2543
      %v2598 = vadd.f32 %v2392, %v2546
      %v2599 = vadd.f32 %v2393, %v2551
      %v2600 = vadd.f32 %v2394, %v2554
      %v2601 = vadd.f32 %v2395, %v2559
      %v2602 = vadd.f32 %v2396, %v2562
      %v2603 = vadd.f32 %v2397, %v2567
      %v2604 = vadd.f32 %v2398, %v2570
      %v2607 = vrot.slane %v638, 1
      %v2608 = vrot.slane %v639, 1
      %v2609 = vsel %vm2104, %v2607, %v2608
      %s2610 = scalar_lea.vmem %s1, 32
      %v2611 = vld [vmem:[%s2610] sm:$0xf]
      %v2613 = vsel %vm643, %v2609, 0
      %v2616 = vsel %vm692, %v2611, 0
      %2618 = vmatprep.subr.bf16.mxu0 0
      %2619 = vmatpush1.bf16.msra.mxu0 %v2616
      %2620 = vmatprep.subr.bf16.mxu0 0
      %2621 = vmatpush1.bf16.msra.mxu0 0
      %2622 = vmatprep.subr.bf16.mxu0 0
      %2623 = vmatpush1.bf16.msra.mxu0 0
      %2624 = vmatprep.subr.bf16.mxu0 0
      %2625 = vmatpush1.bf16.msra.mxu0 0
      %2626 = vmatprep.subr.bf16.mxu0 0
      %2627 = vmatpush1.bf16.msra.mxu0 0
      %2628 = vmatprep.subr.bf16.mxu0 0
      %2629 = vmatpush1.bf16.msra.mxu0 0
      %2630 = vmatprep.subr.bf16.mxu0 0
      %2631 = vmatpush1.bf16.msra.mxu0 0
      %2632 = vmatprep.subr.bf16.mxu0 0
      %2633 = vmatpush1.bf16.msra.mxu0 0
      %2634 = vmatprep.subr.bf16.mxu0 0
      %2635 = vmatpush1.bf16.msra.mxu0 0
      %2636 = vmatprep.subr.bf16.mxu0 0
      %2637 = vmatpush1.bf16.msra.mxu0 0
      %2638 = vmatprep.subr.bf16.mxu0 0
      %2639 = vmatpush1.bf16.msra.mxu0 0
      %2640 = vmatprep.subr.bf16.mxu0 0
      %2641 = vmatpush1.bf16.msra.mxu0 0
      %2642 = vmatprep.subr.bf16.mxu0 0
      %2643 = vmatpush1.bf16.msra.mxu0 0
      %2644 = vmatprep.subr.bf16.mxu0 0
      %2645 = vmatpush1.bf16.msra.mxu0 0
      %2646 = vmatprep.subr.bf16.mxu0 0
      %2647 = vmatpush1.bf16.msra.mxu0 0
      %2648 = vmatprep.subr.bf16.mxu0 0
      %2649 = vmatpush1.bf16.msra.mxu0 0
      %2650 = vmatprep.mubr.bf16.mxu0 0
      %2651 = vmatmul.mubr.bf16.gmra.mrb[0].mxu0 %v2162
      %v2652 = vpop.f32.mrb[0].mxu0
      %v2653 = vadd.f32 0.0, %v2652
      %v2654 = vpop.f32.mrb[0].mxu0
      %v2655 = vpop.f32.mrb[0].mxu0
      %v2656 = vadd.f32 0.0, %v2655
      %v2657 = vpop.f32.mrb[0].mxu0
      %2658 = vmatprep.mubr.bf16.mxu0 0
      %2659 = vmatmul.mubr.bf16.gmra.mrb[0].mxu0 %v2165
      %v2660 = vpop.f32.mrb[0].mxu0
      %v2661 = vadd.f32 0.0, %v2660
      %v2662 = vpop.f32.mrb[0].mxu0
      %v2663 = vpop.f32.mrb[0].mxu0
      %v2664 = vadd.f32 0.0, %v2663
      %v2665 = vpop.f32.mrb[0].mxu0
      %2666 = vmatprep.mubr.bf16.mxu0 0
      %2667 = vmatmul.mubr.bf16.gmra.mrb[0].mxu0 %v2168
      %v2668 = vpop.f32.mrb[0].mxu0
      %v2669 = vadd.f32 0.0, %v2668
      %v2670 = vpop.f32.mrb[0].mxu0
      %v2671 = vpop.f32.mrb[0].mxu0
      %v2672 = vadd.f32 0.0, %v2671
      %v2673 = vpop.f32.mrb[0].mxu0
      %2674 = vmatprep.mubr.bf16.mxu0 0
      %2675 = vmatmul.mubr.bf16.gmra.mrb[0].mxu0 %v2171
      %v2676 = vpop.f32.mrb[0].mxu0
      %v2677 = vadd.f32 0.0, %v2676
      %v2678 = vpop.f32.mrb[0].mxu0
      %v2679 = vpop.f32.mrb[0].mxu0
      %v2680 = vadd.f32 0.0, %v2679
      %v2681 = vpop.f32.mrb[0].mxu0
      %2682 = vmatprep.mubr.bf16.mxu0 0
      %2683 = vmatmul.mubr.bf16.gmra.mrb[0].mxu0 %v2174
      %v2684 = vpop.f32.mrb[0].mxu0
      %v2685 = vadd.f32 0.0, %v2684
      %v2686 = vpop.f32.mrb[0].mxu0
      %v2687 = vpop.f32.mrb[0].mxu0
      %v2688 = vadd.f32 0.0, %v2687
      %v2689 = vpop.f32.mrb[0].mxu0
      %2690 = vmatprep.mubr.bf16.mxu0 0
      %2691 = vmatmul.mubr.bf16.gmra.mrb[0].mxu0 %v2177
      %v2692 = vpop.f32.mrb[0].mxu0
      %v2693 = vadd.f32 0.0, %v2692
      %v2694 = vpop.f32.mrb[0].mxu0
      %v2695 = vpop.f32.mrb[0].mxu0
      %v2696 = vadd.f32 0.0, %v2695
      %v2697 = vpop.f32.mrb[0].mxu0
      %2698 = vmatprep.mubr.bf16.mxu0 0
      %2699 = vmatmul.mubr.bf16.gmra.mrb[0].mxu0 %v2180
      %v2700 = vpop.f32.mrb[0].mxu0
      %v2701 = vadd.f32 0.0, %v2700
      %v2702 = vpop.f32.mrb[0].mxu0
      %v2703 = vpop.f32.mrb[0].mxu0
      %v2704 = vadd.f32 0.0, %v2703
      %v2705 = vpop.f32.mrb[0].mxu0
      %2706 = vmatprep.mubr.bf16.mxu0 0
      %2707 = vmatmul.mubr.bf16.gmra.mrb[0].mxu0 %v2183
      %v2708 = vpop.f32.mrb[0].mxu0
      %v2709 = vadd.f32 0.0, %v2708
      %v2710 = vpop.f32.mrb[0].mxu0
      %v2711 = vpop.f32.mrb[0].mxu0
      %v2712 = vadd.f32 0.0, %v2711
      %v2713 = vpop.f32.mrb[0].mxu0
      %2714 = vmatprep.mubr.bf16.mxu0 0
      %2715 = vmatmul.mubr.bf16.gmra.mrb[0].mxu0 %v2186
      %v2716 = vpop.f32.mrb[0].mxu0
      %v2717 = vadd.f32 0.0, %v2716
      %v2718 = vpop.f32.mrb[0].mxu0
      %v2719 = vpop.f32.mrb[0].mxu0
      %v2720 = vadd.f32 0.0, %v2719
      %v2721 = vpop.f32.mrb[0].mxu0
      %2722 = vmatprep.mubr.bf16.mxu0 0
      %2723 = vmatmul.mubr.bf16.gmra.mrb[0].mxu0 %v2189
      %v2724 = vpop.f32.mrb[0].mxu0
      %v2725 = vadd.f32 0.0, %v2724
      %v2726 = vpop.f32.mrb[0].mxu0
      %v2727 = vpop.f32.mrb[0].mxu0
      %v2728 = vadd.f32 0.0, %v2727
      %v2729 = vpop.f32.mrb[0].mxu0
      %2730 = vmatprep.mubr.bf16.mxu0 0
      %2731 = vmatmul.mubr.bf16.gmra.mrb[0].mxu0 %v2192
      %v2732 = vpop.f32.mrb[0].mxu0
      %v2733 = vadd.f32 0.0, %v2732
      %v2734 = vpop.f32.mrb[0].mxu0
      %v2735 = vpop.f32.mrb[0].mxu0
      %v2736 = vadd.f32 0.0, %v2735
      %v2737 = vpop.f32.mrb[0].mxu0
      %2738 = vmatprep.mubr.bf16.mxu0 0
      %2739 = vmatmul.mubr.bf16.gmra.mrb[0].mxu0 %v2195
      %v2740 = vpop.f32.mrb[0].mxu0
      %v2741 = vadd.f32 0.0, %v2740
      %v2742 = vpop.f32.mrb[0].mxu0
      %v2743 = vpop.f32.mrb[0].mxu0
      %v2744 = vadd.f32 0.0, %v2743
      %v2745 = vpop.f32.mrb[0].mxu0
      %2746 = vmatprep.mubr.bf16.mxu0 0
      %2747 = vmatmul.mubr.bf16.gmra.mrb[0].mxu0 %v2198
      %v2748 = vpop.f32.mrb[0].mxu0
      %v2749 = vadd.f32 0.0, %v2748
      %v2750 = vpop.f32.mrb[0].mxu0
      %v2751 = vpop.f32.mrb[0].mxu0
      %v2752 = vadd.f32 0.0, %v2751
      %v2753 = vpop.f32.mrb[0].mxu0
      %2754 = vmatprep.mubr.bf16.mxu0 0
      %2755 = vmatmul.mubr.bf16.gmra.mrb[0].mxu0 %v2201
      %v2756 = vpop.f32.mrb[0].mxu0
      %v2757 = vadd.f32 0.0, %v2756
      %v2758 = vpop.f32.mrb[0].mxu0
      %v2759 = vpop.f32.mrb[0].mxu0
      %v2760 = vadd.f32 0.0, %v2759
      %v2761 = vpop.f32.mrb[0].mxu0
      %2762 = vmatprep.mubr.bf16.mxu0 0
      %2763 = vmatmul.mubr.bf16.gmra.mrb[0].mxu0 %v2407
      %v2764 = vpop.f32.mrb[0].mxu0
      %v2765 = vadd.f32 0.0, %v2764
      %v2766 = vpop.f32.mrb[0].mxu0
      %v2767 = vpop.f32.mrb[0].mxu0
      %v2768 = vadd.f32 0.0, %v2767
      %v2769 = vpop.f32.mrb[0].mxu0
      %2770 = vmatprep.mubr.bf16.mxu0 0
      %2771 = vmatmul.mubr.bf16.gmra.mrb[0].mxu0 %v2613
      %v2772 = vpop.f32.mrb[0].mxu0
      %v2773 = vadd.f32 0.0, %v2772
      %v2774 = vpop.f32.mrb[0].mxu0
      %v2775 = vpop.f32.mrb[0].mxu0
      %v2776 = vadd.f32 0.0, %v2775
      %v2777 = vpop.f32.mrb[0].mxu0
      %2778 = vdwg.mxu0
      %v2779 = vadd.f32 %v2573, %v2653
      %v2780 = vadd.f32 %v2574, %v2656
      %v2781 = vadd.f32 %v2575, %v2661
      %v2782 = vadd.f32 %v2576, %v2664
      %v2783 = vadd.f32 %v2577, %v2669
      %v2784 = vadd.f32 %v2578, %v2672
      %v2785 = vadd.f32 %v2579, %v2677
      %v2786 = vadd.f32 %v2580, %v2680
      %v2787 = vadd.f32 %v2581, %v2685
      %v2788 = vadd.f32 %v2582, %v2688
      %v2789 = vadd.f32 %v2583, %v2693
      %v2790 = vadd.f32 %v2584, %v2696
      %v2791 = vadd.f32 %v2585, %v2701
      %v2792 = vadd.f32 %v2586, %v2704
      %v2793 = vadd.f32 %v2587, %v2709
      %v2794 = vadd.f32 %v2588, %v2712
      %v2795 = vadd.f32 %v2589, %v2717
      %v2796 = vadd.f32 %v2590, %v2720
      %v2797 = vadd.f32 %v2591, %v2725
      %v2798 = vadd.f32 %v2592, %v2728
      %v2799 = vadd.f32 %v2593, %v2733
      %v2800 = vadd.f32 %v2594, %v2736
      %v2801 = vadd.f32 %v2595, %v2741
      %v2802 = vadd.f32 %v2596, %v2744
      %v2803 = vadd.f32 %v2597, %v2749
      %v2804 = vadd.f32 %v2598, %v2752
      %v2805 = vadd.f32 %v2599, %v2757
      %v2806 = vadd.f32 %v2600, %v2760
      %v2807 = vadd.f32 %v2601, %v2765
      %v2808 = vadd.f32 %v2602, %v2768
      %v2809 = vadd.f32 %v2603, %v2773
      %v2810 = vadd.f32 %v2604, %v2776
      %v2811 = vld [vmem:[%s2] sm:$0x1]
      %v2813 = vlaneseq
      %v2814 = vshrl.u32 %v2813, 7
      %v2815 = vsub.s32 0, %v2814
      %v2816 = vrot.slane %v2811, %v2815
      %v2818 = vadd.f32 %v2779, %v2816
      %v2819 = vadd.f32 %v2780, %v2816
      %v2820 = vadd.f32 %v2781, %v2816
      %v2821 = vadd.f32 %v2782, %v2816
      %v2822 = vadd.f32 %v2783, %v2816
      %v2823 = vadd.f32 %v2784, %v2816
      %v2824 = vadd.f32 %v2785, %v2816
      %v2825 = vadd.f32 %v2786, %v2816
      %v2826 = vadd.f32 %v2787, %v2816
      %v2827 = vadd.f32 %v2788, %v2816
      %v2828 = vadd.f32 %v2789, %v2816
      %v2829 = vadd.f32 %v2790, %v2816
      %v2830 = vadd.f32 %v2791, %v2816
      %v2831 = vadd.f32 %v2792, %v2816
      %v2832 = vadd.f32 %v2793, %v2816
      %v2833 = vadd.f32 %v2794, %v2816
      %v2834 = vadd.f32 %v2795, %v2816
      %v2835 = vadd.f32 %v2796, %v2816
      %v2836 = vadd.f32 %v2797, %v2816
      %v2837 = vadd.f32 %v2798, %v2816
      %v2838 = vadd.f32 %v2799, %v2816
      %v2839 = vadd.f32 %v2800, %v2816
      %v2840 = vadd.f32 %v2801, %v2816
      %v2841 = vadd.f32 %v2802, %v2816
      %v2842 = vadd.f32 %v2803, %v2816
      %v2843 = vadd.f32 %v2804, %v2816
      %v2844 = vadd.f32 %v2805, %v2816
      %v2845 = vadd.f32 %v2806, %v2816
      %v2846 = vadd.f32 %v2807, %v2816
      %v2847 = vadd.f32 %v2808, %v2816
      %v2848 = vadd.f32 %v2809, %v2816
      %v2849 = vadd.f32 %v2810, %v2816
      %2850 = vst.msk [vmem:[%s313] sm:$0xff] %vm643, %v2818
      %2851 = vst.msk [vmem:[%s313 + $0x8] sm:$0xff] %vm643, %v2819
      %2852 = vst.msk [vmem:[%s313 + $0x10] sm:$0xff] %vm643, %v2820
      %2853 = vst.msk [vmem:[%s313 + $0x18] sm:$0xff] %vm643, %v2821
      %2854 = vst.msk [vmem:[%s313 + $0x20] sm:$0xff] %vm643, %v2822
      %2855 = vst.msk [vmem:[%s313 + $0x28] sm:$0xff] %vm643, %v2823
      %2856 = vst.msk [vmem:[%s313 + $0x30] sm:$0xff] %vm643, %v2824
      %2857 = vst.msk [vmem:[%s313 + $0x38] sm:$0xff] %vm643, %v2825
      %2858 = vst.msk [vmem:[%s313 + $0x40] sm:$0xff] %vm643, %v2826
      %2859 = vst.msk [vmem:[%s313 + $0x48] sm:$0xff] %vm643, %v2827
      %2860 = vst.msk [vmem:[%s313 + $0x50] sm:$0xff] %vm643, %v2828
      %2861 = vst.msk [vmem:[%s313 + $0x58] sm:$0xff] %vm643, %v2829
      %2862 = vst.msk [vmem:[%s313 + $0x60] sm:$0xff] %vm643, %v2830
      %2863 = vst.msk [vmem:[%s313 + $0x68] sm:$0xff] %vm643, %v2831
      %2864 = vst.msk [vmem:[%s313 + $0x70] sm:$0xff] %vm643, %v2832
      %2865 = vst.msk [vmem:[%s313 + $0x78] sm:$0xff] %vm643, %v2833
      %2866 = vst.msk [vmem:[%s313 + $0x80] sm:$0xff] %vm643, %v2834
      %2867 = vst.msk [vmem:[%s313 + $0x88] sm:$0xff] %vm643, %v2835
      %2868 = vst.msk [vmem:[%s313 + $0x90] sm:$0xff] %vm643, %v2836
      %2869 = vst.msk [vmem:[%s313 + $0x98] sm:$0xff] %vm643, %v2837
      %2870 = vst.msk [vmem:[%s313 + $0xa0] sm:$0xff] %vm643, %v2838
      %2871 = vst.msk [vmem:[%s313 + $0xa8] sm:$0xff] %vm643, %v2839
      %2872 = vst.msk [vmem:[%s313 + $0xb0] sm:$0xff] %vm643, %v2840
      %2873 = vst.msk [vmem:[%s313 + $0xb8] sm:$0xff] %vm643, %v2841
      %2874 = vst.msk [vmem:[%s313 + $0xc0] sm:$0xff] %vm643, %v2842
      %2875 = vst.msk [vmem:[%s313 + $0xc8] sm:$0xff] %vm643, %v2843
      %2876 = vst.msk [vmem:[%s313 + $0xd0] sm:$0xff] %vm643, %v2844
      %2877 = vst.msk [vmem:[%s313 + $0xd8] sm:$0xff] %vm643, %v2845
      %2878 = vst.msk [vmem:[%s313 + $0xe0] sm:$0xff] %vm643, %v2846
      %2879 = vst.msk [vmem:[%s313 + $0xe8] sm:$0xff] %vm643, %v2847
      %2880 = vst.msk [vmem:[%s313 + $0xf0] sm:$0xff] %vm643, %v2848
      %2881 = vst.msk [vmem:[%s313 + $0xf8] sm:$0xff] %vm643, %v2849
      %p2882 = scmp.eq.s32.totalorder %s24, 0
      // Predicated region
      $region41: #{double_conv_forward.3} parent=39 // pred_check
        %p2883 = pneg %p2882
      $region42: #{double_conv_forward.3} parent=39 // pred_check_branch
        %2885 = sbr.rel (%p2883) target = $region44
      $region43: #{double_conv_forward.3} parent=39 // pred_region
        %vm2886 = vcmask 57344
        %2887 = vst.msk [vmem:[%s317] sm:$0x1] %vm2886, 0.0
        %2888 = vst.msk [vmem:[%s320] sm:$0x1] %vm2886, 0.0
      $region44: #{double_conv_forward.3} parent=39 // pred_fallthru
        _
      %v2889 = vld [vmem:[%s317] sm:$0x1]
      %v2890 = vsel %vm643, %v2818, 0.0
      %v2891 = vsel %vm643, %v2819, 0.0
      %v2892 = vadd.f32 %v2890, %v2891
      %v2893 = vsel %vm643, %v2820, 0.0
      %v2894 = vadd.f32 %v2892, %v2893
      %v2895 = vsel %vm643, %v2821, 0.0
      %v2896 = vadd.f32 %v2894, %v2895
      %v2897 = vsel %vm643, %v2822, 0.0
      %v2898 = vadd.f32 %v2896, %v2897
      %v2899 = vsel %vm643, %v2823, 0.0
      %v2900 = vadd.f32 %v2898, %v2899
      %v2901 = vsel %vm643, %v2824, 0.0
      %v2902 = vadd.f32 %v2900, %v2901
      %v2903 = vsel %vm643, %v2825, 0.0
      %v2904 = vadd.f32 %v2902, %v2903
      %v2905 = vsel %vm643, %v2826, 0.0
      %v2906 = vadd.f32 %v2904, %v2905
      %v2907 = vsel %vm643, %v2827, 0.0
      %v2908 = vadd.f32 %v2906, %v2907
      %v2909 = vsel %vm643, %v2828, 0.0
      %v2910 = vadd.f32 %v2908, %v2909
      %v2911 = vsel %vm643, %v2829, 0.0
      %v2912 = vadd.f32 %v2910, %v2911
      %v2913 = vsel %vm643, %v2830, 0.0
      %v2914 = vadd.f32 %v2912, %v2913
      %v2915 = vsel %vm643, %v2831, 0.0
      %v2916 = vadd.f32 %v2914, %v2915
      %v2917 = vsel %vm643, %v2832, 0.0
      %v2918 = vadd.f32 %v2916, %v2917
      %v2919 = vsel %vm643, %v2833, 0.0
      %v2920 = vadd.f32 %v2918, %v2919
      %v2921 = vsel %vm643, %v2834, 0.0
      %v2922 = vadd.f32 %v2920, %v2921
      %v2923 = vsel %vm643, %v2835, 0.0
      %v2924 = vadd.f32 %v2922, %v2923
      %v2925 = vsel %vm643, %v2836, 0.0
      %v2926 = vadd.f32 %v2924, %v2925
      %v2927 = vsel %vm643, %v2837, 0.0
      %v2928 = vadd.f32 %v2926, %v2927
      %v2929 = vsel %vm643, %v2838, 0.0
      %v2930 = vadd.f32 %v2928, %v2929
      %v2931 = vsel %vm643, %v2839, 0.0
      %v2932 = vadd.f32 %v2930, %v2931
      %v2933 = vsel %vm643, %v2840, 0.0
      %v2934 = vadd.f32 %v2932, %v2933
      %v2935 = vsel %vm643, %v2841, 0.0
      %v2936 = vadd.f32 %v2934, %v2935
      %v2937 = vsel %vm643, %v2842, 0.0
      %v2938 = vadd.f32 %v2936, %v2937
      %v2939 = vsel %vm643, %v2843, 0.0
      %v2940 = vadd.f32 %v2938, %v2939
      %v2941 = vsel %vm643, %v2844, 0.0
      %v2942 = vadd.f32 %v2940, %v2941
      %v2943 = vsel %vm643, %v2845, 0.0
      %v2944 = vadd.f32 %v2942, %v2943
      %v2945 = vsel %vm643, %v2846, 0.0
      %v2946 = vadd.f32 %v2944, %v2945
      %v2947 = vsel %vm643, %v2847, 0.0
      %v2948 = vadd.f32 %v2946, %v2947
      %v2949 = vsel %vm643, %v2848, 0.0
      %v2950 = vadd.f32 %v2948, %v2949
      %v2951 = vsel %vm643, %v2849, 0.0
      %v2952 = vadd.f32 %v2950, %v2951
      %v2953 = vrot.slane %v2952, 4
      %v2954 = vadd.f32 %v2952, %v2953
      %v2955 = vrot.slane %v2954, 2
      %v2956 = vadd.f32 %v2954, %v2955
      %v2957 = vrot.slane %v2956, 1
      %v2958 = vadd.f32 %v2956, %v2957
      %v2959 = vadd.f32 %v2889, %v2958
      %vm2960 = vcmask 57344
      %2961 = vst.msk [vmem:[%s317] sm:$0x1] %vm2960, %v2959
      %v2962 = vld [vmem:[%s320] sm:$0x1]
      %v2963 = vmul.f32 %v2818, %v2818
      %v2964 = vmul.f32 %v2819, %v2819
      %v2965 = vmul.f32 %v2820, %v2820
      %v2966 = vmul.f32 %v2821, %v2821
      %v2967 = vmul.f32 %v2822, %v2822
      %v2968 = vmul.f32 %v2823, %v2823
      %v2969 = vmul.f32 %v2824, %v2824
      %v2970 = vmul.f32 %v2825, %v2825
      %v2971 = vmul.f32 %v2826, %v2826
      %v2972 = vmul.f32 %v2827, %v2827
      %v2973 = vmul.f32 %v2828, %v2828
      %v2974 = vmul.f32 %v2829, %v2829
      %v2975 = vmul.f32 %v2830, %v2830
      %v2976 = vmul.f32 %v2831, %v2831
      %v2977 = vmul.f32 %v2832, %v2832
      %v2978 = vmul.f32 %v2833, %v2833
      %v2979 = vmul.f32 %v2834, %v2834
      %v2980 = vmul.f32 %v2835, %v2835
      %v2981 = vmul.f32 %v2836, %v2836
      %v2982 = vmul.f32 %v2837, %v2837
      %v2983 = vmul.f32 %v2838, %v2838
      %v2984 = vmul.f32 %v2839, %v2839
      %v2985 = vmul.f32 %v2840, %v2840
      %v2986 = vmul.f32 %v2841, %v2841
      %v2987 = vmul.f32 %v2842, %v2842
      %v2988 = vmul.f32 %v2843, %v2843
      %v2989 = vmul.f32 %v2844, %v2844
      %v2990 = vmul.f32 %v2845, %v2845
      %v2991 = vmul.f32 %v2846, %v2846
      %v2992 = vmul.f32 %v2847, %v2847
      %v2993 = vmul.f32 %v2848, %v2848
      %v2994 = vmul.f32 %v2849, %v2849
      %v2995 = vsel %vm643, %v2963, 0.0
      %v2996 = vsel %vm643, %v2964, 0.0
      %v2997 = vadd.f32 %v2995, %v2996
      %v2998 = vsel %vm643, %v2965, 0.0
      %v2999 = vadd.f32 %v2997, %v2998
      %v3000 = vsel %vm643, %v2966, 0.0
      %v3001 = vadd.f32 %v2999, %v3000
      %v3002 = vsel %vm643, %v2967, 0.0
      %v3003 = vadd.f32 %v3001, %v3002
      %v3004 = vsel %vm643, %v2968, 0.0
      %v3005 = vadd.f32 %v3003, %v3004
      %v3006 = vsel %vm643, %v2969, 0.0
      %v3007 = vadd.f32 %v3005, %v3006
      %v3008 = vsel %vm643, %v2970, 0.0
      %v3009 = vadd.f32 %v3007, %v3008
      %v3010 = vsel %vm643, %v2971, 0.0
      %v3011 = vadd.f32 %v3009, %v3010
      %v3012 = vsel %vm643, %v2972, 0.0
      %v3013 = vadd.f32 %v3011, %v3012
      %v3014 = vsel %vm643, %v2973, 0.0
      %v3015 = vadd.f32 %v3013, %v3014
      %v3016 = vsel %vm643, %v2974, 0.0
      %v3017 = vadd.f32 %v3015, %v3016
      %v3018 = vsel %vm643, %v2975, 0.0
      %v3019 = vadd.f32 %v3017, %v3018
      %v3020 = vsel %vm643, %v2976, 0.0
      %v3021 = vadd.f32 %v3019, %v3020
      %v3022 = vsel %vm643, %v2977, 0.0
      %v3023 = vadd.f32 %v3021, %v3022
      %v3024 = vsel %vm643, %v2978, 0.0
      %v3025 = vadd.f32 %v3023, %v3024
      %v3026 = vsel %vm643, %v2979, 0.0
      %v3027 = vadd.f32 %v3025, %v3026
      %v3028 = vsel %vm643, %v2980, 0.0
      %v3029 = vadd.f32 %v3027, %v3028
      %v3030 = vsel %vm643, %v2981, 0.0
      %v3031 = vadd.f32 %v3029, %v3030
      %v3032 = vsel %vm643, %v2982, 0.0
      %v3033 = vadd.f32 %v3031, %v3032
      %v3034 = vsel %vm643, %v2983, 0.0
      %v3035 = vadd.f32 %v3033, %v3034
      %v3036 = vsel %vm643, %v2984, 0.0
      %v3037 = vadd.f32 %v3035, %v3036
      %v3038 = vsel %vm643, %v2985, 0.0
      %v3039 = vadd.f32 %v3037, %v3038
      %v3040 = vsel %vm643, %v2986, 0.0
      %v3041 = vadd.f32 %v3039, %v3040
      %v3042 = vsel %vm643, %v2987, 0.0
      %v3043 = vadd.f32 %v3041, %v3042
      %v3044 = vsel %vm643, %v2988, 0.0
      %v3045 = vadd.f32 %v3043, %v3044
      %v3046 = vsel %vm643, %v2989, 0.0
      %v3047 = vadd.f32 %v3045, %v3046
      %v3048 = vsel %vm643, %v2990, 0.0
      %v3049 = vadd.f32 %v3047, %v3048
      %v3050 = vsel %vm643, %v2991, 0.0
      %v3051 = vadd.f32 %v3049, %v3050
      %v3052 = vsel %vm643, %v2992, 0.0
      %v3053 = vadd.f32 %v3051, %v3052
      %v3054 = vsel %vm643, %v2993, 0.0
      %v3055 = vadd.f32 %v3053, %v3054
      %v3056 = vsel %vm643, %v2994, 0.0
      %v3057 = vadd.f32 %v3055, %v3056
      %v3058 = vrot.slane %v3057, 4
      %v3059 = vadd.f32 %v3057, %v3058
      %v3060 = vrot.slane %v3059, 2
      %v3061 = vadd.f32 %v3059, %v3060
      %v3062 = vrot.slane %v3061, 1
      %v3063 = vadd.f32 %v3061, %v3062
      %v3064 = vadd.f32 %v2962, %v3063
      %3065 = vst.msk [vmem:[%s320] sm:$0x1] %vm2960, %v3064
      %s3066 = smul.u32 16, %s24
      %p3067 = scmp.lt.s32.totalorder %s23, 1
      %s3068 = scalar_select %p3067, %s23, 1
      %p3069 = scmp.lt.s32.totalorder %s3066, 15
      %s3070 = scalar_select %p3069, %s3066, 15
      %s3071 = smul.addr %s3070, 2
      %s3072 = smul.addr %s3068, 32
      %s3073 = sadd.s32 %s3071, %s3072
      %s3074 = smul.addr %s3073, 8
      %s3075 = scalar_lea.vmem %s5, %s3074
      %p3076 = scmp.lt.s32.totalorder %s23, 1
      %s3077 = scalar_select %p3076, %s23, 1
      %s3078 = scalar_lea.vmem %s6, %s3077
      %p3079 = scmp.lt.s32.totalorder %s23, 1
      %s3080 = scalar_select %p3079, %s23, 1
      %s3081 = scalar_lea.vmem %s7, %s3080
      // Predicated region
      $region45: #{double_conv_forward.3} parent=39 // pred_check
        %p3082 = pneg %p161
      $region46: #{double_conv_forward.3} parent=39 // pred_check_branch
        %3084 = sbr.rel (%p3082) target = $region48
      $region47: #{double_conv_forward.3} parent=39 // pred_region
        %s3085 = smul.u32 16, %s24
      $region48: #{double_conv_forward.3} parent=39 // pred_fallthru
        _
      // Predicated region
      $region49: #{double_conv_forward.3} parent=39 // pred_check
        %p3086 = pneg %p187
      $region50: #{double_conv_forward.3} parent=39 // pred_check_branch
        %3088 = sbr.rel (%p3086) target = $region52
      $region51: #{double_conv_forward.3} parent=39 // pred_region
        _
      $region52: #{double_conv_forward.3} parent=39 // pred_fallthru
        _
      // Predicated region
      $region53: #{double_conv_forward.3} parent=39 // pred_check
        %p3089 = pneg %p213
      $region54: #{double_conv_forward.3} parent=39 // pred_check_branch
        %3091 = sbr.rel (%p3089) target = $region56
      $region55: #{double_conv_forward.3} parent=39 // pred_region
        _
      $region56: #{double_conv_forward.3} parent=39 // pred_fallthru
        _
    $region40: #{double_conv_forward.3} parent=5 // pred_fallthru
      _
    %p3092 = scmp.le.s32.totalorder 2, %s14
    // Predicated region
    $region57: #{double_conv_forward.3} parent=5 // pred_check
      %p3093 = pneg %p3092
    $region58: #{double_conv_forward.3} parent=5 // pred_check_branch
      %3095 = sbr.rel (%p3093) target = $region60
    $region59: #{double_conv_forward.3} parent=5 // pred_region
      %s3096 = ssub.s32 %s14, 2
      // Predicated region
      $region61: #{double_conv_forward.3} parent=59 // pred_check
        %p3097 = pneg %p167
      $region62: #{double_conv_forward.3} parent=59 // pred_check_branch
        %3099 = sbr.rel (%p3097) target = $region64
      $region63: #{double_conv_forward.3} parent=59 // pred_region
        %s3100 = smul.u32 16, %s26
        %p3101 = scmp.lt.s32.totalorder %s25, 1
        %s3102 = scalar_select %p3101, %s25, 1
        %p3103 = scmp.lt.s32.totalorder %s3100, 15
        %s3104 = scalar_select %p3103, %s3100, 15
        %s3105 = smul.addr %s3104, 2
        %s3106 = smul.addr %s3102, 32
        %s3107 = sadd.s32 %s3105, %s3106
        %s3108 = smul.addr %s3107, 8
        %s3109 = scalar_lea.vmem %s5, %s3108
      $region64: #{double_conv_forward.3} parent=59 // pred_fallthru
        _
      // Predicated region
      $region65: #{double_conv_forward.3} parent=59 // pred_check
        %p3110 = pneg %p193
      $region66: #{double_conv_forward.3} parent=59 // pred_check_branch
        %3112 = sbr.rel (%p3110) target = $region68
      $region67: #{double_conv_forward.3} parent=59 // pred_region
        %p3113 = scmp.lt.s32.totalorder %s25, 1
        %s3114 = scalar_select %p3113, %s25, 1
        %s3115 = scalar_lea.vmem %s6, %s3114
      $region68: #{double_conv_forward.3} parent=59 // pred_fallthru
        _
      // Predicated region
      $region69: #{double_conv_forward.3} parent=59 // pred_check
        %p3116 = pneg %p219
      $region70: #{double_conv_forward.3} parent=59 // pred_check_branch
        %3118 = sbr.rel (%p3116) target = $region72
      $region71: #{double_conv_forward.3} parent=59 // pred_region
        %p3119 = scmp.lt.s32.totalorder %s25, 1
        %s3120 = scalar_select %p3119, %s25, 1
        %s3121 = scalar_lea.vmem %s7, %s3120
      $region72: #{double_conv_forward.3} parent=59 // pred_fallthru
        _
    $region60: #{double_conv_forward.3} parent=5 // pred_fallthru
      _
  $region6: #{double_conv_forward.3} parent=0 // loop_footer
    %s18 = sadd.s32 1, %s14
  $region7: #{double_conv_forward.3} parent=0 // loop_footer_branch
    %13 = sbr.rel target = $region3
  $region8: #{double_conv_forward.3} parent=0 // loop_exit
    _

// kernel: double_conv_forward.4
$region0: #{double_conv_forward.4}
  #allocation0 [shape = 'u32[]', space=smem, size = 0x4, offset = 0x4, fixed_abs, tag = 'smem constant byte address 0x4 - core index']
  #allocation1 [shape = 'u32[144,128]{1,0:T(1,128)}', space=vmem, size = 0x12000, scoped, tag = 'internal scratch']
  %s0 = inlined_call_operand.vmem [shape: f32[2,16,16,8], index: 0, kind: input, shape index: {}]
  %s1 = inlined_call_operand.vmem [shape: bf16[9,8,8], index: 1, kind: input, shape index: {}]
  %s2 = inlined_call_operand.vmem [shape: f32[1,8], index: 2, kind: input, shape index: {}]
  %s3 = inlined_call_operand.vmem [shape: f32[1,8], index: 3, kind: input, shape index: {}]
  %s4 = inlined_call_operand.vmem [shape: f32[1,8], index: 4, kind: input, shape index: {}]
  %s5 = inlined_call_operand.vmem [shape: f32[2,16,16,8], index: 5, kind: output, shape index: {0}]
  %s6 = inlined_call_operand.vmem [shape: f32[2,1,1,8], index: 6, kind: output, shape index: {1}]
  %s7 = inlined_call_operand.vmem [shape: f32[2,1,1,8], index: 7, kind: output, shape index: {2}]
  %8 = xla_tuple %s5, %s6, %s7
  %s9 = sld [smem:[#allocation0]]
  $region73: #{double_conv_forward.4} parent=0
    _
  %s11 = ssub.s32 1, %s9
  %s12 = scalar_select 0, %s11, %s9
  loop: start=0, step=1, limit=4
  $region2: #{double_conv_forward.4} parent=0 // loop_pre_header
    _
  $region3: #{double_conv_forward.4} parent=0 // loop_header
    %s14 = sphi 0, %s18
    %p15 = scmp.ge.s32.totalorder %s14, 4
    %s21 = sphi 0, %s33
    %s22 = sphi 0, %s29
    %s23 = sphi 0, %s21
    %s24 = sphi 0, %s22
    %s25 = sphi 0, %s23
    %s26 = sphi 0, %s24
    %s36 = sphi 0, %s38
    %s39 = sphi 0, %s36
    %s40 = sphi 0, %s39
    %s56 = sphi 0, %s40
    %s60 = sphi 0, %s60
    %s62 = sphi 0, %s60
    %s63 = sphi 0, %s62
    %s77 = sphi 0, %s63
    %s81 = sphi 0, %s81
    %s83 = sphi 0, %s81
    %s84 = sphi 0, %s83
    %s98 = sphi 0, %s84
    %s102 = sphi 0, %s102
    %s104 = sphi 0, %s102
    %s105 = sphi 0, %s104
    %s119 = sphi 0, %s105
    %s123 = sphi 0, %s123
    %s125 = sphi 0, %s123
    %s126 = sphi 0, %s125
    %s140 = sphi 0, %s126
    %s148 = sphi 0, %s150
    %s151 = sphi 0, %s148
    %s152 = sphi 0, %s151
    %s168 = sphi 0, %s152
    %s174 = sphi 0, %s176
    %s177 = sphi 0, %s174
    %s178 = sphi 0, %s177
    %s194 = sphi 0, %s178
    %s200 = sphi 0, %s202
    %s203 = sphi 0, %s200
    %s204 = sphi 0, %s203
    %s220 = sphi 0, %s204
  $region4: #{double_conv_forward.4} parent=0 // loop_header_branch
    %17 = sbr.rel (%p15) target = $region8
  $region5: #{double_conv_forward.4} parent=0 // loop_body
    %s19 = ssub.s32 %s14, 1
    %s20 = ssub.s32 %s14, 2
    %s27 = sadd.s32 1, %s22
    %p28 = scmp.ge.s32.totalorder %s27, 1
    %s29 = scalar_select %p28, 0, %s27
    %s30 = sadd.s32 1, %s21
    %s31 = scalar_select %p28, %s30, %s21
    %p32 = scmp.ge.s32.totalorder %s31, 2
    %s33 = scalar_select %p32, 0, %s31
    %s34 = ssub.s32 %s21, %s33
    %p35 = scmp.eq.s32.totalorder %s34, 0
    %s37 = sadd.s32 %s36, 1
    %s38 = scalar_select %p35, %s36, %s37
    %p41 = pneg %p35
    %p42 = scmp.eq.s32.totalorder %s14, 1
    %p43 = por %p41, %p42
    %p44 = scmp.ne.s32.totalorder %s36, %s39
    %p45 = scmp.eq.s32.totalorder %s14, 0
    %p46 = por %p44, %p45
    %p47 = scmp.ne.s32.totalorder %s36, %s39
    %p48 = scmp.eq.s32.totalorder %s19, 1
    %p49 = por %p47, %p48
    %p50 = scmp.ne.s32.totalorder %s39, %s40
    %p51 = scmp.eq.s32.totalorder %s19, 0
    %p52 = por %p50, %p51
    %p53 = scmp.ne.s32.totalorder %s39, %s40
    %p54 = scmp.eq.s32.totalorder %s20, 1
    %p55 = por %p53, %p54
    %p57 = scmp.ne.s32.totalorder %s40, %s56
    %p58 = scmp.eq.s32.totalorder %s20, 0
    %p59 = por %p57, %p58
    %s61 = sadd.s32 %s60, 1
    %p64 = scmp.eq.s32.totalorder %s14, 1
    %p65 = scmp.ne.s32.totalorder %s60, %s62
    %p66 = scmp.eq.s32.totalorder %s14, 0
    %p67 = por %p65, %p66
    %p68 = scmp.ne.s32.totalorder %s60, %s62
    %p69 = scmp.eq.s32.totalorder %s19, 1
    %p70 = por %p68, %p69
    %p71 = scmp.ne.s32.totalorder %s62, %s63
    %p72 = scmp.eq.s32.totalorder %s19, 0
    %p73 = por %p71, %p72
    %p74 = scmp.ne.s32.totalorder %s62, %s63
    %p75 = scmp.eq.s32.totalorder %s20, 1
    %p76 = por %p74, %p75
    %p78 = scmp.ne.s32.totalorder %s63, %s77
    %p79 = scmp.eq.s32.totalorder %s20, 0
    %p80 = por %p78, %p79
    %s82 = sadd.s32 %s81, 1
    %p85 = scmp.eq.s32.totalorder %s14, 1
    %p86 = scmp.ne.s32.totalorder %s81, %s83
    %p87 = scmp.eq.s32.totalorder %s14, 0
    %p88 = por %p86, %p87
    %p89 = scmp.ne.s32.totalorder %s81, %s83
    %p90 = scmp.eq.s32.totalorder %s19, 1
    %p91 = por %p89, %p90
    %p92 = scmp.ne.s32.totalorder %s83, %s84
    %p93 = scmp.eq.s32.totalorder %s19, 0
    %p94 = por %p92, %p93
    %p95 = scmp.ne.s32.totalorder %s83, %s84
    %p96 = scmp.eq.s32.totalorder %s20, 1
    %p97 = por %p95, %p96
    %p99 = scmp.ne.s32.totalorder %s84, %s98
    %p100 = scmp.eq.s32.totalorder %s20, 0
    %p101 = por %p99, %p100
    %s103 = sadd.s32 %s102, 1
    %p106 = scmp.eq.s32.totalorder %s14, 1
    %p107 = scmp.ne.s32.totalorder %s102, %s104
    %p108 = scmp.eq.s32.totalorder %s14, 0
    %p109 = por %p107, %p108
    %p110 = scmp.ne.s32.totalorder %s102, %s104
    %p111 = scmp.eq.s32.totalorder %s19, 1
    %p112 = por %p110, %p111
    %p113 = scmp.ne.s32.totalorder %s104, %s105
    %p114 = scmp.eq.s32.totalorder %s19, 0
    %p115 = por %p113, %p114
    %p116 = scmp.ne.s32.totalorder %s104, %s105
    %p117 = scmp.eq.s32.totalorder %s20, 1
    %p118 = por %p116, %p117
    %p120 = scmp.ne.s32.totalorder %s105, %s119
    %p121 = scmp.eq.s32.totalorder %s20, 0
    %p122 = por %p120, %p121
    %s124 = sadd.s32 %s123, 1
    %p127 = scmp.eq.s32.totalorder %s14, 1
    %p128 = scmp.ne.s32.totalorder %s123, %s125
    %p129 = scmp.eq.s32.totalorder %s14, 0
    %p130 = por %p128, %p129
    %p131 = scmp.ne.s32.totalorder %s123, %s125
    %p132 = scmp.eq.s32.totalorder %s19, 1
    %p133 = por %p131, %p132
    %p134 = scmp.ne.s32.totalorder %s125, %s126
    %p135 = scmp.eq.s32.totalorder %s19, 0
    %p136 = por %p134, %p135
    %p137 = scmp.ne.s32.totalorder %s125, %s126
    %p138 = scmp.eq.s32.totalorder %s20, 1
    %p139 = por %p137, %p138
    %p141 = scmp.ne.s32.totalorder %s126, %s140
    %p142 = scmp.eq.s32.totalorder %s20, 0
    %p143 = por %p141, %p142
    %s144 = ssub.s32 %s21, %s33
    %s145 = ssub.s32 %s22, %s29
    %s146 = sor.u32 %s144, %s145
    %p147 = scmp.eq.s32.totalorder %s146, 0
    %s149 = sadd.s32 %s148, 1
    %s150 = scalar_select %p147, %s148, %s149
    %p153 = pneg %p147
    %p154 = scmp.eq.s32.totalorder %s14, 1
    %p155 = por %p153, %p154
    %p156 = scmp.ne.s32.totalorder %s148, %s151
    %p157 = scmp.eq.s32.totalorder %s14, 0
    %p158 = por %p156, %p157
    %p159 = scmp.ne.s32.totalorder %s148, %s151
    %p160 = scmp.eq.s32.totalorder %s19, 1
    %p161 = por %p159, %p160
    %p162 = scmp.ne.s32.totalorder %s151, %s152
    %p163 = scmp.eq.s32.totalorder %s19, 0
    %p164 = por %p162, %p163
    %p165 = scmp.ne.s32.totalorder %s151, %s152
    %p166 = scmp.eq.s32.totalorder %s20, 1
    %p167 = por %p165, %p166
    %p169 = scmp.ne.s32.totalorder %s152, %s168
    %p170 = scmp.eq.s32.totalorder %s20, 0
    %p171 = por %p169, %p170
    %s172 = ssub.s32 %s21, %s33
    %p173 = scmp.eq.s32.totalorder %s172, 0
    %s175 = sadd.s32 %s174, 1
    %s176 = scalar_select %p173, %s174, %s175
    %p179 = pneg %p173
    %p180 = scmp.eq.s32.totalorder %s14, 1
    %p181 = por %p179, %p180
    %p182 = scmp.ne.s32.totalorder %s174, %s177
    %p183 = scmp.eq.s32.totalorder %s14, 0
    %p184 = por %p182, %p183
    %p185 = scmp.ne.s32.totalorder %s174, %s177
    %p186 = scmp.eq.s32.totalorder %s19, 1
    %p187 = por %p185, %p186
    %p188 = scmp.ne.s32.totalorder %s177, %s178
    %p189 = scmp.eq.s32.totalorder %s19, 0
    %p190 = por %p188, %p189
    %p191 = scmp.ne.s32.totalorder %s177, %s178
    %p192 = scmp.eq.s32.totalorder %s20, 1
    %p193 = por %p191, %p192
    %p195 = scmp.ne.s32.totalorder %s178, %s194
    %p196 = scmp.eq.s32.totalorder %s20, 0
    %p197 = por %p195, %p196
    %s198 = ssub.s32 %s21, %s33
    %p199 = scmp.eq.s32.totalorder %s198, 0
    %s201 = sadd.s32 %s200, 1
    %s202 = scalar_select %p199, %s200, %s201
    %p205 = pneg %p199
    %p206 = scmp.eq.s32.totalorder %s14, 1
    %p207 = por %p205, %p206
    %p208 = scmp.ne.s32.totalorder %s200, %s203
    %p209 = scmp.eq.s32.totalorder %s14, 0
    %p210 = por %p208, %p209
    %p211 = scmp.ne.s32.totalorder %s200, %s203
    %p212 = scmp.eq.s32.totalorder %s19, 1
    %p213 = por %p211, %p212
    %p214 = scmp.ne.s32.totalorder %s203, %s204
    %p215 = scmp.eq.s32.totalorder %s19, 0
    %p216 = por %p214, %p215
    %p217 = scmp.ne.s32.totalorder %s203, %s204
    %p218 = scmp.eq.s32.totalorder %s20, 1
    %p219 = por %p217, %p218
    %p221 = scmp.ne.s32.totalorder %s204, %s220
    %p222 = scmp.eq.s32.totalorder %s20, 0
    %p223 = por %p221, %p222
    %p224 = scmp.le.s32.totalorder 1, %s14
    %p225 = scmp.lt.s32.totalorder %s14, 3
    %p226 = pnand %p224, %p225
    %p227 = pneg %p226
    // Predicated region
    $region9: #{double_conv_forward.4} parent=5 // pred_check
      _
    $region10: #{double_conv_forward.4} parent=5 // pred_check_branch
      %229 = sbr.rel (%p226) target = $region12
    $region11: #{double_conv_forward.4} parent=5 // pred_region
      %s230 = ssub.s32 %s14, 1
      // Predicated region
      $region13: #{double_conv_forward.4} parent=11 // pred_check
        %p231 = pneg %p73
      $region14: #{double_conv_forward.4} parent=11 // pred_check_branch
        %233 = sbr.rel (%p231) target = $region16
      $region15: #{double_conv_forward.4} parent=11 // pred_region
        _
      $region16: #{double_conv_forward.4} parent=11 // pred_fallthru
        _
      // Predicated region
      $region17: #{double_conv_forward.4} parent=11 // pred_check
        %p234 = pneg %p94
      $region18: #{double_conv_forward.4} parent=11 // pred_check_branch
        %236 = sbr.rel (%p234) target = $region20
      $region19: #{double_conv_forward.4} parent=11 // pred_region
        _
      $region20: #{double_conv_forward.4} parent=11 // pred_fallthru
        _
      // Predicated region
      $region21: #{double_conv_forward.4} parent=11 // pred_check
        %p237 = pneg %p115
      $region22: #{double_conv_forward.4} parent=11 // pred_check_branch
        %239 = sbr.rel (%p237) target = $region24
      $region23: #{double_conv_forward.4} parent=11 // pred_region
        _
      $region24: #{double_conv_forward.4} parent=11 // pred_fallthru
        _
      // Predicated region
      $region25: #{double_conv_forward.4} parent=11 // pred_check
        %p240 = pneg %p136
      $region26: #{double_conv_forward.4} parent=11 // pred_check_branch
        %242 = sbr.rel (%p240) target = $region28
      $region27: #{double_conv_forward.4} parent=11 // pred_region
        _
      $region28: #{double_conv_forward.4} parent=11 // pred_fallthru
        _
    $region12: #{double_conv_forward.4} parent=5 // pred_fallthru
      _
    %p243 = scmp.lt.s32.totalorder %s14, 2
    // Predicated region
    $region29: #{double_conv_forward.4} parent=5 // pred_check
      %p244 = pneg %p243
    $region30: #{double_conv_forward.4} parent=5 // pred_check_branch
      %246 = sbr.rel (%p244) target = $region32
    $region31: #{double_conv_forward.4} parent=5 // pred_region
      // Predicated region
      $region33: #{double_conv_forward.4} parent=31 // pred_check
        %p247 = pneg %p46
      $region34: #{double_conv_forward.4} parent=31 // pred_check_branch
        %249 = sbr.rel (%p247) target = $region36
      $region35: #{double_conv_forward.4} parent=31 // pred_region
        %p250 = scmp.lt.s32.totalorder %s21, 1
        %s251 = scalar_select %p250, %s21, 1
        %s252 = smul.addr %s251, 32
        %s253 = smul.addr %s252, 8
        %s254 = scalar_lea.vmem %s0, %s253
      $region36: #{double_conv_forward.4} parent=31 // pred_fallthru
        _
    $region32: #{double_conv_forward.4} parent=5 // pred_fallthru
      _
    %p255 = scmp.le.s32.totalorder 1, %s14
    %p256 = scmp.lt.s32.totalorder %s14, 3
    %p257 = pnand %p255, %p256
    %p258 = pneg %p257
    // Predicated region
    $region37: #{double_conv_forward.4} parent=5 // pred_check
      _
    $region38: #{double_conv_forward.4} parent=5 // pred_check_branch
      %260 = sbr.rel (%p257) target = $region40
    $region39: #{double_conv_forward.4} parent=5 // pred_region
      %s261 = ssub.s32 %s14, 1
      %p262 = scmp.lt.s32.totalorder %s23, 1
      %s263 = scalar_select %p262, %s23, 1
      %s264 = smul.addr %s263, 32
      %s265 = smul.addr %s264, 8
      %s266 = scalar_lea.vmem %s0, %s265
      %p267 = pneg %p52
      %p268 = pneg %p49
      %p269 = pneg %p73
      %p270 = pneg %p70
      %p271 = pneg %p94
      %p272 = pneg %p91
      %p273 = pneg %p115
      %p274 = pneg %p112
      %p275 = pneg %p136
      %p276 = pneg %p133
      %p277 = pneg %p164
      %p278 = pneg %p161
      %s279 = smul.u32 16, %s24
      %p280 = scmp.lt.s32.totalorder %s23, 1
      %s281 = scalar_select %p280, %s23, 1
      %p282 = scmp.lt.s32.totalorder %s279, 15
      %s283 = scalar_select %p282, %s279, 15
      %s284 = smul.addr %s283, 2
      %s285 = smul.addr %s281, 32
      %s286 = sadd.s32 %s284, %s285
      %s287 = smul.addr %s286, 8
      %s288 = scalar_lea.vmem %s5, %s287
      %p289 = pneg %p190
      %p290 = pneg %p187
      %p291 = scmp.lt.s32.totalorder %s23, 1
      %s292 = scalar_select %p291, %s23, 1
      %s293 = scalar_lea.vmem %s6, %s292
      %p294 = pneg %p216
      %p295 = pneg %p213
      %p296 = scmp.lt.s32.totalorder %s23, 1
      %s297 = scalar_select %p296, %s23, 1
      %s298 = scalar_lea.vmem %s7, %s297
      %p299 = scmp.lt.s32.totalorder %s23, 1
      %s300 = scalar_select %p299, %s23, 1
      %s301 = smul.addr %s300, 32
      %s302 = smul.addr %s301, 8
      %s303 = scalar_lea.vmem %s0, %s302
      %s304 = smul.u32 16, %s24
      %p305 = scmp.lt.s32.totalorder %s23, 1
      %s306 = scalar_select %p305, %s23, 1
      %p307 = scmp.lt.s32.totalorder %s304, 15
      %s308 = scalar_select %p307, %s304, 15
      %s309 = smul.addr %s308, 2
      %s310 = smul.addr %s306, 32
      %s311 = sadd.s32 %s309, %s310
      %s312 = smul.addr %s311, 8
      %s313 = scalar_lea.vmem %s5, %s312
      %s314 = smul.u32 16, %s24
      %p315 = scmp.lt.s32.totalorder %s23, 1
      %s316 = scalar_select %p315, %s23, 1
      %s317 = scalar_lea.vmem %s6, %s316
      %p318 = scmp.lt.s32.totalorder %s23, 1
      %s319 = scalar_select %p318, %s23, 1
      %s320 = scalar_lea.vmem %s7, %s319
      %s322 = smul.u32 %s24, 16
      %s323 = ssub.s32 %s322, 1
      %p324 = scmp.gt.s32.totalorder %s323, 0
      %s325 = scalar_select %p324, %s323, 0
      %s326 = smul.u32 %s325, 16
      %s327 = scalar_lea.vmem %s303, %s326
      %v328 = vld [vmem:[%s327] sm:$0xff]
      %v329 = vld [vmem:[%s327 + $0x8] sm:$0xff]
      %v330 = vld [vmem:[%s3] sm:$0x1]
      %v332 = vlaneseq
      %v333 = vshrl.u32 %v332, 7
      %v334 = vsub.s32 0, %v333
      %v335 = vrot.slane %v330, %v334
      %v337 = vmul.f32 %v328, %v335
      %v338 = vmul.f32 %v329, %v335
      %v339 = vld [vmem:[%s4] sm:$0x1]
      %v341 = vlaneseq
      %v342 = vshrl.u32 %v341, 7
      %v343 = vsub.s32 0, %v342
      %v344 = vrot.slane %v339, %v343
      %v346 = vadd.f32 %v337, %v344
      %v347 = vadd.f32 %v338, %v344
      %v348 = vmax.f32 %v346, 0.0
      %v349 = vmax.f32 %v347, 0.0
      %s350 = smul.u32 %s322, 16
      %s351 = scalar_lea.vmem %s303, %s350
      %v352 = vld [vmem:[%s351] sm:$0xff]
      %v353 = vld [vmem:[%s351 + $0x8] sm:$0xff]
      %v354 = vld [vmem:[%s351 + $0x10] sm:$0xff]
      %v355 = vld [vmem:[%s351 + $0x18] sm:$0xff]
      %v356 = vld [vmem:[%s351 + $0x20] sm:$0xff]
      %v357 = vld [vmem:[%s351 + $0x28] sm:$0xff]
      %v358 = vld [vmem:[%s351 + $0x30] sm:$0xff]
      %v359 = vld [vmem:[%s351 + $0x38] sm:$0xff]
      %v360 = vld [vmem:[%s351 + $0x40] sm:$0xff]
      %v361 = vld [vmem:[%s351 + $0x48] sm:$0xff]
      %v362 = vld [vmem:[%s351 + $0x50] sm:$0xff]
      %v363 = vld [vmem:[%s351 + $0x58] sm:$0xff]
      %v364 = vld [vmem:[%s351 + $0x60] sm:$0xff]
      %v365 = vld [vmem:[%s351 + $0x68] sm:$0xff]
      %v366 = vld [vmem:[%s351 + $0x70] sm:$0xff]
      %v367 = vld [vmem:[%s351 + $0x78] sm:$0xff]
      %v368 = vld [vmem:[%s351 + $0x80] sm:$0xff]
      %v369 = vld [vmem:[%s351 + $0x88] sm:$0xff]
      %v370 = vld [vmem:[%s351 + $0x90] sm:$0xff]
      %v371 = vld [vmem:[%s351 + $0x98] sm:$0xff]
      %v372 = vld [vmem:[%s351 + $0xa0] sm:$0xff]
      %v373 = vld [vmem:[%s351 + $0xa8] sm:$0xff]
      %v374 = vld [vmem:[%s351 + $0xb0] sm:$0xff]
      %v375 = vld [vmem:[%s351 + $0xb8] sm:$0xff]
      %v376 = vld [vmem:[%s351 + $0xc0] sm:$0xff]
      %v377 = vld [vmem:[%s351 + $0xc8] sm:$0xff]
      %v378 = vld [vmem:[%s351 + $0xd0] sm:$0xff]
      %v379 = vld [vmem:[%s351 + $0xd8] sm:$0xff]
      %v380 = vld [vmem:[%s351 + $0xe0] sm:$0xff]
      %v381 = vld [vmem:[%s351 + $0xe8] sm:$0xff]
      %v382 = vld [vmem:[%s351 + $0xf0] sm:$0xff]
      %v383 = vld [vmem:[%s351 + $0xf8] sm:$0xff]
      %v384 = vmul.f32 %v352, %v335
      %v385 = vmul.f32 %v353, %v335
      %v386 = vmul.f32 %v354, %v335
      %v387 = vmul.f32 %v355, %v335
      %v388 = vmul.f32 %v356, %v335
      %v389 = vmul.f32 %v357, %v335
      %v390 = vmul.f32 %v358, %v335
      %v391 = vmul.f32 %v359, %v335
      %v392 = vmul.f32 %v360, %v335
      %v393 = vmul.f32 %v361, %v335
      %v394 = vmul.f32 %v362, %v335
      %v395 = vmul.f32 %v363, %v335
      %v396 = vmul.f32 %v364, %v335
      %v397 = vmul.f32 %v365, %v335
      %v398 = vmul.f32 %v366, %v335
      %v399 = vmul.f32 %v367, %v335
      %v400 = vmul.f32 %v368, %v335
      %v401 = vmul.f32 %v369, %v335
      %v402 = vmul.f32 %v370, %v335
      %v403 = vmul.f32 %v371, %v335
      %v404 = vmul.f32 %v372, %v335
      %v405 = vmul.f32 %v373, %v335
      %v406 = vmul.f32 %v374, %v335
      %v407 = vmul.f32 %v375, %v335
      %v408 = vmul.f32 %v376, %v335
      %v409 = vmul.f32 %v377, %v335
      %v410 = vmul.f32 %v378, %v335
      %v411 = vmul.f32 %v379, %v335
      %v412 = vmul.f32 %v380, %v335
      %v413 = vmul.f32 %v381, %v335
      %v414 = vmul.f32 %v382, %v335
      %v415 = vmul.f32 %v383, %v335
      %v416 = vadd.f32 %v384, %v344
      %v417 = vadd.f32 %v385, %v344
      %v418 = vadd.f32 %v386, %v344
      %v419 = vadd.f32 %v387, %v344
      %v420 = vadd.f32 %v388, %v344
      %v421 = vadd.f32 %v389, %v344
      %v422 = vadd.f32 %v390, %v344
      %v423 = vadd.f32 %v391, %v344
      %v424 = vadd.f32 %v392, %v344
      %v425 = vadd.f32 %v393, %v344
      %v426 = vadd.f32 %v394, %v344
      %v427 = vadd.f32 %v395, %v344
      %v428 = vadd.f32 %v396, %v344
      %v429 = vadd.f32 %v397, %v344
      %v430 = vadd.f32 %v398, %v344
      %v431 = vadd.f32 %v399, %v344
      %v432 = vadd.f32 %v400, %v344
      %v433 = vadd.f32 %v401, %v344
      %v434 = vadd.f32 %v402, %v344
      %v435 = vadd.f32 %v403, %v344
      %v436 = vadd.f32 %v404, %v344
      %v437 = vadd.f32 %v405, %v344
      %v438 = vadd.f32 %v406, %v344
      %v439 = vadd.f32 %v407, %v344
      %v440 = vadd.f32 %v408, %v344
      %v441 = vadd.f32 %v409, %v344
      %v442 = vadd.f32 %v410, %v344
      %v443 = vadd.f32 %v411, %v344
      %v444 = vadd.f32 %v412, %v344
      %v445 = vadd.f32 %v413, %v344
      %v446 = vadd.f32 %v414, %v344
      %v447 = vadd.f32 %v415, %v344
      %v448 = vmax.f32 %v416, 0.0
      %v449 = vmax.f32 %v417, 0.0
      %v450 = vmax.f32 %v418, 0.0
      %v451 = vmax.f32 %v419, 0.0
      %v452 = vmax.f32 %v420, 0.0
      %v453 = vmax.f32 %v421, 0.0
      %v454 = vmax.f32 %v422, 0.0
      %v455 = vmax.f32 %v423, 0.0
      %v456 = vmax.f32 %v424, 0.0
      %v457 = vmax.f32 %v425, 0.0
      %v458 = vmax.f32 %v426, 0.0
      %v459 = vmax.f32 %v427, 0.0
      %v460 = vmax.f32 %v428, 0.0
      %v461 = vmax.f32 %v429, 0.0
      %v462 = vmax.f32 %v430, 0.0
      %v463 = vmax.f32 %v431, 0.0
      %v464 = vmax.f32 %v432, 0.0
      %v465 = vmax.f32 %v433, 0.0
      %v466 = vmax.f32 %v434, 0.0
      %v467 = vmax.f32 %v435, 0.0
      %v468 = vmax.f32 %v436, 0.0
      %v469 = vmax.f32 %v437, 0.0
      %v470 = vmax.f32 %v438, 0.0
      %v471 = vmax.f32 %v439, 0.0
      %v472 = vmax.f32 %v440, 0.0
      %v473 = vmax.f32 %v441, 0.0
      %v474 = vmax.f32 %v442, 0.0
      %v475 = vmax.f32 %v443, 0.0
      %v476 = vmax.f32 %v444, 0.0
      %v477 = vmax.f32 %v445, 0.0
      %v478 = vmax.f32 %v446, 0.0
      %v479 = vmax.f32 %v447, 0.0
      %s480 = sadd.s32 %s322, 16
      %p481 = scmp.lt.s32.totalorder %s480, 15
      %s482 = scalar_select %p481, %s480, 15
      %s483 = smul.u32 %s482, 16
      %s484 = scalar_lea.vmem %s303, %s483
      %v485 = vld [vmem:[%s484] sm:$0xff]
      %v486 = vld [vmem:[%s484 + $0x8] sm:$0xff]
      %v487 = vmul.f32 %v485, %v335
      %v488 = vmul.f32 %v486, %v335
      %v489 = vadd.f32 %v487, %v344
      %v490 = vadd.f32 %v488, %v344
      %v491 = vmax.f32 %v489, 0.0
      %v492 = vmax.f32 %v490, 0.0
      %p493 = scmp.gt.s32.totalorder %s24, 0
      %s494 = scalar_select %p493, 1, 0
      %s495 = scvt.s32.f32 %s494
      %v496 = vstv %s495
      %v497 = vmul.f32 %v348, %v496
      %v498 = vmul.f32 %v349, %v496
      %s499 = sadd.s32 %s24, 1
      %p500 = scmp.lt.s32.totalorder %s499, 1
      %s501 = scalar_select %p500, 1, 0
      %s502 = scvt.s32.f32 %s501
      %v503 = vstv %s502
      %v504 = vmul.f32 %v491, %v503
      %v505 = vmul.f32 %v492, %v503
      %vm542 = vcmask 1040384
      %v543 = vrot.slane %v497, 7
      %v544 = vrot.slane %v498, 7
      %v545 = vsel %vm542, %v543, %v544
      %v546 = vrot.slane %v448, 7
      %v547 = vrot.slane %v449, 7
      %v548 = vsel %vm542, %v546, %v547
      %v549 = vrot.slane %v450, 7
      %v550 = vrot.slane %v451, 7
      %v551 = vsel %vm542, %v549, %v550
      %v552 = vrot.slane %v452, 7
      %v553 = vrot.slane %v453, 7
      %v554 = vsel %vm542, %v552, %v553
      %v555 = vrot.slane %v454, 7
      %v556 = vrot.slane %v455, 7
      %v557 = vsel %vm542, %v555, %v556
      %v558 = vrot.slane %v456, 7
      %v559 = vrot.slane %v457, 7
      %v560 = vsel %vm542, %v558, %v559
      %v561 = vrot.slane %v458, 7
      %v562 = vrot.slane %v459, 7
      %v563 = vsel %vm542, %v561, %v562
      %v564 = vrot.slane %v460, 7
      %v565 = vrot.slane %v461, 7
      %v566 = vsel %vm542, %v564, %v565
      %v567 = vrot.slane %v462, 7
      %v568 = vrot.slane %v463, 7
      %v569 = vsel %vm542, %v567, %v568
      %v570 = vrot.slane %v464, 7
      %v571 = vrot.slane %v465, 7
      %v572 = vsel %vm542, %v570, %v571
      %v573 = vrot.slane %v466, 7
      %v574 = vrot.slane %v467, 7
      %v575 = vsel %vm542, %v573, %v574
      %v576 = vrot.slane %v468, 7
      %v577 = vrot.slane %v469, 7
      %v578 = vsel %vm542, %v576, %v577
      %v579 = vrot.slane %v470, 7
      %v580 = vrot.slane %v471, 7
      %v581 = vsel %vm542, %v579, %v580
      %v582 = vrot.slane %v472, 7
      %v583 = vrot.slane %v473, 7
      %v584 = vsel %vm542, %v582, %v583
      %v585 = vrot.slane %v474, 7
      %v586 = vrot.slane %v475, 7
      %v587 = vsel %vm542, %v585, %v586
      %v588 = vrot.slane %v476, 7
      %v589 = vrot.slane %v477, 7
      %v590 = vsel %vm542, %v588, %v589
      %v591 = vrot.slane %v478, 7
      %v592 = vrot.slane %v479, 7
      %v593 = vsel %vm542, %v591, %v592
      %v594 = vrot.slane %v504, 7
      %v595 = vrot.slane %v505, 7
      %v596 = vsel %vm542, %v594, %v595
      %v651 = vsel %vm542, 0.0, %v543
      %v652 = vsel %vm542, 0.0, %v546
      %v653 = vsel %vm542, 0.0, %v549
      %v654 = vsel %vm542, 0.0, %v552
      %v655 = vsel %vm542, 0.0, %v555
      %v656 = vsel %vm542, 0.0, %v558
      %v657 = vsel %vm542, 0.0, %v561
      %v658 = vsel %vm542, 0.0, %v564
      %v659 = vsel %vm542, 0.0, %v567
      %v660 = vsel %vm542, 0.0, %v570
      %v661 = vsel %vm542, 0.0, %v573
      %v662 = vsel %vm542, 0.0, %v576
      %v663 = vsel %vm542, 0.0, %v579
      %v664 = vsel %vm542, 0.0, %v582
      %v665 = vsel %vm542, 0.0, %v585
      %v666 = vsel %vm542, 0.0, %v588
      %v667 = vsel %vm542, 0.0, %v591
      %v668 = vsel %vm542, 0.0, %v594
      %v669 = vsel %vm542, %v544, 0.0
      %v670 = vsel %vm542, %v547, 0.0
      %v671 = vsel %vm542, %v550, 0.0
      %v672 = vsel %vm542, %v553, 0.0
      %v673 = vsel %vm542, %v556, 0.0
      %v674 = vsel %vm542, %v559, 0.0
      %v675 = vsel %vm542, %v562, 0.0
      %v676 = vsel %vm542, %v565, 0.0
      %v677 = vsel %vm542, %v568, 0.0
      %v678 = vsel %vm542, %v571, 0.0
      %v679 = vsel %vm542, %v574, 0.0
      %v680 = vsel %vm542, %v577, 0.0
      %v681 = vsel %vm542, %v580, 0.0
      %v682 = vsel %vm542, %v583, 0.0
      %v683 = vsel %vm542, %v586, 0.0
      %v684 = vsel %vm542, %v589, 0.0
      %v685 = vsel %vm542, %v592, 0.0
      %v686 = vsel %vm542, %v595, 0.0
      %v687 = vpack.c.bf16 %v545, %v651
      %v688 = vpack.c.bf16 %v669, %v669
      %v689 = vpack.c.bf16 %v548, %v652
      %v690 = vpack.c.bf16 %v670, %v670
      %v691 = vpack.c.bf16 %v551, %v653
      %v692 = vpack.c.bf16 %v671, %v671
      %v693 = vpack.c.bf16 %v554, %v654
      %v694 = vpack.c.bf16 %v672, %v672
      %v695 = vpack.c.bf16 %v557, %v655
      %v696 = vpack.c.bf16 %v673, %v673
      %v697 = vpack.c.bf16 %v560, %v656
      %v698 = vpack.c.bf16 %v674, %v674
      %v699 = vpack.c.bf16 %v563, %v657
      %v700 = vpack.c.bf16 %v675, %v675
      %v701 = vpack.c.bf16 %v566, %v658
      %v702 = vpack.c.bf16 %v676, %v676
      %v703 = vpack.c.bf16 %v569, %v659
      %v704 = vpack.c.bf16 %v677, %v677
      %v705 = vpack.c.bf16 %v572, %v660
      %v706 = vpack.c.bf16 %v678, %v678
      %v707 = vpack.c.bf16 %v575, %v661
      %v708 = vpack.c.bf16 %v679, %v679
      %v709 = vpack.c.bf16 %v578, %v662
      %v710 = vpack.c.bf16 %v680, %v680
      %v711 = vpack.c.bf16 %v581, %v663
      %v712 = vpack.c.bf16 %v681, %v681
      %v713 = vpack.c.bf16 %v584, %v664
      %v714 = vpack.c.bf16 %v682, %v682
      %v715 = vpack.c.bf16 %v587, %v665
      %v716 = vpack.c.bf16 %v683, %v683
      %v717 = vpack.c.bf16 %v590, %v666
      %v718 = vpack.c.bf16 %v684, %v684
      %v719 = vpack.c.bf16 %v593, %v667
      %v720 = vpack.c.bf16 %v685, %v685
      %v721 = vpack.c.bf16 %v596, %v668
      %v722 = vpack.c.bf16 %v686, %v686
      %v723 = vld [vmem:[%s1] sm:$0xf]
      %s724 = scalar_lea.vmem %s1, 12
      %v725 = vld [vmem:[%s724] sm:$0xf]
      %vm726 = vcmask 64512
      %v728 = vsel %vm726, %v689, 0
      %v731 = vsel %vm726, %v691, 0
      %v734 = vsel %vm726, %v693, 0
      %v737 = vsel %vm726, %v695, 0
      %v740 = vsel %vm726, %v697, 0
      %v743 = vsel %vm726, %v699, 0
      %v746 = vsel %vm726, %v701, 0
      %v749 = vsel %vm726, %v703, 0
      %v752 = vsel %vm726, %v705, 0
      %v755 = vsel %vm726, %v707, 0
      %v758 = vsel %vm726, %v709, 0
      %v761 = vsel %vm726, %v711, 0
      %v764 = vsel %vm726, %v713, 0
      %v767 = vsel %vm726, %v715, 0
      %v770 = vsel %vm726, %v717, 0
      %v773 = vsel %vm726, %v719, 0
      %vm775 = vcmask 1043456
      %v777 = vsel %vm775, %v725, 0
      %779 = vmatprep.subr.bf16.mxu0 0
      %780 = vmatpush1.bf16.msra.mxu0 %v777
      %781 = vmatprep.subr.bf16.mxu0 0
      %782 = vmatpush1.bf16.msra.mxu0 0
      %783 = vmatprep.subr.bf16.mxu0 0
      %784 = vmatpush1.bf16.msra.mxu0 0
      %785 = vmatprep.subr.bf16.mxu0 0
      %786 = vmatpush1.bf16.msra.mxu0 0
      %787 = vmatprep.subr.bf16.mxu0 0
      %788 = vmatpush1.bf16.msra.mxu0 0
      %789 = vmatprep.subr.bf16.mxu0 0
      %790 = vmatpush1.bf16.msra.mxu0 0
      %791 = vmatprep.subr.bf16.mxu0 0
      %792 = vmatpush1.bf16.msra.mxu0 0
      %793 = vmatprep.subr.bf16.mxu0 0
      %794 = vmatpush1.bf16.msra.mxu0 0
      %795 = vmatprep.subr.bf16.mxu0 0
      %796 = vmatpush1.bf16.msra.mxu0 0
      %797 = vmatprep.subr.bf16.mxu0 0
      %798 = vmatpush1.bf16.msra.mxu0 0
      %799 = vmatprep.subr.bf16.mxu0 0
      %800 = vmatpush1.bf16.msra.mxu0 0
      %801 = vmatprep.subr.bf16.mxu0 0
      %802 = vmatpush1.bf16.msra.mxu0 0
      %803 = vmatprep.subr.bf16.mxu0 0
      %804 = vmatpush1.bf16.msra.mxu0 0
      %805 = vmatprep.subr.bf16.mxu0 0
      %806 = vmatpush1.bf16.msra.mxu0 0
      %807 = vmatprep.subr.bf16.mxu0 0
      %808 = vmatpush1.bf16.msra.mxu0 0
      %809 = vmatprep.subr.bf16.mxu0 0
      %810 = vmatpush1.bf16.msra.mxu0 0
      %811 = vmatprep.mubr.bf16.mxu0 0
      %812 = vmatmul.mubr.bf16.gmra.mrb[0].mxu0 %v728
      %v813 = vpop.f32.mrb[0].mxu0
      %v814 = vadd.f32 0.0, %v813
      %v815 = vpop.f32.mrb[0].mxu0
      %v816 = vpop.f32.mrb[0].mxu0
      %v817 = vadd.f32 0.0, %v816
      %v818 = vpop.f32.mrb[0].mxu0
      %819 = vmatprep.mubr.bf16.mxu0 0
      %820 = vmatmul.mubr.bf16.gmra.mrb[0].mxu0 %v731
      %v821 = vpop.f32.mrb[0].mxu0
      %v822 = vadd.f32 0.0, %v821
      %v823 = vpop.f32.mrb[0].mxu0
      %v824 = vpop.f32.mrb[0].mxu0
      %v825 = vadd.f32 0.0, %v824
      %v826 = vpop.f32.mrb[0].mxu0
      %827 = vmatprep.mubr.bf16.mxu0 0
      %828 = vmatmul.mubr.bf16.gmra.mrb[0].mxu0 %v734
      %v829 = vpop.f32.mrb[0].mxu0
      %v830 = vadd.f32 0.0, %v829
      %v831 = vpop.f32.mrb[0].mxu0
      %v832 = vpop.f32.mrb[0].mxu0
      %v833 = vadd.f32 0.0, %v832
      %v834 = vpop.f32.mrb[0].mxu0
      %835 = vmatprep.mubr.bf16.mxu0 0
      %836 = vmatmul.mubr.bf16.gmra.mrb[0].mxu0 %v737
      %v837 = vpop.f32.mrb[0].mxu0
      %v838 = vadd.f32 0.0, %v837
      %v839 = vpop.f32.mrb[0].mxu0
      %v840 = vpop.f32.mrb[0].mxu0
      %v841 = vadd.f32 0.0, %v840
      %v842 = vpop.f32.mrb[0].mxu0
      %843 = vmatprep.mubr.bf16.mxu0 0
      %844 = vmatmul.mubr.bf16.gmra.mrb[0].mxu0 %v740
      %v845 = vpop.f32.mrb[0].mxu0
      %v846 = vadd.f32 0.0, %v845
      %v847 = vpop.f32.mrb[0].mxu0
      %v848 = vpop.f32.mrb[0].mxu0
      %v849 = vadd.f32 0.0, %v848
      %v850 = vpop.f32.mrb[0].mxu0
      %851 = vmatprep.mubr.bf16.mxu0 0
      %852 = vmatmul.mubr.bf16.gmra.mrb[0].mxu0 %v743
      %v853 = vpop.f32.mrb[0].mxu0
      %v854 = vadd.f32 0.0, %v853
      %v855 = vpop.f32.mrb[0].mxu0
      %v856 = vpop.f32.mrb[0].mxu0
      %v857 = vadd.f32 0.0, %v856
      %v858 = vpop.f32.mrb[0].mxu0
      %859 = vmatprep.mubr.bf16.mxu0 0
      %860 = vmatmul.mubr.bf16.gmra.mrb[0].mxu0 %v746
      %v861 = vpop.f32.mrb[0].mxu0
      %v862 = vadd.f32 0.0, %v861
      %v863 = vpop.f32.mrb[0].mxu0
      %v864 = vpop.f32.mrb[0].mxu0
      %v865 = vadd.f32 0.0, %v864
      %v866 = vpop.f32.mrb[0].mxu0
      %867 = vmatprep.mubr.bf16.mxu0 0
      %868 = vmatmul.mubr.bf16.gmra.mrb[0].mxu0 %v749
      %v869 = vpop.f32.mrb[0].mxu0
      %v870 = vadd.f32 0.0, %v869
      %v871 = vpop.f32.mrb[0].mxu0
      %v872 = vpop.f32.mrb[0].mxu0
      %v873 = vadd.f32 0.0, %v872
      %v874 = vpop.f32.mrb[0].mxu0
      %875 = vmatprep.mubr.bf16.mxu0 0
      %876 = vmatmul.mubr.bf16.gmra.mrb[0].mxu0 %v752
      %v877 = vpop.f32.mrb[0].mxu0
      %v878 = vadd.f32 0.0, %v877
      %v879 = vpop.f32.mrb[0].mxu0
      %v880 = vpop.f32.mrb[0].mxu0
      %v881 = vadd.f32 0.0, %v880
      %v882 = vpop.f32.mrb[0].mxu0
      %883 = vmatprep.mubr.bf16.mxu0 0
      %884 = vmatmul.mubr.bf16.gmra.mrb[0].mxu0 %v755
      %v885 = vpop.f32.mrb[0].mxu0
      %v886 = vadd.f32 0.0, %v885
      %v887 = vpop.f32.mrb[0].mxu0
      %v888 = vpop.f32.mrb[0].mxu0
      %v889 = vadd.f32 0.0, %v888
      %v890 = vpop.f32.mrb[0].mxu0
      %891 = vmatprep.mubr.bf16.mxu0 0
      %892 = vmatmul.mubr.bf16.gmra.mrb[0].mxu0 %v758
      %v893 = vpop.f32.mrb[0].mxu0
      %v894 = vadd.f32 0.0, %v893
      %v895 = vpop.f32.mrb[0].mxu0
      %v896 = vpop.f32.mrb[0].mxu0
      %v897 = vadd.f32 0.0, %v896
      %v898 = vpop.f32.mrb[0].mxu0
      %899 = vmatprep.mubr.bf16.mxu0 0
      %900 = vmatmul.mubr.bf16.gmra.mrb[0].mxu0 %v761
      %v901 = vpop.f32.mrb[0].mxu0
      %v902 = vadd.f32 0.0, %v901
      %v903 = vpop.f32.mrb[0].mxu0
      %v904 = vpop.f32.mrb[0].mxu0
      %v905 = vadd.f32 0.0, %v904
      %v906 = vpop.f32.mrb[0].mxu0
      %907 = vmatprep.mubr.bf16.mxu0 0
      %908 = vmatmul.mubr.bf16.gmra.mrb[0].mxu0 %v764
      %v909 = vpop.f32.mrb[0].mxu0
      %v910 = vadd.f32 0.0, %v909
      %v911 = vpop.f32.mrb[0].mxu0
      %v912 = vpop.f32.mrb[0].mxu0
      %v913 = vadd.f32 0.0, %v912
      %v914 = vpop.f32.mrb[0].mxu0
      %915 = vmatprep.mubr.bf16.mxu0 0
      %916 = vmatmul.mubr.bf16.gmra.mrb[0].mxu0 %v767
      %v917 = vpop.f32.mrb[0].mxu0
      %v918 = vadd.f32 0.0, %v917
      %v919 = vpop.f32.mrb[0].mxu0
      %v920 = vpop.f32.mrb[0].mxu0
      %v921 = vadd.f32 0.0, %v920
      %v922 = vpop.f32.mrb[0].mxu0
      %923 = vmatprep.mubr.bf16.mxu0 0
      %924 = vmatmul.mubr.bf16.gmra.mrb[0].mxu0 %v770
      %v925 = vpop.f32.mrb[0].mxu0
      %v926 = vadd.f32 0.0, %v925
      %v927 = vpop.f32.mrb[0].mxu0
      %v928 = vpop.f32.mrb[0].mxu0
      %v929 = vadd.f32 0.0, %v928
      %v930 = vpop.f32.mrb[0].mxu0
      %931 = vmatprep.mubr.bf16.mxu0 0
      %932 = vmatmul.mubr.bf16.gmra.mrb[0].mxu0 %v773
      %v933 = vpop.f32.mrb[0].mxu0
      %v934 = vadd.f32 0.0, %v933
      %v935 = vpop.f32.mrb[0].mxu0
      %v936 = vpop.f32.mrb[0].mxu0
      %v937 = vadd.f32 0.0, %v936
      %v938 = vpop.f32.mrb[0].mxu0
      %939 = vdwg.mxu0
      %v941 = vsel %vm726, %v687, 0
      %v944 = vsel %vm775, %v723, 0
      %946 = vmatprep.subr.bf16.mxu0 0
      %947 = vmatpush1.bf16.msra.mxu0 %v944
      %948 = vmatprep.subr.bf16.mxu0 0
      %949 = vmatpush1.bf16.msra.mxu0 0
      %950 = vmatprep.subr.bf16.mxu0 0
      %951 = vmatpush1.bf16.msra.mxu0 0
      %952 = vmatprep.subr.bf16.mxu0 0
      %953 = vmatpush1.bf16.msra.mxu0 0
      %954 = vmatprep.subr.bf16.mxu0 0
      %955 = vmatpush1.bf16.msra.mxu0 0
      %956 = vmatprep.subr.bf16.mxu0 0
      %957 = vmatpush1.bf16.msra.mxu0 0
      %958 = vmatprep.subr.bf16.mxu0 0
      %959 = vmatpush1.bf16.msra.mxu0 0
      %960 = vmatprep.subr.bf16.mxu0 0
      %961 = vmatpush1.bf16.msra.mxu0 0
      %962 = vmatprep.subr.bf16.mxu0 0
      %963 = vmatpush1.bf16.msra.mxu0 0
      %964 = vmatprep.subr.bf16.mxu0 0
      %965 = vmatpush1.bf16.msra.mxu0 0
      %966 = vmatprep.subr.bf16.mxu0 0
      %967 = vmatpush1.bf16.msra.mxu0 0
      %968 = vmatprep.subr.bf16.mxu0 0
      %969 = vmatpush1.bf16.msra.mxu0 0
      %970 = vmatprep.subr.bf16.mxu0 0
      %971 = vmatpush1.bf16.msra.mxu0 0
      %972 = vmatprep.subr.bf16.mxu0 0
      %973 = vmatpush1.bf16.msra.mxu0 0
      %974 = vmatprep.subr.bf16.mxu0 0
      %975 = vmatpush1.bf16.msra.mxu0 0
      %976 = vmatprep.subr.bf16.mxu0 0
      %977 = vmatpush1.bf16.msra.mxu0 0
      %978 = vmatprep.mubr.bf16.mxu0 0
      %979 = vmatmul.mubr.bf16.gmra.mrb[0].mxu0 %v941
      %v980 = vpop.f32.mrb[0].mxu0
      %v981 = vadd.f32 %v814, %v980
      %v982 = vpop.f32.mrb[0].mxu0
      %v983 = vpop.f32.mrb[0].mxu0
      %v984 = vadd.f32 %v817, %v983
      %v985 = vpop.f32.mrb[0].mxu0
      %986 = vmatprep.mubr.bf16.mxu0 0
      %987 = vmatmul.mubr.bf16.gmra.mrb[0].mxu0 %v728
      %v988 = vpop.f32.mrb[0].mxu0
      %v989 = vadd.f32 %v822, %v988
      %v990 = vpop.f32.mrb[0].mxu0
      %v991 = vpop.f32.mrb[0].mxu0
      %v992 = vadd.f32 %v825, %v991
      %v993 = vpop.f32.mrb[0].mxu0
      %994 = vmatprep.mubr.bf16.mxu0 0
      %995 = vmatmul.mubr.bf16.gmra.mrb[0].mxu0 %v731
      %v996 = vpop.f32.mrb[0].mxu0
      %v997 = vadd.f32 %v830, %v996
      %v998 = vpop.f32.mrb[0].mxu0
      %v999 = vpop.f32.mrb[0].mxu0
      %v1000 = vadd.f32 %v833, %v999
      %v1001 = vpop.f32.mrb[0].mxu0
      %1002 = vmatprep.mubr.bf16.mxu0 0
      %1003 = vmatmul.mubr.bf16.gmra.mrb[0].mxu0 %v734
      %v1004 = vpop.f32.mrb[0].mxu0
      %v1005 = vadd.f32 %v838, %v1004
      %v1006 = vpop.f32.mrb[0].mxu0
      %v1007 = vpop.f32.mrb[0].mxu0
      %v1008 = vadd.f32 %v841, %v1007
      %v1009 = vpop.f32.mrb[0].mxu0
      %1010 = vmatprep.mubr.bf16.mxu0 0
      %1011 = vmatmul.mubr.bf16.gmra.mrb[0].mxu0 %v737
      %v1012 = vpop.f32.mrb[0].mxu0
      %v1013 = vadd.f32 %v846, %v1012
      %v1014 = vpop.f32.mrb[0].mxu0
      %v1015 = vpop.f32.mrb[0].mxu0
      %v1016 = vadd.f32 %v849, %v1015
      %v1017 = vpop.f32.mrb[0].mxu0
      %1018 = vmatprep.mubr.bf16.mxu0 0
      %1019 = vmatmul.mubr.bf16.gmra.mrb[0].mxu0 %v740
      %v1020 = vpop.f32.mrb[0].mxu0
      %v1021 = vadd.f32 %v854, %v1020
      %v1022 = vpop.f32.mrb[0].mxu0
      %v1023 = vpop.f32.mrb[0].mxu0
      %v1024 = vadd.f32 %v857, %v1023
      %v1025 = vpop.f32.mrb[0].mxu0
      %1026 = vmatprep.mubr.bf16.mxu0 0
      %1027 = vmatmul.mubr.bf16.gmra.mrb[0].mxu0 %v743
      %v1028 = vpop.f32.mrb[0].mxu0
      %v1029 = vadd.f32 %v862, %v1028
      %v1030 = vpop.f32.mrb[0].mxu0
      %v1031 = vpop.f32.mrb[0].mxu0
      %v1032 = vadd.f32 %v865, %v1031
      %v1033 = vpop.f32.mrb[0].mxu0
      %1034 = vmatprep.mubr.bf16.mxu0 0
      %1035 = vmatmul.mubr.bf16.gmra.mrb[0].mxu0 %v746
      %v1036 = vpop.f32.mrb[0].mxu0
      %v1037 = vadd.f32 %v870, %v1036
      %v1038 = vpop.f32.mrb[0].mxu0
      %v1039 = vpop.f32.mrb[0].mxu0
      %v1040 = vadd.f32 %v873, %v1039
      %v1041 = vpop.f32.mrb[0].mxu0
      %1042 = vmatprep.mubr.bf16.mxu0 0
      %1043 = vmatmul.mubr.bf16.gmra.mrb[0].mxu0 %v749
      %v1044 = vpop.f32.mrb[0].mxu0
      %v1045 = vadd.f32 %v878, %v1044
      %v1046 = vpop.f32.mrb[0].mxu0
      %v1047 = vpop.f32.mrb[0].mxu0
      %v1048 = vadd.f32 %v881, %v1047
      %v1049 = vpop.f32.mrb[0].mxu0
      %1050 = vmatprep.mubr.bf16.mxu0 0
      %1051 = vmatmul.mubr.bf16.gmra.mrb[0].mxu0 %v752
      %v1052 = vpop.f32.mrb[0].mxu0
      %v1053 = vadd.f32 %v886, %v1052
      %v1054 = vpop.f32.mrb[0].mxu0
      %v1055 = vpop.f32.mrb[0].mxu0
      %v1056 = vadd.f32 %v889, %v1055
      %v1057 = vpop.f32.mrb[0].mxu0
      %1058 = vmatprep.mubr.bf16.mxu0 0
      %1059 = vmatmul.mubr.bf16.gmra.mrb[0].mxu0 %v755
      %v1060 = vpop.f32.mrb[0].mxu0
      %v1061 = vadd.f32 %v894, %v1060
      %v1062 = vpop.f32.mrb[0].mxu0
      %v1063 = vpop.f32.mrb[0].mxu0
      %v1064 = vadd.f32 %v897, %v1063
      %v1065 = vpop.f32.mrb[0].mxu0
      %1066 = vmatprep.mubr.bf16.mxu0 0
      %1067 = vmatmul.mubr.bf16.gmra.mrb[0].mxu0 %v758
      %v1068 = vpop.f32.mrb[0].mxu0
      %v1069 = vadd.f32 %v902, %v1068
      %v1070 = vpop.f32.mrb[0].mxu0
      %v1071 = vpop.f32.mrb[0].mxu0
      %v1072 = vadd.f32 %v905, %v1071
      %v1073 = vpop.f32.mrb[0].mxu0
      %1074 = vmatprep.mubr.bf16.mxu0 0
      %1075 = vmatmul.mubr.bf16.gmra.mrb[0].mxu0 %v761
      %v1076 = vpop.f32.mrb[0].mxu0
      %v1077 = vadd.f32 %v910, %v1076
      %v1078 = vpop.f32.mrb[0].mxu0
      %v1079 = vpop.f32.mrb[0].mxu0
      %v1080 = vadd.f32 %v913, %v1079
      %v1081 = vpop.f32.mrb[0].mxu0
      %1082 = vmatprep.mubr.bf16.mxu0 0
      %1083 = vmatmul.mubr.bf16.gmra.mrb[0].mxu0 %v764
      %v1084 = vpop.f32.mrb[0].mxu0
      %v1085 = vadd.f32 %v918, %v1084
      %v1086 = vpop.f32.mrb[0].mxu0
      %v1087 = vpop.f32.mrb[0].mxu0
      %v1088 = vadd.f32 %v921, %v1087
      %v1089 = vpop.f32.mrb[0].mxu0
      %1090 = vmatprep.mubr.bf16.mxu0 0
      %1091 = vmatmul.mubr.bf16.gmra.mrb[0].mxu0 %v767
      %v1092 = vpop.f32.mrb[0].mxu0
      %v1093 = vadd.f32 %v926, %v1092
      %v1094 = vpop.f32.mrb[0].mxu0
      %v1095 = vpop.f32.mrb[0].mxu0
      %v1096 = vadd.f32 %v929, %v1095
      %v1097 = vpop.f32.mrb[0].mxu0
      %1098 = vmatprep.mubr.bf16.mxu0 0
      %1099 = vmatmul.mubr.bf16.gmra.mrb[0].mxu0 %v770
      %v1100 = vpop.f32.mrb[0].mxu0
      %v1101 = vadd.f32 %v934, %v1100
      %v1102 = vpop.f32.mrb[0].mxu0
      %v1103 = vpop.f32.mrb[0].mxu0
      %v1104 = vadd.f32 %v937, %v1103
      %v1105 = vpop.f32.mrb[0].mxu0
      %1106 = vdwg.mxu0
      %s1107 = scalar_lea.vmem %s1, 24
      %v1108 = vld [vmem:[%s1107] sm:$0xf]
      %v1110 = vsel %vm726, %v721, 0
      %v1113 = vsel %vm775, %v1108, 0
      %1115 = vmatprep.subr.bf16.mxu0 0
      %1116 = vmatpush1.bf16.msra.mxu0 %v1113
      %1117 = vmatprep.subr.bf16.mxu0 0
      %1118 = vmatpush1.bf16.msra.mxu0 0
      %1119 = vmatprep.subr.bf16.mxu0 0
      %1120 = vmatpush1.bf16.msra.mxu0 0
      %1121 = vmatprep.subr.bf16.mxu0 0
      %1122 = vmatpush1.bf16.msra.mxu0 0
      %1123 = vmatprep.subr.bf16.mxu0 0
      %1124 = vmatpush1.bf16.msra.mxu0 0
      %1125 = vmatprep.subr.bf16.mxu0 0
      %1126 = vmatpush1.bf16.msra.mxu0 0
      %1127 = vmatprep.subr.bf16.mxu0 0
      %1128 = vmatpush1.bf16.msra.mxu0 0
      %1129 = vmatprep.subr.bf16.mxu0 0
      %1130 = vmatpush1.bf16.msra.mxu0 0
      %1131 = vmatprep.subr.bf16.mxu0 0
      %1132 = vmatpush1.bf16.msra.mxu0 0
      %1133 = vmatprep.subr.bf16.mxu0 0
      %1134 = vmatpush1.bf16.msra.mxu0 0
      %1135 = vmatprep.subr.bf16.mxu0 0
      %1136 = vmatpush1.bf16.msra.mxu0 0
      %1137 = vmatprep.subr.bf16.mxu0 0
      %1138 = vmatpush1.bf16.msra.mxu0 0
      %1139 = vmatprep.subr.bf16.mxu0 0
      %1140 = vmatpush1.bf16.msra.mxu0 0
      %1141 = vmatprep.subr.bf16.mxu0 0
      %1142 = vmatpush1.bf16.msra.mxu0 0
      %1143 = vmatprep.subr.bf16.mxu0 0
      %1144 = vmatpush1.bf16.msra.mxu0 0
      %1145 = vmatprep.subr.bf16.mxu0 0
      %1146 = vmatpush1.bf16.msra.mxu0 0
      %1147 = vmatprep.mubr.bf16.mxu0 0
      %1148 = vmatmul.mubr.bf16.gmra.mrb[0].mxu0 %v731
      %v1149 = vpop.f32.mrb[0].mxu0
      %v1150 = vadd.f32 0.0, %v1149
      %v1151 = vpop.f32.mrb[0].mxu0
      %v1152 = vpop.f32.mrb[0].mxu0
      %v1153 = vadd.f32 0.0, %v1152
      %v1154 = vpop.f32.mrb[0].mxu0
      %1155 = vmatprep.mubr.bf16.mxu0 0
      %1156 = vmatmul.mubr.bf16.gmra.mrb[0].mxu0 %v734
      %v1157 = vpop.f32.mrb[0].mxu0
      %v1158 = vadd.f32 0.0, %v1157
      %v1159 = vpop.f32.mrb[0].mxu0
      %v1160 = vpop.f32.mrb[0].mxu0
      %v1161 = vadd.f32 0.0, %v1160
      %v1162 = vpop.f32.mrb[0].mxu0
      %1163 = vmatprep.mubr.bf16.mxu0 0
      %1164 = vmatmul.mubr.bf16.gmra.mrb[0].mxu0 %v737
      %v1165 = vpop.f32.mrb[0].mxu0
      %v1166 = vadd.f32 0.0, %v1165
      %v1167 = vpop.f32.mrb[0].mxu0
      %v1168 = vpop.f32.mrb[0].mxu0
      %v1169 = vadd.f32 0.0, %v1168
      %v1170 = vpop.f32.mrb[0].mxu0
      %1171 = vmatprep.mubr.bf16.mxu0 0
      %1172 = vmatmul.mubr.bf16.gmra.mrb[0].mxu0 %v740
      %v1173 = vpop.f32.mrb[0].mxu0
      %v1174 = vadd.f32 0.0, %v1173
      %v1175 = vpop.f32.mrb[0].mxu0
      %v1176 = vpop.f32.mrb[0].mxu0
      %v1177 = vadd.f32 0.0, %v1176
      %v1178 = vpop.f32.mrb[0].mxu0
      %1179 = vmatprep.mubr.bf16.mxu0 0
      %1180 = vmatmul.mubr.bf16.gmra.mrb[0].mxu0 %v743
      %v1181 = vpop.f32.mrb[0].mxu0
      %v1182 = vadd.f32 0.0, %v1181
      %v1183 = vpop.f32.mrb[0].mxu0
      %v1184 = vpop.f32.mrb[0].mxu0
      %v1185 = vadd.f32 0.0, %v1184
      %v1186 = vpop.f32.mrb[0].mxu0
      %1187 = vmatprep.mubr.bf16.mxu0 0
      %1188 = vmatmul.mubr.bf16.gmra.mrb[0].mxu0 %v746
      %v1189 = vpop.f32.mrb[0].mxu0
      %v1190 = vadd.f32 0.0, %v1189
      %v1191 = vpop.f32.mrb[0].mxu0
      %v1192 = vpop.f32.mrb[0].mxu0
      %v1193 = vadd.f32 0.0, %v1192
      %v1194 = vpop.f32.mrb[0].mxu0
      %1195 = vmatprep.mubr.bf16.mxu0 0
      %1196 = vmatmul.mubr.bf16.gmra.mrb[0].mxu0 %v749
      %v1197 = vpop.f32.mrb[0].mxu0
      %v1198 = vadd.f32 0.0, %v1197
      %v1199 = vpop.f32.mrb[0].mxu0
      %v1200 = vpop.f32.mrb[0].mxu0
      %v1201 = vadd.f32 0.0, %v1200
      %v1202 = vpop.f32.mrb[0].mxu0
      %1203 = vmatprep.mubr.bf16.mxu0 0
      %1204 = vmatmul.mubr.bf16.gmra.mrb[0].mxu0 %v752
      %v1205 = vpop.f32.mrb[0].mxu0
      %v1206 = vadd.f32 0.0, %v1205
      %v1207 = vpop.f32.mrb[0].mxu0
      %v1208 = vpop.f32.mrb[0].mxu0
      %v1209 = vadd.f32 0.0, %v1208
      %v1210 = vpop.f32.mrb[0].mxu0
      %1211 = vmatprep.mubr.bf16.mxu0 0
      %1212 = vmatmul.mubr.bf16.gmra.mrb[0].mxu0 %v755
      %v1213 = vpop.f32.mrb[0].mxu0
      %v1214 = vadd.f32 0.0, %v1213
      %v1215 = vpop.f32.mrb[0].mxu0
      %v1216 = vpop.f32.mrb[0].mxu0
      %v1217 = vadd.f32 0.0, %v1216
      %v1218 = vpop.f32.mrb[0].mxu0
      %1219 = vmatprep.mubr.bf16.mxu0 0
      %1220 = vmatmul.mubr.bf16.gmra.mrb[0].mxu0 %v758
      %v1221 = vpop.f32.mrb[0].mxu0
      %v1222 = vadd.f32 0.0, %v1221
      %v1223 = vpop.f32.mrb[0].mxu0
      %v1224 = vpop.f32.mrb[0].mxu0
      %v1225 = vadd.f32 0.0, %v1224
      %v1226 = vpop.f32.mrb[0].mxu0
      %1227 = vmatprep.mubr.bf16.mxu0 0
      %1228 = vmatmul.mubr.bf16.gmra.mrb[0].mxu0 %v761
      %v1229 = vpop.f32.mrb[0].mxu0
      %v1230 = vadd.f32 0.0, %v1229
      %v1231 = vpop.f32.mrb[0].mxu0
      %v1232 = vpop.f32.mrb[0].mxu0
      %v1233 = vadd.f32 0.0, %v1232
      %v1234 = vpop.f32.mrb[0].mxu0
      %1235 = vmatprep.mubr.bf16.mxu0 0
      %1236 = vmatmul.mubr.bf16.gmra.mrb[0].mxu0 %v764
      %v1237 = vpop.f32.mrb[0].mxu0
      %v1238 = vadd.f32 0.0, %v1237
      %v1239 = vpop.f32.mrb[0].mxu0
      %v1240 = vpop.f32.mrb[0].mxu0
      %v1241 = vadd.f32 0.0, %v1240
      %v1242 = vpop.f32.mrb[0].mxu0
      %1243 = vmatprep.mubr.bf16.mxu0 0
      %1244 = vmatmul.mubr.bf16.gmra.mrb[0].mxu0 %v767
      %v1245 = vpop.f32.mrb[0].mxu0
      %v1246 = vadd.f32 0.0, %v1245
      %v1247 = vpop.f32.mrb[0].mxu0
      %v1248 = vpop.f32.mrb[0].mxu0
      %v1249 = vadd.f32 0.0, %v1248
      %v1250 = vpop.f32.mrb[0].mxu0
      %1251 = vmatprep.mubr.bf16.mxu0 0
      %1252 = vmatmul.mubr.bf16.gmra.mrb[0].mxu0 %v770
      %v1253 = vpop.f32.mrb[0].mxu0
      %v1254 = vadd.f32 0.0, %v1253
      %v1255 = vpop.f32.mrb[0].mxu0
      %v1256 = vpop.f32.mrb[0].mxu0
      %v1257 = vadd.f32 0.0, %v1256
      %v1258 = vpop.f32.mrb[0].mxu0
      %1259 = vmatprep.mubr.bf16.mxu0 0
      %1260 = vmatmul.mubr.bf16.gmra.mrb[0].mxu0 %v773
      %v1261 = vpop.f32.mrb[0].mxu0
      %v1262 = vadd.f32 0.0, %v1261
      %v1263 = vpop.f32.mrb[0].mxu0
      %v1264 = vpop.f32.mrb[0].mxu0
      %v1265 = vadd.f32 0.0, %v1264
      %v1266 = vpop.f32.mrb[0].mxu0
      %1267 = vmatprep.mubr.bf16.mxu0 0
      %1268 = vmatmul.mubr.bf16.gmra.mrb[0].mxu0 %v1110
      %v1269 = vpop.f32.mrb[0].mxu0
      %v1270 = vadd.f32 0.0, %v1269
      %v1271 = vpop.f32.mrb[0].mxu0
      %v1272 = vpop.f32.mrb[0].mxu0
      %v1273 = vadd.f32 0.0, %v1272
      %v1274 = vpop.f32.mrb[0].mxu0
      %1275 = vdwg.mxu0
      %v1276 = vadd.f32 %v981, %v1150
      %v1277 = vadd.f32 %v984, %v1153
      %v1278 = vadd.f32 %v989, %v1158
      %v1279 = vadd.f32 %v992, %v1161
      %v1280 = vadd.f32 %v997, %v1166
      %v1281 = vadd.f32 %v1000, %v1169
      %v1282 = vadd.f32 %v1005, %v1174
      %v1283 = vadd.f32 %v1008, %v1177
      %v1284 = vadd.f32 %v1013, %v1182
      %v1285 = vadd.f32 %v1016, %v1185
      %v1286 = vadd.f32 %v1021, %v1190
      %v1287 = vadd.f32 %v1024, %v1193
      %v1288 = vadd.f32 %v1029, %v1198
      %v1289 = vadd.f32 %v1032, %v1201
      %v1290 = vadd.f32 %v1037, %v1206
      %v1291 = vadd.f32 %v1040, %v1209
      %v1292 = vadd.f32 %v1045, %v1214
      %v1293 = vadd.f32 %v1048, %v1217
      %v1294 = vadd.f32 %v1053, %v1222
      %v1295 = vadd.f32 %v1056, %v1225
      %v1296 = vadd.f32 %v1061, %v1230
      %v1297 = vadd.f32 %v1064, %v1233
      %v1298 = vadd.f32 %v1069, %v1238
      %v1299 = vadd.f32 %v1072, %v1241
      %v1300 = vadd.f32 %v1077, %v1246
      %v1301 = vadd.f32 %v1080, %v1249
      %v1302 = vadd.f32 %v1085, %v1254
      %v1303 = vadd.f32 %v1088, %v1257
      %v1304 = vadd.f32 %v1093, %v1262
      %v1305 = vadd.f32 %v1096, %v1265
      %v1306 = vadd.f32 %v1101, %v1270
      %v1307 = vadd.f32 %v1104, %v1273
      %vm1308 = vsmask.f32 7424
      %v1309 = vshrl.u32 %v687, 16
      %v1311 = vshll.u32 %v687, 16
      %v1313 = vrot.slane %v1311, 1
      %v1314 = vor.u32 %v1309, %v1313
      %v1316 = vshll.u32 %v688, 16
      %v1318 = vrot.slane %v1316, 1
      %v1319 = vsel %vm1308, %v1314, %v1318
      %v1320 = vshrl.u32 %v689, 16
      %v1322 = vshll.u32 %v689, 16
      %v1324 = vrot.slane %v1322, 1
      %v1325 = vor.u32 %v1320, %v1324
      %v1327 = vshll.u32 %v690, 16
      %v1329 = vrot.slane %v1327, 1
      %v1330 = vsel %vm1308, %v1325, %v1329
      %v1331 = vshrl.u32 %v691, 16
      %v1333 = vshll.u32 %v691, 16
      %v1335 = vrot.slane %v1333, 1
      %v1336 = vor.u32 %v1331, %v1335
      %v1338 = vshll.u32 %v692, 16
      %v1340 = vrot.slane %v1338, 1
      %v1341 = vsel %vm1308, %v1336, %v1340
      %v1342 = vshrl.u32 %v693, 16
      %v1344 = vshll.u32 %v693, 16
      %v1346 = vrot.slane %v1344, 1
      %v1347 = vor.u32 %v1342, %v1346
      %v1349 = vshll.u32 %v694, 16
      %v1351 = vrot.slane %v1349, 1
      %v1352 = vsel %vm1308, %v1347, %v1351
      %v1353 = vshrl.u32 %v695, 16
      %v1355 = vshll.u32 %v695, 16
      %v1357 = vrot.slane %v1355, 1
      %v1358 = vor.u32 %v1353, %v1357
      %v1360 = vshll.u32 %v696, 16
      %v1362 = vrot.slane %v1360, 1
      %v1363 = vsel %vm1308, %v1358, %v1362
      %v1364 = vshrl.u32 %v697, 16
      %v1366 = vshll.u32 %v697, 16
      %v1368 = vrot.slane %v1366, 1
      %v1369 = vor.u32 %v1364, %v1368
      %v1371 = vshll.u32 %v698, 16
      %v1373 = vrot.slane %v1371, 1
      %v1374 = vsel %vm1308, %v1369, %v1373
      %v1375 = vshrl.u32 %v699, 16
      %v1377 = vshll.u32 %v699, 16
      %v1379 = vrot.slane %v1377, 1
      %v1380 = vor.u32 %v1375, %v1379
      %v1382 = vshll.u32 %v700, 16
      %v1384 = vrot.slane %v1382, 1
      %v1385 = vsel %vm1308, %v1380, %v1384
      %v1386 = vshrl.u32 %v701, 16
      %v1388 = vshll.u32 %v701, 16
      %v1390 = vrot.slane %v1388, 1
      %v1391 = vor.u32 %v1386, %v1390
      %v1393 = vshll.u32 %v702, 16
      %v1395 = vrot.slane %v1393, 1
      %v1396 = vsel %vm1308, %v1391, %v1395
      %v1397 = vshrl.u32 %v703, 16
      %v1399 = vshll.u32 %v703, 16
      %v1401 = vrot.slane %v1399, 1
      %v1402 = vor.u32 %v1397, %v1401
      %v1404 = vshll.u32 %v704, 16
      %v1406 = vrot.slane %v1404, 1
      %v1407 = vsel %vm1308, %v1402, %v1406
      %v1408 = vshrl.u32 %v705, 16
      %v1410 = vshll.u32 %v705, 16
      %v1412 = vrot.slane %v1410, 1
      %v1413 = vor.u32 %v1408, %v1412
      %v1415 = vshll.u32 %v706, 16
      %v1417 = vrot.slane %v1415, 1
      %v1418 = vsel %vm1308, %v1413, %v1417
      %v1419 = vshrl.u32 %v707, 16
      %v1421 = vshll.u32 %v707, 16
      %v1423 = vrot.slane %v1421, 1
      %v1424 = vor.u32 %v1419, %v1423
      %v1426 = vshll.u32 %v708, 16
      %v1428 = vrot.slane %v1426, 1
      %v1429 = vsel %vm1308, %v1424, %v1428
      %v1430 = vshrl.u32 %v709, 16
      %v1432 = vshll.u32 %v709, 16
      %v1434 = vrot.slane %v1432, 1
      %v1435 = vor.u32 %v1430, %v1434
      %v1437 = vshll.u32 %v710, 16
      %v1439 = vrot.slane %v1437, 1
      %v1440 = vsel %vm1308, %v1435, %v1439
      %v1441 = vshrl.u32 %v711, 16
      %v1443 = vshll.u32 %v711, 16
      %v1445 = vrot.slane %v1443, 1
      %v1446 = vor.u32 %v1441, %v1445
      %v1448 = vshll.u32 %v712, 16
      %v1450 = vrot.slane %v1448, 1
      %v1451 = vsel %vm1308, %v1446, %v1450
      %v1452 = vshrl.u32 %v713, 16
      %v1454 = vshll.u32 %v713, 16
      %v1456 = vrot.slane %v1454, 1
      %v1457 = vor.u32 %v1452, %v1456
      %v1459 = vshll.u32 %v714, 16
      %v1461 = vrot.slane %v1459, 1
      %v1462 = vsel %vm1308, %v1457, %v1461
      %v1463 = vshrl.u32 %v715, 16
      %v1465 = vshll.u32 %v715, 16
      %v1467 = vrot.slane %v1465, 1
      %v1468 = vor.u32 %v1463, %v1467
      %v1470 = vshll.u32 %v716, 16
      %v1472 = vrot.slane %v1470, 1
      %v1473 = vsel %vm1308, %v1468, %v1472
      %v1474 = vshrl.u32 %v717, 16
      %v1476 = vshll.u32 %v717, 16
      %v1478 = vrot.slane %v1476, 1
      %v1479 = vor.u32 %v1474, %v1478
      %v1481 = vshll.u32 %v718, 16
      %v1483 = vrot.slane %v1481, 1
      %v1484 = vsel %vm1308, %v1479, %v1483
      %s1485 = scalar_lea.vmem %s1, 4
      %v1486 = vld [vmem:[%s1485] sm:$0xf]
      %v1488 = vsel %vm726, %v1319, 0
      %v1491 = vsel %vm726, %v1330, 0
      %v1494 = vsel %vm726, %v1341, 0
      %v1497 = vsel %vm726, %v1352, 0
      %v1500 = vsel %vm726, %v1363, 0
      %v1503 = vsel %vm726, %v1374, 0
      %v1506 = vsel %vm726, %v1385, 0
      %v1509 = vsel %vm726, %v1396, 0
      %v1512 = vsel %vm726, %v1407, 0
      %v1515 = vsel %vm726, %v1418, 0
      %v1518 = vsel %vm726, %v1429, 0
      %v1521 = vsel %vm726, %v1440, 0
      %v1524 = vsel %vm726, %v1451, 0
      %v1527 = vsel %vm726, %v1462, 0
      %v1530 = vsel %vm726, %v1473, 0
      %v1533 = vsel %vm726, %v1484, 0
      %v1536 = vsel %vm775, %v1486, 0
      %1538 = vmatprep.subr.bf16.mxu0 0
      %1539 = vmatpush1.bf16.msra.mxu0 %v1536
      %1540 = vmatprep.subr.bf16.mxu0 0
      %1541 = vmatpush1.bf16.msra.mxu0 0
      %1542 = vmatprep.subr.bf16.mxu0 0
      %1543 = vmatpush1.bf16.msra.mxu0 0
      %1544 = vmatprep.subr.bf16.mxu0 0
      %1545 = vmatpush1.bf16.msra.mxu0 0
      %1546 = vmatprep.subr.bf16.mxu0 0
      %1547 = vmatpush1.bf16.msra.mxu0 0
      %1548 = vmatprep.subr.bf16.mxu0 0
      %1549 = vmatpush1.bf16.msra.mxu0 0
      %1550 = vmatprep.subr.bf16.mxu0 0
      %1551 = vmatpush1.bf16.msra.mxu0 0
      %1552 = vmatprep.subr.bf16.mxu0 0
      %1553 = vmatpush1.bf16.msra.mxu0 0
      %1554 = vmatprep.subr.bf16.mxu0 0
      %1555 = vmatpush1.bf16.msra.mxu0 0
      %1556 = vmatprep.subr.bf16.mxu0 0
      %1557 = vmatpush1.bf16.msra.mxu0 0
      %1558 = vmatprep.subr.bf16.mxu0 0
      %1559 = vmatpush1.bf16.msra.mxu0 0
      %1560 = vmatprep.subr.bf16.mxu0 0
      %1561 = vmatpush1.bf16.msra.mxu0 0
      %1562 = vmatprep.subr.bf16.mxu0 0
      %1563 = vmatpush1.bf16.msra.mxu0 0
      %1564 = vmatprep.subr.bf16.mxu0 0
      %1565 = vmatpush1.bf16.msra.mxu0 0
      %1566 = vmatprep.subr.bf16.mxu0 0
      %1567 = vmatpush1.bf16.msra.mxu0 0
      %1568 = vmatprep.subr.bf16.mxu0 0
      %1569 = vmatpush1.bf16.msra.mxu0 0
      %1570 = vmatprep.mubr.bf16.mxu0 0
      %1571 = vmatmul.mubr.bf16.gmra.mrb[0].mxu0 %v1488
      %v1572 = vpop.f32.mrb[0].mxu0
      %v1573 = vadd.f32 0.0, %v1572
      %v1574 = vpop.f32.mrb[0].mxu0
      %v1575 = vpop.f32.mrb[0].mxu0
      %v1576 = vadd.f32 0.0, %v1575
      %v1577 = vpop.f32.mrb[0].mxu0
      %1578 = vmatprep.mubr.bf16.mxu0 0
      %1579 = vmatmul.mubr.bf16.gmra.mrb[0].mxu0 %v1491
      %v1580 = vpop.f32.mrb[0].mxu0
      %v1581 = vadd.f32 0.0, %v1580
      %v1582 = vpop.f32.mrb[0].mxu0
      %v1583 = vpop.f32.mrb[0].mxu0
      %v1584 = vadd.f32 0.0, %v1583
      %v1585 = vpop.f32.mrb[0].mxu0
      %1586 = vmatprep.mubr.bf16.mxu0 0
      %1587 = vmatmul.mubr.bf16.gmra.mrb[0].mxu0 %v1494
      %v1588 = vpop.f32.mrb[0].mxu0
      %v1589 = vadd.f32 0.0, %v1588
      %v1590 = vpop.f32.mrb[0].mxu0
      %v1591 = vpop.f32.mrb[0].mxu0
      %v1592 = vadd.f32 0.0, %v1591
      %v1593 = vpop.f32.mrb[0].mxu0
      %1594 = vmatprep.mubr.bf16.mxu0 0
      %1595 = vmatmul.mubr.bf16.gmra.mrb[0].mxu0 %v1497
      %v1596 = vpop.f32.mrb[0].mxu0
      %v1597 = vadd.f32 0.0, %v1596
      %v1598 = vpop.f32.mrb[0].mxu0
      %v1599 = vpop.f32.mrb[0].mxu0
      %v1600 = vadd.f32 0.0, %v1599
      %v1601 = vpop.f32.mrb[0].mxu0
      %1602 = vmatprep.mubr.bf16.mxu0 0
      %1603 = vmatmul.mubr.bf16.gmra.mrb[0].mxu0 %v1500
      %v1604 = vpop.f32.mrb[0].mxu0
      %v1605 = vadd.f32 0.0, %v1604
      %v1606 = vpop.f32.mrb[0].mxu0
      %v1607 = vpop.f32.mrb[0].mxu0
      %v1608 = vadd.f32 0.0, %v1607
      %v1609 = vpop.f32.mrb[0].mxu0
      %1610 = vmatprep.mubr.bf16.mxu0 0
      %1611 = vmatmul.mubr.bf16.gmra.mrb[0].mxu0 %v1503
      %v1612 = vpop.f32.mrb[0].mxu0
      %v1613 = vadd.f32 0.0, %v1612
      %v1614 = vpop.f32.mrb[0].mxu0
      %v1615 = vpop.f32.mrb[0].mxu0
      %v1616 = vadd.f32 0.0, %v1615
      %v1617 = vpop.f32.mrb[0].mxu0
      %1618 = vmatprep.mubr.bf16.mxu0 0
      %1619 = vmatmul.mubr.bf16.gmra.mrb[0].mxu0 %v1506
      %v1620 = vpop.f32.mrb[0].mxu0
      %v1621 = vadd.f32 0.0, %v1620
      %v1622 = vpop.f32.mrb[0].mxu0
      %v1623 = vpop.f32.mrb[0].mxu0
      %v1624 = vadd.f32 0.0, %v1623
      %v1625 = vpop.f32.mrb[0].mxu0
      %1626 = vmatprep.mubr.bf16.mxu0 0
      %1627 = vmatmul.mubr.bf16.gmra.mrb[0].mxu0 %v1509
      %v1628 = vpop.f32.mrb[0].mxu0
      %v1629 = vadd.f32 0.0, %v1628
      %v1630 = vpop.f32.mrb[0].mxu0
      %v1631 = vpop.f32.mrb[0].mxu0
      %v1632 = vadd.f32 0.0, %v1631
      %v1633 = vpop.f32.mrb[0].mxu0
      %1634 = vmatprep.mubr.bf16.mxu0 0
      %1635 = vmatmul.mubr.bf16.gmra.mrb[0].mxu0 %v1512
      %v1636 = vpop.f32.mrb[0].mxu0
      %v1637 = vadd.f32 0.0, %v1636
      %v1638 = vpop.f32.mrb[0].mxu0
      %v1639 = vpop.f32.mrb[0].mxu0
      %v1640 = vadd.f32 0.0, %v1639
      %v1641 = vpop.f32.mrb[0].mxu0
      %1642 = vmatprep.mubr.bf16.mxu0 0
      %1643 = vmatmul.mubr.bf16.gmra.mrb[0].mxu0 %v1515
      %v1644 = vpop.f32.mrb[0].mxu0
      %v1645 = vadd.f32 0.0, %v1644
      %v1646 = vpop.f32.mrb[0].mxu0
      %v1647 = vpop.f32.mrb[0].mxu0
      %v1648 = vadd.f32 0.0, %v1647
      %v1649 = vpop.f32.mrb[0].mxu0
      %1650 = vmatprep.mubr.bf16.mxu0 0
      %1651 = vmatmul.mubr.bf16.gmra.mrb[0].mxu0 %v1518
      %v1652 = vpop.f32.mrb[0].mxu0
      %v1653 = vadd.f32 0.0, %v1652
      %v1654 = vpop.f32.mrb[0].mxu0
      %v1655 = vpop.f32.mrb[0].mxu0
      %v1656 = vadd.f32 0.0, %v1655
      %v1657 = vpop.f32.mrb[0].mxu0
      %1658 = vmatprep.mubr.bf16.mxu0 0
      %1659 = vmatmul.mubr.bf16.gmra.mrb[0].mxu0 %v1521
      %v1660 = vpop.f32.mrb[0].mxu0
      %v1661 = vadd.f32 0.0, %v1660
      %v1662 = vpop.f32.mrb[0].mxu0
      %v1663 = vpop.f32.mrb[0].mxu0
      %v1664 = vadd.f32 0.0, %v1663
      %v1665 = vpop.f32.mrb[0].mxu0
      %1666 = vmatprep.mubr.bf16.mxu0 0
      %1667 = vmatmul.mubr.bf16.gmra.mrb[0].mxu0 %v1524
      %v1668 = vpop.f32.mrb[0].mxu0
      %v1669 = vadd.f32 0.0, %v1668
      %v1670 = vpop.f32.mrb[0].mxu0
      %v1671 = vpop.f32.mrb[0].mxu0
      %v1672 = vadd.f32 0.0, %v1671
      %v1673 = vpop.f32.mrb[0].mxu0
      %1674 = vmatprep.mubr.bf16.mxu0 0
      %1675 = vmatmul.mubr.bf16.gmra.mrb[0].mxu0 %v1527
      %v1676 = vpop.f32.mrb[0].mxu0
      %v1677 = vadd.f32 0.0, %v1676
      %v1678 = vpop.f32.mrb[0].mxu0
      %v1679 = vpop.f32.mrb[0].mxu0
      %v1680 = vadd.f32 0.0, %v1679
      %v1681 = vpop.f32.mrb[0].mxu0
      %1682 = vmatprep.mubr.bf16.mxu0 0
      %1683 = vmatmul.mubr.bf16.gmra.mrb[0].mxu0 %v1530
      %v1684 = vpop.f32.mrb[0].mxu0
      %v1685 = vadd.f32 0.0, %v1684
      %v1686 = vpop.f32.mrb[0].mxu0
      %v1687 = vpop.f32.mrb[0].mxu0
      %v1688 = vadd.f32 0.0, %v1687
      %v1689 = vpop.f32.mrb[0].mxu0
      %1690 = vmatprep.mubr.bf16.mxu0 0
      %1691 = vmatmul.mubr.bf16.gmra.mrb[0].mxu0 %v1533
      %v1692 = vpop.f32.mrb[0].mxu0
      %v1693 = vadd.f32 0.0, %v1692
      %v1694 = vpop.f32.mrb[0].mxu0
      %v1695 = vpop.f32.mrb[0].mxu0
      %v1696 = vadd.f32 0.0, %v1695
      %v1697 = vpop.f32.mrb[0].mxu0
      %1698 = vdwg.mxu0
      %v1699 = vadd.f32 %v1276, %v1573
      %v1700 = vadd.f32 %v1277, %v1576
      %v1701 = vadd.f32 %v1278, %v1581
      %v1702 = vadd.f32 %v1279, %v1584
      %v1703 = vadd.f32 %v1280, %v1589
      %v1704 = vadd.f32 %v1281, %v1592
      %v1705 = vadd.f32 %v1282, %v1597
      %v1706 = vadd.f32 %v1283, %v1600
      %v1707 = vadd.f32 %v1284, %v1605
      %v1708 = vadd.f32 %v1285, %v1608
      %v1709 = vadd.f32 %v1286, %v1613
      %v1710 = vadd.f32 %v1287, %v1616
      %v1711 = vadd.f32 %v1288, %v1621
      %v1712 = vadd.f32 %v1289, %v1624
      %v1713 = vadd.f32 %v1290, %v1629
      %v1714 = vadd.f32 %v1291, %v1632
      %v1715 = vadd.f32 %v1292, %v1637
      %v1716 = vadd.f32 %v1293, %v1640
      %v1717 = vadd.f32 %v1294, %v1645
      %v1718 = vadd.f32 %v1295, %v1648
      %v1719 = vadd.f32 %v1296, %v1653
      %v1720 = vadd.f32 %v1297, %v1656
      %v1721 = vadd.f32 %v1298, %v1661
      %v1722 = vadd.f32 %v1299, %v1664
      %v1723 = vadd.f32 %v1300, %v1669
      %v1724 = vadd.f32 %v1301, %v1672
      %v1725 = vadd.f32 %v1302, %v1677
      %v1726 = vadd.f32 %v1303, %v1680
      %v1727 = vadd.f32 %v1304, %v1685
      %v1728 = vadd.f32 %v1305, %v1688
      %v1729 = vadd.f32 %v1306, %v1693
      %v1730 = vadd.f32 %v1307, %v1696
      %v1731 = vshrl.u32 %v719, 16
      %v1733 = vshll.u32 %v719, 16
      %v1735 = vrot.slane %v1733, 1
      %v1736 = vor.u32 %v1731, %v1735
      %v1738 = vshll.u32 %v720, 16
      %v1740 = vrot.slane %v1738, 1
      %v1741 = vsel %vm1308, %v1736, %v1740
      %s1742 = scalar_lea.vmem %s1, 16
      %v1743 = vld [vmem:[%s1742] sm:$0xf]
      %v1745 = vsel %vm726, %v1741, 0
      %v1748 = vsel %vm775, %v1743, 0
      %1750 = vmatprep.subr.bf16.mxu0 0
      %1751 = vmatpush1.bf16.msra.mxu0 %v1748
      %1752 = vmatprep.subr.bf16.mxu0 0
      %1753 = vmatpush1.bf16.msra.mxu0 0
      %1754 = vmatprep.subr.bf16.mxu0 0
      %1755 = vmatpush1.bf16.msra.mxu0 0
      %1756 = vmatprep.subr.bf16.mxu0 0
      %1757 = vmatpush1.bf16.msra.mxu0 0
      %1758 = vmatprep.subr.bf16.mxu0 0
      %1759 = vmatpush1.bf16.msra.mxu0 0
      %1760 = vmatprep.subr.bf16.mxu0 0
      %1761 = vmatpush1.bf16.msra.mxu0 0
      %1762 = vmatprep.subr.bf16.mxu0 0
      %1763 = vmatpush1.bf16.msra.mxu0 0
      %1764 = vmatprep.subr.bf16.mxu0 0
      %1765 = vmatpush1.bf16.msra.mxu0 0
      %1766 = vmatprep.subr.bf16.mxu0 0
      %1767 = vmatpush1.bf16.msra.mxu0 0
      %1768 = vmatprep.subr.bf16.mxu0 0
      %1769 = vmatpush1.bf16.msra.mxu0 0
      %1770 = vmatprep.subr.bf16.mxu0 0
      %1771 = vmatpush1.bf16.msra.mxu0 0
      %1772 = vmatprep.subr.bf16.mxu0 0
      %1773 = vmatpush1.bf16.msra.mxu0 0
      %1774 = vmatprep.subr.bf16.mxu0 0
      %1775 = vmatpush1.bf16.msra.mxu0 0
      %1776 = vmatprep.subr.bf16.mxu0 0
      %1777 = vmatpush1.bf16.msra.mxu0 0
      %1778 = vmatprep.subr.bf16.mxu0 0
      %1779 = vmatpush1.bf16.msra.mxu0 0
      %1780 = vmatprep.subr.bf16.mxu0 0
      %1781 = vmatpush1.bf16.msra.mxu0 0
      %1782 = vmatprep.mubr.bf16.mxu0 0
      %1783 = vmatmul.mubr.bf16.gmra.mrb[0].mxu0 %v1491
      %v1784 = vpop.f32.mrb[0].mxu0
      %v1785 = vadd.f32 0.0, %v1784
      %v1786 = vpop.f32.mrb[0].mxu0
      %v1787 = vpop.f32.mrb[0].mxu0
      %v1788 = vadd.f32 0.0, %v1787
      %v1789 = vpop.f32.mrb[0].mxu0
      %1790 = vmatprep.mubr.bf16.mxu0 0
      %1791 = vmatmul.mubr.bf16.gmra.mrb[0].mxu0 %v1494
      %v1792 = vpop.f32.mrb[0].mxu0
      %v1793 = vadd.f32 0.0, %v1792
      %v1794 = vpop.f32.mrb[0].mxu0
      %v1795 = vpop.f32.mrb[0].mxu0
      %v1796 = vadd.f32 0.0, %v1795
      %v1797 = vpop.f32.mrb[0].mxu0
      %1798 = vmatprep.mubr.bf16.mxu0 0
      %1799 = vmatmul.mubr.bf16.gmra.mrb[0].mxu0 %v1497
      %v1800 = vpop.f32.mrb[0].mxu0
      %v1801 = vadd.f32 0.0, %v1800
      %v1802 = vpop.f32.mrb[0].mxu0
      %v1803 = vpop.f32.mrb[0].mxu0
      %v1804 = vadd.f32 0.0, %v1803
      %v1805 = vpop.f32.mrb[0].mxu0
      %1806 = vmatprep.mubr.bf16.mxu0 0
      %1807 = vmatmul.mubr.bf16.gmra.mrb[0].mxu0 %v1500
      %v1808 = vpop.f32.mrb[0].mxu0
      %v1809 = vadd.f32 0.0, %v1808
      %v1810 = vpop.f32.mrb[0].mxu0
      %v1811 = vpop.f32.mrb[0].mxu0
      %v1812 = vadd.f32 0.0, %v1811
      %v1813 = vpop.f32.mrb[0].mxu0
      %1814 = vmatprep.mubr.bf16.mxu0 0
      %1815 = vmatmul.mubr.bf16.gmra.mrb[0].mxu0 %v1503
      %v1816 = vpop.f32.mrb[0].mxu0
      %v1817 = vadd.f32 0.0, %v1816
      %v1818 = vpop.f32.mrb[0].mxu0
      %v1819 = vpop.f32.mrb[0].mxu0
      %v1820 = vadd.f32 0.0, %v1819
      %v1821 = vpop.f32.mrb[0].mxu0
      %1822 = vmatprep.mubr.bf16.mxu0 0
      %1823 = vmatmul.mubr.bf16.gmra.mrb[0].mxu0 %v1506
      %v1824 = vpop.f32.mrb[0].mxu0
      %v1825 = vadd.f32 0.0, %v1824
      %v1826 = vpop.f32.mrb[0].mxu0
      %v1827 = vpop.f32.mrb[0].mxu0
      %v1828 = vadd.f32 0.0, %v1827
      %v1829 = vpop.f32.mrb[0].mxu0
      %1830 = vmatprep.mubr.bf16.mxu0 0
      %1831 = vmatmul.mubr.bf16.gmra.mrb[0].mxu0 %v1509
      %v1832 = vpop.f32.mrb[0].mxu0
      %v1833 = vadd.f32 0.0, %v1832
      %v1834 = vpop.f32.mrb[0].mxu0
      %v1835 = vpop.f32.mrb[0].mxu0
      %v1836 = vadd.f32 0.0, %v1835
      %v1837 = vpop.f32.mrb[0].mxu0
      %1838 = vmatprep.mubr.bf16.mxu0 0
      %1839 = vmatmul.mubr.bf16.gmra.mrb[0].mxu0 %v1512
      %v1840 = vpop.f32.mrb[0].mxu0
      %v1841 = vadd.f32 0.0, %v1840
      %v1842 = vpop.f32.mrb[0].mxu0
      %v1843 = vpop.f32.mrb[0].mxu0
      %v1844 = vadd.f32 0.0, %v1843
      %v1845 = vpop.f32.mrb[0].mxu0
      %1846 = vmatprep.mubr.bf16.mxu0 0
      %1847 = vmatmul.mubr.bf16.gmra.mrb[0].mxu0 %v1515
      %v1848 = vpop.f32.mrb[0].mxu0
      %v1849 = vadd.f32 0.0, %v1848
      %v1850 = vpop.f32.mrb[0].mxu0
      %v1851 = vpop.f32.mrb[0].mxu0
      %v1852 = vadd.f32 0.0, %v1851
      %v1853 = vpop.f32.mrb[0].mxu0
      %1854 = vmatprep.mubr.bf16.mxu0 0
      %1855 = vmatmul.mubr.bf16.gmra.mrb[0].mxu0 %v1518
      %v1856 = vpop.f32.mrb[0].mxu0
      %v1857 = vadd.f32 0.0, %v1856
      %v1858 = vpop.f32.mrb[0].mxu0
      %v1859 = vpop.f32.mrb[0].mxu0
      %v1860 = vadd.f32 0.0, %v1859
      %v1861 = vpop.f32.mrb[0].mxu0
      %1862 = vmatprep.mubr.bf16.mxu0 0
      %1863 = vmatmul.mubr.bf16.gmra.mrb[0].mxu0 %v1521
      %v1864 = vpop.f32.mrb[0].mxu0
      %v1865 = vadd.f32 0.0, %v1864
      %v1866 = vpop.f32.mrb[0].mxu0
      %v1867 = vpop.f32.mrb[0].mxu0
      %v1868 = vadd.f32 0.0, %v1867
      %v1869 = vpop.f32.mrb[0].mxu0
      %1870 = vmatprep.mubr.bf16.mxu0 0
      %1871 = vmatmul.mubr.bf16.gmra.mrb[0].mxu0 %v1524
      %v1872 = vpop.f32.mrb[0].mxu0
      %v1873 = vadd.f32 0.0, %v1872
      %v1874 = vpop.f32.mrb[0].mxu0
      %v1875 = vpop.f32.mrb[0].mxu0
      %v1876 = vadd.f32 0.0, %v1875
      %v1877 = vpop.f32.mrb[0].mxu0
      %1878 = vmatprep.mubr.bf16.mxu0 0
      %1879 = vmatmul.mubr.bf16.gmra.mrb[0].mxu0 %v1527
      %v1880 = vpop.f32.mrb[0].mxu0
      %v1881 = vadd.f32 0.0, %v1880
      %v1882 = vpop.f32.mrb[0].mxu0
      %v1883 = vpop.f32.mrb[0].mxu0
      %v1884 = vadd.f32 0.0, %v1883
      %v1885 = vpop.f32.mrb[0].mxu0
      %1886 = vmatprep.mubr.bf16.mxu0 0
      %1887 = vmatmul.mubr.bf16.gmra.mrb[0].mxu0 %v1530
      %v1888 = vpop.f32.mrb[0].mxu0
      %v1889 = vadd.f32 0.0, %v1888
      %v1890 = vpop.f32.mrb[0].mxu0
      %v1891 = vpop.f32.mrb[0].mxu0
      %v1892 = vadd.f32 0.0, %v1891
      %v1893 = vpop.f32.mrb[0].mxu0
      %1894 = vmatprep.mubr.bf16.mxu0 0
      %1895 = vmatmul.mubr.bf16.gmra.mrb[0].mxu0 %v1533
      %v1896 = vpop.f32.mrb[0].mxu0
      %v1897 = vadd.f32 0.0, %v1896
      %v1898 = vpop.f32.mrb[0].mxu0
      %v1899 = vpop.f32.mrb[0].mxu0
      %v1900 = vadd.f32 0.0, %v1899
      %v1901 = vpop.f32.mrb[0].mxu0
      %1902 = vmatprep.mubr.bf16.mxu0 0
      %1903 = vmatmul.mubr.bf16.gmra.mrb[0].mxu0 %v1745
      %v1904 = vpop.f32.mrb[0].mxu0
      %v1905 = vadd.f32 0.0, %v1904
      %v1906 = vpop.f32.mrb[0].mxu0
      %v1907 = vpop.f32.mrb[0].mxu0
      %v1908 = vadd.f32 0.0, %v1907
      %v1909 = vpop.f32.mrb[0].mxu0
      %1910 = vdwg.mxu0
      %v1911 = vadd.f32 %v1699, %v1785
      %v1912 = vadd.f32 %v1700, %v1788
      %v1913 = vadd.f32 %v1701, %v1793
      %v1914 = vadd.f32 %v1702, %v1796
      %v1915 = vadd.f32 %v1703, %v1801
      %v1916 = vadd.f32 %v1704, %v1804
      %v1917 = vadd.f32 %v1705, %v1809
      %v1918 = vadd.f32 %v1706, %v1812
      %v1919 = vadd.f32 %v1707, %v1817
      %v1920 = vadd.f32 %v1708, %v1820
      %v1921 = vadd.f32 %v1709, %v1825
      %v1922 = vadd.f32 %v1710, %v1828
      %v1923 = vadd.f32 %v1711, %v1833
      %v1924 = vadd.f32 %v1712, %v1836
      %v1925 = vadd.f32 %v1713, %v1841
      %v1926 = vadd.f32 %v1714, %v1844
      %v1927 = vadd.f32 %v1715, %v1849
      %v1928 = vadd.f32 %v1716, %v1852
      %v1929 = vadd.f32 %v1717, %v1857
      %v1930 = vadd.f32 %v1718, %v1860
      %v1931 = vadd.f32 %v1719, %v1865
      %v1932 = vadd.f32 %v1720, %v1868
      %v1933 = vadd.f32 %v1721, %v1873
      %v1934 = vadd.f32 %v1722, %v1876
      %v1935 = vadd.f32 %v1723, %v1881
      %v1936 = vadd.f32 %v1724, %v1884
      %v1937 = vadd.f32 %v1725, %v1889
      %v1938 = vadd.f32 %v1726, %v1892
      %v1939 = vadd.f32 %v1727, %v1897
      %v1940 = vadd.f32 %v1728, %v1900
      %v1941 = vadd.f32 %v1729, %v1905
      %v1942 = vadd.f32 %v1730, %v1908
      %v1943 = vshrl.u32 %v721, 16
      %v1945 = vshll.u32 %v721, 16
      %v1947 = vrot.slane %v1945, 1
      %v1948 = vor.u32 %v1943, %v1947
      %v1950 = vshll.u32 %v722, 16
      %v1952 = vrot.slane %v1950, 1
      %v1953 = vsel %vm1308, %v1948, %v1952
      %s1954 = scalar_lea.vmem %s1, 28
      %v1955 = vld [vmem:[%s1954] sm:$0xf]
      %v1957 = vsel %vm726, %v1953, 0
      %v1960 = vsel %vm775, %v1955, 0
      %1962 = vmatprep.subr.bf16.mxu0 0
      %1963 = vmatpush1.bf16.msra.mxu0 %v1960
      %1964 = vmatprep.subr.bf16.mxu0 0
      %1965 = vmatpush1.bf16.msra.mxu0 0
      %1966 = vmatprep.subr.bf16.mxu0 0
      %1967 = vmatpush1.bf16.msra.mxu0 0
      %1968 = vmatprep.subr.bf16.mxu0 0
      %1969 = vmatpush1.bf16.msra.mxu0 0
      %1970 = vmatprep.subr.bf16.mxu0 0
      %1971 = vmatpush1.bf16.msra.mxu0 0
      %1972 = vmatprep.subr.bf16.mxu0 0
      %1973 = vmatpush1.bf16.msra.mxu0 0
      %1974 = vmatprep.subr.bf16.mxu0 0
      %1975 = vmatpush1.bf16.msra.mxu0 0
      %1976 = vmatprep.subr.bf16.mxu0 0
      %1977 = vmatpush1.bf16.msra.mxu0 0
      %1978 = vmatprep.subr.bf16.mxu0 0
      %1979 = vmatpush1.bf16.msra.mxu0 0
      %1980 = vmatprep.subr.bf16.mxu0 0
      %1981 = vmatpush1.bf16.msra.mxu0 0
      %1982 = vmatprep.subr.bf16.mxu0 0
      %1983 = vmatpush1.bf16.msra.mxu0 0
      %1984 = vmatprep.subr.bf16.mxu0 0
      %1985 = vmatpush1.bf16.msra.mxu0 0
      %1986 = vmatprep.subr.bf16.mxu0 0
      %1987 = vmatpush1.bf16.msra.mxu0 0
      %1988 = vmatprep.subr.bf16.mxu0 0
      %1989 = vmatpush1.bf16.msra.mxu0 0
      %1990 = vmatprep.subr.bf16.mxu0 0
      %1991 = vmatpush1.bf16.msra.mxu0 0
      %1992 = vmatprep.subr.bf16.mxu0 0
      %1993 = vmatpush1.bf16.msra.mxu0 0
      %1994 = vmatprep.mubr.bf16.mxu0 0
      %1995 = vmatmul.mubr.bf16.gmra.mrb[0].mxu0 %v1494
      %v1996 = vpop.f32.mrb[0].mxu0
      %v1997 = vadd.f32 0.0, %v1996
      %v1998 = vpop.f32.mrb[0].mxu0
      %v1999 = vpop.f32.mrb[0].mxu0
      %v2000 = vadd.f32 0.0, %v1999
      %v2001 = vpop.f32.mrb[0].mxu0
      %2002 = vmatprep.mubr.bf16.mxu0 0
      %2003 = vmatmul.mubr.bf16.gmra.mrb[0].mxu0 %v1497
      %v2004 = vpop.f32.mrb[0].mxu0
      %v2005 = vadd.f32 0.0, %v2004
      %v2006 = vpop.f32.mrb[0].mxu0
      %v2007 = vpop.f32.mrb[0].mxu0
      %v2008 = vadd.f32 0.0, %v2007
      %v2009 = vpop.f32.mrb[0].mxu0
      %2010 = vmatprep.mubr.bf16.mxu0 0
      %2011 = vmatmul.mubr.bf16.gmra.mrb[0].mxu0 %v1500
      %v2012 = vpop.f32.mrb[0].mxu0
      %v2013 = vadd.f32 0.0, %v2012
      %v2014 = vpop.f32.mrb[0].mxu0
      %v2015 = vpop.f32.mrb[0].mxu0
      %v2016 = vadd.f32 0.0, %v2015
      %v2017 = vpop.f32.mrb[0].mxu0
      %2018 = vmatprep.mubr.bf16.mxu0 0
      %2019 = vmatmul.mubr.bf16.gmra.mrb[0].mxu0 %v1503
      %v2020 = vpop.f32.mrb[0].mxu0
      %v2021 = vadd.f32 0.0, %v2020
      %v2022 = vpop.f32.mrb[0].mxu0
      %v2023 = vpop.f32.mrb[0].mxu0
      %v2024 = vadd.f32 0.0, %v2023
      %v2025 = vpop.f32.mrb[0].mxu0
      %2026 = vmatprep.mubr.bf16.mxu0 0
      %2027 = vmatmul.mubr.bf16.gmra.mrb[0].mxu0 %v1506
      %v2028 = vpop.f32.mrb[0].mxu0
      %v2029 = vadd.f32 0.0, %v2028
      %v2030 = vpop.f32.mrb[0].mxu0
      %v2031 = vpop.f32.mrb[0].mxu0
      %v2032 = vadd.f32 0.0, %v2031
      %v2033 = vpop.f32.mrb[0].mxu0
      %2034 = vmatprep.mubr.bf16.mxu0 0
      %2035 = vmatmul.mubr.bf16.gmra.mrb[0].mxu0 %v1509
      %v2036 = vpop.f32.mrb[0].mxu0
      %v2037 = vadd.f32 0.0, %v2036
      %v2038 = vpop.f32.mrb[0].mxu0
      %v2039 = vpop.f32.mrb[0].mxu0
      %v2040 = vadd.f32 0.0, %v2039
      %v2041 = vpop.f32.mrb[0].mxu0
      %2042 = vmatprep.mubr.bf16.mxu0 0
      %2043 = vmatmul.mubr.bf16.gmra.mrb[0].mxu0 %v1512
      %v2044 = vpop.f32.mrb[0].mxu0
      %v2045 = vadd.f32 0.0, %v2044
      %v2046 = vpop.f32.mrb[0].mxu0
      %v2047 = vpop.f32.mrb[0].mxu0
      %v2048 = vadd.f32 0.0, %v2047
      %v2049 = vpop.f32.mrb[0].mxu0
      %2050 = vmatprep.mubr.bf16.mxu0 0
      %2051 = vmatmul.mubr.bf16.gmra.mrb[0].mxu0 %v1515
      %v2052 = vpop.f32.mrb[0].mxu0
      %v2053 = vadd.f32 0.0, %v2052
      %v2054 = vpop.f32.mrb[0].mxu0
      %v2055 = vpop.f32.mrb[0].mxu0
      %v2056 = vadd.f32 0.0, %v2055
      %v2057 = vpop.f32.mrb[0].mxu0
      %2058 = vmatprep.mubr.bf16.mxu0 0
      %2059 = vmatmul.mubr.bf16.gmra.mrb[0].mxu0 %v1518
      %v2060 = vpop.f32.mrb[0].mxu0
      %v2061 = vadd.f32 0.0, %v2060
      %v2062 = vpop.f32.mrb[0].mxu0
      %v2063 = vpop.f32.mrb[0].mxu0
      %v2064 = vadd.f32 0.0, %v2063
      %v2065 = vpop.f32.mrb[0].mxu0
      %2066 = vmatprep.mubr.bf16.mxu0 0
      %2067 = vmatmul.mubr.bf16.gmra.mrb[0].mxu0 %v1521
      %v2068 = vpop.f32.mrb[0].mxu0
      %v2069 = vadd.f32 0.0, %v2068
      %v2070 = vpop.f32.mrb[0].mxu0
      %v2071 = vpop.f32.mrb[0].mxu0
      %v2072 = vadd.f32 0.0, %v2071
      %v2073 = vpop.f32.mrb[0].mxu0
      %2074 = vmatprep.mubr.bf16.mxu0 0
      %2075 = vmatmul.mubr.bf16.gmra.mrb[0].mxu0 %v1524
      %v2076 = vpop.f32.mrb[0].mxu0
      %v2077 = vadd.f32 0.0, %v2076
      %v2078 = vpop.f32.mrb[0].mxu0
      %v2079 = vpop.f32.mrb[0].mxu0
      %v2080 = vadd.f32 0.0, %v2079
      %v2081 = vpop.f32.mrb[0].mxu0
      %2082 = vmatprep.mubr.bf16.mxu0 0
      %2083 = vmatmul.mubr.bf16.gmra.mrb[0].mxu0 %v1527
      %v2084 = vpop.f32.mrb[0].mxu0
      %v2085 = vadd.f32 0.0, %v2084
      %v2086 = vpop.f32.mrb[0].mxu0
      %v2087 = vpop.f32.mrb[0].mxu0
      %v2088 = vadd.f32 0.0, %v2087
      %v2089 = vpop.f32.mrb[0].mxu0
      %2090 = vmatprep.mubr.bf16.mxu0 0
      %2091 = vmatmul.mubr.bf16.gmra.mrb[0].mxu0 %v1530
      %v2092 = vpop.f32.mrb[0].mxu0
      %v2093 = vadd.f32 0.0, %v2092
      %v2094 = vpop.f32.mrb[0].mxu0
      %v2095 = vpop.f32.mrb[0].mxu0
      %v2096 = vadd.f32 0.0, %v2095
      %v2097 = vpop.f32.mrb[0].mxu0
      %2098 = vmatprep.mubr.bf16.mxu0 0
      %2099 = vmatmul.mubr.bf16.gmra.mrb[0].mxu0 %v1533
      %v2100 = vpop.f32.mrb[0].mxu0
      %v2101 = vadd.f32 0.0, %v2100
      %v2102 = vpop.f32.mrb[0].mxu0
      %v2103 = vpop.f32.mrb[0].mxu0
      %v2104 = vadd.f32 0.0, %v2103
      %v2105 = vpop.f32.mrb[0].mxu0
      %2106 = vmatprep.mubr.bf16.mxu0 0
      %2107 = vmatmul.mubr.bf16.gmra.mrb[0].mxu0 %v1745
      %v2108 = vpop.f32.mrb[0].mxu0
      %v2109 = vadd.f32 0.0, %v2108
      %v2110 = vpop.f32.mrb[0].mxu0
      %v2111 = vpop.f32.mrb[0].mxu0
      %v2112 = vadd.f32 0.0, %v2111
      %v2113 = vpop.f32.mrb[0].mxu0
      %2114 = vmatprep.mubr.bf16.mxu0 0
      %2115 = vmatmul.mubr.bf16.gmra.mrb[0].mxu0 %v1957
      %v2116 = vpop.f32.mrb[0].mxu0
      %v2117 = vadd.f32 0.0, %v2116
      %v2118 = vpop.f32.mrb[0].mxu0
      %v2119 = vpop.f32.mrb[0].mxu0
      %v2120 = vadd.f32 0.0, %v2119
      %v2121 = vpop.f32.mrb[0].mxu0
      %2122 = vdwg.mxu0
      %v2123 = vadd.f32 %v1911, %v1997
      %v2124 = vadd.f32 %v1912, %v2000
      %v2125 = vadd.f32 %v1913, %v2005
      %v2126 = vadd.f32 %v1914, %v2008
      %v2127 = vadd.f32 %v1915, %v2013
      %v2128 = vadd.f32 %v1916, %v2016
      %v2129 = vadd.f32 %v1917, %v2021
      %v2130 = vadd.f32 %v1918, %v2024
      %v2131 = vadd.f32 %v1919, %v2029
      %v2132 = vadd.f32 %v1920, %v2032
      %v2133 = vadd.f32 %v1921, %v2037
      %v2134 = vadd.f32 %v1922, %v2040
      %v2135 = vadd.f32 %v1923, %v2045
      %v2136 = vadd.f32 %v1924, %v2048
      %v2137 = vadd.f32 %v1925, %v2053
      %v2138 = vadd.f32 %v1926, %v2056
      %v2139 = vadd.f32 %v1927, %v2061
      %v2140 = vadd.f32 %v1928, %v2064
      %v2141 = vadd.f32 %v1929, %v2069
      %v2142 = vadd.f32 %v1930, %v2072
      %v2143 = vadd.f32 %v1931, %v2077
      %v2144 = vadd.f32 %v1932, %v2080
      %v2145 = vadd.f32 %v1933, %v2085
      %v2146 = vadd.f32 %v1934, %v2088
      %v2147 = vadd.f32 %v1935, %v2093
      %v2148 = vadd.f32 %v1936, %v2096
      %v2149 = vadd.f32 %v1937, %v2101
      %v2150 = vadd.f32 %v1938, %v2104
      %v2151 = vadd.f32 %v1939, %v2109
      %v2152 = vadd.f32 %v1940, %v2112
      %v2153 = vadd.f32 %v1941, %v2117
      %v2154 = vadd.f32 %v1942, %v2120
      %vm2187 = vcmask 1046528
      %v2188 = vrot.slane %v687, 1
      %v2189 = vrot.slane %v688, 1
      %v2190 = vsel %vm2187, %v2188, %v2189
      %v2191 = vrot.slane %v689, 1
      %v2192 = vrot.slane %v690, 1
      %v2193 = vsel %vm2187, %v2191, %v2192
      %v2194 = vrot.slane %v691, 1
      %v2195 = vrot.slane %v692, 1
      %v2196 = vsel %vm2187, %v2194, %v2195
      %v2197 = vrot.slane %v693, 1
      %v2198 = vrot.slane %v694, 1
      %v2199 = vsel %vm2187, %v2197, %v2198
      %v2200 = vrot.slane %v695, 1
      %v2201 = vrot.slane %v696, 1
      %v2202 = vsel %vm2187, %v2200, %v2201
      %v2203 = vrot.slane %v697, 1
      %v2204 = vrot.slane %v698, 1
      %v2205 = vsel %vm2187, %v2203, %v2204
      %v2206 = vrot.slane %v699, 1
      %v2207 = vrot.slane %v700, 1
      %v2208 = vsel %vm2187, %v2206, %v2207
      %v2209 = vrot.slane %v701, 1
      %v2210 = vrot.slane %v702, 1
      %v2211 = vsel %vm2187, %v2209, %v2210
      %v2212 = vrot.slane %v703, 1
      %v2213 = vrot.slane %v704, 1
      %v2214 = vsel %vm2187, %v2212, %v2213
      %v2215 = vrot.slane %v705, 1
      %v2216 = vrot.slane %v706, 1
      %v2217 = vsel %vm2187, %v2215, %v2216
      %v2218 = vrot.slane %v707, 1
      %v2219 = vrot.slane %v708, 1
      %v2220 = vsel %vm2187, %v2218, %v2219
      %v2221 = vrot.slane %v709, 1
      %v2222 = vrot.slane %v710, 1
      %v2223 = vsel %vm2187, %v2221, %v2222
      %v2224 = vrot.slane %v711, 1
      %v2225 = vrot.slane %v712, 1
      %v2226 = vsel %vm2187, %v2224, %v2225
      %v2227 = vrot.slane %v713, 1
      %v2228 = vrot.slane %v714, 1
      %v2229 = vsel %vm2187, %v2227, %v2228
      %v2230 = vrot.slane %v715, 1
      %v2231 = vrot.slane %v716, 1
      %v2232 = vsel %vm2187, %v2230, %v2231
      %v2233 = vrot.slane %v717, 1
      %v2234 = vrot.slane %v718, 1
      %v2235 = vsel %vm2187, %v2233, %v2234
      %s2236 = scalar_lea.vmem %s1, 8
      %v2237 = vld [vmem:[%s2236] sm:$0xf]
      %v2239 = vsel %vm726, %v2190, 0
      %v2242 = vsel %vm726, %v2193, 0
      %v2245 = vsel %vm726, %v2196, 0
      %v2248 = vsel %vm726, %v2199, 0
      %v2251 = vsel %vm726, %v2202, 0
      %v2254 = vsel %vm726, %v2205, 0
      %v2257 = vsel %vm726, %v2208, 0
      %v2260 = vsel %vm726, %v2211, 0
      %v2263 = vsel %vm726, %v2214, 0
      %v2266 = vsel %vm726, %v2217, 0
      %v2269 = vsel %vm726, %v2220, 0
      %v2272 = vsel %vm726, %v2223, 0
      %v2275 = vsel %vm726, %v2226, 0
      %v2278 = vsel %vm726, %v2229, 0
      %v2281 = vsel %vm726, %v2232, 0
      %v2284 = vsel %vm726, %v2235, 0
      %v2287 = vsel %vm775, %v2237, 0
      %2289 = vmatprep.subr.bf16.mxu0 0
      %2290 = vmatpush1.bf16.msra.mxu0 %v2287
      %2291 = vmatprep.subr.bf16.mxu0 0
      %2292 = vmatpush1.bf16.msra.mxu0 0
      %2293 = vmatprep.subr.bf16.mxu0 0
      %2294 = vmatpush1.bf16.msra.mxu0 0
      %2295 = vmatprep.subr.bf16.mxu0 0
      %2296 = vmatpush1.bf16.msra.mxu0 0
      %2297 = vmatprep.subr.bf16.mxu0 0
      %2298 = vmatpush1.bf16.msra.mxu0 0
      %2299 = vmatprep.subr.bf16.mxu0 0
      %2300 = vmatpush1.bf16.msra.mxu0 0
      %2301 = vmatprep.subr.bf16.mxu0 0
      %2302 = vmatpush1.bf16.msra.mxu0 0
      %2303 = vmatprep.subr.bf16.mxu0 0
      %2304 = vmatpush1.bf16.msra.mxu0 0
      %2305 = vmatprep.subr.bf16.mxu0 0
      %2306 = vmatpush1.bf16.msra.mxu0 0
      %2307 = vmatprep.subr.bf16.mxu0 0
      %2308 = vmatpush1.bf16.msra.mxu0 0
      %2309 = vmatprep.subr.bf16.mxu0 0
      %2310 = vmatpush1.bf16.msra.mxu0 0
      %2311 = vmatprep.subr.bf16.mxu0 0
      %2312 = vmatpush1.bf16.msra.mxu0 0
      %2313 = vmatprep.subr.bf16.mxu0 0
      %2314 = vmatpush1.bf16.msra.mxu0 0
      %2315 = vmatprep.subr.bf16.mxu0 0
      %2316 = vmatpush1.bf16.msra.mxu0 0
      %2317 = vmatprep.subr.bf16.mxu0 0
      %2318 = vmatpush1.bf16.msra.mxu0 0
      %2319 = vmatprep.subr.bf16.mxu0 0
      %2320 = vmatpush1.bf16.msra.mxu0 0
      %2321 = vmatprep.mubr.bf16.mxu0 0
      %2322 = vmatmul.mubr.bf16.gmra.mrb[0].mxu0 %v2239
      %v2323 = vpop.f32.mrb[0].mxu0
      %v2324 = vadd.f32 0.0, %v2323
      %v2325 = vpop.f32.mrb[0].mxu0
      %v2326 = vpop.f32.mrb[0].mxu0
      %v2327 = vadd.f32 0.0, %v2326
      %v2328 = vpop.f32.mrb[0].mxu0
      %2329 = vmatprep.mubr.bf16.mxu0 0
      %2330 = vmatmul.mubr.bf16.gmra.mrb[0].mxu0 %v2242
      %v2331 = vpop.f32.mrb[0].mxu0
      %v2332 = vadd.f32 0.0, %v2331
      %v2333 = vpop.f32.mrb[0].mxu0
      %v2334 = vpop.f32.mrb[0].mxu0
      %v2335 = vadd.f32 0.0, %v2334
      %v2336 = vpop.f32.mrb[0].mxu0
      %2337 = vmatprep.mubr.bf16.mxu0 0
      %2338 = vmatmul.mubr.bf16.gmra.mrb[0].mxu0 %v2245
      %v2339 = vpop.f32.mrb[0].mxu0
      %v2340 = vadd.f32 0.0, %v2339
      %v2341 = vpop.f32.mrb[0].mxu0
      %v2342 = vpop.f32.mrb[0].mxu0
      %v2343 = vadd.f32 0.0, %v2342
      %v2344 = vpop.f32.mrb[0].mxu0
      %2345 = vmatprep.mubr.bf16.mxu0 0
      %2346 = vmatmul.mubr.bf16.gmra.mrb[0].mxu0 %v2248
      %v2347 = vpop.f32.mrb[0].mxu0
      %v2348 = vadd.f32 0.0, %v2347
      %v2349 = vpop.f32.mrb[0].mxu0
      %v2350 = vpop.f32.mrb[0].mxu0
      %v2351 = vadd.f32 0.0, %v2350
      %v2352 = vpop.f32.mrb[0].mxu0
      %2353 = vmatprep.mubr.bf16.mxu0 0
      %2354 = vmatmul.mubr.bf16.gmra.mrb[0].mxu0 %v2251
      %v2355 = vpop.f32.mrb[0].mxu0
      %v2356 = vadd.f32 0.0, %v2355
      %v2357 = vpop.f32.mrb[0].mxu0
      %v2358 = vpop.f32.mrb[0].mxu0
      %v2359 = vadd.f32 0.0, %v2358
      %v2360 = vpop.f32.mrb[0].mxu0
      %2361 = vmatprep.mubr.bf16.mxu0 0
      %2362 = vmatmul.mubr.bf16.gmra.mrb[0].mxu0 %v2254
      %v2363 = vpop.f32.mrb[0].mxu0
      %v2364 = vadd.f32 0.0, %v2363
      %v2365 = vpop.f32.mrb[0].mxu0
      %v2366 = vpop.f32.mrb[0].mxu0
      %v2367 = vadd.f32 0.0, %v2366
      %v2368 = vpop.f32.mrb[0].mxu0
      %2369 = vmatprep.mubr.bf16.mxu0 0
      %2370 = vmatmul.mubr.bf16.gmra.mrb[0].mxu0 %v2257
      %v2371 = vpop.f32.mrb[0].mxu0
      %v2372 = vadd.f32 0.0, %v2371
      %v2373 = vpop.f32.mrb[0].mxu0
      %v2374 = vpop.f32.mrb[0].mxu0
      %v2375 = vadd.f32 0.0, %v2374
      %v2376 = vpop.f32.mrb[0].mxu0
      %2377 = vmatprep.mubr.bf16.mxu0 0
      %2378 = vmatmul.mubr.bf16.gmra.mrb[0].mxu0 %v2260
      %v2379 = vpop.f32.mrb[0].mxu0
      %v2380 = vadd.f32 0.0, %v2379
      %v2381 = vpop.f32.mrb[0].mxu0
      %v2382 = vpop.f32.mrb[0].mxu0
      %v2383 = vadd.f32 0.0, %v2382
      %v2384 = vpop.f32.mrb[0].mxu0
      %2385 = vmatprep.mubr.bf16.mxu0 0
      %2386 = vmatmul.mubr.bf16.gmra.mrb[0].mxu0 %v2263
      %v2387 = vpop.f32.mrb[0].mxu0
      %v2388 = vadd.f32 0.0, %v2387
      %v2389 = vpop.f32.mrb[0].mxu0
      %v2390 = vpop.f32.mrb[0].mxu0
      %v2391 = vadd.f32 0.0, %v2390
      %v2392 = vpop.f32.mrb[0].mxu0
      %2393 = vmatprep.mubr.bf16.mxu0 0
      %2394 = vmatmul.mubr.bf16.gmra.mrb[0].mxu0 %v2266
      %v2395 = vpop.f32.mrb[0].mxu0
      %v2396 = vadd.f32 0.0, %v2395
      %v2397 = vpop.f32.mrb[0].mxu0
      %v2398 = vpop.f32.mrb[0].mxu0
      %v2399 = vadd.f32 0.0, %v2398
      %v2400 = vpop.f32.mrb[0].mxu0
      %2401 = vmatprep.mubr.bf16.mxu0 0
      %2402 = vmatmul.mubr.bf16.gmra.mrb[0].mxu0 %v2269
      %v2403 = vpop.f32.mrb[0].mxu0
      %v2404 = vadd.f32 0.0, %v2403
      %v2405 = vpop.f32.mrb[0].mxu0
      %v2406 = vpop.f32.mrb[0].mxu0
      %v2407 = vadd.f32 0.0, %v2406
      %v2408 = vpop.f32.mrb[0].mxu0
      %2409 = vmatprep.mubr.bf16.mxu0 0
      %2410 = vmatmul.mubr.bf16.gmra.mrb[0].mxu0 %v2272
      %v2411 = vpop.f32.mrb[0].mxu0
      %v2412 = vadd.f32 0.0, %v2411
      %v2413 = vpop.f32.mrb[0].mxu0
      %v2414 = vpop.f32.mrb[0].mxu0
      %v2415 = vadd.f32 0.0, %v2414
      %v2416 = vpop.f32.mrb[0].mxu0
      %2417 = vmatprep.mubr.bf16.mxu0 0
      %2418 = vmatmul.mubr.bf16.gmra.mrb[0].mxu0 %v2275
      %v2419 = vpop.f32.mrb[0].mxu0
      %v2420 = vadd.f32 0.0, %v2419
      %v2421 = vpop.f32.mrb[0].mxu0
      %v2422 = vpop.f32.mrb[0].mxu0
      %v2423 = vadd.f32 0.0, %v2422
      %v2424 = vpop.f32.mrb[0].mxu0
      %2425 = vmatprep.mubr.bf16.mxu0 0
      %2426 = vmatmul.mubr.bf16.gmra.mrb[0].mxu0 %v2278
      %v2427 = vpop.f32.mrb[0].mxu0
      %v2428 = vadd.f32 0.0, %v2427
      %v2429 = vpop.f32.mrb[0].mxu0
      %v2430 = vpop.f32.mrb[0].mxu0
      %v2431 = vadd.f32 0.0, %v2430
      %v2432 = vpop.f32.mrb[0].mxu0
      %2433 = vmatprep.mubr.bf16.mxu0 0
      %2434 = vmatmul.mubr.bf16.gmra.mrb[0].mxu0 %v2281
      %v2435 = vpop.f32.mrb[0].mxu0
      %v2436 = vadd.f32 0.0, %v2435
      %v2437 = vpop.f32.mrb[0].mxu0
      %v2438 = vpop.f32.mrb[0].mxu0
      %v2439 = vadd.f32 0.0, %v2438
      %v2440 = vpop.f32.mrb[0].mxu0
      %2441 = vmatprep.mubr.bf16.mxu0 0
      %2442 = vmatmul.mubr.bf16.gmra.mrb[0].mxu0 %v2284
      %v2443 = vpop.f32.mrb[0].mxu0
      %v2444 = vadd.f32 0.0, %v2443
      %v2445 = vpop.f32.mrb[0].mxu0
      %v2446 = vpop.f32.mrb[0].mxu0
      %v2447 = vadd.f32 0.0, %v2446
      %v2448 = vpop.f32.mrb[0].mxu0
      %2449 = vdwg.mxu0
      %v2450 = vadd.f32 %v2123, %v2324
      %v2451 = vadd.f32 %v2124, %v2327
      %v2452 = vadd.f32 %v2125, %v2332
      %v2453 = vadd.f32 %v2126, %v2335
      %v2454 = vadd.f32 %v2127, %v2340
      %v2455 = vadd.f32 %v2128, %v2343
      %v2456 = vadd.f32 %v2129, %v2348
      %v2457 = vadd.f32 %v2130, %v2351
      %v2458 = vadd.f32 %v2131, %v2356
      %v2459 = vadd.f32 %v2132, %v2359
      %v2460 = vadd.f32 %v2133, %v2364
      %v2461 = vadd.f32 %v2134, %v2367
      %v2462 = vadd.f32 %v2135, %v2372
      %v2463 = vadd.f32 %v2136, %v2375
      %v2464 = vadd.f32 %v2137, %v2380
      %v2465 = vadd.f32 %v2138, %v2383
      %v2466 = vadd.f32 %v2139, %v2388
      %v2467 = vadd.f32 %v2140, %v2391
      %v2468 = vadd.f32 %v2141, %v2396
      %v2469 = vadd.f32 %v2142, %v2399
      %v2470 = vadd.f32 %v2143, %v2404
      %v2471 = vadd.f32 %v2144, %v2407
      %v2472 = vadd.f32 %v2145, %v2412
      %v2473 = vadd.f32 %v2146, %v2415
      %v2474 = vadd.f32 %v2147, %v2420
      %v2475 = vadd.f32 %v2148, %v2423
      %v2476 = vadd.f32 %v2149, %v2428
      %v2477 = vadd.f32 %v2150, %v2431
      %v2478 = vadd.f32 %v2151, %v2436
      %v2479 = vadd.f32 %v2152, %v2439
      %v2480 = vadd.f32 %v2153, %v2444
      %v2481 = vadd.f32 %v2154, %v2447
      %v2484 = vrot.slane %v719, 1
      %v2485 = vrot.slane %v720, 1
      %v2486 = vsel %vm2187, %v2484, %v2485
      %s2487 = scalar_lea.vmem %s1, 20
      %v2488 = vld [vmem:[%s2487] sm:$0xf]
      %v2490 = vsel %vm726, %v2486, 0
      %v2493 = vsel %vm775, %v2488, 0
      %2495 = vmatprep.subr.bf16.mxu0 0
      %2496 = vmatpush1.bf16.msra.mxu0 %v2493
      %2497 = vmatprep.subr.bf16.mxu0 0
      %2498 = vmatpush1.bf16.msra.mxu0 0
      %2499 = vmatprep.subr.bf16.mxu0 0
      %2500 = vmatpush1.bf16.msra.mxu0 0
      %2501 = vmatprep.subr.bf16.mxu0 0
      %2502 = vmatpush1.bf16.msra.mxu0 0
      %2503 = vmatprep.subr.bf16.mxu0 0
      %2504 = vmatpush1.bf16.msra.mxu0 0
      %2505 = vmatprep.subr.bf16.mxu0 0
      %2506 = vmatpush1.bf16.msra.mxu0 0
      %2507 = vmatprep.subr.bf16.mxu0 0
      %2508 = vmatpush1.bf16.msra.mxu0 0
      %2509 = vmatprep.subr.bf16.mxu0 0
      %2510 = vmatpush1.bf16.msra.mxu0 0
      %2511 = vmatprep.subr.bf16.mxu0 0
      %2512 = vmatpush1.bf16.msra.mxu0 0
      %2513 = vmatprep.subr.bf16.mxu0 0
      %2514 = vmatpush1.bf16.msra.mxu0 0
      %2515 = vmatprep.subr.bf16.mxu0 0
      %2516 = vmatpush1.bf16.msra.mxu0 0
      %2517 = vmatprep.subr.bf16.mxu0 0
      %2518 = vmatpush1.bf16.msra.mxu0 0
      %2519 = vmatprep.subr.bf16.mxu0 0
      %2520 = vmatpush1.bf16.msra.mxu0 0
      %2521 = vmatprep.subr.bf16.mxu0 0
      %2522 = vmatpush1.bf16.msra.mxu0 0
      %2523 = vmatprep.subr.bf16.mxu0 0
      %2524 = vmatpush1.bf16.msra.mxu0 0
      %2525 = vmatprep.subr.bf16.mxu0 0
      %2526 = vmatpush1.bf16.msra.mxu0 0
      %2527 = vmatprep.mubr.bf16.mxu0 0
      %2528 = vmatmul.mubr.bf16.gmra.mrb[0].mxu0 %v2242
      %v2529 = vpop.f32.mrb[0].mxu0
      %v2530 = vadd.f32 0.0, %v2529
      %v2531 = vpop.f32.mrb[0].mxu0
      %v2532 = vpop.f32.mrb[0].mxu0
      %v2533 = vadd.f32 0.0, %v2532
      %v2534 = vpop.f32.mrb[0].mxu0
      %2535 = vmatprep.mubr.bf16.mxu0 0
      %2536 = vmatmul.mubr.bf16.gmra.mrb[0].mxu0 %v2245
      %v2537 = vpop.f32.mrb[0].mxu0
      %v2538 = vadd.f32 0.0, %v2537
      %v2539 = vpop.f32.mrb[0].mxu0
      %v2540 = vpop.f32.mrb[0].mxu0
      %v2541 = vadd.f32 0.0, %v2540
      %v2542 = vpop.f32.mrb[0].mxu0
      %2543 = vmatprep.mubr.bf16.mxu0 0
      %2544 = vmatmul.mubr.bf16.gmra.mrb[0].mxu0 %v2248
      %v2545 = vpop.f32.mrb[0].mxu0
      %v2546 = vadd.f32 0.0, %v2545
      %v2547 = vpop.f32.mrb[0].mxu0
      %v2548 = vpop.f32.mrb[0].mxu0
      %v2549 = vadd.f32 0.0, %v2548
      %v2550 = vpop.f32.mrb[0].mxu0
      %2551 = vmatprep.mubr.bf16.mxu0 0
      %2552 = vmatmul.mubr.bf16.gmra.mrb[0].mxu0 %v2251
      %v2553 = vpop.f32.mrb[0].mxu0
      %v2554 = vadd.f32 0.0, %v2553
      %v2555 = vpop.f32.mrb[0].mxu0
      %v2556 = vpop.f32.mrb[0].mxu0
      %v2557 = vadd.f32 0.0, %v2556
      %v2558 = vpop.f32.mrb[0].mxu0
      %2559 = vmatprep.mubr.bf16.mxu0 0
      %2560 = vmatmul.mubr.bf16.gmra.mrb[0].mxu0 %v2254
      %v2561 = vpop.f32.mrb[0].mxu0
      %v2562 = vadd.f32 0.0, %v2561
      %v2563 = vpop.f32.mrb[0].mxu0
      %v2564 = vpop.f32.mrb[0].mxu0
      %v2565 = vadd.f32 0.0, %v2564
      %v2566 = vpop.f32.mrb[0].mxu0
      %2567 = vmatprep.mubr.bf16.mxu0 0
      %2568 = vmatmul.mubr.bf16.gmra.mrb[0].mxu0 %v2257
      %v2569 = vpop.f32.mrb[0].mxu0
      %v2570 = vadd.f32 0.0, %v2569
      %v2571 = vpop.f32.mrb[0].mxu0
      %v2572 = vpop.f32.mrb[0].mxu0
      %v2573 = vadd.f32 0.0, %v2572
      %v2574 = vpop.f32.mrb[0].mxu0
      %2575 = vmatprep.mubr.bf16.mxu0 0
      %2576 = vmatmul.mubr.bf16.gmra.mrb[0].mxu0 %v2260
      %v2577 = vpop.f32.mrb[0].mxu0
      %v2578 = vadd.f32 0.0, %v2577
      %v2579 = vpop.f32.mrb[0].mxu0
      %v2580 = vpop.f32.mrb[0].mxu0
      %v2581 = vadd.f32 0.0, %v2580
      %v2582 = vpop.f32.mrb[0].mxu0
      %2583 = vmatprep.mubr.bf16.mxu0 0
      %2584 = vmatmul.mubr.bf16.gmra.mrb[0].mxu0 %v2263
      %v2585 = vpop.f32.mrb[0].mxu0
      %v2586 = vadd.f32 0.0, %v2585
      %v2587 = vpop.f32.mrb[0].mxu0
      %v2588 = vpop.f32.mrb[0].mxu0
      %v2589 = vadd.f32 0.0, %v2588
      %v2590 = vpop.f32.mrb[0].mxu0
      %2591 = vmatprep.mubr.bf16.mxu0 0
      %2592 = vmatmul.mubr.bf16.gmra.mrb[0].mxu0 %v2266
      %v2593 = vpop.f32.mrb[0].mxu0
      %v2594 = vadd.f32 0.0, %v2593
      %v2595 = vpop.f32.mrb[0].mxu0
      %v2596 = vpop.f32.mrb[0].mxu0
      %v2597 = vadd.f32 0.0, %v2596
      %v2598 = vpop.f32.mrb[0].mxu0
      %2599 = vmatprep.mubr.bf16.mxu0 0
      %2600 = vmatmul.mubr.bf16.gmra.mrb[0].mxu0 %v2269
      %v2601 = vpop.f32.mrb[0].mxu0
      %v2602 = vadd.f32 0.0, %v2601
      %v2603 = vpop.f32.mrb[0].mxu0
      %v2604 = vpop.f32.mrb[0].mxu0
      %v2605 = vadd.f32 0.0, %v2604
      %v2606 = vpop.f32.mrb[0].mxu0
      %2607 = vmatprep.mubr.bf16.mxu0 0
      %2608 = vmatmul.mubr.bf16.gmra.mrb[0].mxu0 %v2272
      %v2609 = vpop.f32.mrb[0].mxu0
      %v2610 = vadd.f32 0.0, %v2609
      %v2611 = vpop.f32.mrb[0].mxu0
      %v2612 = vpop.f32.mrb[0].mxu0
      %v2613 = vadd.f32 0.0, %v2612
      %v2614 = vpop.f32.mrb[0].mxu0
      %2615 = vmatprep.mubr.bf16.mxu0 0
      %2616 = vmatmul.mubr.bf16.gmra.mrb[0].mxu0 %v2275
      %v2617 = vpop.f32.mrb[0].mxu0
      %v2618 = vadd.f32 0.0, %v2617
      %v2619 = vpop.f32.mrb[0].mxu0
      %v2620 = vpop.f32.mrb[0].mxu0
      %v2621 = vadd.f32 0.0, %v2620
      %v2622 = vpop.f32.mrb[0].mxu0
      %2623 = vmatprep.mubr.bf16.mxu0 0
      %2624 = vmatmul.mubr.bf16.gmra.mrb[0].mxu0 %v2278
      %v2625 = vpop.f32.mrb[0].mxu0
      %v2626 = vadd.f32 0.0, %v2625
      %v2627 = vpop.f32.mrb[0].mxu0
      %v2628 = vpop.f32.mrb[0].mxu0
      %v2629 = vadd.f32 0.0, %v2628
      %v2630 = vpop.f32.mrb[0].mxu0
      %2631 = vmatprep.mubr.bf16.mxu0 0
      %2632 = vmatmul.mubr.bf16.gmra.mrb[0].mxu0 %v2281
      %v2633 = vpop.f32.mrb[0].mxu0
      %v2634 = vadd.f32 0.0, %v2633
      %v2635 = vpop.f32.mrb[0].mxu0
      %v2636 = vpop.f32.mrb[0].mxu0
      %v2637 = vadd.f32 0.0, %v2636
      %v2638 = vpop.f32.mrb[0].mxu0
      %2639 = vmatprep.mubr.bf16.mxu0 0
      %2640 = vmatmul.mubr.bf16.gmra.mrb[0].mxu0 %v2284
      %v2641 = vpop.f32.mrb[0].mxu0
      %v2642 = vadd.f32 0.0, %v2641
      %v2643 = vpop.f32.mrb[0].mxu0
      %v2644 = vpop.f32.mrb[0].mxu0
      %v2645 = vadd.f32 0.0, %v2644
      %v2646 = vpop.f32.mrb[0].mxu0
      %2647 = vmatprep.mubr.bf16.mxu0 0
      %2648 = vmatmul.mubr.bf16.gmra.mrb[0].mxu0 %v2490
      %v2649 = vpop.f32.mrb[0].mxu0
      %v2650 = vadd.f32 0.0, %v2649
      %v2651 = vpop.f32.mrb[0].mxu0
      %v2652 = vpop.f32.mrb[0].mxu0
      %v2653 = vadd.f32 0.0, %v2652
      %v2654 = vpop.f32.mrb[0].mxu0
      %2655 = vdwg.mxu0
      %v2656 = vadd.f32 %v2450, %v2530
      %v2657 = vadd.f32 %v2451, %v2533
      %v2658 = vadd.f32 %v2452, %v2538
      %v2659 = vadd.f32 %v2453, %v2541
      %v2660 = vadd.f32 %v2454, %v2546
      %v2661 = vadd.f32 %v2455, %v2549
      %v2662 = vadd.f32 %v2456, %v2554
      %v2663 = vadd.f32 %v2457, %v2557
      %v2664 = vadd.f32 %v2458, %v2562
      %v2665 = vadd.f32 %v2459, %v2565
      %v2666 = vadd.f32 %v2460, %v2570
      %v2667 = vadd.f32 %v2461, %v2573
      %v2668 = vadd.f32 %v2462, %v2578
      %v2669 = vadd.f32 %v2463, %v2581
      %v2670 = vadd.f32 %v2464, %v2586
      %v2671 = vadd.f32 %v2465, %v2589
      %v2672 = vadd.f32 %v2466, %v2594
      %v2673 = vadd.f32 %v2467, %v2597
      %v2674 = vadd.f32 %v2468, %v2602
      %v2675 = vadd.f32 %v2469, %v2605
      %v2676 = vadd.f32 %v2470, %v2610
      %v2677 = vadd.f32 %v2471, %v2613
      %v2678 = vadd.f32 %v2472, %v2618
      %v2679 = vadd.f32 %v2473, %v2621
      %v2680 = vadd.f32 %v2474, %v2626
      %v2681 = vadd.f32 %v2475, %v2629
      %v2682 = vadd.f32 %v2476, %v2634
      %v2683 = vadd.f32 %v2477, %v2637
      %v2684 = vadd.f32 %v2478, %v2642
      %v2685 = vadd.f32 %v2479, %v2645
      %v2686 = vadd.f32 %v2480, %v2650
      %v2687 = vadd.f32 %v2481, %v2653
      %v2690 = vrot.slane %v721, 1
      %v2691 = vrot.slane %v722, 1
      %v2692 = vsel %vm2187, %v2690, %v2691
      %s2693 = scalar_lea.vmem %s1, 32
      %v2694 = vld [vmem:[%s2693] sm:$0xf]
      %v2696 = vsel %vm726, %v2692, 0
      %v2699 = vsel %vm775, %v2694, 0
      %2701 = vmatprep.subr.bf16.mxu0 0
      %2702 = vmatpush1.bf16.msra.mxu0 %v2699
      %2703 = vmatprep.subr.bf16.mxu0 0
      %2704 = vmatpush1.bf16.msra.mxu0 0
      %2705 = vmatprep.subr.bf16.mxu0 0
      %2706 = vmatpush1.bf16.msra.mxu0 0
      %2707 = vmatprep.subr.bf16.mxu0 0
      %2708 = vmatpush1.bf16.msra.mxu0 0
      %2709 = vmatprep.subr.bf16.mxu0 0
      %2710 = vmatpush1.bf16.msra.mxu0 0
      %2711 = vmatprep.subr.bf16.mxu0 0
      %2712 = vmatpush1.bf16.msra.mxu0 0
      %2713 = vmatprep.subr.bf16.mxu0 0
      %2714 = vmatpush1.bf16.msra.mxu0 0
      %2715 = vmatprep.subr.bf16.mxu0 0
      %2716 = vmatpush1.bf16.msra.mxu0 0
      %2717 = vmatprep.subr.bf16.mxu0 0
      %2718 = vmatpush1.bf16.msra.mxu0 0
      %2719 = vmatprep.subr.bf16.mxu0 0
      %2720 = vmatpush1.bf16.msra.mxu0 0
      %2721 = vmatprep.subr.bf16.mxu0 0
      %2722 = vmatpush1.bf16.msra.mxu0 0
      %2723 = vmatprep.subr.bf16.mxu0 0
      %2724 = vmatpush1.bf16.msra.mxu0 0
      %2725 = vmatprep.subr.bf16.mxu0 0
      %2726 = vmatpush1.bf16.msra.mxu0 0
      %2727 = vmatprep.subr.bf16.mxu0 0
      %2728 = vmatpush1.bf16.msra.mxu0 0
      %2729 = vmatprep.subr.bf16.mxu0 0
      %2730 = vmatpush1.bf16.msra.mxu0 0
      %2731 = vmatprep.subr.bf16.mxu0 0
      %2732 = vmatpush1.bf16.msra.mxu0 0
      %2733 = vmatprep.mubr.bf16.mxu0 0
      %2734 = vmatmul.mubr.bf16.gmra.mrb[0].mxu0 %v2245
      %v2735 = vpop.f32.mrb[0].mxu0
      %v2736 = vadd.f32 0.0, %v2735
      %v2737 = vpop.f32.mrb[0].mxu0
      %v2738 = vpop.f32.mrb[0].mxu0
      %v2739 = vadd.f32 0.0, %v2738
      %v2740 = vpop.f32.mrb[0].mxu0
      %2741 = vmatprep.mubr.bf16.mxu0 0
      %2742 = vmatmul.mubr.bf16.gmra.mrb[0].mxu0 %v2248
      %v2743 = vpop.f32.mrb[0].mxu0
      %v2744 = vadd.f32 0.0, %v2743
      %v2745 = vpop.f32.mrb[0].mxu0
      %v2746 = vpop.f32.mrb[0].mxu0
      %v2747 = vadd.f32 0.0, %v2746
      %v2748 = vpop.f32.mrb[0].mxu0
      %2749 = vmatprep.mubr.bf16.mxu0 0
      %2750 = vmatmul.mubr.bf16.gmra.mrb[0].mxu0 %v2251
      %v2751 = vpop.f32.mrb[0].mxu0
      %v2752 = vadd.f32 0.0, %v2751
      %v2753 = vpop.f32.mrb[0].mxu0
      %v2754 = vpop.f32.mrb[0].mxu0
      %v2755 = vadd.f32 0.0, %v2754
      %v2756 = vpop.f32.mrb[0].mxu0
      %2757 = vmatprep.mubr.bf16.mxu0 0
      %2758 = vmatmul.mubr.bf16.gmra.mrb[0].mxu0 %v2254
      %v2759 = vpop.f32.mrb[0].mxu0
      %v2760 = vadd.f32 0.0, %v2759
      %v2761 = vpop.f32.mrb[0].mxu0
      %v2762 = vpop.f32.mrb[0].mxu0
      %v2763 = vadd.f32 0.0, %v2762
      %v2764 = vpop.f32.mrb[0].mxu0
      %2765 = vmatprep.mubr.bf16.mxu0 0
      %2766 = vmatmul.mubr.bf16.gmra.mrb[0].mxu0 %v2257
      %v2767 = vpop.f32.mrb[0].mxu0
      %v2768 = vadd.f32 0.0, %v2767
      %v2769 = vpop.f32.mrb[0].mxu0
      %v2770 = vpop.f32.mrb[0].mxu0
      %v2771 = vadd.f32 0.0, %v2770
      %v2772 = vpop.f32.mrb[0].mxu0
      %2773 = vmatprep.mubr.bf16.mxu0 0
      %2774 = vmatmul.mubr.bf16.gmra.mrb[0].mxu0 %v2260
      %v2775 = vpop.f32.mrb[0].mxu0
      %v2776 = vadd.f32 0.0, %v2775
      %v2777 = vpop.f32.mrb[0].mxu0
      %v2778 = vpop.f32.mrb[0].mxu0
      %v2779 = vadd.f32 0.0, %v2778
      %v2780 = vpop.f32.mrb[0].mxu0
      %2781 = vmatprep.mubr.bf16.mxu0 0
      %2782 = vmatmul.mubr.bf16.gmra.mrb[0].mxu0 %v2263
      %v2783 = vpop.f32.mrb[0].mxu0
      %v2784 = vadd.f32 0.0, %v2783
      %v2785 = vpop.f32.mrb[0].mxu0
      %v2786 = vpop.f32.mrb[0].mxu0
      %v2787 = vadd.f32 0.0, %v2786
      %v2788 = vpop.f32.mrb[0].mxu0
      %2789 = vmatprep.mubr.bf16.mxu0 0
      %2790 = vmatmul.mubr.bf16.gmra.mrb[0].mxu0 %v2266
      %v2791 = vpop.f32.mrb[0].mxu0
      %v2792 = vadd.f32 0.0, %v2791
      %v2793 = vpop.f32.mrb[0].mxu0
      %v2794 = vpop.f32.mrb[0].mxu0
      %v2795 = vadd.f32 0.0, %v2794
      %v2796 = vpop.f32.mrb[0].mxu0
      %2797 = vmatprep.mubr.bf16.mxu0 0
      %2798 = vmatmul.mubr.bf16.gmra.mrb[0].mxu0 %v2269
      %v2799 = vpop.f32.mrb[0].mxu0
      %v2800 = vadd.f32 0.0, %v2799
      %v2801 = vpop.f32.mrb[0].mxu0
      %v2802 = vpop.f32.mrb[0].mxu0
      %v2803 = vadd.f32 0.0, %v2802
      %v2804 = vpop.f32.mrb[0].mxu0
      %2805 = vmatprep.mubr.bf16.mxu0 0
      %2806 = vmatmul.mubr.bf16.gmra.mrb[0].mxu0 %v2272
      %v2807 = vpop.f32.mrb[0].mxu0
      %v2808 = vadd.f32 0.0, %v2807
      %v2809 = vpop.f32.mrb[0].mxu0
      %v2810 = vpop.f32.mrb[0].mxu0
      %v2811 = vadd.f32 0.0, %v2810
      %v2812 = vpop.f32.mrb[0].mxu0
      %2813 = vmatprep.mubr.bf16.mxu0 0
      %2814 = vmatmul.mubr.bf16.gmra.mrb[0].mxu0 %v2275
      %v2815 = vpop.f32.mrb[0].mxu0
      %v2816 = vadd.f32 0.0, %v2815
      %v2817 = vpop.f32.mrb[0].mxu0
      %v2818 = vpop.f32.mrb[0].mxu0
      %v2819 = vadd.f32 0.0, %v2818
      %v2820 = vpop.f32.mrb[0].mxu0
      %2821 = vmatprep.mubr.bf16.mxu0 0
      %2822 = vmatmul.mubr.bf16.gmra.mrb[0].mxu0 %v2278
      %v2823 = vpop.f32.mrb[0].mxu0
      %v2824 = vadd.f32 0.0, %v2823
      %v2825 = vpop.f32.mrb[0].mxu0
      %v2826 = vpop.f32.mrb[0].mxu0
      %v2827 = vadd.f32 0.0, %v2826
      %v2828 = vpop.f32.mrb[0].mxu0
      %2829 = vmatprep.mubr.bf16.mxu0 0
      %2830 = vmatmul.mubr.bf16.gmra.mrb[0].mxu0 %v2281
      %v2831 = vpop.f32.mrb[0].mxu0
      %v2832 = vadd.f32 0.0, %v2831
      %v2833 = vpop.f32.mrb[0].mxu0
      %v2834 = vpop.f32.mrb[0].mxu0
      %v2835 = vadd.f32 0.0, %v2834
      %v2836 = vpop.f32.mrb[0].mxu0
      %2837 = vmatprep.mubr.bf16.mxu0 0
      %2838 = vmatmul.mubr.bf16.gmra.mrb[0].mxu0 %v2284
      %v2839 = vpop.f32.mrb[0].mxu0
      %v2840 = vadd.f32 0.0, %v2839
      %v2841 = vpop.f32.mrb[0].mxu0
      %v2842 = vpop.f32.mrb[0].mxu0
      %v2843 = vadd.f32 0.0, %v2842
      %v2844 = vpop.f32.mrb[0].mxu0
      %2845 = vmatprep.mubr.bf16.mxu0 0
      %2846 = vmatmul.mubr.bf16.gmra.mrb[0].mxu0 %v2490
      %v2847 = vpop.f32.mrb[0].mxu0
      %v2848 = vadd.f32 0.0, %v2847
      %v2849 = vpop.f32.mrb[0].mxu0
      %v2850 = vpop.f32.mrb[0].mxu0
      %v2851 = vadd.f32 0.0, %v2850
      %v2852 = vpop.f32.mrb[0].mxu0
      %2853 = vmatprep.mubr.bf16.mxu0 0
      %2854 = vmatmul.mubr.bf16.gmra.mrb[0].mxu0 %v2696
      %v2855 = vpop.f32.mrb[0].mxu0
      %v2856 = vadd.f32 0.0, %v2855
      %v2857 = vpop.f32.mrb[0].mxu0
      %v2858 = vpop.f32.mrb[0].mxu0
      %v2859 = vadd.f32 0.0, %v2858
      %v2860 = vpop.f32.mrb[0].mxu0
      %2861 = vdwg.mxu0
      %v2862 = vadd.f32 %v2656, %v2736
      %v2863 = vadd.f32 %v2657, %v2739
      %v2864 = vadd.f32 %v2658, %v2744
      %v2865 = vadd.f32 %v2659, %v2747
      %v2866 = vadd.f32 %v2660, %v2752
      %v2867 = vadd.f32 %v2661, %v2755
      %v2868 = vadd.f32 %v2662, %v2760
      %v2869 = vadd.f32 %v2663, %v2763
      %v2870 = vadd.f32 %v2664, %v2768
      %v2871 = vadd.f32 %v2665, %v2771
      %v2872 = vadd.f32 %v2666, %v2776
      %v2873 = vadd.f32 %v2667, %v2779
      %v2874 = vadd.f32 %v2668, %v2784
      %v2875 = vadd.f32 %v2669, %v2787
      %v2876 = vadd.f32 %v2670, %v2792
      %v2877 = vadd.f32 %v2671, %v2795
      %v2878 = vadd.f32 %v2672, %v2800
      %v2879 = vadd.f32 %v2673, %v2803
      %v2880 = vadd.f32 %v2674, %v2808
      %v2881 = vadd.f32 %v2675, %v2811
      %v2882 = vadd.f32 %v2676, %v2816
      %v2883 = vadd.f32 %v2677, %v2819
      %v2884 = vadd.f32 %v2678, %v2824
      %v2885 = vadd.f32 %v2679, %v2827
      %v2886 = vadd.f32 %v2680, %v2832
      %v2887 = vadd.f32 %v2681, %v2835
      %v2888 = vadd.f32 %v2682, %v2840
      %v2889 = vadd.f32 %v2683, %v2843
      %v2890 = vadd.f32 %v2684, %v2848
      %v2891 = vadd.f32 %v2685, %v2851
      %v2892 = vadd.f32 %v2686, %v2856
      %v2893 = vadd.f32 %v2687, %v2859
      %v2894 = vld [vmem:[%s2] sm:$0x1]
      %v2896 = vlaneseq
      %v2897 = vshrl.u32 %v2896, 7
      %v2898 = vsub.s32 0, %v2897
      %v2899 = vrot.slane %v2894, %v2898
      %v2901 = vadd.f32 %v2862, %v2899
      %v2902 = vadd.f32 %v2863, %v2899
      %v2903 = vadd.f32 %v2864, %v2899
      %v2904 = vadd.f32 %v2865, %v2899
      %v2905 = vadd.f32 %v2866, %v2899
      %v2906 = vadd.f32 %v2867, %v2899
      %v2907 = vadd.f32 %v2868, %v2899
      %v2908 = vadd.f32 %v2869, %v2899
      %v2909 = vadd.f32 %v2870, %v2899
      %v2910 = vadd.f32 %v2871, %v2899
      %v2911 = vadd.f32 %v2872, %v2899
      %v2912 = vadd.f32 %v2873, %v2899
      %v2913 = vadd.f32 %v2874, %v2899
      %v2914 = vadd.f32 %v2875, %v2899
      %v2915 = vadd.f32 %v2876, %v2899
      %v2916 = vadd.f32 %v2877, %v2899
      %v2917 = vadd.f32 %v2878, %v2899
      %v2918 = vadd.f32 %v2879, %v2899
      %v2919 = vadd.f32 %v2880, %v2899
      %v2920 = vadd.f32 %v2881, %v2899
      %v2921 = vadd.f32 %v2882, %v2899
      %v2922 = vadd.f32 %v2883, %v2899
      %v2923 = vadd.f32 %v2884, %v2899
      %v2924 = vadd.f32 %v2885, %v2899
      %v2925 = vadd.f32 %v2886, %v2899
      %v2926 = vadd.f32 %v2887, %v2899
      %v2927 = vadd.f32 %v2888, %v2899
      %v2928 = vadd.f32 %v2889, %v2899
      %v2929 = vadd.f32 %v2890, %v2899
      %v2930 = vadd.f32 %v2891, %v2899
      %v2931 = vadd.f32 %v2892, %v2899
      %v2932 = vadd.f32 %v2893, %v2899
      %2933 = vst.msk [vmem:[%s313] sm:$0xff] %vm726, %v2901
      %2934 = vst.msk [vmem:[%s313 + $0x8] sm:$0xff] %vm726, %v2902
      %2935 = vst.msk [vmem:[%s313 + $0x10] sm:$0xff] %vm726, %v2903
      %2936 = vst.msk [vmem:[%s313 + $0x18] sm:$0xff] %vm726, %v2904
      %2937 = vst.msk [vmem:[%s313 + $0x20] sm:$0xff] %vm726, %v2905
      %2938 = vst.msk [vmem:[%s313 + $0x28] sm:$0xff] %vm726, %v2906
      %2939 = vst.msk [vmem:[%s313 + $0x30] sm:$0xff] %vm726, %v2907
      %2940 = vst.msk [vmem:[%s313 + $0x38] sm:$0xff] %vm726, %v2908
      %2941 = vst.msk [vmem:[%s313 + $0x40] sm:$0xff] %vm726, %v2909
      %2942 = vst.msk [vmem:[%s313 + $0x48] sm:$0xff] %vm726, %v2910
      %2943 = vst.msk [vmem:[%s313 + $0x50] sm:$0xff] %vm726, %v2911
      %2944 = vst.msk [vmem:[%s313 + $0x58] sm:$0xff] %vm726, %v2912
      %2945 = vst.msk [vmem:[%s313 + $0x60] sm:$0xff] %vm726, %v2913
      %2946 = vst.msk [vmem:[%s313 + $0x68] sm:$0xff] %vm726, %v2914
      %2947 = vst.msk [vmem:[%s313 + $0x70] sm:$0xff] %vm726, %v2915
      %2948 = vst.msk [vmem:[%s313 + $0x78] sm:$0xff] %vm726, %v2916
      %2949 = vst.msk [vmem:[%s313 + $0x80] sm:$0xff] %vm726, %v2917
      %2950 = vst.msk [vmem:[%s313 + $0x88] sm:$0xff] %vm726, %v2918
      %2951 = vst.msk [vmem:[%s313 + $0x90] sm:$0xff] %vm726, %v2919
      %2952 = vst.msk [vmem:[%s313 + $0x98] sm:$0xff] %vm726, %v2920
      %2953 = vst.msk [vmem:[%s313 + $0xa0] sm:$0xff] %vm726, %v2921
      %2954 = vst.msk [vmem:[%s313 + $0xa8] sm:$0xff] %vm726, %v2922
      %2955 = vst.msk [vmem:[%s313 + $0xb0] sm:$0xff] %vm726, %v2923
      %2956 = vst.msk [vmem:[%s313 + $0xb8] sm:$0xff] %vm726, %v2924
      %2957 = vst.msk [vmem:[%s313 + $0xc0] sm:$0xff] %vm726, %v2925
      %2958 = vst.msk [vmem:[%s313 + $0xc8] sm:$0xff] %vm726, %v2926
      %2959 = vst.msk [vmem:[%s313 + $0xd0] sm:$0xff] %vm726, %v2927
      %2960 = vst.msk [vmem:[%s313 + $0xd8] sm:$0xff] %vm726, %v2928
      %2961 = vst.msk [vmem:[%s313 + $0xe0] sm:$0xff] %vm726, %v2929
      %2962 = vst.msk [vmem:[%s313 + $0xe8] sm:$0xff] %vm726, %v2930
      %2963 = vst.msk [vmem:[%s313 + $0xf0] sm:$0xff] %vm726, %v2931
      %2964 = vst.msk [vmem:[%s313 + $0xf8] sm:$0xff] %vm726, %v2932
      %p2965 = scmp.eq.s32.totalorder %s24, 0
      // Predicated region
      $region41: #{double_conv_forward.4} parent=39 // pred_check
        %p2966 = pneg %p2965
      $region42: #{double_conv_forward.4} parent=39 // pred_check_branch
        %2968 = sbr.rel (%p2966) target = $region44
      $region43: #{double_conv_forward.4} parent=39 // pred_region
        %vm2969 = vcmask 57344
        %2970 = vst.msk [vmem:[%s317] sm:$0x1] %vm2969, 0.0
        %2971 = vst.msk [vmem:[%s320] sm:$0x1] %vm2969, 0.0
      $region44: #{double_conv_forward.4} parent=39 // pred_fallthru
        _
      %v2972 = vld [vmem:[%s317] sm:$0x1]
      %v2973 = vsel %vm726, %v2901, 0.0
      %v2974 = vsel %vm726, %v2902, 0.0
      %v2975 = vadd.f32 %v2973, %v2974
      %v2976 = vsel %vm726, %v2903, 0.0
      %v2977 = vadd.f32 %v2975, %v2976
      %v2978 = vsel %vm726, %v2904, 0.0
      %v2979 = vadd.f32 %v2977, %v2978
      %v2980 = vsel %vm726, %v2905, 0.0
      %v2981 = vadd.f32 %v2979, %v2980
      %v2982 = vsel %vm726, %v2906, 0.0
      %v2983 = vadd.f32 %v2981, %v2982
      %v2984 = vsel %vm726, %v2907, 0.0
      %v2985 = vadd.f32 %v2983, %v2984
      %v2986 = vsel %vm726, %v2908, 0.0
      %v2987 = vadd.f32 %v2985, %v2986
      %v2988 = vsel %vm726, %v2909, 0.0
      %v2989 = vadd.f32 %v2987, %v2988
      %v2990 = vsel %vm726, %v2910, 0.0
      %v2991 = vadd.f32 %v2989, %v2990
      %v2992 = vsel %vm726, %v2911, 0.0
      %v2993 = vadd.f32 %v2991, %v2992
      %v2994 = vsel %vm726, %v2912, 0.0
      %v2995 = vadd.f32 %v2993, %v2994
      %v2996 = vsel %vm726, %v2913, 0.0
      %v2997 = vadd.f32 %v2995, %v2996
      %v2998 = vsel %vm726, %v2914, 0.0
      %v2999 = vadd.f32 %v2997, %v2998
      %v3000 = vsel %vm726, %v2915, 0.0
      %v3001 = vadd.f32 %v2999, %v3000
      %v3002 = vsel %vm726, %v2916, 0.0
      %v3003 = vadd.f32 %v3001, %v3002
      %v3004 = vsel %vm726, %v2917, 0.0
      %v3005 = vadd.f32 %v3003, %v3004
      %v3006 = vsel %vm726, %v2918, 0.0
      %v3007 = vadd.f32 %v3005, %v3006
      %v3008 = vsel %vm726, %v2919, 0.0
      %v3009 = vadd.f32 %v3007, %v3008
      %v3010 = vsel %vm726, %v2920, 0.0
      %v3011 = vadd.f32 %v3009, %v3010
      %v3012 = vsel %vm726, %v2921, 0.0
      %v3013 = vadd.f32 %v3011, %v3012
      %v3014 = vsel %vm726, %v2922, 0.0
      %v3015 = vadd.f32 %v3013, %v3014
      %v3016 = vsel %vm726, %v2923, 0.0
      %v3017 = vadd.f32 %v3015, %v3016
      %v3018 = vsel %vm726, %v2924, 0.0
      %v3019 = vadd.f32 %v3017, %v3018
      %v3020 = vsel %vm726, %v2925, 0.0
      %v3021 = vadd.f32 %v3019, %v3020
      %v3022 = vsel %vm726, %v2926, 0.0
      %v3023 = vadd.f32 %v3021, %v3022
      %v3024 = vsel %vm726, %v2927, 0.0
      %v3025 = vadd.f32 %v3023, %v3024
      %v3026 = vsel %vm726, %v2928, 0.0
      %v3027 = vadd.f32 %v3025, %v3026
      %v3028 = vsel %vm726, %v2929, 0.0
      %v3029 = vadd.f32 %v3027, %v3028
      %v3030 = vsel %vm726, %v2930, 0.0
      %v3031 = vadd.f32 %v3029, %v3030
      %v3032 = vsel %vm726, %v2931, 0.0
      %v3033 = vadd.f32 %v3031, %v3032
      %v3034 = vsel %vm726, %v2932, 0.0
      %v3035 = vadd.f32 %v3033, %v3034
      %v3036 = vrot.slane %v3035, 4
      %v3037 = vadd.f32 %v3035, %v3036
      %v3038 = vrot.slane %v3037, 2
      %v3039 = vadd.f32 %v3037, %v3038
      %v3040 = vrot.slane %v3039, 1
      %v3041 = vadd.f32 %v3039, %v3040
      %v3042 = vadd.f32 %v2972, %v3041
      %vm3043 = vcmask 57344
      %3044 = vst.msk [vmem:[%s317] sm:$0x1] %vm3043, %v3042
      %v3045 = vld [vmem:[%s320] sm:$0x1]
      %v3046 = vmul.f32 %v2901, %v2901
      %v3047 = vmul.f32 %v2902, %v2902
      %v3048 = vmul.f32 %v2903, %v2903
      %v3049 = vmul.f32 %v2904, %v2904
      %v3050 = vmul.f32 %v2905, %v2905
      %v3051 = vmul.f32 %v2906, %v2906
      %v3052 = vmul.f32 %v2907, %v2907
      %v3053 = vmul.f32 %v2908, %v2908
      %v3054 = vmul.f32 %v2909, %v2909
      %v3055 = vmul.f32 %v2910, %v2910
      %v3056 = vmul.f32 %v2911, %v2911
      %v3057 = vmul.f32 %v2912, %v2912
      %v3058 = vmul.f32 %v2913, %v2913
      %v3059 = vmul.f32 %v2914, %v2914
      %v3060 = vmul.f32 %v2915, %v2915
      %v3061 = vmul.f32 %v2916, %v2916
      %v3062 = vmul.f32 %v2917, %v2917
      %v3063 = vmul.f32 %v2918, %v2918
      %v3064 = vmul.f32 %v2919, %v2919
      %v3065 = vmul.f32 %v2920, %v2920
      %v3066 = vmul.f32 %v2921, %v2921
      %v3067 = vmul.f32 %v2922, %v2922
      %v3068 = vmul.f32 %v2923, %v2923
      %v3069 = vmul.f32 %v2924, %v2924
      %v3070 = vmul.f32 %v2925, %v2925
      %v3071 = vmul.f32 %v2926, %v2926
      %v3072 = vmul.f32 %v2927, %v2927
      %v3073 = vmul.f32 %v2928, %v2928
      %v3074 = vmul.f32 %v2929, %v2929
      %v3075 = vmul.f32 %v2930, %v2930
      %v3076 = vmul.f32 %v2931, %v2931
      %v3077 = vmul.f32 %v2932, %v2932
      %v3078 = vsel %vm726, %v3046, 0.0
      %v3079 = vsel %vm726, %v3047, 0.0
      %v3080 = vadd.f32 %v3078, %v3079
      %v3081 = vsel %vm726, %v3048, 0.0
      %v3082 = vadd.f32 %v3080, %v3081
      %v3083 = vsel %vm726, %v3049, 0.0
      %v3084 = vadd.f32 %v3082, %v3083
      %v3085 = vsel %vm726, %v3050, 0.0
      %v3086 = vadd.f32 %v3084, %v3085
      %v3087 = vsel %vm726, %v3051, 0.0
      %v3088 = vadd.f32 %v3086, %v3087
      %v3089 = vsel %vm726, %v3052, 0.0
      %v3090 = vadd.f32 %v3088, %v3089
      %v3091 = vsel %vm726, %v3053, 0.0
      %v3092 = vadd.f32 %v3090, %v3091
      %v3093 = vsel %vm726, %v3054, 0.0
      %v3094 = vadd.f32 %v3092, %v3093
      %v3095 = vsel %vm726, %v3055, 0.0
      %v3096 = vadd.f32 %v3094, %v3095
      %v3097 = vsel %vm726, %v3056, 0.0
      %v3098 = vadd.f32 %v3096, %v3097
      %v3099 = vsel %vm726, %v3057, 0.0
      %v3100 = vadd.f32 %v3098, %v3099
      %v3101 = vsel %vm726, %v3058, 0.0
      %v3102 = vadd.f32 %v3100, %v3101
      %v3103 = vsel %vm726, %v3059, 0.0
      %v3104 = vadd.f32 %v3102, %v3103
      %v3105 = vsel %vm726, %v3060, 0.0
      %v3106 = vadd.f32 %v3104, %v3105
      %v3107 = vsel %vm726, %v3061, 0.0
      %v3108 = vadd.f32 %v3106, %v3107
      %v3109 = vsel %vm726, %v3062, 0.0
      %v3110 = vadd.f32 %v3108, %v3109
      %v3111 = vsel %vm726, %v3063, 0.0
      %v3112 = vadd.f32 %v3110, %v3111
      %v3113 = vsel %vm726, %v3064, 0.0
      %v3114 = vadd.f32 %v3112, %v3113
      %v3115 = vsel %vm726, %v3065, 0.0
      %v3116 = vadd.f32 %v3114, %v3115
      %v3117 = vsel %vm726, %v3066, 0.0
      %v3118 = vadd.f32 %v3116, %v3117
      %v3119 = vsel %vm726, %v3067, 0.0
      %v3120 = vadd.f32 %v3118, %v3119
      %v3121 = vsel %vm726, %v3068, 0.0
      %v3122 = vadd.f32 %v3120, %v3121
      %v3123 = vsel %vm726, %v3069, 0.0
      %v3124 = vadd.f32 %v3122, %v3123
      %v3125 = vsel %vm726, %v3070, 0.0
      %v3126 = vadd.f32 %v3124, %v3125
      %v3127 = vsel %vm726, %v3071, 0.0
      %v3128 = vadd.f32 %v3126, %v3127
      %v3129 = vsel %vm726, %v3072, 0.0
      %v3130 = vadd.f32 %v3128, %v3129
      %v3131 = vsel %vm726, %v3073, 0.0
      %v3132 = vadd.f32 %v3130, %v3131
      %v3133 = vsel %vm726, %v3074, 0.0
      %v3134 = vadd.f32 %v3132, %v3133
      %v3135 = vsel %vm726, %v3075, 0.0
      %v3136 = vadd.f32 %v3134, %v3135
      %v3137 = vsel %vm726, %v3076, 0.0
      %v3138 = vadd.f32 %v3136, %v3137
      %v3139 = vsel %vm726, %v3077, 0.0
      %v3140 = vadd.f32 %v3138, %v3139
      %v3141 = vrot.slane %v3140, 4
      %v3142 = vadd.f32 %v3140, %v3141
      %v3143 = vrot.slane %v3142, 2
      %v3144 = vadd.f32 %v3142, %v3143
      %v3145 = vrot.slane %v3144, 1
      %v3146 = vadd.f32 %v3144, %v3145
      %v3147 = vadd.f32 %v3045, %v3146
      %3148 = vst.msk [vmem:[%s320] sm:$0x1] %vm3043, %v3147
      %s3149 = smul.u32 16, %s24
      %p3150 = scmp.lt.s32.totalorder %s23, 1
      %s3151 = scalar_select %p3150, %s23, 1
      %p3152 = scmp.lt.s32.totalorder %s3149, 15
      %s3153 = scalar_select %p3152, %s3149, 15
      %s3154 = smul.addr %s3153, 2
      %s3155 = smul.addr %s3151, 32
      %s3156 = sadd.s32 %s3154, %s3155
      %s3157 = smul.addr %s3156, 8
      %s3158 = scalar_lea.vmem %s5, %s3157
      %p3159 = scmp.lt.s32.totalorder %s23, 1
      %s3160 = scalar_select %p3159, %s23, 1
      %s3161 = scalar_lea.vmem %s6, %s3160
      %p3162 = scmp.lt.s32.totalorder %s23, 1
      %s3163 = scalar_select %p3162, %s23, 1
      %s3164 = scalar_lea.vmem %s7, %s3163
      // Predicated region
      $region45: #{double_conv_forward.4} parent=39 // pred_check
        %p3165 = pneg %p161
      $region46: #{double_conv_forward.4} parent=39 // pred_check_branch
        %3167 = sbr.rel (%p3165) target = $region48
      $region47: #{double_conv_forward.4} parent=39 // pred_region
        %s3168 = smul.u32 16, %s24
      $region48: #{double_conv_forward.4} parent=39 // pred_fallthru
        _
      // Predicated region
      $region49: #{double_conv_forward.4} parent=39 // pred_check
        %p3169 = pneg %p187
      $region50: #{double_conv_forward.4} parent=39 // pred_check_branch
        %3171 = sbr.rel (%p3169) target = $region52
      $region51: #{double_conv_forward.4} parent=39 // pred_region
        _
      $region52: #{double_conv_forward.4} parent=39 // pred_fallthru
        _
      // Predicated region
      $region53: #{double_conv_forward.4} parent=39 // pred_check
        %p3172 = pneg %p213
      $region54: #{double_conv_forward.4} parent=39 // pred_check_branch
        %3174 = sbr.rel (%p3172) target = $region56
      $region55: #{double_conv_forward.4} parent=39 // pred_region
        _
      $region56: #{double_conv_forward.4} parent=39 // pred_fallthru
        _
    $region40: #{double_conv_forward.4} parent=5 // pred_fallthru
      _
    %p3175 = scmp.le.s32.totalorder 2, %s14
    // Predicated region
    $region57: #{double_conv_forward.4} parent=5 // pred_check
      %p3176 = pneg %p3175
    $region58: #{double_conv_forward.4} parent=5 // pred_check_branch
      %3178 = sbr.rel (%p3176) target = $region60
    $region59: #{double_conv_forward.4} parent=5 // pred_region
      %s3179 = ssub.s32 %s14, 2
      // Predicated region
      $region61: #{double_conv_forward.4} parent=59 // pred_check
        %p3180 = pneg %p167
      $region62: #{double_conv_forward.4} parent=59 // pred_check_branch
        %3182 = sbr.rel (%p3180) target = $region64
      $region63: #{double_conv_forward.4} parent=59 // pred_region
        %s3183 = smul.u32 16, %s26
        %p3184 = scmp.lt.s32.totalorder %s25, 1
        %s3185 = scalar_select %p3184, %s25, 1
        %p3186 = scmp.lt.s32.totalorder %s3183, 15
        %s3187 = scalar_select %p3186, %s3183, 15
        %s3188 = smul.addr %s3187, 2
        %s3189 = smul.addr %s3185, 32
        %s3190 = sadd.s32 %s3188, %s3189
        %s3191 = smul.addr %s3190, 8
        %s3192 = scalar_lea.vmem %s5, %s3191
      $region64: #{double_conv_forward.4} parent=59 // pred_fallthru
        _
      // Predicated region
      $region65: #{double_conv_forward.4} parent=59 // pred_check
        %p3193 = pneg %p193
      $region66: #{double_conv_forward.4} parent=59 // pred_check_branch
        %3195 = sbr.rel (%p3193) target = $region68
      $region67: #{double_conv_forward.4} parent=59 // pred_region
        %p3196 = scmp.lt.s32.totalorder %s25, 1
        %s3197 = scalar_select %p3196, %s25, 1
        %s3198 = scalar_lea.vmem %s6, %s3197
      $region68: #{double_conv_forward.4} parent=59 // pred_fallthru
        _
      // Predicated region
      $region69: #{double_conv_forward.4} parent=59 // pred_check
        %p3199 = pneg %p219
      $region70: #{double_conv_forward.4} parent=59 // pred_check_branch
        %3201 = sbr.rel (%p3199) target = $region72
      $region71: #{double_conv_forward.4} parent=59 // pred_region
        %p3202 = scmp.lt.s32.totalorder %s25, 1
        %s3203 = scalar_select %p3202, %s25, 1
        %s3204 = scalar_lea.vmem %s7, %s3203
      $region72: #{double_conv_forward.4} parent=59 // pred_fallthru
        _
    $region60: #{double_conv_forward.4} parent=5 // pred_fallthru
      _
  $region6: #{double_conv_forward.4} parent=0 // loop_footer
    %s18 = sadd.s32 1, %s14
  $region7: #{double_conv_forward.4} parent=0 // loop_footer_branch
    %13 = sbr.rel target = $region3
  $region8: #{double_conv_forward.4} parent=0 // loop_exit
    _

</llo_original>
